<compile_context>
chip_gen: v7x
topology: tpu7x:2x2x1
jax: 0.10.0
libtpu: 0.0.40
codegen_flags: <defaults>
</compile_context>

<pallas_src>
from functools import partial

import jax
import jax.numpy as jnp
from jax import lax
from jax.experimental import pallas as pl
from jax.experimental.pallas import tpu as pltpu

# ----------------------------- geometry constants ---------------------------
H = W = 14            # conv spatial size
WP = 16               # padded/flattened row width (power of 2 -> cheap column masking)
ROWS_IN = 17 * WP     # 272 rows of the zero-padded flattened conv1 input
M_CONV = H * WP       # 224 conv-output rows per image (2 garbage columns per 16-wide row)
A2 = 32               # sublane-aligned (bf16: 32 % 16 == 0) placement offset inside x2 buffer
OFF2 = A2 - WP - 1    # = 15, base read offset for conv2's shifted slices
ROWS_X2 = 288         # rows of the in-kernel zero-padded conv2 input buffer (>= A2 + 241)
N_POOL = 49           # 7*7 pooled positions
M_WIN = 207           # rows of the 2x2-window-max array fed to the selection matmul
C1, C2 = 16, 32       # per-image channel counts
G = 8                 # images lane-packed per grid step (8*16 = 128 lanes; G=16 viable on v6e/v7x)
GC1 = G * C1          # 128 packed conv1 channels
GC2 = G * C2          # 256 packed conv2 channels
N_CLS = 2             # classifier outputs


# ------------------------------- fused kernel -------------------------------

def _fused_kernel(x1_ref, w1_ref, b1_ref, w2_ref, b2_ref, sel_ref,
                  pool_ref, x2_ref, c2_ref):
    # ---- conv1 (3x3, pad=1) for G lane-packed images: 9 accumulated shifted
    #      block-diagonal matmuls; BN scale folded into weights, bias + ReLU fused ----
    acc1 = jnp.zeros((M_CONV, GC1), jnp.float32)
    for k in range(9):
        off = (k // 3) * WP + (k % 3)
        acc1 = acc1 + jnp.dot(x1_ref[0, off:off + M_CONV, :], w1_ref[k],
                              preferred_element_type=jnp.float32)
    a1 = jnp.maximum(acc1 + b1_ref[...], 0.0)

    # zero the 2 wrap columns of every 16-wide row; they double as conv2's zero padding
    ridx = lax.broadcasted_iota(jnp.int32, (M_CONV, GC1), 0)
    a1 = jnp.where((ridx % WP) < W, a1, 0.0)

    # refresh only the zero-padding rows of the conv2 input buffer; the interior
    # [A2, A2+M_CONV) is fully overwritten below (unconditional -> megacore-safe)
    x2_ref[0:A2, :] = jnp.zeros((A2, GC1), jnp.bfloat16)
    x2_ref[A2 + M_CONV:ROWS_X2, :] = jnp.zeros((ROWS_X2 - A2 - M_CONV, GC1), jnp.bfloat16)
    x2_ref[A2:A2 + M_CONV, :] = a1.astype(jnp.bfloat16)   # single cast, aligned bf16 store

    # ---- conv2 (3x3, pad=1) + bias + ReLU; output lanes split into two 128-wide
    #      halves to bound accumulator vreg pressure ----
    for h in range(2):
        acc2 = jnp.zeros((M_CONV, GC1), jnp.float32)
        for k in range(9):
            off = OFF2 + (k // 3) * WP + (k % 3)
            acc2 = acc2 + jnp.dot(x2_ref[off:off + M_CONV, :], w2_ref[h, k],
                                  preferred_element_type=jnp.float32)
        c2_ref[:, h * GC1:(h + 1) * GC1] = jnp.maximum(acc2 + b2_ref[h], 0.0)

    # ---- 2x2 max pool: window max via 4 shifted slices + 0/1 selection matmul ----
    win = jnp.maximum(
        jnp.maximum(c2_ref[0:M_WIN, :], c2_ref[1:M_WIN + 1, :]),
        jnp.maximum(c2_ref[WP:WP + M_WIN, :], c2_ref[WP + 1:WP + 1 + M_WIN, :]))
    pool_ref[0] = jnp.dot(sel_ref[...], win, preferred_element_type=jnp.float32)  # (49, 256)


# ------------------------------ module forward ------------------------------

def mod_four_forward(x_nchw, params, eps=1e-5):
    B = x_nchw.shape[0]
    f32 = jnp.float32
    bf16 = jnp.bfloat16

    # ---- trace-time parameter prep (tiny, constant-folded by XLA) ----
    def conv_taps(w_oihw):
        # torch (Cout, Cin, 3, 3) -> (9, Cin, Cout), tap index k = kh*3 + kw
        cout, cin = w_oihw.shape[0], w_oihw.shape[1]
        return jnp.transpose(w_oihw, (2, 3, 1, 0)).reshape(9, cin, cout)

    def fold(w_oihw, cb, g, beta, mean, var):
        # bn(conv_w(x) + cb) == conv_{w*s}(x) + ((cb - mean)*s + beta),  s = g/sqrt(var+eps)
        s = g / jnp.sqrt(var + eps)
        return conv_taps(w_oihw) * s[None, None, :], (cb - mean) * s + beta

    def block_diag(w_taps):
        # (9, cin, cout) -> (9, G*cin, G*cout): one conv copy per lane group
        nine, cin, cout = w_taps.shape
        eye = jnp.eye(G, dtype=w_taps.dtype)
        return jnp.einsum('ab,kio->kaibo', eye, w_taps).reshape(nine, G * cin, G * cout)

    w1t, b1c = fold(params["conv1_w"], params["conv1_b"], params["bn1_g"],
                    params["bn1_b"], params["bn1_m"], params["bn1_v"])
    w2t, b2c = fold(params["conv2_w"], params["conv2_b"], params["bn2_g"],
                    params["bn2_b"], params["bn2_m"], params["bn2_v"])

    w1 = block_diag(w1t).astype(bf16)                                  # (9, 128, 128)
    w2 = block_diag(w2t).astype(bf16)                                  # (9, 128, 256)
    w2 = w2.reshape(9, GC1, 2, GC1).transpose(2, 0, 1, 3)              # (2, 9, 128, 128)
    b1 = jnp.tile(b1c.reshape(1, C1), (1, G)).astype(f32)              # (1, 128) lane = g*16 + c
    b2 = jnp.tile(b2c.reshape(1, C2), (1, G)).astype(f32)              # (1, 256) lane = g*32 + c
    b2 = b2.reshape(1, 2, GC1).transpose(1, 0, 2)                      # (2, 1, 128)

    # maxpool selection matrix: pooled[p] = win[2*WP*(p//7) + 2*(p%7)]
    p = jnp.arange(N_POOL)
    tgt = 2 * WP * (p // 7) + 2 * (p % 7)
    sel = (jnp.arange(M_WIN)[None, :] == tgt[:, None]).astype(f32)     # (49, 207)

    # ---- input layout: NCHW -> zero-padded, row-flattened, G-image lane-packed bf16 ----
    B_pad = ((B + G - 1) // G) * G
    NT = B_pad // G
    x = jnp.transpose(x_nchw, (0, 2, 3, 1))                            # (B, 14, 14, 16)
    x = jnp.pad(x, ((0, B_pad - B), (1, 2), (1, 1), (0, 0)))           # (B_pad, 17, 16, 16)
    x1f = x.reshape(NT, G, ROWS_IN, C1)
    x1f = jnp.transpose(x1f, (0, 2, 1, 3)).reshape(NT, ROWS_IN, GC1).astype(bf16)

    pooled = pl.pallas_call(
        _fused_kernel,
        grid=(NT,),
        in_specs=[
            pl.BlockSpec((1, ROWS_IN, GC1), lambda t: (t, 0, 0)),      # lane-packed images
            pl.BlockSpec((9, GC1, GC1), lambda t: (0, 0, 0)),          # conv1 weights (bd, BN-folded)
            pl.BlockSpec((1, GC1), lambda t: (0, 0)),                  # conv1+BN bias
            pl.BlockSpec((2, 9, GC1, GC1), lambda t: (0, 0, 0, 0)),    # conv2 weights (bd, halves)
            pl.BlockSpec((2, 1, GC1), lambda t: (0, 0, 0)),            # conv2+BN bias (halves)
            pl.BlockSpec((N_POOL, M_WIN), lambda t: (0, 0)),           # pool selection matrix
        ],
        out_specs=pl.BlockSpec((1, N_POOL, GC2), lambda t: (t, 0, 0)), # lane-dense pooled features
        out_shape=jax.ShapeDtypeStruct((NT, N_POOL, GC2), f32),
        scratch_shapes=[
            pltpu.VMEM((ROWS_X2, GC1), jnp.bfloat16),   # zero-padded conv2 input (bf16)
            pltpu.VMEM((M_CONV, GC2), jnp.float32),     # conv2 output (pre-pool)
        ],
        compiler_params=pltpu.CompilerParams(
            dimension_semantics=("parallel",),
        ),
    )(x1f, w1, b1, w2, b2, sel)

    # unpack lane-packed pooled features -> torch NCHW flatten order (B, 32*7*7)
    feat = pooled.reshape(NT, N_POOL, G, C2)
    feat = jnp.transpose(feat, (0, 2, 3, 1)).reshape(B_pad, C2 * N_POOL)[:B]

    # classifier runs in XLA (tiny 1568x2 matmul; keeps the kernel's serial tail short)
    out = feat @ params["fc_w"].T + params["fc_b"]
    return feat, out


# ------------------------ pure-XLA reference (for checking) -----------------

def _reference_forward(x_nchw, params, eps=1e-5):
    def conv(x, w, b):
        y = lax.conv_general_dilated(x, w, (1, 1), 'SAME',
                                     dimension_numbers=('NCHW', 'OIHW', 'NCHW'),
                                     precision=lax.Precision.HIGHEST)
        return y + b[None, :, None, None]

    def bn(x, g, beta, m, v):
        inv = g / jnp.sqrt(v + eps)
        return (x - m[None, :, None, None]) * inv[None, :, None, None] + beta[None, :, None, None]

    h = jax.nn.relu(bn(conv(x_nchw, params["conv1_w"], params["conv1_b"]),
                       params["bn1_g"], params["bn1_b"], params["bn1_m"], params["bn1_v"]))
    h = jax.nn.relu(bn(conv(h, params["conv2_w"], params["conv2_b"]),
                       params["bn2_g"], params["bn2_b"], params["bn2_m"], params["bn2_v"]))
    h = h.reshape(h.shape[0], C2, 7, 2, 7, 2).max(axis=(3, 5))   # MaxPool2d(2,2)
    xf = h.reshape(h.shape[0], -1)                               # NCHW flatten
    return xf, xf @ params["fc_w"].T + params["fc_b"]


# ------------------------------ parameter init ------------------------------

def init_params(key):
    ks = jax.random.split(key, 12)
    f32 = jnp.float32
    p = {}
    # Conv2d(16 -> 16, 3x3) + BN(16)
    p["conv1_w"] = 0.1 * jax.random.normal(ks[0], (16, 16, 3, 3), f32)
    p["conv1_b"] = 0.1 * jax.random.normal(ks[1], (16,), f32)
    p["bn1_g"] = 1.0 + 0.1 * jax.random.normal(ks[2], (16,), f32)
    p["bn1_b"] = 0.1 * jax.random.normal(ks[3], (16,), f32)
    p["bn1_m"] = 0.1 * jax.random.normal(ks[4], (16,), f32)
    p["bn1_v"] = 1.0 + 0.1 * jnp.abs(jax.random.normal(ks[5], (16,), f32))
    # Conv2d(16 -> 32, 3x3) + BN(32)
    p["conv2_w"] = 0.1 * jax.random.normal(ks[6], (32, 16, 3, 3), f32)
    p["conv2_b"] = 0.1 * jax.random.normal(ks[7], (32,), f32)
    p["bn2_g"] = 1.0 + 0.1 * jax.random.normal(ks[8], (32,), f32)
    p["bn2_b"] = 0.1 * jax.random.normal(ks[9], (32,), f32)
    p["bn2_m"] = 0.1 * jax.random.normal(ks[10], (32,), f32)
    p["bn2_v"] = 1.0 + 0.1 * jnp.abs(jax.random.normal(ks[11], (32,), f32))
    # Linear(32*7*7 -> 2)   (PyTorch weight layout: (out, in))
    kw, kb = jax.random.split(jax.random.fold_in(key, 99))
    p["fc_w"] = 0.05 * jax.random.normal(kw, (2, 32 * 7 * 7), f32)
    p["fc_b"] = 0.05 * jax.random.normal(kb, (2,), f32)
    return p


if __name__ == "__main__":
    key = jax.random.PRNGKey(0)
    xkey, pkey = jax.random.split(key)
    # 16 in-channels, 14x14 spatial (7x7 after the single pool); B=16 -> 2 lane-packed
    # groups of G=8 -> 2 grid steps, feeding both v7x TensorCores.
    B = 16
    x = jax.random.normal(xkey, (B, 16, 14, 14), jnp.float32)
    params = init_params(pkey)

    fwd = jax.jit(partial(mod_four_forward, params=params))
    feat, out = fwd(x)
    jax.block_until_ready((feat, out))

    assert feat.shape == (B, 32 * 7 * 7), feat.shape
    assert out.shape == (B, N_CLS), out.shape
    assert feat.dtype == jnp.float32 and out.dtype == jnp.float32
    assert bool(jnp.all(jnp.isfinite(feat))) and bool(jnp.all(jnp.isfinite(out)))

    # correctness vs. pure-XLA reference (loose tolerance: conv GEMMs run bf16 on the MXU)
    feat_ref, out_ref = jax.jit(partial(_reference_forward, params=params))(x)
    jax.block_until_ready((feat_ref, out_ref))
    assert jnp.allclose(feat, feat_ref, atol=5e-2, rtol=5e-2), \
        float(jnp.max(jnp.abs(feat - feat_ref)))
    assert jnp.allclose(out, out_ref, atol=5e-2, rtol=5e-2), \
        float(jnp.max(jnp.abs(out - out_ref)))

    print("KERNEL_OK")
</pallas_src>

<mosaic_0001>
module attributes {stable_mosaic.version = 11 : i64} {
  func.func @_fused_kernel(%arg0: i32, %arg1: memref<1x272x128xbf16, #tpu.memory_space<vmem>>, %arg2: memref<9x128x128xbf16, #tpu.memory_space<vmem>>, %arg3: memref<1x128xf32, #tpu.memory_space<vmem>>, %arg4: memref<2x9x128x128xbf16, #tpu.memory_space<vmem>>, %arg5: memref<2x1x128xf32, #tpu.memory_space<vmem>>, %arg6: memref<49x207xf32, #tpu.memory_space<vmem>>, %arg7: memref<1x49x256xf32, #tpu.memory_space<vmem>>, %arg8: memref<288x128xbf16, #tpu.memory_space<vmem>>, %arg9: memref<224x256xf32, #tpu.memory_space<vmem>>) attributes {dimension_semantics = [#tpu.dimension_semantics<parallel>], iteration_bounds = array<i64: 2>, scalar_prefetch = 0 : i64, scratch_operands = 2 : i64, tpu.core_type = #tpu.core_type<tc>, window_params = [{transform_indices = @transform_0, window_bounds = array<i64: 1, 272, 128>}, {pipeline_mode = #tpu.pipeline_mode<synchronous>, transform_indices = @transform_1, window_bounds = array<i64: 9, 128, 128>}, {pipeline_mode = #tpu.pipeline_mode<synchronous>, transform_indices = @transform_2, window_bounds = array<i64: 1, 128>}, {pipeline_mode = #tpu.pipeline_mode<synchronous>, transform_indices = @transform_3, window_bounds = array<i64: 2, 9, 128, 128>}, {pipeline_mode = #tpu.pipeline_mode<synchronous>, transform_indices = @transform_4, window_bounds = array<i64: 2, 1, 128>}, {pipeline_mode = #tpu.pipeline_mode<synchronous>, transform_indices = @transform_5, window_bounds = array<i64: 49, 207>}, {transform_indices = @transform_6, window_bounds = array<i64: 1, 49, 256>}]} {
    %cst = arith.constant 0.000000e+00 : f32
    %0 = vector.broadcast %cst : f32 to vector<224x128xf32>
    %c0 = arith.constant 0 : index
    %c0_0 = arith.constant 0 : index
    %c0_1 = arith.constant 0 : index
    %1 = vector.load %arg1[%c0, %c0_0, %c0_1] : memref<1x272x128xbf16, #tpu.memory_space<vmem>>, vector<1x224x128xbf16>
    %2 = vector.shape_cast %1 : vector<1x224x128xbf16> to vector<224x128xbf16>
    %c0_2 = arith.constant 0 : index
    %c0_3 = arith.constant 0 : index
    %c0_4 = arith.constant 0 : index
    %3 = vector.load %arg2[%c0_2, %c0_3, %c0_4] : memref<9x128x128xbf16, #tpu.memory_space<vmem>>, vector<1x128x128xbf16>
    %4 = vector.shape_cast %3 : vector<1x128x128xbf16> to vector<128x128xbf16>
    %cst_5 = arith.constant dense<0.000000e+00> : vector<224x128xf32>
    %5 = tpu.matmul %2, %4, %cst_5 {dimension_numbers = #tpu.dot_dimension_numbers<[1], [0], [0], [1], [0, 0, 1, 1], [], []>} : vector<224x128xbf16>, vector<128x128xbf16>, vector<224x128xf32> -> vector<224x128xf32>
    %6 = arith.addf %0, %5 : vector<224x128xf32>
    %c0_6 = arith.constant 0 : index
    %c1 = arith.constant 1 : index
    %c0_7 = arith.constant 0 : index
    %7 = vector.load %arg1[%c0_6, %c1, %c0_7] : memref<1x272x128xbf16, #tpu.memory_space<vmem>>, vector<1x224x128xbf16>
    %8 = vector.shape_cast %7 : vector<1x224x128xbf16> to vector<224x128xbf16>
    %c1_8 = arith.constant 1 : index
    %c0_9 = arith.constant 0 : index
    %c0_10 = arith.constant 0 : index
    %9 = vector.load %arg2[%c1_8, %c0_9, %c0_10] : memref<9x128x128xbf16, #tpu.memory_space<vmem>>, vector<1x128x128xbf16>
    %10 = vector.shape_cast %9 : vector<1x128x128xbf16> to vector<128x128xbf16>
    %cst_11 = arith.constant dense<0.000000e+00> : vector<224x128xf32>
    %11 = tpu.matmul %8, %10, %cst_11 {dimension_numbers = #tpu.dot_dimension_numbers<[1], [0], [0], [1], [0, 0, 1, 1], [], []>} : vector<224x128xbf16>, vector<128x128xbf16>, vector<224x128xf32> -> vector<224x128xf32>
    %12 = arith.addf %6, %11 : vector<224x128xf32>
    %c0_12 = arith.constant 0 : index
    %c2 = arith.constant 2 : index
    %c0_13 = arith.constant 0 : index
    %13 = vector.load %arg1[%c0_12, %c2, %c0_13] : memref<1x272x128xbf16, #tpu.memory_space<vmem>>, vector<1x224x128xbf16>
    %14 = vector.shape_cast %13 : vector<1x224x128xbf16> to vector<224x128xbf16>
    %c2_14 = arith.constant 2 : index
    %c0_15 = arith.constant 0 : index
    %c0_16 = arith.constant 0 : index
    %15 = vector.load %arg2[%c2_14, %c0_15, %c0_16] : memref<9x128x128xbf16, #tpu.memory_space<vmem>>, vector<1x128x128xbf16>
    %16 = vector.shape_cast %15 : vector<1x128x128xbf16> to vector<128x128xbf16>
    %cst_17 = arith.constant dense<0.000000e+00> : vector<224x128xf32>
    %17 = tpu.matmul %14, %16, %cst_17 {dimension_numbers = #tpu.dot_dimension_numbers<[1], [0], [0], [1], [0, 0, 1, 1], [], []>} : vector<224x128xbf16>, vector<128x128xbf16>, vector<224x128xf32> -> vector<224x128xf32>
    %18 = arith.addf %12, %17 : vector<224x128xf32>
    %c0_18 = arith.constant 0 : index
    %c16 = arith.constant 16 : index
    %c0_19 = arith.constant 0 : index
    %19 = vector.load %arg1[%c0_18, %c16, %c0_19] : memref<1x272x128xbf16, #tpu.memory_space<vmem>>, vector<1x224x128xbf16>
    %20 = vector.shape_cast %19 : vector<1x224x128xbf16> to vector<224x128xbf16>
    %c3 = arith.constant 3 : index
    %c0_20 = arith.constant 0 : index
    %c0_21 = arith.constant 0 : index
    %21 = vector.load %arg2[%c3, %c0_20, %c0_21] : memref<9x128x128xbf16, #tpu.memory_space<vmem>>, vector<1x128x128xbf16>
    %22 = vector.shape_cast %21 : vector<1x128x128xbf16> to vector<128x128xbf16>
    %cst_22 = arith.constant dense<0.000000e+00> : vector<224x128xf32>
    %23 = tpu.matmul %20, %22, %cst_22 {dimension_numbers = #tpu.dot_dimension_numbers<[1], [0], [0], [1], [0, 0, 1, 1], [], []>} : vector<224x128xbf16>, vector<128x128xbf16>, vector<224x128xf32> -> vector<224x128xf32>
    %24 = arith.addf %18, %23 : vector<224x128xf32>
    %c0_23 = arith.constant 0 : index
    %c17 = arith.constant 17 : index
    %c0_24 = arith.constant 0 : index
    %25 = vector.load %arg1[%c0_23, %c17, %c0_24] : memref<1x272x128xbf16, #tpu.memory_space<vmem>>, vector<1x224x128xbf16>
    %26 = vector.shape_cast %25 : vector<1x224x128xbf16> to vector<224x128xbf16>
    %c4 = arith.constant 4 : index
    %c0_25 = arith.constant 0 : index
    %c0_26 = arith.constant 0 : index
    %27 = vector.load %arg2[%c4, %c0_25, %c0_26] : memref<9x128x128xbf16, #tpu.memory_space<vmem>>, vector<1x128x128xbf16>
    %28 = vector.shape_cast %27 : vector<1x128x128xbf16> to vector<128x128xbf16>
    %cst_27 = arith.constant dense<0.000000e+00> : vector<224x128xf32>
    %29 = tpu.matmul %26, %28, %cst_27 {dimension_numbers = #tpu.dot_dimension_numbers<[1], [0], [0], [1], [0, 0, 1, 1], [], []>} : vector<224x128xbf16>, vector<128x128xbf16>, vector<224x128xf32> -> vector<224x128xf32>
    %30 = arith.addf %24, %29 : vector<224x128xf32>
    %c0_28 = arith.constant 0 : index
    %c18 = arith.constant 18 : index
    %c0_29 = arith.constant 0 : index
    %31 = vector.load %arg1[%c0_28, %c18, %c0_29] : memref<1x272x128xbf16, #tpu.memory_space<vmem>>, vector<1x224x128xbf16>
    %32 = vector.shape_cast %31 : vector<1x224x128xbf16> to vector<224x128xbf16>
    %c5 = arith.constant 5 : index
    %c0_30 = arith.constant 0 : index
    %c0_31 = arith.constant 0 : index
    %33 = vector.load %arg2[%c5, %c0_30, %c0_31] : memref<9x128x128xbf16, #tpu.memory_space<vmem>>, vector<1x128x128xbf16>
    %34 = vector.shape_cast %33 : vector<1x128x128xbf16> to vector<128x128xbf16>
    %cst_32 = arith.constant dense<0.000000e+00> : vector<224x128xf32>
    %35 = tpu.matmul %32, %34, %cst_32 {dimension_numbers = #tpu.dot_dimension_numbers<[1], [0], [0], [1], [0, 0, 1, 1], [], []>} : vector<224x128xbf16>, vector<128x128xbf16>, vector<224x128xf32> -> vector<224x128xf32>
    %36 = arith.addf %30, %35 : vector<224x128xf32>
    %c0_33 = arith.constant 0 : index
    %c32 = arith.constant 32 : index
    %c0_34 = arith.constant 0 : index
    %37 = vector.load %arg1[%c0_33, %c32, %c0_34] : memref<1x272x128xbf16, #tpu.memory_space<vmem>>, vector<1x224x128xbf16>
    %38 = vector.shape_cast %37 : vector<1x224x128xbf16> to vector<224x128xbf16>
    %c6 = arith.constant 6 : index
    %c0_35 = arith.constant 0 : index
    %c0_36 = arith.constant 0 : index
    %39 = vector.load %arg2[%c6, %c0_35, %c0_36] : memref<9x128x128xbf16, #tpu.memory_space<vmem>>, vector<1x128x128xbf16>
    %40 = vector.shape_cast %39 : vector<1x128x128xbf16> to vector<128x128xbf16>
    %cst_37 = arith.constant dense<0.000000e+00> : vector<224x128xf32>
    %41 = tpu.matmul %38, %40, %cst_37 {dimension_numbers = #tpu.dot_dimension_numbers<[1], [0], [0], [1], [0, 0, 1, 1], [], []>} : vector<224x128xbf16>, vector<128x128xbf16>, vector<224x128xf32> -> vector<224x128xf32>
    %42 = arith.addf %36, %41 : vector<224x128xf32>
    %c0_38 = arith.constant 0 : index
    %c33 = arith.constant 33 : index
    %c0_39 = arith.constant 0 : index
    %43 = vector.load %arg1[%c0_38, %c33, %c0_39] : memref<1x272x128xbf16, #tpu.memory_space<vmem>>, vector<1x224x128xbf16>
    %44 = vector.shape_cast %43 : vector<1x224x128xbf16> to vector<224x128xbf16>
    %c7 = arith.constant 7 : index
    %c0_40 = arith.constant 0 : index
    %c0_41 = arith.constant 0 : index
    %45 = vector.load %arg2[%c7, %c0_40, %c0_41] : memref<9x128x128xbf16, #tpu.memory_space<vmem>>, vector<1x128x128xbf16>
    %46 = vector.shape_cast %45 : vector<1x128x128xbf16> to vector<128x128xbf16>
    %cst_42 = arith.constant dense<0.000000e+00> : vector<224x128xf32>
    %47 = tpu.matmul %44, %46, %cst_42 {dimension_numbers = #tpu.dot_dimension_numbers<[1], [0], [0], [1], [0, 0, 1, 1], [], []>} : vector<224x128xbf16>, vector<128x128xbf16>, vector<224x128xf32> -> vector<224x128xf32>
    %48 = arith.addf %42, %47 : vector<224x128xf32>
    %c0_43 = arith.constant 0 : index
    %c34 = arith.constant 34 : index
    %c0_44 = arith.constant 0 : index
    %49 = vector.load %arg1[%c0_43, %c34, %c0_44] : memref<1x272x128xbf16, #tpu.memory_space<vmem>>, vector<1x224x128xbf16>
    %50 = vector.shape_cast %49 : vector<1x224x128xbf16> to vector<224x128xbf16>
    %c8 = arith.constant 8 : index
    %c0_45 = arith.constant 0 : index
    %c0_46 = arith.constant 0 : index
    %51 = vector.load %arg2[%c8, %c0_45, %c0_46] : memref<9x128x128xbf16, #tpu.memory_space<vmem>>, vector<1x128x128xbf16>
    %52 = vector.shape_cast %51 : vector<1x128x128xbf16> to vector<128x128xbf16>
    %cst_47 = arith.constant dense<0.000000e+00> : vector<224x128xf32>
    %53 = tpu.matmul %50, %52, %cst_47 {dimension_numbers = #tpu.dot_dimension_numbers<[1], [0], [0], [1], [0, 0, 1, 1], [], []>} : vector<224x128xbf16>, vector<128x128xbf16>, vector<224x128xf32> -> vector<224x128xf32>
    %54 = arith.addf %48, %53 : vector<224x128xf32>
    %c0_48 = arith.constant 0 : index
    %c0_49 = arith.constant 0 : index
    %55 = vector.load %arg3[%c0_48, %c0_49] : memref<1x128xf32, #tpu.memory_space<vmem>>, vector<1x128xf32>
    %56 = vector.broadcast %55 : vector<1x128xf32> to vector<224x128xf32>
    %57 = arith.addf %54, %56 : vector<224x128xf32>
    %cst_50 = arith.constant 0.000000e+00 : f32
    %58 = vector.broadcast %cst_50 : f32 to vector<224x128xf32>
    %59 = arith.maximumf %57, %58 : vector<224x128xf32>
    %60 = tpu.iota {dimensions = array<i32: 0>} : vector<224x128xi32>
    %c16_i32 = arith.constant 16 : i32
    %c0_i32 = arith.constant 0 : i32
    %61 = arith.cmpi eq, %c16_i32, %c0_i32 : i32
    %c1_i32 = arith.constant 1 : i32
    %62 = arith.select %61, %c1_i32, %c16_i32 : i32
    %63 = vector.broadcast %62 : i32 to vector<224x128xi32>
    %64 = arith.remsi %60, %63 : vector<224x128xi32>
    %c0_i32_51 = arith.constant 0 : i32
    %65 = vector.broadcast %c0_i32_51 : i32 to vector<224x128xi32>
    %66 = arith.cmpi ne, %64, %65 : vector<224x128xi32>
    %c0_i32_52 = arith.constant 0 : i32
    %67 = vector.broadcast %c0_i32_52 : i32 to vector<224x128xi32>
    %68 = arith.cmpi slt, %64, %67 : vector<224x128xi32>
    %c0_i32_53 = arith.constant 0 : i32
    %69 = arith.cmpi slt, %62, %c0_i32_53 : i32
    %70 = vector.broadcast %69 : i1 to vector<224x128xi1>
    %71 = vector.broadcast %70 : vector<224x128xi1> to vector<224x128xi1>
    %72 = arith.xori %68, %71 : vector<224x128xi1>
    %73 = arith.andi %72, %66 : vector<224x128xi1>
    %74 = vector.broadcast %62 : i32 to vector<224x128xi32>
    %75 = arith.addi %64, %74 : vector<224x128xi32>
    %76 = arith.select %73, %75, %64 : vector<224x128xi1>, vector<224x128xi32>
    %c14_i32 = arith.constant 14 : i32
    %77 = vector.broadcast %c14_i32 : i32 to vector<224x128xi32>
    %78 = arith.cmpi slt, %76, %77 : vector<224x128xi32>
    %cst_54 = arith.constant 0.000000e+00 : f32
    %79 = vector.broadcast %cst_54 : f32 to vector<224x128xf32>
    %80 = arith.select %78, %59, %79 : vector<224x128xi1>, vector<224x128xf32>
    %cst_55 = arith.constant 0.000000e+00 : bf16
    %81 = vector.broadcast %cst_55 : bf16 to vector<32x128xbf16>
    %c0_56 = arith.constant 0 : index
    %c0_57 = arith.constant 0 : index
    %82 = vector.load %arg8[%c0_56, %c0_57] : memref<288x128xbf16, #tpu.memory_space<vmem>>, vector<32x128xbf16>
    tpu.vector_store %arg8[%c0_56, %c0_57], %81 {strides = array<i32>} : memref<288x128xbf16, #tpu.memory_space<vmem>>, vector<32x128xbf16>,
    %cst_58 = arith.constant 0.000000e+00 : bf16
    %83 = vector.broadcast %cst_58 : bf16 to vector<32x128xbf16>
    %c256 = arith.constant 256 : index
    %c0_59 = arith.constant 0 : index
    %84 = vector.load %arg8[%c256, %c0_59] : memref<288x128xbf16, #tpu.memory_space<vmem>>, vector<32x128xbf16>
    tpu.vector_store %arg8[%c256, %c0_59], %83 {strides = array<i32>} : memref<288x128xbf16, #tpu.memory_space<vmem>>, vector<32x128xbf16>,
    %85 = arith.truncf %80 : vector<224x128xf32> to vector<224x128xbf16>
    %c32_60 = arith.constant 32 : index
    %c0_61 = arith.constant 0 : index
    %86 = vector.load %arg8[%c32_60, %c0_61] : memref<288x128xbf16, #tpu.memory_space<vmem>>, vector<224x128xbf16>
    tpu.vector_store %arg8[%c32_60, %c0_61], %85 {strides = array<i32>} : memref<288x128xbf16, #tpu.memory_space<vmem>>, vector<224x128xbf16>,
    %cst_62 = arith.constant 0.000000e+00 : f32
    %87 = vector.broadcast %cst_62 : f32 to vector<224x128xf32>
    %c15 = arith.constant 15 : index
    %c0_63 = arith.constant 0 : index
    %88 = vector.load %arg8[%c15, %c0_63] : memref<288x128xbf16, #tpu.memory_space<vmem>>, vector<224x128xbf16>
    %c0_64 = arith.constant 0 : index
    %c0_65 = arith.constant 0 : index
    %c0_66 = arith.constant 0 : index
    %c0_67 = arith.constant 0 : index
    %89 = vector.load %arg4[%c0_64, %c0_65, %c0_66, %c0_67] : memref<2x9x128x128xbf16, #tpu.memory_space<vmem>>, vector<1x1x128x128xbf16>
    %90 = vector.shape_cast %89 : vector<1x1x128x128xbf16> to vector<128x128xbf16>
    %cst_68 = arith.constant dense<0.000000e+00> : vector<224x128xf32>
    %91 = tpu.matmul %88, %90, %cst_68 {dimension_numbers = #tpu.dot_dimension_numbers<[1], [0], [0], [1], [0, 0, 1, 1], [], []>} : vector<224x128xbf16>, vector<128x128xbf16>, vector<224x128xf32> -> vector<224x128xf32>
    %92 = arith.addf %87, %91 : vector<224x128xf32>
    %c16_69 = arith.constant 16 : index
    %c0_70 = arith.constant 0 : index
    %93 = vector.load %arg8[%c16_69, %c0_70] : memref<288x128xbf16, #tpu.memory_space<vmem>>, vector<224x128xbf16>
    %c0_71 = arith.constant 0 : index
    %c1_72 = arith.constant 1 : index
    %c0_73 = arith.constant 0 : index
    %c0_74 = arith.constant 0 : index
    %94 = vector.load %arg4[%c0_71, %c1_72, %c0_73, %c0_74] : memref<2x9x128x128xbf16, #tpu.memory_space<vmem>>, vector<1x1x128x128xbf16>
    %95 = vector.shape_cast %94 : vector<1x1x128x128xbf16> to vector<128x128xbf16>
    %cst_75 = arith.constant dense<0.000000e+00> : vector<224x128xf32>
    %96 = tpu.matmul %93, %95, %cst_75 {dimension_numbers = #tpu.dot_dimension_numbers<[1], [0], [0], [1], [0, 0, 1, 1], [], []>} : vector<224x128xbf16>, vector<128x128xbf16>, vector<224x128xf32> -> vector<224x128xf32>
    %97 = arith.addf %92, %96 : vector<224x128xf32>
    %c17_76 = arith.constant 17 : index
    %c0_77 = arith.constant 0 : index
    %98 = vector.load %arg8[%c17_76, %c0_77] : memref<288x128xbf16, #tpu.memory_space<vmem>>, vector<224x128xbf16>
    %c0_78 = arith.constant 0 : index
    %c2_79 = arith.constant 2 : index
    %c0_80 = arith.constant 0 : index
    %c0_81 = arith.constant 0 : index
    %99 = vector.load %arg4[%c0_78, %c2_79, %c0_80, %c0_81] : memref<2x9x128x128xbf16, #tpu.memory_space<vmem>>, vector<1x1x128x128xbf16>
    %100 = vector.shape_cast %99 : vector<1x1x128x128xbf16> to vector<128x128xbf16>
    %cst_82 = arith.constant dense<0.000000e+00> : vector<224x128xf32>
    %101 = tpu.matmul %98, %100, %cst_82 {dimension_numbers = #tpu.dot_dimension_numbers<[1], [0], [0], [1], [0, 0, 1, 1], [], []>} : vector<224x128xbf16>, vector<128x128xbf16>, vector<224x128xf32> -> vector<224x128xf32>
    %102 = arith.addf %97, %101 : vector<224x128xf32>
    %c31 = arith.constant 31 : index
    %c0_83 = arith.constant 0 : index
    %103 = vector.load %arg8[%c31, %c0_83] : memref<288x128xbf16, #tpu.memory_space<vmem>>, vector<224x128xbf16>
    %c0_84 = arith.constant 0 : index
    %c3_85 = arith.constant 3 : index
    %c0_86 = arith.constant 0 : index
    %c0_87 = arith.constant 0 : index
    %104 = vector.load %arg4[%c0_84, %c3_85, %c0_86, %c0_87] : memref<2x9x128x128xbf16, #tpu.memory_space<vmem>>, vector<1x1x128x128xbf16>
    %105 = vector.shape_cast %104 : vector<1x1x128x128xbf16> to vector<128x128xbf16>
    %cst_88 = arith.constant dense<0.000000e+00> : vector<224x128xf32>
    %106 = tpu.matmul %103, %105, %cst_88 {dimension_numbers = #tpu.dot_dimension_numbers<[1], [0], [0], [1], [0, 0, 1, 1], [], []>} : vector<224x128xbf16>, vector<128x128xbf16>, vector<224x128xf32> -> vector<224x128xf32>
    %107 = arith.addf %102, %106 : vector<224x128xf32>
    %c32_89 = arith.constant 32 : index
    %c0_90 = arith.constant 0 : index
    %108 = vector.load %arg8[%c32_89, %c0_90] : memref<288x128xbf16, #tpu.memory_space<vmem>>, vector<224x128xbf16>
    %c0_91 = arith.constant 0 : index
    %c4_92 = arith.constant 4 : index
    %c0_93 = arith.constant 0 : index
    %c0_94 = arith.constant 0 : index
    %109 = vector.load %arg4[%c0_91, %c4_92, %c0_93, %c0_94] : memref<2x9x128x128xbf16, #tpu.memory_space<vmem>>, vector<1x1x128x128xbf16>
    %110 = vector.shape_cast %109 : vector<1x1x128x128xbf16> to vector<128x128xbf16>
    %cst_95 = arith.constant dense<0.000000e+00> : vector<224x128xf32>
    %111 = tpu.matmul %108, %110, %cst_95 {dimension_numbers = #tpu.dot_dimension_numbers<[1], [0], [0], [1], [0, 0, 1, 1], [], []>} : vector<224x128xbf16>, vector<128x128xbf16>, vector<224x128xf32> -> vector<224x128xf32>
    %112 = arith.addf %107, %111 : vector<224x128xf32>
    %c33_96 = arith.constant 33 : index
    %c0_97 = arith.constant 0 : index
    %113 = vector.load %arg8[%c33_96, %c0_97] : memref<288x128xbf16, #tpu.memory_space<vmem>>, vector<224x128xbf16>
    %c0_98 = arith.constant 0 : index
    %c5_99 = arith.constant 5 : index
    %c0_100 = arith.constant 0 : index
    %c0_101 = arith.constant 0 : index
    %114 = vector.load %arg4[%c0_98, %c5_99, %c0_100, %c0_101] : memref<2x9x128x128xbf16, #tpu.memory_space<vmem>>, vector<1x1x128x128xbf16>
    %115 = vector.shape_cast %114 : vector<1x1x128x128xbf16> to vector<128x128xbf16>
    %cst_102 = arith.constant dense<0.000000e+00> : vector<224x128xf32>
    %116 = tpu.matmul %113, %115, %cst_102 {dimension_numbers = #tpu.dot_dimension_numbers<[1], [0], [0], [1], [0, 0, 1, 1], [], []>} : vector<224x128xbf16>, vector<128x128xbf16>, vector<224x128xf32> -> vector<224x128xf32>
    %117 = arith.addf %112, %116 : vector<224x128xf32>
    %c47 = arith.constant 47 : index
    %c0_103 = arith.constant 0 : index
    %118 = vector.load %arg8[%c47, %c0_103] : memref<288x128xbf16, #tpu.memory_space<vmem>>, vector<224x128xbf16>
    %c0_104 = arith.constant 0 : index
    %c6_105 = arith.constant 6 : index
    %c0_106 = arith.constant 0 : index
    %c0_107 = arith.constant 0 : index
    %119 = vector.load %arg4[%c0_104, %c6_105, %c0_106, %c0_107] : memref<2x9x128x128xbf16, #tpu.memory_space<vmem>>, vector<1x1x128x128xbf16>
    %120 = vector.shape_cast %119 : vector<1x1x128x128xbf16> to vector<128x128xbf16>
    %cst_108 = arith.constant dense<0.000000e+00> : vector<224x128xf32>
    %121 = tpu.matmul %118, %120, %cst_108 {dimension_numbers = #tpu.dot_dimension_numbers<[1], [0], [0], [1], [0, 0, 1, 1], [], []>} : vector<224x128xbf16>, vector<128x128xbf16>, vector<224x128xf32> -> vector<224x128xf32>
    %122 = arith.addf %117, %121 : vector<224x128xf32>
    %c48 = arith.constant 48 : index
    %c0_109 = arith.constant 0 : index
    %123 = vector.load %arg8[%c48, %c0_109] : memref<288x128xbf16, #tpu.memory_space<vmem>>, vector<224x128xbf16>
    %c0_110 = arith.constant 0 : index
    %c7_111 = arith.constant 7 : index
    %c0_112 = arith.constant 0 : index
    %c0_113 = arith.constant 0 : index
    %124 = vector.load %arg4[%c0_110, %c7_111, %c0_112, %c0_113] : memref<2x9x128x128xbf16, #tpu.memory_space<vmem>>, vector<1x1x128x128xbf16>
    %125 = vector.shape_cast %124 : vector<1x1x128x128xbf16> to vector<128x128xbf16>
    %cst_114 = arith.constant dense<0.000000e+00> : vector<224x128xf32>
    %126 = tpu.matmul %123, %125, %cst_114 {dimension_numbers = #tpu.dot_dimension_numbers<[1], [0], [0], [1], [0, 0, 1, 1], [], []>} : vector<224x128xbf16>, vector<128x128xbf16>, vector<224x128xf32> -> vector<224x128xf32>
    %127 = arith.addf %122, %126 : vector<224x128xf32>
    %c49 = arith.constant 49 : index
    %c0_115 = arith.constant 0 : index
    %128 = vector.load %arg8[%c49, %c0_115] : memref<288x128xbf16, #tpu.memory_space<vmem>>, vector<224x128xbf16>
    %c0_116 = arith.constant 0 : index
    %c8_117 = arith.constant 8 : index
    %c0_118 = arith.constant 0 : index
    %c0_119 = arith.constant 0 : index
    %129 = vector.load %arg4[%c0_116, %c8_117, %c0_118, %c0_119] : memref<2x9x128x128xbf16, #tpu.memory_space<vmem>>, vector<1x1x128x128xbf16>
    %130 = vector.shape_cast %129 : vector<1x1x128x128xbf16> to vector<128x128xbf16>
    %cst_120 = arith.constant dense<0.000000e+00> : vector<224x128xf32>
    %131 = tpu.matmul %128, %130, %cst_120 {dimension_numbers = #tpu.dot_dimension_numbers<[1], [0], [0], [1], [0, 0, 1, 1], [], []>} : vector<224x128xbf16>, vector<128x128xbf16>, vector<224x128xf32> -> vector<224x128xf32>
    %132 = arith.addf %127, %131 : vector<224x128xf32>
    %c0_121 = arith.constant 0 : index
    %c0_122 = arith.constant 0 : index
    %c0_123 = arith.constant 0 : index
    %133 = vector.load %arg5[%c0_121, %c0_122, %c0_123] : memref<2x1x128xf32, #tpu.memory_space<vmem>>, vector<1x1x128xf32>
    %134 = vector.shape_cast %133 : vector<1x1x128xf32> to vector<1x128xf32>
    %135 = vector.broadcast %134 : vector<1x128xf32> to vector<224x128xf32>
    %136 = arith.addf %132, %135 : vector<224x128xf32>
    %cst_124 = arith.constant 0.000000e+00 : f32
    %137 = vector.broadcast %cst_124 : f32 to vector<224x128xf32>
    %138 = arith.maximumf %136, %137 : vector<224x128xf32>
    %c0_125 = arith.constant 0 : index
    %c0_126 = arith.constant 0 : index
    %139 = vector.load %arg9[%c0_125, %c0_126] : memref<224x256xf32, #tpu.memory_space<vmem>>, vector<224x128xf32>
    tpu.vector_store %arg9[%c0_125, %c0_126], %138 {strides = array<i32>} : memref<224x256xf32, #tpu.memory_space<vmem>>, vector<224x128xf32>,
    %cst_127 = arith.constant 0.000000e+00 : f32
    %140 = vector.broadcast %cst_127 : f32 to vector<224x128xf32>
    %c15_128 = arith.constant 15 : index
    %c0_129 = arith.constant 0 : index
    %141 = vector.load %arg8[%c15_128, %c0_129] : memref<288x128xbf16, #tpu.memory_space<vmem>>, vector<224x128xbf16>
    %c1_130 = arith.constant 1 : index
    %c0_131 = arith.constant 0 : index
    %c0_132 = arith.constant 0 : index
    %c0_133 = arith.constant 0 : index
    %142 = vector.load %arg4[%c1_130, %c0_131, %c0_132, %c0_133] : memref<2x9x128x128xbf16, #tpu.memory_space<vmem>>, vector<1x1x128x128xbf16>
    %143 = vector.shape_cast %142 : vector<1x1x128x128xbf16> to vector<128x128xbf16>
    %cst_134 = arith.constant dense<0.000000e+00> : vector<224x128xf32>
    %144 = tpu.matmul %141, %143, %cst_134 {dimension_numbers = #tpu.dot_dimension_numbers<[1], [0], [0], [1], [0, 0, 1, 1], [], []>} : vector<224x128xbf16>, vector<128x128xbf16>, vector<224x128xf32> -> vector<224x128xf32>
    %145 = arith.addf %140, %144 : vector<224x128xf32>
    %c16_135 = arith.constant 16 : index
    %c0_136 = arith.constant 0 : index
    %146 = vector.load %arg8[%c16_135, %c0_136] : memref<288x128xbf16, #tpu.memory_space<vmem>>, vector<224x128xbf16>
    %c1_137 = arith.constant 1 : index
    %c1_138 = arith.constant 1 : index
    %c0_139 = arith.constant 0 : index
    %c0_140 = arith.constant 0 : index
    %147 = vector.load %arg4[%c1_137, %c1_138, %c0_139, %c0_140] : memref<2x9x128x128xbf16, #tpu.memory_space<vmem>>, vector<1x1x128x128xbf16>
    %148 = vector.shape_cast %147 : vector<1x1x128x128xbf16> to vector<128x128xbf16>
    %cst_141 = arith.constant dense<0.000000e+00> : vector<224x128xf32>
    %149 = tpu.matmul %146, %148, %cst_141 {dimension_numbers = #tpu.dot_dimension_numbers<[1], [0], [0], [1], [0, 0, 1, 1], [], []>} : vector<224x128xbf16>, vector<128x128xbf16>, vector<224x128xf32> -> vector<224x128xf32>
    %150 = arith.addf %145, %149 : vector<224x128xf32>
    %c17_142 = arith.constant 17 : index
    %c0_143 = arith.constant 0 : index
    %151 = vector.load %arg8[%c17_142, %c0_143] : memref<288x128xbf16, #tpu.memory_space<vmem>>, vector<224x128xbf16>
    %c1_144 = arith.constant 1 : index
    %c2_145 = arith.constant 2 : index
    %c0_146 = arith.constant 0 : index
    %c0_147 = arith.constant 0 : index
    %152 = vector.load %arg4[%c1_144, %c2_145, %c0_146, %c0_147] : memref<2x9x128x128xbf16, #tpu.memory_space<vmem>>, vector<1x1x128x128xbf16>
    %153 = vector.shape_cast %152 : vector<1x1x128x128xbf16> to vector<128x128xbf16>
    %cst_148 = arith.constant dense<0.000000e+00> : vector<224x128xf32>
    %154 = tpu.matmul %151, %153, %cst_148 {dimension_numbers = #tpu.dot_dimension_numbers<[1], [0], [0], [1], [0, 0, 1, 1], [], []>} : vector<224x128xbf16>, vector<128x128xbf16>, vector<224x128xf32> -> vector<224x128xf32>
    %155 = arith.addf %150, %154 : vector<224x128xf32>
    %c31_149 = arith.constant 31 : index
    %c0_150 = arith.constant 0 : index
    %156 = vector.load %arg8[%c31_149, %c0_150] : memref<288x128xbf16, #tpu.memory_space<vmem>>, vector<224x128xbf16>
    %c1_151 = arith.constant 1 : index
    %c3_152 = arith.constant 3 : index
    %c0_153 = arith.constant 0 : index
    %c0_154 = arith.constant 0 : index
    %157 = vector.load %arg4[%c1_151, %c3_152, %c0_153, %c0_154] : memref<2x9x128x128xbf16, #tpu.memory_space<vmem>>, vector<1x1x128x128xbf16>
    %158 = vector.shape_cast %157 : vector<1x1x128x128xbf16> to vector<128x128xbf16>
    %cst_155 = arith.constant dense<0.000000e+00> : vector<224x128xf32>
    %159 = tpu.matmul %156, %158, %cst_155 {dimension_numbers = #tpu.dot_dimension_numbers<[1], [0], [0], [1], [0, 0, 1, 1], [], []>} : vector<224x128xbf16>, vector<128x128xbf16>, vector<224x128xf32> -> vector<224x128xf32>
    %160 = arith.addf %155, %159 : vector<224x128xf32>
    %c32_156 = arith.constant 32 : index
    %c0_157 = arith.constant 0 : index
    %161 = vector.load %arg8[%c32_156, %c0_157] : memref<288x128xbf16, #tpu.memory_space<vmem>>, vector<224x128xbf16>
    %c1_158 = arith.constant 1 : index
    %c4_159 = arith.constant 4 : index
    %c0_160 = arith.constant 0 : index
    %c0_161 = arith.constant 0 : index
    %162 = vector.load %arg4[%c1_158, %c4_159, %c0_160, %c0_161] : memref<2x9x128x128xbf16, #tpu.memory_space<vmem>>, vector<1x1x128x128xbf16>
    %163 = vector.shape_cast %162 : vector<1x1x128x128xbf16> to vector<128x128xbf16>
    %cst_162 = arith.constant dense<0.000000e+00> : vector<224x128xf32>
    %164 = tpu.matmul %161, %163, %cst_162 {dimension_numbers = #tpu.dot_dimension_numbers<[1], [0], [0], [1], [0, 0, 1, 1], [], []>} : vector<224x128xbf16>, vector<128x128xbf16>, vector<224x128xf32> -> vector<224x128xf32>
    %165 = arith.addf %160, %164 : vector<224x128xf32>
    %c33_163 = arith.constant 33 : index
    %c0_164 = arith.constant 0 : index
    %166 = vector.load %arg8[%c33_163, %c0_164] : memref<288x128xbf16, #tpu.memory_space<vmem>>, vector<224x128xbf16>
    %c1_165 = arith.constant 1 : index
    %c5_166 = arith.constant 5 : index
    %c0_167 = arith.constant 0 : index
    %c0_168 = arith.constant 0 : index
    %167 = vector.load %arg4[%c1_165, %c5_166, %c0_167, %c0_168] : memref<2x9x128x128xbf16, #tpu.memory_space<vmem>>, vector<1x1x128x128xbf16>
    %168 = vector.shape_cast %167 : vector<1x1x128x128xbf16> to vector<128x128xbf16>
    %cst_169 = arith.constant dense<0.000000e+00> : vector<224x128xf32>
    %169 = tpu.matmul %166, %168, %cst_169 {dimension_numbers = #tpu.dot_dimension_numbers<[1], [0], [0], [1], [0, 0, 1, 1], [], []>} : vector<224x128xbf16>, vector<128x128xbf16>, vector<224x128xf32> -> vector<224x128xf32>
    %170 = arith.addf %165, %169 : vector<224x128xf32>
    %c47_170 = arith.constant 47 : index
    %c0_171 = arith.constant 0 : index
    %171 = vector.load %arg8[%c47_170, %c0_171] : memref<288x128xbf16, #tpu.memory_space<vmem>>, vector<224x128xbf16>
    %c1_172 = arith.constant 1 : index
    %c6_173 = arith.constant 6 : index
    %c0_174 = arith.constant 0 : index
    %c0_175 = arith.constant 0 : index
    %172 = vector.load %arg4[%c1_172, %c6_173, %c0_174, %c0_175] : memref<2x9x128x128xbf16, #tpu.memory_space<vmem>>, vector<1x1x128x128xbf16>
    %173 = vector.shape_cast %172 : vector<1x1x128x128xbf16> to vector<128x128xbf16>
    %cst_176 = arith.constant dense<0.000000e+00> : vector<224x128xf32>
    %174 = tpu.matmul %171, %173, %cst_176 {dimension_numbers = #tpu.dot_dimension_numbers<[1], [0], [0], [1], [0, 0, 1, 1], [], []>} : vector<224x128xbf16>, vector<128x128xbf16>, vector<224x128xf32> -> vector<224x128xf32>
    %175 = arith.addf %170, %174 : vector<224x128xf32>
    %c48_177 = arith.constant 48 : index
    %c0_178 = arith.constant 0 : index
    %176 = vector.load %arg8[%c48_177, %c0_178] : memref<288x128xbf16, #tpu.memory_space<vmem>>, vector<224x128xbf16>
    %c1_179 = arith.constant 1 : index
    %c7_180 = arith.constant 7 : index
    %c0_181 = arith.constant 0 : index
    %c0_182 = arith.constant 0 : index
    %177 = vector.load %arg4[%c1_179, %c7_180, %c0_181, %c0_182] : memref<2x9x128x128xbf16, #tpu.memory_space<vmem>>, vector<1x1x128x128xbf16>
    %178 = vector.shape_cast %177 : vector<1x1x128x128xbf16> to vector<128x128xbf16>
    %cst_183 = arith.constant dense<0.000000e+00> : vector<224x128xf32>
    %179 = tpu.matmul %176, %178, %cst_183 {dimension_numbers = #tpu.dot_dimension_numbers<[1], [0], [0], [1], [0, 0, 1, 1], [], []>} : vector<224x128xbf16>, vector<128x128xbf16>, vector<224x128xf32> -> vector<224x128xf32>
    %180 = arith.addf %175, %179 : vector<224x128xf32>
    %c49_184 = arith.constant 49 : index
    %c0_185 = arith.constant 0 : index
    %181 = vector.load %arg8[%c49_184, %c0_185] : memref<288x128xbf16, #tpu.memory_space<vmem>>, vector<224x128xbf16>
    %c1_186 = arith.constant 1 : index
    %c8_187 = arith.constant 8 : index
    %c0_188 = arith.constant 0 : index
    %c0_189 = arith.constant 0 : index
    %182 = vector.load %arg4[%c1_186, %c8_187, %c0_188, %c0_189] : memref<2x9x128x128xbf16, #tpu.memory_space<vmem>>, vector<1x1x128x128xbf16>
    %183 = vector.shape_cast %182 : vector<1x1x128x128xbf16> to vector<128x128xbf16>
    %cst_190 = arith.constant dense<0.000000e+00> : vector<224x128xf32>
    %184 = tpu.matmul %181, %183, %cst_190 {dimension_numbers = #tpu.dot_dimension_numbers<[1], [0], [0], [1], [0, 0, 1, 1], [], []>} : vector<224x128xbf16>, vector<128x128xbf16>, vector<224x128xf32> -> vector<224x128xf32>
    %185 = arith.addf %180, %184 : vector<224x128xf32>
    %c1_191 = arith.constant 1 : index
    %c0_192 = arith.constant 0 : index
    %c0_193 = arith.constant 0 : index
    %186 = vector.load %arg5[%c1_191, %c0_192, %c0_193] : memref<2x1x128xf32, #tpu.memory_space<vmem>>, vector<1x1x128xf32>
    %187 = vector.shape_cast %186 : vector<1x1x128xf32> to vector<1x128xf32>
    %188 = vector.broadcast %187 : vector<1x128xf32> to vector<224x128xf32>
    %189 = arith.addf %185, %188 : vector<224x128xf32>
    %cst_194 = arith.constant 0.000000e+00 : f32
    %190 = vector.broadcast %cst_194 : f32 to vector<224x128xf32>
    %191 = arith.maximumf %189, %190 : vector<224x128xf32>
    %c0_195 = arith.constant 0 : index
    %c128 = arith.constant 128 : index
    %192 = vector.load %arg9[%c0_195, %c128] : memref<224x256xf32, #tpu.memory_space<vmem>>, vector<224x128xf32>
    tpu.vector_store %arg9[%c0_195, %c128], %191 {strides = array<i32>} : memref<224x256xf32, #tpu.memory_space<vmem>>, vector<224x128xf32>,
    %c0_196 = arith.constant 0 : index
    %c0_197 = arith.constant 0 : index
    %193 = vector.load %arg9[%c0_196, %c0_197] : memref<224x256xf32, #tpu.memory_space<vmem>>, vector<207x256xf32>
    %c1_198 = arith.constant 1 : index
    %c0_199 = arith.constant 0 : index
    %194 = vector.load %arg9[%c1_198, %c0_199] : memref<224x256xf32, #tpu.memory_space<vmem>>, vector<207x256xf32>
    %195 = arith.maximumf %193, %194 : vector<207x256xf32>
    %c16_200 = arith.constant 16 : index
    %c0_201 = arith.constant 0 : index
    %196 = vector.load %arg9[%c16_200, %c0_201] : memref<224x256xf32, #tpu.memory_space<vmem>>, vector<207x256xf32>
    %c17_202 = arith.constant 17 : index
    %c0_203 = arith.constant 0 : index
    %197 = vector.load %arg9[%c17_202, %c0_203] : memref<224x256xf32, #tpu.memory_space<vmem>>, vector<207x256xf32>
    %198 = arith.maximumf %196, %197 : vector<207x256xf32>
    %199 = arith.maximumf %195, %198 : vector<207x256xf32>
    %c0_204 = arith.constant 0 : index
    %c0_205 = arith.constant 0 : index
    %200 = vector.load %arg6[%c0_204, %c0_205] : memref<49x207xf32, #tpu.memory_space<vmem>>, vector<49x207xf32>
    %cst_206 = arith.constant dense<0.000000e+00> : vector<49x256xf32>
    %201 = tpu.matmul %200, %199, %cst_206 {dimension_numbers = #tpu.dot_dimension_numbers<[1], [0], [0], [1], [0, 0, 1, 1], [], []>} : vector<49x207xf32>, vector<207x256xf32>, vector<49x256xf32> -> vector<49x256xf32>
    %c0_207 = arith.constant 0 : index
    %c0_208 = arith.constant 0 : index
    %c0_209 = arith.constant 0 : index
    %202 = vector.load %arg7[%c0_207, %c0_208, %c0_209] : memref<1x49x256xf32, #tpu.memory_space<vmem>>, vector<1x49x256xf32>
    %203 = vector.shape_cast %202 : vector<1x49x256xf32> to vector<49x256xf32>
    %204 = vector.shape_cast %201 : vector<49x256xf32> to vector<1x49x256xf32>
    tpu.vector_store %arg7[%c0_207, %c0_208, %c0_209], %204 {strides = array<i32>} : memref<1x49x256xf32, #tpu.memory_space<vmem>>, vector<1x49x256xf32>,
    return
  }
  func.func @transform_0(%arg0: i32) -> (i32, i32, i32) {
    %c0_i32 = arith.constant 0 : i32
    %c0_i32_0 = arith.constant 0 : i32
    %c0_i32_1 = arith.constant 0 : i32
    return %arg0, %c0_i32, %c0_i32_0 : i32, i32, i32
  }
  func.func @transform_1(%arg0: i32) -> (i32, i32, i32) {
    %c0_i32 = arith.constant 0 : i32
    %c0_i32_0 = arith.constant 0 : i32
    %c0_i32_1 = arith.constant 0 : i32
    %c0_i32_2 = arith.constant 0 : i32
    return %c0_i32, %c0_i32_0, %c0_i32_1 : i32, i32, i32
  }
  func.func @transform_2(%arg0: i32) -> (i32, i32) {
    %c0_i32 = arith.constant 0 : i32
    %c0_i32_0 = arith.constant 0 : i32
    %c0_i32_1 = arith.constant 0 : i32
    return %c0_i32, %c0_i32_0 : i32, i32
  }
  func.func @transform_3(%arg0: i32) -> (i32, i32, i32, i32) {
    %c0_i32 = arith.constant 0 : i32
    %c0_i32_0 = arith.constant 0 : i32
    %c0_i32_1 = arith.constant 0 : i32
    %c0_i32_2 = arith.constant 0 : i32
    %c0_i32_3 = arith.constant 0 : i32
    return %c0_i32, %c0_i32_0, %c0_i32_1, %c0_i32_2 : i32, i32, i32, i32
  }
  func.func @transform_4(%arg0: i32) -> (i32, i32, i32) {
    %c0_i32 = arith.constant 0 : i32
    %c0_i32_0 = arith.constant 0 : i32
    %c0_i32_1 = arith.constant 0 : i32
    %c0_i32_2 = arith.constant 0 : i32
    return %c0_i32, %c0_i32_0, %c0_i32_1 : i32, i32, i32
  }
  func.func @transform_5(%arg0: i32) -> (i32, i32) {
    %c0_i32 = arith.constant 0 : i32
    %c0_i32_0 = arith.constant 0 : i32
    %c0_i32_1 = arith.constant 0 : i32
    return %c0_i32, %c0_i32_0 : i32, i32
  }
  func.func @transform_6(%arg0: i32) -> (i32, i32, i32) {
    %c0_i32 = arith.constant 0 : i32
    %c0_i32_0 = arith.constant 0 : i32
    %c0_i32_1 = arith.constant 0 : i32
    return %arg0, %c0_i32, %c0_i32_0 : i32, i32, i32
  }
}

</mosaic_0001>

<llo_original>
// kernel: mod_four_forward.1
$region0: #{mod_four_forward.1}
  #allocation0 [shape = 'u32[]', space=smem, size = 0x4, offset = 0x4, fixed_abs, tag = 'smem constant byte address 0x4 - core index']
  #allocation1 [shape = 'u32[144,128]{1,0:T(1,128)}', space=vmem, size = 0x12000, scoped, tag = 'internal scratch']
  #allocation2 [shape = 'bf16[288,128]{1,0:T(16,128)(2,1)}', space=vmem, size = 0x12000, scoped, tag = 'scratch operand']
  #allocation3 [shape = 'f32[224,256]{1,0:T(8,128)}', space=vmem, size = 0x38000, scoped, tag = 'scratch operand']
  %s0 = inlined_call_operand.vmem [shape: bf16[2,272,128], index: 0, kind: input, shape index: {}]
  %s1 = inlined_call_operand.vmem [shape: bf16[9,128,128], index: 1, kind: input, shape index: {}]
  %s2 = inlined_call_operand.vmem [shape: f32[1,128], index: 2, kind: input, shape index: {}]
  %s3 = inlined_call_operand.vmem [shape: bf16[2,9,128,128], index: 3, kind: input, shape index: {}]
  %s4 = inlined_call_operand.vmem [shape: f32[2,1,128], index: 4, kind: input, shape index: {}]
  %s5 = inlined_call_operand.vmem [shape: f32[49,207], index: 5, kind: input, shape index: {}]
  %s6 = inlined_call_operand.vmem [shape: f32[2,49,256], index: 6, kind: output, shape index: {}]
  %s7 = sld [smem:[#allocation0]]
  $region57: #{mod_four_forward.1} parent=0
    _
  %s9 = ssub.s32 1, %s7
  %s10 = scalar_select 0, %s9, %s7
  loop: start=0, step=1, limit=4
  $region2: #{mod_four_forward.1} parent=0 // loop_pre_header
    _
  $region3: #{mod_four_forward.1} parent=0 // loop_header
    %s12 = sphi 0, %s16
    %p13 = scmp.ge.s32.totalorder %s12, 4
    %s22 = sphi 0, %s24
    %s25 = sphi 0, %s22
    %s26 = sphi 0, %s25
    %s42 = sphi 0, %s26
    %s46 = sphi 0, %s46
    %s48 = sphi 0, %s46
    %s49 = sphi 0, %s48
    %s63 = sphi 0, %s49
    %s67 = sphi 0, %s67
    %s69 = sphi 0, %s67
    %s70 = sphi 0, %s69
    %s84 = sphi 0, %s70
    %s88 = sphi 0, %s88
    %s90 = sphi 0, %s88
    %s91 = sphi 0, %s90
    %s105 = sphi 0, %s91
    %s109 = sphi 0, %s109
    %s111 = sphi 0, %s109
    %s112 = sphi 0, %s111
    %s126 = sphi 0, %s112
    %s130 = sphi 0, %s130
    %s132 = sphi 0, %s130
    %s133 = sphi 0, %s132
    %s147 = sphi 0, %s133
    %s153 = sphi 0, %s155
    %s156 = sphi 0, %s153
    %s157 = sphi 0, %s156
    %s173 = sphi 0, %s157
  $region4: #{mod_four_forward.1} parent=0 // loop_header_branch
    %15 = sbr.rel (%p13) target = $region8
  $region5: #{mod_four_forward.1} parent=0 // loop_body
    %s17 = ssub.s32 %s12, 1
    %s18 = ssub.s32 %s12, 2
    %s19 = sadd.s32 %s12, 1
    %s20 = ssub.s32 %s12, %s19
    %p21 = scmp.eq.s32.totalorder %s20, 0
    %s23 = sadd.s32 %s22, 1
    %s24 = scalar_select %p21, %s22, %s23
    %p27 = pneg %p21
    %p28 = scmp.eq.s32.totalorder %s12, 1
    %p29 = por %p27, %p28
    %p30 = scmp.ne.s32.totalorder %s22, %s25
    %p31 = scmp.eq.s32.totalorder %s12, 0
    %p32 = por %p30, %p31
    %p33 = scmp.ne.s32.totalorder %s22, %s25
    %p34 = scmp.eq.s32.totalorder %s17, 1
    %p35 = por %p33, %p34
    %p36 = scmp.ne.s32.totalorder %s25, %s26
    %p37 = scmp.eq.s32.totalorder %s17, 0
    %p38 = por %p36, %p37
    %p39 = scmp.ne.s32.totalorder %s25, %s26
    %p40 = scmp.eq.s32.totalorder %s18, 1
    %p41 = por %p39, %p40
    %p43 = scmp.ne.s32.totalorder %s26, %s42
    %p44 = scmp.eq.s32.totalorder %s18, 0
    %p45 = por %p43, %p44
    %s47 = sadd.s32 %s46, 1
    %p50 = scmp.eq.s32.totalorder %s12, 1
    %p51 = scmp.ne.s32.totalorder %s46, %s48
    %p52 = scmp.eq.s32.totalorder %s12, 0
    %p53 = por %p51, %p52
    %p54 = scmp.ne.s32.totalorder %s46, %s48
    %p55 = scmp.eq.s32.totalorder %s17, 1
    %p56 = por %p54, %p55
    %p57 = scmp.ne.s32.totalorder %s48, %s49
    %p58 = scmp.eq.s32.totalorder %s17, 0
    %p59 = por %p57, %p58
    %p60 = scmp.ne.s32.totalorder %s48, %s49
    %p61 = scmp.eq.s32.totalorder %s18, 1
    %p62 = por %p60, %p61
    %p64 = scmp.ne.s32.totalorder %s49, %s63
    %p65 = scmp.eq.s32.totalorder %s18, 0
    %p66 = por %p64, %p65
    %s68 = sadd.s32 %s67, 1
    %p71 = scmp.eq.s32.totalorder %s12, 1
    %p72 = scmp.ne.s32.totalorder %s67, %s69
    %p73 = scmp.eq.s32.totalorder %s12, 0
    %p74 = por %p72, %p73
    %p75 = scmp.ne.s32.totalorder %s67, %s69
    %p76 = scmp.eq.s32.totalorder %s17, 1
    %p77 = por %p75, %p76
    %p78 = scmp.ne.s32.totalorder %s69, %s70
    %p79 = scmp.eq.s32.totalorder %s17, 0
    %p80 = por %p78, %p79
    %p81 = scmp.ne.s32.totalorder %s69, %s70
    %p82 = scmp.eq.s32.totalorder %s18, 1
    %p83 = por %p81, %p82
    %p85 = scmp.ne.s32.totalorder %s70, %s84
    %p86 = scmp.eq.s32.totalorder %s18, 0
    %p87 = por %p85, %p86
    %s89 = sadd.s32 %s88, 1
    %p92 = scmp.eq.s32.totalorder %s12, 1
    %p93 = scmp.ne.s32.totalorder %s88, %s90
    %p94 = scmp.eq.s32.totalorder %s12, 0
    %p95 = por %p93, %p94
    %p96 = scmp.ne.s32.totalorder %s88, %s90
    %p97 = scmp.eq.s32.totalorder %s17, 1
    %p98 = por %p96, %p97
    %p99 = scmp.ne.s32.totalorder %s90, %s91
    %p100 = scmp.eq.s32.totalorder %s17, 0
    %p101 = por %p99, %p100
    %p102 = scmp.ne.s32.totalorder %s90, %s91
    %p103 = scmp.eq.s32.totalorder %s18, 1
    %p104 = por %p102, %p103
    %p106 = scmp.ne.s32.totalorder %s91, %s105
    %p107 = scmp.eq.s32.totalorder %s18, 0
    %p108 = por %p106, %p107
    %s110 = sadd.s32 %s109, 1
    %p113 = scmp.eq.s32.totalorder %s12, 1
    %p114 = scmp.ne.s32.totalorder %s109, %s111
    %p115 = scmp.eq.s32.totalorder %s12, 0
    %p116 = por %p114, %p115
    %p117 = scmp.ne.s32.totalorder %s109, %s111
    %p118 = scmp.eq.s32.totalorder %s17, 1
    %p119 = por %p117, %p118
    %p120 = scmp.ne.s32.totalorder %s111, %s112
    %p121 = scmp.eq.s32.totalorder %s17, 0
    %p122 = por %p120, %p121
    %p123 = scmp.ne.s32.totalorder %s111, %s112
    %p124 = scmp.eq.s32.totalorder %s18, 1
    %p125 = por %p123, %p124
    %p127 = scmp.ne.s32.totalorder %s112, %s126
    %p128 = scmp.eq.s32.totalorder %s18, 0
    %p129 = por %p127, %p128
    %s131 = sadd.s32 %s130, 1
    %p134 = scmp.eq.s32.totalorder %s12, 1
    %p135 = scmp.ne.s32.totalorder %s130, %s132
    %p136 = scmp.eq.s32.totalorder %s12, 0
    %p137 = por %p135, %p136
    %p138 = scmp.ne.s32.totalorder %s130, %s132
    %p139 = scmp.eq.s32.totalorder %s17, 1
    %p140 = por %p138, %p139
    %p141 = scmp.ne.s32.totalorder %s132, %s133
    %p142 = scmp.eq.s32.totalorder %s17, 0
    %p143 = por %p141, %p142
    %p144 = scmp.ne.s32.totalorder %s132, %s133
    %p145 = scmp.eq.s32.totalorder %s18, 1
    %p146 = por %p144, %p145
    %p148 = scmp.ne.s32.totalorder %s133, %s147
    %p149 = scmp.eq.s32.totalorder %s18, 0
    %p150 = por %p148, %p149
    %s151 = ssub.s32 %s12, %s19
    %p152 = scmp.eq.s32.totalorder %s151, 0
    %s154 = sadd.s32 %s153, 1
    %s155 = scalar_select %p152, %s153, %s154
    %p158 = pneg %p152
    %p159 = scmp.eq.s32.totalorder %s12, 1
    %p160 = por %p158, %p159
    %p161 = scmp.ne.s32.totalorder %s153, %s156
    %p162 = scmp.eq.s32.totalorder %s12, 0
    %p163 = por %p161, %p162
    %p164 = scmp.ne.s32.totalorder %s153, %s156
    %p165 = scmp.eq.s32.totalorder %s17, 1
    %p166 = por %p164, %p165
    %p167 = scmp.ne.s32.totalorder %s156, %s157
    %p168 = scmp.eq.s32.totalorder %s17, 0
    %p169 = por %p167, %p168
    %p170 = scmp.ne.s32.totalorder %s156, %s157
    %p171 = scmp.eq.s32.totalorder %s18, 1
    %p172 = por %p170, %p171
    %p174 = scmp.ne.s32.totalorder %s157, %s173
    %p175 = scmp.eq.s32.totalorder %s18, 0
    %p176 = por %p174, %p175
    %p177 = scmp.le.s32.totalorder 1, %s12
    %p178 = scmp.lt.s32.totalorder %s12, 3
    %p179 = pnand %p177, %p178
    %p180 = pneg %p179
    // Predicated region
    $region9: #{mod_four_forward.1} parent=5 // pred_check
      _
    $region10: #{mod_four_forward.1} parent=5 // pred_check_branch
      %182 = sbr.rel (%p179) target = $region12
    $region11: #{mod_four_forward.1} parent=5 // pred_region
      %s183 = ssub.s32 %s12, 1
      // Predicated region
      $region13: #{mod_four_forward.1} parent=11 // pred_check
        %p184 = pneg %p59
      $region14: #{mod_four_forward.1} parent=11 // pred_check_branch
        %186 = sbr.rel (%p184) target = $region16
      $region15: #{mod_four_forward.1} parent=11 // pred_region
        _
      $region16: #{mod_four_forward.1} parent=11 // pred_fallthru
        _
      // Predicated region
      $region17: #{mod_four_forward.1} parent=11 // pred_check
        %p187 = pneg %p80
      $region18: #{mod_four_forward.1} parent=11 // pred_check_branch
        %189 = sbr.rel (%p187) target = $region20
      $region19: #{mod_four_forward.1} parent=11 // pred_region
        _
      $region20: #{mod_four_forward.1} parent=11 // pred_fallthru
        _
      // Predicated region
      $region21: #{mod_four_forward.1} parent=11 // pred_check
        %p190 = pneg %p101
      $region22: #{mod_four_forward.1} parent=11 // pred_check_branch
        %192 = sbr.rel (%p190) target = $region24
      $region23: #{mod_four_forward.1} parent=11 // pred_region
        _
      $region24: #{mod_four_forward.1} parent=11 // pred_fallthru
        _
      // Predicated region
      $region25: #{mod_four_forward.1} parent=11 // pred_check
        %p193 = pneg %p122
      $region26: #{mod_four_forward.1} parent=11 // pred_check_branch
        %195 = sbr.rel (%p193) target = $region28
      $region27: #{mod_four_forward.1} parent=11 // pred_region
        _
      $region28: #{mod_four_forward.1} parent=11 // pred_fallthru
        _
      // Predicated region
      $region29: #{mod_four_forward.1} parent=11 // pred_check
        %p196 = pneg %p143
      $region30: #{mod_four_forward.1} parent=11 // pred_check_branch
        %198 = sbr.rel (%p196) target = $region32
      $region31: #{mod_four_forward.1} parent=11 // pred_region
        _
      $region32: #{mod_four_forward.1} parent=11 // pred_fallthru
        _
    $region12: #{mod_four_forward.1} parent=5 // pred_fallthru
      _
    %p199 = scmp.lt.s32.totalorder %s12, 2
    // Predicated region
    $region33: #{mod_four_forward.1} parent=5 // pred_check
      %p200 = pneg %p199
    $region34: #{mod_four_forward.1} parent=5 // pred_check_branch
      %202 = sbr.rel (%p200) target = $region36
    $region35: #{mod_four_forward.1} parent=5 // pred_region
      // Predicated region
      $region37: #{mod_four_forward.1} parent=35 // pred_check
        %p203 = pneg %p32
      $region38: #{mod_four_forward.1} parent=35 // pred_check_branch
        %205 = sbr.rel (%p203) target = $region40
      $region39: #{mod_four_forward.1} parent=35 // pred_region
        %p206 = scmp.lt.s32.totalorder %s12, 1
        %s207 = scalar_select %p206, %s12, 1
        %s208 = smul.addr %s207, 34
        %s209 = smul.addr %s208, 4
        %s210 = scalar_lea.vmem %s0, %s209
      $region40: #{mod_four_forward.1} parent=35 // pred_fallthru
        _
    $region36: #{mod_four_forward.1} parent=5 // pred_fallthru
      _
    %p211 = scmp.le.s32.totalorder 1, %s12
    %p212 = scmp.lt.s32.totalorder %s12, 3
    %p213 = pnand %p211, %p212
    %p214 = pneg %p213
    // Predicated region
    $region41: #{mod_four_forward.1} parent=5 // pred_check
      _
    $region42: #{mod_four_forward.1} parent=5 // pred_check_branch
      %216 = sbr.rel (%p213) target = $region44
    $region43: #{mod_four_forward.1} parent=5 // pred_region
      %s217 = ssub.s32 %s12, 1
      %p218 = scmp.lt.s32.totalorder %s17, 1
      %s219 = scalar_select %p218, %s17, 1
      %s220 = smul.addr %s219, 34
      %s221 = smul.addr %s220, 4
      %s222 = scalar_lea.vmem %s0, %s221
      %p223 = pneg %p38
      %p224 = pneg %p35
      %p225 = pneg %p59
      %p226 = pneg %p56
      %p227 = pneg %p80
      %p228 = pneg %p77
      %p229 = pneg %p101
      %p230 = pneg %p98
      %p231 = pneg %p122
      %p232 = pneg %p119
      %p233 = pneg %p143
      %p234 = pneg %p140
      %p235 = pneg %p169
      %p236 = pneg %p166
      %p237 = scmp.lt.s32.totalorder %s17, 1
      %s238 = scalar_select %p237, %s17, 1
      %s239 = smul.addr %s238, 14
      %s240 = smul.addr %s239, 8
      %s241 = scalar_lea.vmem %s6, %s240
      %p242 = scmp.lt.s32.totalorder %s17, 1
      %s243 = scalar_select %p242, %s17, 1
      %s244 = smul.addr %s243, 34
      %s245 = smul.addr %s244, 4
      %s246 = scalar_lea.vmem %s0, %s245
      %p247 = scmp.lt.s32.totalorder %s17, 1
      %s248 = scalar_select %p247, %s17, 1
      %s249 = smul.addr %s248, 14
      %s250 = smul.addr %s249, 8
      %s251 = scalar_lea.vmem %s6, %s250
      %v253 = vld [vmem:[%s246] sm:$0xf]
      %v254 = vld [vmem:[%s246 + $0x4] sm:$0xf]
      %v255 = vld [vmem:[%s246 + $0x8] sm:$0xf]
      %v256 = vld [vmem:[%s246 + $0xc] sm:$0xf]
      %v257 = vld [vmem:[%s246 + $0x10] sm:$0xf]
      %v258 = vld [vmem:[%s246 + $0x14] sm:$0xf]
      %v259 = vld [vmem:[%s246 + $0x18] sm:$0xf]
      %v260 = vld [vmem:[%s246 + $0x1c] sm:$0xf]
      %v261 = vld [vmem:[%s246 + $0x20] sm:$0xf]
      %v262 = vld [vmem:[%s246 + $0x24] sm:$0xf]
      %v263 = vld [vmem:[%s246 + $0x28] sm:$0xf]
      %v264 = vld [vmem:[%s246 + $0x2c] sm:$0xf]
      %v265 = vld [vmem:[%s246 + $0x30] sm:$0xf]
      %v266 = vld [vmem:[%s246 + $0x34] sm:$0xf]
      %v267 = vld [vmem:[%s246 + $0x38] sm:$0xf]
      %v268 = vld [vmem:[%s246 + $0x3c] sm:$0xf]
      %v269 = vld [vmem:[%s246 + $0x40] sm:$0xf]
      %v270 = vld [vmem:[%s246 + $0x44] sm:$0xf]
      %v271 = vld [vmem:[%s246 + $0x48] sm:$0xf]
      %v272 = vld [vmem:[%s246 + $0x4c] sm:$0xf]
      %v273 = vld [vmem:[%s246 + $0x50] sm:$0xf]
      %v274 = vld [vmem:[%s246 + $0x54] sm:$0xf]
      %v275 = vld [vmem:[%s246 + $0x58] sm:$0xf]
      %v276 = vld [vmem:[%s246 + $0x5c] sm:$0xf]
      %v277 = vld [vmem:[%s246 + $0x60] sm:$0xf]
      %v278 = vld [vmem:[%s246 + $0x64] sm:$0xf]
      %v279 = vld [vmem:[%s246 + $0x68] sm:$0xf]
      %v280 = vld [vmem:[%s246 + $0x6c] sm:$0xf]
      %v281 = vld [vmem:[%s1] sm:$0xf]
      %v282 = vld [vmem:[%s1 + $0x4] sm:$0xf]
      %v283 = vld [vmem:[%s1 + $0x8] sm:$0xf]
      %v284 = vld [vmem:[%s1 + $0xc] sm:$0xf]
      %v285 = vld [vmem:[%s1 + $0x10] sm:$0xf]
      %v286 = vld [vmem:[%s1 + $0x14] sm:$0xf]
      %v287 = vld [vmem:[%s1 + $0x18] sm:$0xf]
      %v288 = vld [vmem:[%s1 + $0x1c] sm:$0xf]
      %v289 = vld [vmem:[%s1 + $0x20] sm:$0xf]
      %v290 = vld [vmem:[%s1 + $0x24] sm:$0xf]
      %v291 = vld [vmem:[%s1 + $0x28] sm:$0xf]
      %v292 = vld [vmem:[%s1 + $0x2c] sm:$0xf]
      %v293 = vld [vmem:[%s1 + $0x30] sm:$0xf]
      %v294 = vld [vmem:[%s1 + $0x34] sm:$0xf]
      %v295 = vld [vmem:[%s1 + $0x38] sm:$0xf]
      %v296 = vld [vmem:[%s1 + $0x3c] sm:$0xf]
      %v297 = vld [vmem:[%s246 + $0x70] sm:$0x1]
      %s298 = scalar_lea.vmem %s1, 64
      %v299 = vld [vmem:[%s298] sm:$0xf]
      %v300 = vld [vmem:[%s298 + $0x4] sm:$0xf]
      %v301 = vld [vmem:[%s298 + $0x8] sm:$0xf]
      %v302 = vld [vmem:[%s298 + $0xc] sm:$0xf]
      %v303 = vld [vmem:[%s298 + $0x10] sm:$0xf]
      %v304 = vld [vmem:[%s298 + $0x14] sm:$0xf]
      %v305 = vld [vmem:[%s298 + $0x18] sm:$0xf]
      %v306 = vld [vmem:[%s298 + $0x1c] sm:$0xf]
      %v307 = vld [vmem:[%s298 + $0x20] sm:$0xf]
      %v308 = vld [vmem:[%s298 + $0x24] sm:$0xf]
      %v309 = vld [vmem:[%s298 + $0x28] sm:$0xf]
      %v310 = vld [vmem:[%s298 + $0x2c] sm:$0xf]
      %v311 = vld [vmem:[%s298 + $0x30] sm:$0xf]
      %v312 = vld [vmem:[%s298 + $0x34] sm:$0xf]
      %v313 = vld [vmem:[%s298 + $0x38] sm:$0xf]
      %v314 = vld [vmem:[%s298 + $0x3c] sm:$0xf]
      %v344 = vunpack.c.l.b16 %v253
      %v345 = vunpack.c.l.b16 %v254
      %v346 = vunpack.c.l.b16 %v255
      %v347 = vunpack.c.l.b16 %v256
      %v348 = vunpack.c.l.b16 %v257
      %v349 = vunpack.c.l.b16 %v258
      %v350 = vunpack.c.l.b16 %v259
      %v351 = vunpack.c.l.b16 %v260
      %v352 = vunpack.c.l.b16 %v261
      %v353 = vunpack.c.l.b16 %v262
      %v354 = vunpack.c.l.b16 %v263
      %v355 = vunpack.c.l.b16 %v264
      %v356 = vunpack.c.l.b16 %v265
      %v357 = vunpack.c.l.b16 %v266
      %v358 = vunpack.c.l.b16 %v267
      %v359 = vunpack.c.l.b16 %v268
      %v360 = vunpack.c.l.b16 %v269
      %v361 = vunpack.c.l.b16 %v270
      %v362 = vunpack.c.l.b16 %v271
      %v363 = vunpack.c.l.b16 %v272
      %v364 = vunpack.c.l.b16 %v273
      %v365 = vunpack.c.l.b16 %v274
      %v366 = vunpack.c.l.b16 %v275
      %v367 = vunpack.c.l.b16 %v276
      %v368 = vunpack.c.l.b16 %v277
      %v369 = vunpack.c.l.b16 %v278
      %v370 = vunpack.c.l.b16 %v279
      %v371 = vunpack.c.l.b16 %v280
      %v372 = vunpack.c.l.b16 %v297
      %v373 = vpack.c.b16 %v345, %v344
      %v374 = vpack.c.b16 %v347, %v346
      %v375 = vpack.c.b16 %v349, %v348
      %v376 = vpack.c.b16 %v351, %v350
      %v377 = vpack.c.b16 %v353, %v352
      %v378 = vpack.c.b16 %v355, %v354
      %v379 = vpack.c.b16 %v357, %v356
      %v380 = vpack.c.b16 %v359, %v358
      %v381 = vpack.c.b16 %v361, %v360
      %v382 = vpack.c.b16 %v363, %v362
      %v383 = vpack.c.b16 %v365, %v364
      %v384 = vpack.c.b16 %v367, %v366
      %v385 = vpack.c.b16 %v369, %v368
      %v386 = vpack.c.b16 %v371, %v370
      %v387 = vpack.c.b16 %v372, %v372
      %vm388 = vsmask.f32 7424
      %v390 = vshrl.u32 %v373, 16
      %v392 = vshll.u32 %v373, 16
      %v394 = vrot.slane %v392, 1
      %v395 = vor.u32 %v390, %v394
      %v397 = vshll.u32 %v374, 16
      %v399 = vrot.slane %v397, 1
      %v400 = vsel %vm388, %v395, %v399
      %v401 = vshrl.u32 %v374, 16
      %v403 = vor.u32 %v401, %v399
      %v405 = vshll.u32 %v375, 16
      %v407 = vrot.slane %v405, 1
      %v408 = vsel %vm388, %v403, %v407
      %v409 = vshrl.u32 %v375, 16
      %v411 = vor.u32 %v409, %v407
      %v413 = vshll.u32 %v376, 16
      %v415 = vrot.slane %v413, 1
      %v416 = vsel %vm388, %v411, %v415
      %v417 = vshrl.u32 %v376, 16
      %v419 = vor.u32 %v417, %v415
      %v421 = vshll.u32 %v377, 16
      %v423 = vrot.slane %v421, 1
      %v424 = vsel %vm388, %v419, %v423
      %v425 = vshrl.u32 %v377, 16
      %v427 = vor.u32 %v425, %v423
      %v429 = vshll.u32 %v378, 16
      %v431 = vrot.slane %v429, 1
      %v432 = vsel %vm388, %v427, %v431
      %v433 = vshrl.u32 %v378, 16
      %v435 = vor.u32 %v433, %v431
      %v437 = vshll.u32 %v379, 16
      %v439 = vrot.slane %v437, 1
      %v440 = vsel %vm388, %v435, %v439
      %v441 = vshrl.u32 %v379, 16
      %v443 = vor.u32 %v441, %v439
      %v445 = vshll.u32 %v380, 16
      %v447 = vrot.slane %v445, 1
      %v448 = vsel %vm388, %v443, %v447
      %v449 = vshrl.u32 %v380, 16
      %v451 = vor.u32 %v449, %v447
      %v453 = vshll.u32 %v381, 16
      %v455 = vrot.slane %v453, 1
      %v456 = vsel %vm388, %v451, %v455
      %v457 = vshrl.u32 %v381, 16
      %v459 = vor.u32 %v457, %v455
      %v461 = vshll.u32 %v382, 16
      %v463 = vrot.slane %v461, 1
      %v464 = vsel %vm388, %v459, %v463
      %v465 = vshrl.u32 %v382, 16
      %v467 = vor.u32 %v465, %v463
      %v469 = vshll.u32 %v383, 16
      %v471 = vrot.slane %v469, 1
      %v472 = vsel %vm388, %v467, %v471
      %v473 = vshrl.u32 %v383, 16
      %v475 = vor.u32 %v473, %v471
      %v477 = vshll.u32 %v384, 16
      %v479 = vrot.slane %v477, 1
      %v480 = vsel %vm388, %v475, %v479
      %v481 = vshrl.u32 %v384, 16
      %v483 = vor.u32 %v481, %v479
      %v485 = vshll.u32 %v385, 16
      %v487 = vrot.slane %v485, 1
      %v488 = vsel %vm388, %v483, %v487
      %v489 = vshrl.u32 %v385, 16
      %v491 = vor.u32 %v489, %v487
      %v493 = vshll.u32 %v386, 16
      %v495 = vrot.slane %v493, 1
      %v496 = vsel %vm388, %v491, %v495
      %v497 = vshrl.u32 %v386, 16
      %v499 = vor.u32 %v497, %v495
      %v501 = vshll.u32 %v387, 16
      %v503 = vrot.slane %v501, 1
      %v504 = vsel %vm388, %v499, %v503
      %v535 = vunpack.c.l.b16 %v299
      %v536 = vunpack.c.l.b16 %v300
      %v537 = vunpack.c.l.b16 %v301
      %v538 = vunpack.c.l.b16 %v302
      %v539 = vunpack.c.l.b16 %v303
      %v540 = vunpack.c.l.b16 %v304
      %v541 = vunpack.c.l.b16 %v305
      %v542 = vunpack.c.l.b16 %v306
      %v543 = vunpack.c.l.b16 %v307
      %v544 = vunpack.c.l.b16 %v308
      %v545 = vunpack.c.l.b16 %v309
      %v546 = vunpack.c.l.b16 %v310
      %v547 = vunpack.c.l.b16 %v311
      %v548 = vunpack.c.l.b16 %v312
      %v549 = vunpack.c.l.b16 %v313
      %v550 = vunpack.c.l.b16 %v314
      %v551 = vpack.c.b16 %v536, %v535
      %v552 = vpack.c.b16 %v538, %v537
      %v553 = vpack.c.b16 %v540, %v539
      %v554 = vpack.c.b16 %v542, %v541
      %v555 = vpack.c.b16 %v544, %v543
      %v556 = vpack.c.b16 %v546, %v545
      %v557 = vpack.c.b16 %v548, %v547
      %v558 = vpack.c.b16 %v550, %v549
      %567 = vmatprep.subr.bf16.mxu0 0
      %568 = vmatpush1.bf16.msra.mxu0 %v551
      %569 = vmatprep.subr.bf16.mxu0 0
      %570 = vmatpush1.bf16.msra.mxu0 %v552
      %571 = vmatprep.subr.bf16.mxu0 0
      %572 = vmatpush1.bf16.msra.mxu0 %v553
      %573 = vmatprep.subr.bf16.mxu0 0
      %574 = vmatpush1.bf16.msra.mxu0 %v554
      %575 = vmatprep.subr.bf16.mxu0 0
      %576 = vmatpush1.bf16.msra.mxu0 %v555
      %577 = vmatprep.subr.bf16.mxu0 0
      %578 = vmatpush1.bf16.msra.mxu0 %v556
      %579 = vmatprep.subr.bf16.mxu0 0
      %580 = vmatpush1.bf16.msra.mxu0 %v557
      %581 = vmatprep.subr.bf16.mxu0 0
      %582 = vmatpush1.bf16.msra.mxu0 %v558
      %583 = vmatprep.subr.bf16.mxu0 0
      %584 = vmatpush1.bf16.msra.mxu0 0
      %585 = vmatprep.subr.bf16.mxu0 0
      %586 = vmatpush1.bf16.msra.mxu0 0
      %587 = vmatprep.subr.bf16.mxu0 0
      %588 = vmatpush1.bf16.msra.mxu0 0
      %589 = vmatprep.subr.bf16.mxu0 0
      %590 = vmatpush1.bf16.msra.mxu0 0
      %591 = vmatprep.subr.bf16.mxu0 0
      %592 = vmatpush1.bf16.msra.mxu0 0
      %593 = vmatprep.subr.bf16.mxu0 0
      %594 = vmatpush1.bf16.msra.mxu0 0
      %595 = vmatprep.subr.bf16.mxu0 0
      %596 = vmatpush1.bf16.msra.mxu0 0
      %597 = vmatprep.subr.bf16.mxu0 0
      %598 = vmatpush1.bf16.msra.mxu0 0
      %599 = vmatprep.mubr.bf16.mxu0 0
      %600 = vmatmul.mubr.bf16.gmra.mrb[0].mxu0 %v400
      %v601 = vpop.f32.mrb[0].mxu0
      %v602 = vadd.f32 0.0, %v601
      %v603 = vpop.f32.mrb[0].mxu0
      %v604 = vpop.f32.mrb[0].mxu0
      %v605 = vadd.f32 0.0, %v604
      %v606 = vpop.f32.mrb[0].mxu0
      %607 = vmatprep.mubr.bf16.mxu0 0
      %608 = vmatmul.mubr.bf16.gmra.mrb[0].mxu0 %v408
      %v609 = vpop.f32.mrb[0].mxu0
      %v610 = vadd.f32 0.0, %v609
      %v611 = vpop.f32.mrb[0].mxu0
      %v612 = vpop.f32.mrb[0].mxu0
      %v613 = vadd.f32 0.0, %v612
      %v614 = vpop.f32.mrb[0].mxu0
      %615 = vmatprep.mubr.bf16.mxu0 0
      %616 = vmatmul.mubr.bf16.gmra.mrb[0].mxu0 %v416
      %v617 = vpop.f32.mrb[0].mxu0
      %v618 = vadd.f32 0.0, %v617
      %v619 = vpop.f32.mrb[0].mxu0
      %v620 = vpop.f32.mrb[0].mxu0
      %v621 = vadd.f32 0.0, %v620
      %v622 = vpop.f32.mrb[0].mxu0
      %623 = vmatprep.mubr.bf16.mxu0 0
      %624 = vmatmul.mubr.bf16.gmra.mrb[0].mxu0 %v424
      %v625 = vpop.f32.mrb[0].mxu0
      %v626 = vadd.f32 0.0, %v625
      %v627 = vpop.f32.mrb[0].mxu0
      %v628 = vpop.f32.mrb[0].mxu0
      %v629 = vadd.f32 0.0, %v628
      %v630 = vpop.f32.mrb[0].mxu0
      %631 = vmatprep.mubr.bf16.mxu0 0
      %632 = vmatmul.mubr.bf16.gmra.mrb[0].mxu0 %v432
      %v633 = vpop.f32.mrb[0].mxu0
      %v634 = vadd.f32 0.0, %v633
      %v635 = vpop.f32.mrb[0].mxu0
      %v636 = vpop.f32.mrb[0].mxu0
      %v637 = vadd.f32 0.0, %v636
      %v638 = vpop.f32.mrb[0].mxu0
      %639 = vmatprep.mubr.bf16.mxu0 0
      %640 = vmatmul.mubr.bf16.gmra.mrb[0].mxu0 %v440
      %v641 = vpop.f32.mrb[0].mxu0
      %v642 = vadd.f32 0.0, %v641
      %v643 = vpop.f32.mrb[0].mxu0
      %v644 = vpop.f32.mrb[0].mxu0
      %v645 = vadd.f32 0.0, %v644
      %v646 = vpop.f32.mrb[0].mxu0
      %647 = vmatprep.mubr.bf16.mxu0 0
      %648 = vmatmul.mubr.bf16.gmra.mrb[0].mxu0 %v448
      %v649 = vpop.f32.mrb[0].mxu0
      %v650 = vadd.f32 0.0, %v649
      %v651 = vpop.f32.mrb[0].mxu0
      %v652 = vpop.f32.mrb[0].mxu0
      %v653 = vadd.f32 0.0, %v652
      %v654 = vpop.f32.mrb[0].mxu0
      %655 = vmatprep.mubr.bf16.mxu0 0
      %656 = vmatmul.mubr.bf16.gmra.mrb[0].mxu0 %v456
      %v657 = vpop.f32.mrb[0].mxu0
      %v658 = vadd.f32 0.0, %v657
      %v659 = vpop.f32.mrb[0].mxu0
      %v660 = vpop.f32.mrb[0].mxu0
      %v661 = vadd.f32 0.0, %v660
      %v662 = vpop.f32.mrb[0].mxu0
      %663 = vmatprep.mubr.bf16.mxu0 0
      %664 = vmatmul.mubr.bf16.gmra.mrb[0].mxu0 %v464
      %v665 = vpop.f32.mrb[0].mxu0
      %v666 = vadd.f32 0.0, %v665
      %v667 = vpop.f32.mrb[0].mxu0
      %v668 = vpop.f32.mrb[0].mxu0
      %v669 = vadd.f32 0.0, %v668
      %v670 = vpop.f32.mrb[0].mxu0
      %671 = vmatprep.mubr.bf16.mxu0 0
      %672 = vmatmul.mubr.bf16.gmra.mrb[0].mxu0 %v472
      %v673 = vpop.f32.mrb[0].mxu0
      %v674 = vadd.f32 0.0, %v673
      %v675 = vpop.f32.mrb[0].mxu0
      %v676 = vpop.f32.mrb[0].mxu0
      %v677 = vadd.f32 0.0, %v676
      %v678 = vpop.f32.mrb[0].mxu0
      %679 = vmatprep.mubr.bf16.mxu0 0
      %680 = vmatmul.mubr.bf16.gmra.mrb[0].mxu0 %v480
      %v681 = vpop.f32.mrb[0].mxu0
      %v682 = vadd.f32 0.0, %v681
      %v683 = vpop.f32.mrb[0].mxu0
      %v684 = vpop.f32.mrb[0].mxu0
      %v685 = vadd.f32 0.0, %v684
      %v686 = vpop.f32.mrb[0].mxu0
      %687 = vmatprep.mubr.bf16.mxu0 0
      %688 = vmatmul.mubr.bf16.gmra.mrb[0].mxu0 %v488
      %v689 = vpop.f32.mrb[0].mxu0
      %v690 = vadd.f32 0.0, %v689
      %v691 = vpop.f32.mrb[0].mxu0
      %v692 = vpop.f32.mrb[0].mxu0
      %v693 = vadd.f32 0.0, %v692
      %v694 = vpop.f32.mrb[0].mxu0
      %695 = vmatprep.mubr.bf16.mxu0 0
      %696 = vmatmul.mubr.bf16.gmra.mrb[0].mxu0 %v496
      %v697 = vpop.f32.mrb[0].mxu0
      %v698 = vadd.f32 0.0, %v697
      %v699 = vpop.f32.mrb[0].mxu0
      %v700 = vpop.f32.mrb[0].mxu0
      %v701 = vadd.f32 0.0, %v700
      %v702 = vpop.f32.mrb[0].mxu0
      %703 = vmatprep.mubr.bf16.mxu0 0
      %704 = vmatmul.mubr.bf16.gmra.mrb[0].mxu0 %v504
      %v705 = vpop.f32.mrb[0].mxu0
      %v706 = vadd.f32 0.0, %v705
      %v707 = vpop.f32.mrb[0].mxu0
      %v708 = vpop.f32.mrb[0].mxu0
      %v709 = vadd.f32 0.0, %v708
      %v710 = vpop.f32.mrb[0].mxu0
      %711 = vdwg.mxu0
      %v742 = vunpack.c.l.b16 %v281
      %v743 = vunpack.c.l.b16 %v282
      %v744 = vunpack.c.l.b16 %v283
      %v745 = vunpack.c.l.b16 %v284
      %v746 = vunpack.c.l.b16 %v285
      %v747 = vunpack.c.l.b16 %v286
      %v748 = vunpack.c.l.b16 %v287
      %v749 = vunpack.c.l.b16 %v288
      %v750 = vunpack.c.l.b16 %v289
      %v751 = vunpack.c.l.b16 %v290
      %v752 = vunpack.c.l.b16 %v291
      %v753 = vunpack.c.l.b16 %v292
      %v754 = vunpack.c.l.b16 %v293
      %v755 = vunpack.c.l.b16 %v294
      %v756 = vunpack.c.l.b16 %v295
      %v757 = vunpack.c.l.b16 %v296
      %v758 = vpack.c.b16 %v743, %v742
      %v759 = vpack.c.b16 %v745, %v744
      %v760 = vpack.c.b16 %v747, %v746
      %v761 = vpack.c.b16 %v749, %v748
      %v762 = vpack.c.b16 %v751, %v750
      %v763 = vpack.c.b16 %v753, %v752
      %v764 = vpack.c.b16 %v755, %v754
      %v765 = vpack.c.b16 %v757, %v756
      %774 = vmatprep.subr.bf16.mxu0 0
      %775 = vmatpush1.bf16.msra.mxu0 %v758
      %776 = vmatprep.subr.bf16.mxu0 0
      %777 = vmatpush1.bf16.msra.mxu0 %v759
      %778 = vmatprep.subr.bf16.mxu0 0
      %779 = vmatpush1.bf16.msra.mxu0 %v760
      %780 = vmatprep.subr.bf16.mxu0 0
      %781 = vmatpush1.bf16.msra.mxu0 %v761
      %782 = vmatprep.subr.bf16.mxu0 0
      %783 = vmatpush1.bf16.msra.mxu0 %v762
      %784 = vmatprep.subr.bf16.mxu0 0
      %785 = vmatpush1.bf16.msra.mxu0 %v763
      %786 = vmatprep.subr.bf16.mxu0 0
      %787 = vmatpush1.bf16.msra.mxu0 %v764
      %788 = vmatprep.subr.bf16.mxu0 0
      %789 = vmatpush1.bf16.msra.mxu0 %v765
      %790 = vmatprep.subr.bf16.mxu0 0
      %791 = vmatpush1.bf16.msra.mxu0 0
      %792 = vmatprep.subr.bf16.mxu0 0
      %793 = vmatpush1.bf16.msra.mxu0 0
      %794 = vmatprep.subr.bf16.mxu0 0
      %795 = vmatpush1.bf16.msra.mxu0 0
      %796 = vmatprep.subr.bf16.mxu0 0
      %797 = vmatpush1.bf16.msra.mxu0 0
      %798 = vmatprep.subr.bf16.mxu0 0
      %799 = vmatpush1.bf16.msra.mxu0 0
      %800 = vmatprep.subr.bf16.mxu0 0
      %801 = vmatpush1.bf16.msra.mxu0 0
      %802 = vmatprep.subr.bf16.mxu0 0
      %803 = vmatpush1.bf16.msra.mxu0 0
      %804 = vmatprep.subr.bf16.mxu0 0
      %805 = vmatpush1.bf16.msra.mxu0 0
      %806 = vmatprep.mubr.bf16.mxu0 0
      %807 = vmatmul.mubr.bf16.gmra.mrb[0].mxu0 %v373
      %v808 = vpop.f32.mrb[0].mxu0
      %v809 = vadd.f32 %v602, %v808
      %v810 = vpop.f32.mrb[0].mxu0
      %v811 = vpop.f32.mrb[0].mxu0
      %v812 = vadd.f32 %v605, %v811
      %v813 = vpop.f32.mrb[0].mxu0
      %814 = vmatprep.mubr.bf16.mxu0 0
      %815 = vmatmul.mubr.bf16.gmra.mrb[0].mxu0 %v374
      %v816 = vpop.f32.mrb[0].mxu0
      %v817 = vadd.f32 %v610, %v816
      %v818 = vpop.f32.mrb[0].mxu0
      %v819 = vpop.f32.mrb[0].mxu0
      %v820 = vadd.f32 %v613, %v819
      %v821 = vpop.f32.mrb[0].mxu0
      %822 = vmatprep.mubr.bf16.mxu0 0
      %823 = vmatmul.mubr.bf16.gmra.mrb[0].mxu0 %v375
      %v824 = vpop.f32.mrb[0].mxu0
      %v825 = vadd.f32 %v618, %v824
      %v826 = vpop.f32.mrb[0].mxu0
      %v827 = vpop.f32.mrb[0].mxu0
      %v828 = vadd.f32 %v621, %v827
      %v829 = vpop.f32.mrb[0].mxu0
      %830 = vmatprep.mubr.bf16.mxu0 0
      %831 = vmatmul.mubr.bf16.gmra.mrb[0].mxu0 %v376
      %v832 = vpop.f32.mrb[0].mxu0
      %v833 = vadd.f32 %v626, %v832
      %v834 = vpop.f32.mrb[0].mxu0
      %v835 = vpop.f32.mrb[0].mxu0
      %v836 = vadd.f32 %v629, %v835
      %v837 = vpop.f32.mrb[0].mxu0
      %838 = vmatprep.mubr.bf16.mxu0 0
      %839 = vmatmul.mubr.bf16.gmra.mrb[0].mxu0 %v377
      %v840 = vpop.f32.mrb[0].mxu0
      %v841 = vadd.f32 %v634, %v840
      %v842 = vpop.f32.mrb[0].mxu0
      %v843 = vpop.f32.mrb[0].mxu0
      %v844 = vadd.f32 %v637, %v843
      %v845 = vpop.f32.mrb[0].mxu0
      %846 = vmatprep.mubr.bf16.mxu0 0
      %847 = vmatmul.mubr.bf16.gmra.mrb[0].mxu0 %v378
      %v848 = vpop.f32.mrb[0].mxu0
      %v849 = vadd.f32 %v642, %v848
      %v850 = vpop.f32.mrb[0].mxu0
      %v851 = vpop.f32.mrb[0].mxu0
      %v852 = vadd.f32 %v645, %v851
      %v853 = vpop.f32.mrb[0].mxu0
      %854 = vmatprep.mubr.bf16.mxu0 0
      %855 = vmatmul.mubr.bf16.gmra.mrb[0].mxu0 %v379
      %v856 = vpop.f32.mrb[0].mxu0
      %v857 = vadd.f32 %v650, %v856
      %v858 = vpop.f32.mrb[0].mxu0
      %v859 = vpop.f32.mrb[0].mxu0
      %v860 = vadd.f32 %v653, %v859
      %v861 = vpop.f32.mrb[0].mxu0
      %862 = vmatprep.mubr.bf16.mxu0 0
      %863 = vmatmul.mubr.bf16.gmra.mrb[0].mxu0 %v380
      %v864 = vpop.f32.mrb[0].mxu0
      %v865 = vadd.f32 %v658, %v864
      %v866 = vpop.f32.mrb[0].mxu0
      %v867 = vpop.f32.mrb[0].mxu0
      %v868 = vadd.f32 %v661, %v867
      %v869 = vpop.f32.mrb[0].mxu0
      %870 = vmatprep.mubr.bf16.mxu0 0
      %871 = vmatmul.mubr.bf16.gmra.mrb[0].mxu0 %v381
      %v872 = vpop.f32.mrb[0].mxu0
      %v873 = vadd.f32 %v666, %v872
      %v874 = vpop.f32.mrb[0].mxu0
      %v875 = vpop.f32.mrb[0].mxu0
      %v876 = vadd.f32 %v669, %v875
      %v877 = vpop.f32.mrb[0].mxu0
      %878 = vmatprep.mubr.bf16.mxu0 0
      %879 = vmatmul.mubr.bf16.gmra.mrb[0].mxu0 %v382
      %v880 = vpop.f32.mrb[0].mxu0
      %v881 = vadd.f32 %v674, %v880
      %v882 = vpop.f32.mrb[0].mxu0
      %v883 = vpop.f32.mrb[0].mxu0
      %v884 = vadd.f32 %v677, %v883
      %v885 = vpop.f32.mrb[0].mxu0
      %886 = vmatprep.mubr.bf16.mxu0 0
      %887 = vmatmul.mubr.bf16.gmra.mrb[0].mxu0 %v383
      %v888 = vpop.f32.mrb[0].mxu0
      %v889 = vadd.f32 %v682, %v888
      %v890 = vpop.f32.mrb[0].mxu0
      %v891 = vpop.f32.mrb[0].mxu0
      %v892 = vadd.f32 %v685, %v891
      %v893 = vpop.f32.mrb[0].mxu0
      %894 = vmatprep.mubr.bf16.mxu0 0
      %895 = vmatmul.mubr.bf16.gmra.mrb[0].mxu0 %v384
      %v896 = vpop.f32.mrb[0].mxu0
      %v897 = vadd.f32 %v690, %v896
      %v898 = vpop.f32.mrb[0].mxu0
      %v899 = vpop.f32.mrb[0].mxu0
      %v900 = vadd.f32 %v693, %v899
      %v901 = vpop.f32.mrb[0].mxu0
      %902 = vmatprep.mubr.bf16.mxu0 0
      %903 = vmatmul.mubr.bf16.gmra.mrb[0].mxu0 %v385
      %v904 = vpop.f32.mrb[0].mxu0
      %v905 = vadd.f32 %v698, %v904
      %v906 = vpop.f32.mrb[0].mxu0
      %v907 = vpop.f32.mrb[0].mxu0
      %v908 = vadd.f32 %v701, %v907
      %v909 = vpop.f32.mrb[0].mxu0
      %910 = vmatprep.mubr.bf16.mxu0 0
      %911 = vmatmul.mubr.bf16.gmra.mrb[0].mxu0 %v386
      %v912 = vpop.f32.mrb[0].mxu0
      %v913 = vadd.f32 %v706, %v912
      %v914 = vpop.f32.mrb[0].mxu0
      %v915 = vpop.f32.mrb[0].mxu0
      %v916 = vadd.f32 %v709, %v915
      %v917 = vpop.f32.mrb[0].mxu0
      %918 = vdwg.mxu0
      %v919 = vld [vmem:[%s246] sm:$0xe]
      %s920 = scalar_lea.vmem %s1, 128
      %v921 = vld [vmem:[%s920] sm:$0xf]
      %v922 = vld [vmem:[%s920 + $0x4] sm:$0xf]
      %v923 = vld [vmem:[%s920 + $0x8] sm:$0xf]
      %v924 = vld [vmem:[%s920 + $0xc] sm:$0xf]
      %v925 = vld [vmem:[%s920 + $0x10] sm:$0xf]
      %v926 = vld [vmem:[%s920 + $0x14] sm:$0xf]
      %v927 = vld [vmem:[%s920 + $0x18] sm:$0xf]
      %v928 = vld [vmem:[%s920 + $0x1c] sm:$0xf]
      %v929 = vld [vmem:[%s920 + $0x20] sm:$0xf]
      %v930 = vld [vmem:[%s920 + $0x24] sm:$0xf]
      %v931 = vld [vmem:[%s920 + $0x28] sm:$0xf]
      %v932 = vld [vmem:[%s920 + $0x2c] sm:$0xf]
      %v933 = vld [vmem:[%s920 + $0x30] sm:$0xf]
      %v934 = vld [vmem:[%s920 + $0x34] sm:$0xf]
      %v935 = vld [vmem:[%s920 + $0x38] sm:$0xf]
      %v936 = vld [vmem:[%s920 + $0x3c] sm:$0xf]
      %v938 = vunpack.c.l.b16 %v919
      %v939 = vpack.c.b16 %v345, %v938
      %vm940 = vcmask 1046528
      %v941 = vrot.slane %v939, 1
      %v942 = vrot.slane %v374, 1
      %v943 = vsel %vm940, %v941, %v942
      %v944 = vrot.slane %v375, 1
      %v945 = vsel %vm940, %v942, %v944
      %v946 = vrot.slane %v376, 1
      %v947 = vsel %vm940, %v944, %v946
      %v948 = vrot.slane %v377, 1
      %v949 = vsel %vm940, %v946, %v948
      %v950 = vrot.slane %v378, 1
      %v951 = vsel %vm940, %v948, %v950
      %v952 = vrot.slane %v379, 1
      %v953 = vsel %vm940, %v950, %v952
      %v954 = vrot.slane %v380, 1
      %v955 = vsel %vm940, %v952, %v954
      %v956 = vrot.slane %v381, 1
      %v957 = vsel %vm940, %v954, %v956
      %v958 = vrot.slane %v382, 1
      %v959 = vsel %vm940, %v956, %v958
      %v960 = vrot.slane %v383, 1
      %v961 = vsel %vm940, %v958, %v960
      %v962 = vrot.slane %v384, 1
      %v963 = vsel %vm940, %v960, %v962
      %v964 = vrot.slane %v385, 1
      %v965 = vsel %vm940, %v962, %v964
      %v966 = vrot.slane %v386, 1
      %v967 = vsel %vm940, %v964, %v966
      %v968 = vrot.slane %v387, 1
      %v969 = vsel %vm940, %v966, %v968
      %v1000 = vunpack.c.l.b16 %v921
      %v1001 = vunpack.c.l.b16 %v922
      %v1002 = vunpack.c.l.b16 %v923
      %v1003 = vunpack.c.l.b16 %v924
      %v1004 = vunpack.c.l.b16 %v925
      %v1005 = vunpack.c.l.b16 %v926
      %v1006 = vunpack.c.l.b16 %v927
      %v1007 = vunpack.c.l.b16 %v928
      %v1008 = vunpack.c.l.b16 %v929
      %v1009 = vunpack.c.l.b16 %v930
      %v1010 = vunpack.c.l.b16 %v931
      %v1011 = vunpack.c.l.b16 %v932
      %v1012 = vunpack.c.l.b16 %v933
      %v1013 = vunpack.c.l.b16 %v934
      %v1014 = vunpack.c.l.b16 %v935
      %v1015 = vunpack.c.l.b16 %v936
      %v1016 = vpack.c.b16 %v1001, %v1000
      %v1017 = vpack.c.b16 %v1003, %v1002
      %v1018 = vpack.c.b16 %v1005, %v1004
      %v1019 = vpack.c.b16 %v1007, %v1006
      %v1020 = vpack.c.b16 %v1009, %v1008
      %v1021 = vpack.c.b16 %v1011, %v1010
      %v1022 = vpack.c.b16 %v1013, %v1012
      %v1023 = vpack.c.b16 %v1015, %v1014
      %1032 = vmatprep.subr.bf16.mxu0 0
      %1033 = vmatpush1.bf16.msra.mxu0 %v1016
      %1034 = vmatprep.subr.bf16.mxu0 0
      %1035 = vmatpush1.bf16.msra.mxu0 %v1017
      %1036 = vmatprep.subr.bf16.mxu0 0
      %1037 = vmatpush1.bf16.msra.mxu0 %v1018
      %1038 = vmatprep.subr.bf16.mxu0 0
      %1039 = vmatpush1.bf16.msra.mxu0 %v1019
      %1040 = vmatprep.subr.bf16.mxu0 0
      %1041 = vmatpush1.bf16.msra.mxu0 %v1020
      %1042 = vmatprep.subr.bf16.mxu0 0
      %1043 = vmatpush1.bf16.msra.mxu0 %v1021
      %1044 = vmatprep.subr.bf16.mxu0 0
      %1045 = vmatpush1.bf16.msra.mxu0 %v1022
      %1046 = vmatprep.subr.bf16.mxu0 0
      %1047 = vmatpush1.bf16.msra.mxu0 %v1023
      %1048 = vmatprep.subr.bf16.mxu0 0
      %1049 = vmatpush1.bf16.msra.mxu0 0
      %1050 = vmatprep.subr.bf16.mxu0 0
      %1051 = vmatpush1.bf16.msra.mxu0 0
      %1052 = vmatprep.subr.bf16.mxu0 0
      %1053 = vmatpush1.bf16.msra.mxu0 0
      %1054 = vmatprep.subr.bf16.mxu0 0
      %1055 = vmatpush1.bf16.msra.mxu0 0
      %1056 = vmatprep.subr.bf16.mxu0 0
      %1057 = vmatpush1.bf16.msra.mxu0 0
      %1058 = vmatprep.subr.bf16.mxu0 0
      %1059 = vmatpush1.bf16.msra.mxu0 0
      %1060 = vmatprep.subr.bf16.mxu0 0
      %1061 = vmatpush1.bf16.msra.mxu0 0
      %1062 = vmatprep.subr.bf16.mxu0 0
      %1063 = vmatpush1.bf16.msra.mxu0 0
      %1064 = vmatprep.mubr.bf16.mxu0 0
      %1065 = vmatmul.mubr.bf16.gmra.mrb[0].mxu0 %v943
      %v1066 = vpop.f32.mrb[0].mxu0
      %v1067 = vadd.f32 0.0, %v1066
      %v1068 = vpop.f32.mrb[0].mxu0
      %v1069 = vpop.f32.mrb[0].mxu0
      %v1070 = vadd.f32 0.0, %v1069
      %v1071 = vpop.f32.mrb[0].mxu0
      %1072 = vmatprep.mubr.bf16.mxu0 0
      %1073 = vmatmul.mubr.bf16.gmra.mrb[0].mxu0 %v945
      %v1074 = vpop.f32.mrb[0].mxu0
      %v1075 = vadd.f32 0.0, %v1074
      %v1076 = vpop.f32.mrb[0].mxu0
      %v1077 = vpop.f32.mrb[0].mxu0
      %v1078 = vadd.f32 0.0, %v1077
      %v1079 = vpop.f32.mrb[0].mxu0
      %1080 = vmatprep.mubr.bf16.mxu0 0
      %1081 = vmatmul.mubr.bf16.gmra.mrb[0].mxu0 %v947
      %v1082 = vpop.f32.mrb[0].mxu0
      %v1083 = vadd.f32 0.0, %v1082
      %v1084 = vpop.f32.mrb[0].mxu0
      %v1085 = vpop.f32.mrb[0].mxu0
      %v1086 = vadd.f32 0.0, %v1085
      %v1087 = vpop.f32.mrb[0].mxu0
      %1088 = vmatprep.mubr.bf16.mxu0 0
      %1089 = vmatmul.mubr.bf16.gmra.mrb[0].mxu0 %v949
      %v1090 = vpop.f32.mrb[0].mxu0
      %v1091 = vadd.f32 0.0, %v1090
      %v1092 = vpop.f32.mrb[0].mxu0
      %v1093 = vpop.f32.mrb[0].mxu0
      %v1094 = vadd.f32 0.0, %v1093
      %v1095 = vpop.f32.mrb[0].mxu0
      %1096 = vmatprep.mubr.bf16.mxu0 0
      %1097 = vmatmul.mubr.bf16.gmra.mrb[0].mxu0 %v951
      %v1098 = vpop.f32.mrb[0].mxu0
      %v1099 = vadd.f32 0.0, %v1098
      %v1100 = vpop.f32.mrb[0].mxu0
      %v1101 = vpop.f32.mrb[0].mxu0
      %v1102 = vadd.f32 0.0, %v1101
      %v1103 = vpop.f32.mrb[0].mxu0
      %1104 = vmatprep.mubr.bf16.mxu0 0
      %1105 = vmatmul.mubr.bf16.gmra.mrb[0].mxu0 %v953
      %v1106 = vpop.f32.mrb[0].mxu0
      %v1107 = vadd.f32 0.0, %v1106
      %v1108 = vpop.f32.mrb[0].mxu0
      %v1109 = vpop.f32.mrb[0].mxu0
      %v1110 = vadd.f32 0.0, %v1109
      %v1111 = vpop.f32.mrb[0].mxu0
      %1112 = vmatprep.mubr.bf16.mxu0 0
      %1113 = vmatmul.mubr.bf16.gmra.mrb[0].mxu0 %v955
      %v1114 = vpop.f32.mrb[0].mxu0
      %v1115 = vadd.f32 0.0, %v1114
      %v1116 = vpop.f32.mrb[0].mxu0
      %v1117 = vpop.f32.mrb[0].mxu0
      %v1118 = vadd.f32 0.0, %v1117
      %v1119 = vpop.f32.mrb[0].mxu0
      %1120 = vmatprep.mubr.bf16.mxu0 0
      %1121 = vmatmul.mubr.bf16.gmra.mrb[0].mxu0 %v957
      %v1122 = vpop.f32.mrb[0].mxu0
      %v1123 = vadd.f32 0.0, %v1122
      %v1124 = vpop.f32.mrb[0].mxu0
      %v1125 = vpop.f32.mrb[0].mxu0
      %v1126 = vadd.f32 0.0, %v1125
      %v1127 = vpop.f32.mrb[0].mxu0
      %1128 = vmatprep.mubr.bf16.mxu0 0
      %1129 = vmatmul.mubr.bf16.gmra.mrb[0].mxu0 %v959
      %v1130 = vpop.f32.mrb[0].mxu0
      %v1131 = vadd.f32 0.0, %v1130
      %v1132 = vpop.f32.mrb[0].mxu0
      %v1133 = vpop.f32.mrb[0].mxu0
      %v1134 = vadd.f32 0.0, %v1133
      %v1135 = vpop.f32.mrb[0].mxu0
      %1136 = vmatprep.mubr.bf16.mxu0 0
      %1137 = vmatmul.mubr.bf16.gmra.mrb[0].mxu0 %v961
      %v1138 = vpop.f32.mrb[0].mxu0
      %v1139 = vadd.f32 0.0, %v1138
      %v1140 = vpop.f32.mrb[0].mxu0
      %v1141 = vpop.f32.mrb[0].mxu0
      %v1142 = vadd.f32 0.0, %v1141
      %v1143 = vpop.f32.mrb[0].mxu0
      %1144 = vmatprep.mubr.bf16.mxu0 0
      %1145 = vmatmul.mubr.bf16.gmra.mrb[0].mxu0 %v963
      %v1146 = vpop.f32.mrb[0].mxu0
      %v1147 = vadd.f32 0.0, %v1146
      %v1148 = vpop.f32.mrb[0].mxu0
      %v1149 = vpop.f32.mrb[0].mxu0
      %v1150 = vadd.f32 0.0, %v1149
      %v1151 = vpop.f32.mrb[0].mxu0
      %1152 = vmatprep.mubr.bf16.mxu0 0
      %1153 = vmatmul.mubr.bf16.gmra.mrb[0].mxu0 %v965
      %v1154 = vpop.f32.mrb[0].mxu0
      %v1155 = vadd.f32 0.0, %v1154
      %v1156 = vpop.f32.mrb[0].mxu0
      %v1157 = vpop.f32.mrb[0].mxu0
      %v1158 = vadd.f32 0.0, %v1157
      %v1159 = vpop.f32.mrb[0].mxu0
      %1160 = vmatprep.mubr.bf16.mxu0 0
      %1161 = vmatmul.mubr.bf16.gmra.mrb[0].mxu0 %v967
      %v1162 = vpop.f32.mrb[0].mxu0
      %v1163 = vadd.f32 0.0, %v1162
      %v1164 = vpop.f32.mrb[0].mxu0
      %v1165 = vpop.f32.mrb[0].mxu0
      %v1166 = vadd.f32 0.0, %v1165
      %v1167 = vpop.f32.mrb[0].mxu0
      %1168 = vmatprep.mubr.bf16.mxu0 0
      %1169 = vmatmul.mubr.bf16.gmra.mrb[0].mxu0 %v969
      %v1170 = vpop.f32.mrb[0].mxu0
      %v1171 = vadd.f32 0.0, %v1170
      %v1172 = vpop.f32.mrb[0].mxu0
      %v1173 = vpop.f32.mrb[0].mxu0
      %v1174 = vadd.f32 0.0, %v1173
      %v1175 = vpop.f32.mrb[0].mxu0
      %1176 = vdwg.mxu0
      %v1177 = vadd.f32 %v809, %v1067
      %v1178 = vadd.f32 %v812, %v1070
      %v1179 = vadd.f32 %v817, %v1075
      %v1180 = vadd.f32 %v820, %v1078
      %v1181 = vadd.f32 %v825, %v1083
      %v1182 = vadd.f32 %v828, %v1086
      %v1183 = vadd.f32 %v833, %v1091
      %v1184 = vadd.f32 %v836, %v1094
      %v1185 = vadd.f32 %v841, %v1099
      %v1186 = vadd.f32 %v844, %v1102
      %v1187 = vadd.f32 %v849, %v1107
      %v1188 = vadd.f32 %v852, %v1110
      %v1189 = vadd.f32 %v857, %v1115
      %v1190 = vadd.f32 %v860, %v1118
      %v1191 = vadd.f32 %v865, %v1123
      %v1192 = vadd.f32 %v868, %v1126
      %v1193 = vadd.f32 %v873, %v1131
      %v1194 = vadd.f32 %v876, %v1134
      %v1195 = vadd.f32 %v881, %v1139
      %v1196 = vadd.f32 %v884, %v1142
      %v1197 = vadd.f32 %v889, %v1147
      %v1198 = vadd.f32 %v892, %v1150
      %v1199 = vadd.f32 %v897, %v1155
      %v1200 = vadd.f32 %v900, %v1158
      %v1201 = vadd.f32 %v905, %v1163
      %v1202 = vadd.f32 %v908, %v1166
      %v1203 = vadd.f32 %v913, %v1171
      %v1204 = vadd.f32 %v916, %v1174
      %v1205 = vld [vmem:[%s246 + $0x8] sm:$0xf]
      %v1206 = vld [vmem:[%s246 + $0xc] sm:$0xf]
      %v1207 = vld [vmem:[%s246 + $0x10] sm:$0xf]
      %v1208 = vld [vmem:[%s246 + $0x14] sm:$0xf]
      %v1209 = vld [vmem:[%s246 + $0x18] sm:$0xf]
      %v1210 = vld [vmem:[%s246 + $0x1c] sm:$0xf]
      %v1211 = vld [vmem:[%s246 + $0x20] sm:$0xf]
      %v1212 = vld [vmem:[%s246 + $0x24] sm:$0xf]
      %v1213 = vld [vmem:[%s246 + $0x28] sm:$0xf]
      %v1214 = vld [vmem:[%s246 + $0x2c] sm:$0xf]
      %v1215 = vld [vmem:[%s246 + $0x30] sm:$0xf]
      %v1216 = vld [vmem:[%s246 + $0x34] sm:$0xf]
      %v1217 = vld [vmem:[%s246 + $0x38] sm:$0xf]
      %v1218 = vld [vmem:[%s246 + $0x3c] sm:$0xf]
      %v1219 = vld [vmem:[%s246 + $0x40] sm:$0xf]
      %v1220 = vld [vmem:[%s246 + $0x44] sm:$0xf]
      %v1221 = vld [vmem:[%s246 + $0x48] sm:$0xf]
      %v1222 = vld [vmem:[%s246 + $0x4c] sm:$0xf]
      %v1223 = vld [vmem:[%s246 + $0x50] sm:$0xf]
      %v1224 = vld [vmem:[%s246 + $0x54] sm:$0xf]
      %v1225 = vld [vmem:[%s246 + $0x58] sm:$0xf]
      %v1226 = vld [vmem:[%s246 + $0x5c] sm:$0xf]
      %v1227 = vld [vmem:[%s246 + $0x60] sm:$0xf]
      %v1228 = vld [vmem:[%s246 + $0x64] sm:$0xf]
      %v1229 = vld [vmem:[%s246 + $0x68] sm:$0xf]
      %v1230 = vld [vmem:[%s246 + $0x6c] sm:$0xf]
      %v1231 = vld [vmem:[%s246 + $0x70] sm:$0xf]
      %v1232 = vld [vmem:[%s246 + $0x74] sm:$0xf]
      %s1233 = scalar_lea.vmem %s1, 192
      %v1234 = vld [vmem:[%s1233] sm:$0xf]
      %v1235 = vld [vmem:[%s1233 + $0x4] sm:$0xf]
      %v1236 = vld [vmem:[%s1233 + $0x8] sm:$0xf]
      %v1237 = vld [vmem:[%s1233 + $0xc] sm:$0xf]
      %v1238 = vld [vmem:[%s1233 + $0x10] sm:$0xf]
      %v1239 = vld [vmem:[%s1233 + $0x14] sm:$0xf]
      %v1240 = vld [vmem:[%s1233 + $0x18] sm:$0xf]
      %v1241 = vld [vmem:[%s1233 + $0x1c] sm:$0xf]
      %v1242 = vld [vmem:[%s1233 + $0x20] sm:$0xf]
      %v1243 = vld [vmem:[%s1233 + $0x24] sm:$0xf]
      %v1244 = vld [vmem:[%s1233 + $0x28] sm:$0xf]
      %v1245 = vld [vmem:[%s1233 + $0x2c] sm:$0xf]
      %v1246 = vld [vmem:[%s1233 + $0x30] sm:$0xf]
      %v1247 = vld [vmem:[%s1233 + $0x34] sm:$0xf]
      %v1248 = vld [vmem:[%s1233 + $0x38] sm:$0xf]
      %v1249 = vld [vmem:[%s1233 + $0x3c] sm:$0xf]
      %v1278 = vunpack.c.l.b16 %v1205
      %v1279 = vunpack.c.l.b16 %v1206
      %v1280 = vunpack.c.l.b16 %v1207
      %v1281 = vunpack.c.l.b16 %v1208
      %v1282 = vunpack.c.l.b16 %v1209
      %v1283 = vunpack.c.l.b16 %v1210
      %v1284 = vunpack.c.l.b16 %v1211
      %v1285 = vunpack.c.l.b16 %v1212
      %v1286 = vunpack.c.l.b16 %v1213
      %v1287 = vunpack.c.l.b16 %v1214
      %v1288 = vunpack.c.l.b16 %v1215
      %v1289 = vunpack.c.l.b16 %v1216
      %v1290 = vunpack.c.l.b16 %v1217
      %v1291 = vunpack.c.l.b16 %v1218
      %v1292 = vunpack.c.l.b16 %v1219
      %v1293 = vunpack.c.l.b16 %v1220
      %v1294 = vunpack.c.l.b16 %v1221
      %v1295 = vunpack.c.l.b16 %v1222
      %v1296 = vunpack.c.l.b16 %v1223
      %v1297 = vunpack.c.l.b16 %v1224
      %v1298 = vunpack.c.l.b16 %v1225
      %v1299 = vunpack.c.l.b16 %v1226
      %v1300 = vunpack.c.l.b16 %v1227
      %v1301 = vunpack.c.l.b16 %v1228
      %v1302 = vunpack.c.l.b16 %v1229
      %v1303 = vunpack.c.l.b16 %v1230
      %v1304 = vunpack.c.l.b16 %v1231
      %v1305 = vunpack.c.l.b16 %v1232
      %v1306 = vpack.c.b16 %v1279, %v1278
      %v1307 = vpack.c.b16 %v1281, %v1280
      %v1308 = vpack.c.b16 %v1283, %v1282
      %v1309 = vpack.c.b16 %v1285, %v1284
      %v1310 = vpack.c.b16 %v1287, %v1286
      %v1311 = vpack.c.b16 %v1289, %v1288
      %v1312 = vpack.c.b16 %v1291, %v1290
      %v1313 = vpack.c.b16 %v1293, %v1292
      %v1314 = vpack.c.b16 %v1295, %v1294
      %v1315 = vpack.c.b16 %v1297, %v1296
      %v1316 = vpack.c.b16 %v1299, %v1298
      %v1317 = vpack.c.b16 %v1301, %v1300
      %v1318 = vpack.c.b16 %v1303, %v1302
      %v1319 = vpack.c.b16 %v1305, %v1304
      %v1350 = vunpack.c.l.b16 %v1234
      %v1351 = vunpack.c.l.b16 %v1235
      %v1352 = vunpack.c.l.b16 %v1236
      %v1353 = vunpack.c.l.b16 %v1237
      %v1354 = vunpack.c.l.b16 %v1238
      %v1355 = vunpack.c.l.b16 %v1239
      %v1356 = vunpack.c.l.b16 %v1240
      %v1357 = vunpack.c.l.b16 %v1241
      %v1358 = vunpack.c.l.b16 %v1242
      %v1359 = vunpack.c.l.b16 %v1243
      %v1360 = vunpack.c.l.b16 %v1244
      %v1361 = vunpack.c.l.b16 %v1245
      %v1362 = vunpack.c.l.b16 %v1246
      %v1363 = vunpack.c.l.b16 %v1247
      %v1364 = vunpack.c.l.b16 %v1248
      %v1365 = vunpack.c.l.b16 %v1249
      %v1366 = vpack.c.b16 %v1351, %v1350
      %v1367 = vpack.c.b16 %v1353, %v1352
      %v1368 = vpack.c.b16 %v1355, %v1354
      %v1369 = vpack.c.b16 %v1357, %v1356
      %v1370 = vpack.c.b16 %v1359, %v1358
      %v1371 = vpack.c.b16 %v1361, %v1360
      %v1372 = vpack.c.b16 %v1363, %v1362
      %v1373 = vpack.c.b16 %v1365, %v1364
      %1382 = vmatprep.subr.bf16.mxu0 0
      %1383 = vmatpush1.bf16.msra.mxu0 %v1366
      %1384 = vmatprep.subr.bf16.mxu0 0
      %1385 = vmatpush1.bf16.msra.mxu0 %v1367
      %1386 = vmatprep.subr.bf16.mxu0 0
      %1387 = vmatpush1.bf16.msra.mxu0 %v1368
      %1388 = vmatprep.subr.bf16.mxu0 0
      %1389 = vmatpush1.bf16.msra.mxu0 %v1369
      %1390 = vmatprep.subr.bf16.mxu0 0
      %1391 = vmatpush1.bf16.msra.mxu0 %v1370
      %1392 = vmatprep.subr.bf16.mxu0 0
      %1393 = vmatpush1.bf16.msra.mxu0 %v1371
      %1394 = vmatprep.subr.bf16.mxu0 0
      %1395 = vmatpush1.bf16.msra.mxu0 %v1372
      %1396 = vmatprep.subr.bf16.mxu0 0
      %1397 = vmatpush1.bf16.msra.mxu0 %v1373
      %1398 = vmatprep.subr.bf16.mxu0 0
      %1399 = vmatpush1.bf16.msra.mxu0 0
      %1400 = vmatprep.subr.bf16.mxu0 0
      %1401 = vmatpush1.bf16.msra.mxu0 0
      %1402 = vmatprep.subr.bf16.mxu0 0
      %1403 = vmatpush1.bf16.msra.mxu0 0
      %1404 = vmatprep.subr.bf16.mxu0 0
      %1405 = vmatpush1.bf16.msra.mxu0 0
      %1406 = vmatprep.subr.bf16.mxu0 0
      %1407 = vmatpush1.bf16.msra.mxu0 0
      %1408 = vmatprep.subr.bf16.mxu0 0
      %1409 = vmatpush1.bf16.msra.mxu0 0
      %1410 = vmatprep.subr.bf16.mxu0 0
      %1411 = vmatpush1.bf16.msra.mxu0 0
      %1412 = vmatprep.subr.bf16.mxu0 0
      %1413 = vmatpush1.bf16.msra.mxu0 0
      %1414 = vmatprep.mubr.bf16.mxu0 0
      %1415 = vmatmul.mubr.bf16.gmra.mrb[0].mxu0 %v1306
      %v1416 = vpop.f32.mrb[0].mxu0
      %v1417 = vadd.f32 0.0, %v1416
      %v1418 = vpop.f32.mrb[0].mxu0
      %v1419 = vpop.f32.mrb[0].mxu0
      %v1420 = vadd.f32 0.0, %v1419
      %v1421 = vpop.f32.mrb[0].mxu0
      %1422 = vmatprep.mubr.bf16.mxu0 0
      %1423 = vmatmul.mubr.bf16.gmra.mrb[0].mxu0 %v1307
      %v1424 = vpop.f32.mrb[0].mxu0
      %v1425 = vadd.f32 0.0, %v1424
      %v1426 = vpop.f32.mrb[0].mxu0
      %v1427 = vpop.f32.mrb[0].mxu0
      %v1428 = vadd.f32 0.0, %v1427
      %v1429 = vpop.f32.mrb[0].mxu0
      %1430 = vmatprep.mubr.bf16.mxu0 0
      %1431 = vmatmul.mubr.bf16.gmra.mrb[0].mxu0 %v1308
      %v1432 = vpop.f32.mrb[0].mxu0
      %v1433 = vadd.f32 0.0, %v1432
      %v1434 = vpop.f32.mrb[0].mxu0
      %v1435 = vpop.f32.mrb[0].mxu0
      %v1436 = vadd.f32 0.0, %v1435
      %v1437 = vpop.f32.mrb[0].mxu0
      %1438 = vmatprep.mubr.bf16.mxu0 0
      %1439 = vmatmul.mubr.bf16.gmra.mrb[0].mxu0 %v1309
      %v1440 = vpop.f32.mrb[0].mxu0
      %v1441 = vadd.f32 0.0, %v1440
      %v1442 = vpop.f32.mrb[0].mxu0
      %v1443 = vpop.f32.mrb[0].mxu0
      %v1444 = vadd.f32 0.0, %v1443
      %v1445 = vpop.f32.mrb[0].mxu0
      %1446 = vmatprep.mubr.bf16.mxu0 0
      %1447 = vmatmul.mubr.bf16.gmra.mrb[0].mxu0 %v1310
      %v1448 = vpop.f32.mrb[0].mxu0
      %v1449 = vadd.f32 0.0, %v1448
      %v1450 = vpop.f32.mrb[0].mxu0
      %v1451 = vpop.f32.mrb[0].mxu0
      %v1452 = vadd.f32 0.0, %v1451
      %v1453 = vpop.f32.mrb[0].mxu0
      %1454 = vmatprep.mubr.bf16.mxu0 0
      %1455 = vmatmul.mubr.bf16.gmra.mrb[0].mxu0 %v1311
      %v1456 = vpop.f32.mrb[0].mxu0
      %v1457 = vadd.f32 0.0, %v1456
      %v1458 = vpop.f32.mrb[0].mxu0
      %v1459 = vpop.f32.mrb[0].mxu0
      %v1460 = vadd.f32 0.0, %v1459
      %v1461 = vpop.f32.mrb[0].mxu0
      %1462 = vmatprep.mubr.bf16.mxu0 0
      %1463 = vmatmul.mubr.bf16.gmra.mrb[0].mxu0 %v1312
      %v1464 = vpop.f32.mrb[0].mxu0
      %v1465 = vadd.f32 0.0, %v1464
      %v1466 = vpop.f32.mrb[0].mxu0
      %v1467 = vpop.f32.mrb[0].mxu0
      %v1468 = vadd.f32 0.0, %v1467
      %v1469 = vpop.f32.mrb[0].mxu0
      %1470 = vmatprep.mubr.bf16.mxu0 0
      %1471 = vmatmul.mubr.bf16.gmra.mrb[0].mxu0 %v1313
      %v1472 = vpop.f32.mrb[0].mxu0
      %v1473 = vadd.f32 0.0, %v1472
      %v1474 = vpop.f32.mrb[0].mxu0
      %v1475 = vpop.f32.mrb[0].mxu0
      %v1476 = vadd.f32 0.0, %v1475
      %v1477 = vpop.f32.mrb[0].mxu0
      %1478 = vmatprep.mubr.bf16.mxu0 0
      %1479 = vmatmul.mubr.bf16.gmra.mrb[0].mxu0 %v1314
      %v1480 = vpop.f32.mrb[0].mxu0
      %v1481 = vadd.f32 0.0, %v1480
      %v1482 = vpop.f32.mrb[0].mxu0
      %v1483 = vpop.f32.mrb[0].mxu0
      %v1484 = vadd.f32 0.0, %v1483
      %v1485 = vpop.f32.mrb[0].mxu0
      %1486 = vmatprep.mubr.bf16.mxu0 0
      %1487 = vmatmul.mubr.bf16.gmra.mrb[0].mxu0 %v1315
      %v1488 = vpop.f32.mrb[0].mxu0
      %v1489 = vadd.f32 0.0, %v1488
      %v1490 = vpop.f32.mrb[0].mxu0
      %v1491 = vpop.f32.mrb[0].mxu0
      %v1492 = vadd.f32 0.0, %v1491
      %v1493 = vpop.f32.mrb[0].mxu0
      %1494 = vmatprep.mubr.bf16.mxu0 0
      %1495 = vmatmul.mubr.bf16.gmra.mrb[0].mxu0 %v1316
      %v1496 = vpop.f32.mrb[0].mxu0
      %v1497 = vadd.f32 0.0, %v1496
      %v1498 = vpop.f32.mrb[0].mxu0
      %v1499 = vpop.f32.mrb[0].mxu0
      %v1500 = vadd.f32 0.0, %v1499
      %v1501 = vpop.f32.mrb[0].mxu0
      %1502 = vmatprep.mubr.bf16.mxu0 0
      %1503 = vmatmul.mubr.bf16.gmra.mrb[0].mxu0 %v1317
      %v1504 = vpop.f32.mrb[0].mxu0
      %v1505 = vadd.f32 0.0, %v1504
      %v1506 = vpop.f32.mrb[0].mxu0
      %v1507 = vpop.f32.mrb[0].mxu0
      %v1508 = vadd.f32 0.0, %v1507
      %v1509 = vpop.f32.mrb[0].mxu0
      %1510 = vmatprep.mubr.bf16.mxu0 0
      %1511 = vmatmul.mubr.bf16.gmra.mrb[0].mxu0 %v1318
      %v1512 = vpop.f32.mrb[0].mxu0
      %v1513 = vadd.f32 0.0, %v1512
      %v1514 = vpop.f32.mrb[0].mxu0
      %v1515 = vpop.f32.mrb[0].mxu0
      %v1516 = vadd.f32 0.0, %v1515
      %v1517 = vpop.f32.mrb[0].mxu0
      %1518 = vmatprep.mubr.bf16.mxu0 0
      %1519 = vmatmul.mubr.bf16.gmra.mrb[0].mxu0 %v1319
      %v1520 = vpop.f32.mrb[0].mxu0
      %v1521 = vadd.f32 0.0, %v1520
      %v1522 = vpop.f32.mrb[0].mxu0
      %v1523 = vpop.f32.mrb[0].mxu0
      %v1524 = vadd.f32 0.0, %v1523
      %v1525 = vpop.f32.mrb[0].mxu0
      %1526 = vdwg.mxu0
      %v1527 = vadd.f32 %v1177, %v1417
      %v1528 = vadd.f32 %v1178, %v1420
      %v1529 = vadd.f32 %v1179, %v1425
      %v1530 = vadd.f32 %v1180, %v1428
      %v1531 = vadd.f32 %v1181, %v1433
      %v1532 = vadd.f32 %v1182, %v1436
      %v1533 = vadd.f32 %v1183, %v1441
      %v1534 = vadd.f32 %v1184, %v1444
      %v1535 = vadd.f32 %v1185, %v1449
      %v1536 = vadd.f32 %v1186, %v1452
      %v1537 = vadd.f32 %v1187, %v1457
      %v1538 = vadd.f32 %v1188, %v1460
      %v1539 = vadd.f32 %v1189, %v1465
      %v1540 = vadd.f32 %v1190, %v1468
      %v1541 = vadd.f32 %v1191, %v1473
      %v1542 = vadd.f32 %v1192, %v1476
      %v1543 = vadd.f32 %v1193, %v1481
      %v1544 = vadd.f32 %v1194, %v1484
      %v1545 = vadd.f32 %v1195, %v1489
      %v1546 = vadd.f32 %v1196, %v1492
      %v1547 = vadd.f32 %v1197, %v1497
      %v1548 = vadd.f32 %v1198, %v1500
      %v1549 = vadd.f32 %v1199, %v1505
      %v1550 = vadd.f32 %v1200, %v1508
      %v1551 = vadd.f32 %v1201, %v1513
      %v1552 = vadd.f32 %v1202, %v1516
      %v1553 = vadd.f32 %v1203, %v1521
      %v1554 = vadd.f32 %v1204, %v1524
      %v1555 = vld [vmem:[%s246 + $0x8] sm:$0xf]
      %v1556 = vld [vmem:[%s246 + $0xc] sm:$0xf]
      %v1557 = vld [vmem:[%s246 + $0x10] sm:$0xf]
      %v1558 = vld [vmem:[%s246 + $0x14] sm:$0xf]
      %v1559 = vld [vmem:[%s246 + $0x18] sm:$0xf]
      %v1560 = vld [vmem:[%s246 + $0x1c] sm:$0xf]
      %v1561 = vld [vmem:[%s246 + $0x20] sm:$0xf]
      %v1562 = vld [vmem:[%s246 + $0x24] sm:$0xf]
      %v1563 = vld [vmem:[%s246 + $0x28] sm:$0xf]
      %v1564 = vld [vmem:[%s246 + $0x2c] sm:$0xf]
      %v1565 = vld [vmem:[%s246 + $0x30] sm:$0xf]
      %v1566 = vld [vmem:[%s246 + $0x34] sm:$0xf]
      %v1567 = vld [vmem:[%s246 + $0x38] sm:$0xf]
      %v1568 = vld [vmem:[%s246 + $0x3c] sm:$0xf]
      %v1569 = vld [vmem:[%s246 + $0x40] sm:$0xf]
      %v1570 = vld [vmem:[%s246 + $0x44] sm:$0xf]
      %v1571 = vld [vmem:[%s246 + $0x48] sm:$0xf]
      %v1572 = vld [vmem:[%s246 + $0x4c] sm:$0xf]
      %v1573 = vld [vmem:[%s246 + $0x50] sm:$0xf]
      %v1574 = vld [vmem:[%s246 + $0x54] sm:$0xf]
      %v1575 = vld [vmem:[%s246 + $0x58] sm:$0xf]
      %v1576 = vld [vmem:[%s246 + $0x5c] sm:$0xf]
      %v1577 = vld [vmem:[%s246 + $0x60] sm:$0xf]
      %v1578 = vld [vmem:[%s246 + $0x64] sm:$0xf]
      %v1579 = vld [vmem:[%s246 + $0x68] sm:$0xf]
      %v1580 = vld [vmem:[%s246 + $0x6c] sm:$0xf]
      %v1581 = vld [vmem:[%s246 + $0x70] sm:$0xf]
      %v1582 = vld [vmem:[%s246 + $0x74] sm:$0xf]
      %v1583 = vld [vmem:[%s246 + $0x78] sm:$0x1]
      %s1584 = scalar_lea.vmem %s1, 256
      %v1585 = vld [vmem:[%s1584] sm:$0xf]
      %v1586 = vld [vmem:[%s1584 + $0x4] sm:$0xf]
      %v1587 = vld [vmem:[%s1584 + $0x8] sm:$0xf]
      %v1588 = vld [vmem:[%s1584 + $0xc] sm:$0xf]
      %v1589 = vld [vmem:[%s1584 + $0x10] sm:$0xf]
      %v1590 = vld [vmem:[%s1584 + $0x14] sm:$0xf]
      %v1591 = vld [vmem:[%s1584 + $0x18] sm:$0xf]
      %v1592 = vld [vmem:[%s1584 + $0x1c] sm:$0xf]
      %v1593 = vld [vmem:[%s1584 + $0x20] sm:$0xf]
      %v1594 = vld [vmem:[%s1584 + $0x24] sm:$0xf]
      %v1595 = vld [vmem:[%s1584 + $0x28] sm:$0xf]
      %v1596 = vld [vmem:[%s1584 + $0x2c] sm:$0xf]
      %v1597 = vld [vmem:[%s1584 + $0x30] sm:$0xf]
      %v1598 = vld [vmem:[%s1584 + $0x34] sm:$0xf]
      %v1599 = vld [vmem:[%s1584 + $0x38] sm:$0xf]
      %v1600 = vld [vmem:[%s1584 + $0x3c] sm:$0xf]
      %v1630 = vunpack.c.l.b16 %v1555
      %v1631 = vunpack.c.l.b16 %v1556
      %v1632 = vunpack.c.l.b16 %v1557
      %v1633 = vunpack.c.l.b16 %v1558
      %v1634 = vunpack.c.l.b16 %v1559
      %v1635 = vunpack.c.l.b16 %v1560
      %v1636 = vunpack.c.l.b16 %v1561
      %v1637 = vunpack.c.l.b16 %v1562
      %v1638 = vunpack.c.l.b16 %v1563
      %v1639 = vunpack.c.l.b16 %v1564
      %v1640 = vunpack.c.l.b16 %v1565
      %v1641 = vunpack.c.l.b16 %v1566
      %v1642 = vunpack.c.l.b16 %v1567
      %v1643 = vunpack.c.l.b16 %v1568
      %v1644 = vunpack.c.l.b16 %v1569
      %v1645 = vunpack.c.l.b16 %v1570
      %v1646 = vunpack.c.l.b16 %v1571
      %v1647 = vunpack.c.l.b16 %v1572
      %v1648 = vunpack.c.l.b16 %v1573
      %v1649 = vunpack.c.l.b16 %v1574
      %v1650 = vunpack.c.l.b16 %v1575
      %v1651 = vunpack.c.l.b16 %v1576
      %v1652 = vunpack.c.l.b16 %v1577
      %v1653 = vunpack.c.l.b16 %v1578
      %v1654 = vunpack.c.l.b16 %v1579
      %v1655 = vunpack.c.l.b16 %v1580
      %v1656 = vunpack.c.l.b16 %v1581
      %v1657 = vunpack.c.l.b16 %v1582
      %v1658 = vunpack.c.l.b16 %v1583
      %v1659 = vpack.c.b16 %v1631, %v1630
      %v1660 = vpack.c.b16 %v1633, %v1632
      %v1661 = vpack.c.b16 %v1635, %v1634
      %v1662 = vpack.c.b16 %v1637, %v1636
      %v1663 = vpack.c.b16 %v1639, %v1638
      %v1664 = vpack.c.b16 %v1641, %v1640
      %v1665 = vpack.c.b16 %v1643, %v1642
      %v1666 = vpack.c.b16 %v1645, %v1644
      %v1667 = vpack.c.b16 %v1647, %v1646
      %v1668 = vpack.c.b16 %v1649, %v1648
      %v1669 = vpack.c.b16 %v1651, %v1650
      %v1670 = vpack.c.b16 %v1653, %v1652
      %v1671 = vpack.c.b16 %v1655, %v1654
      %v1672 = vpack.c.b16 %v1657, %v1656
      %v1673 = vpack.c.b16 %v1658, %v1658
      %v1675 = vshrl.u32 %v1659, 16
      %v1677 = vshll.u32 %v1659, 16
      %v1679 = vrot.slane %v1677, 1
      %v1680 = vor.u32 %v1675, %v1679
      %v1682 = vshll.u32 %v1660, 16
      %v1684 = vrot.slane %v1682, 1
      %v1685 = vsel %vm388, %v1680, %v1684
      %v1686 = vshrl.u32 %v1660, 16
      %v1688 = vor.u32 %v1686, %v1684
      %v1690 = vshll.u32 %v1661, 16
      %v1692 = vrot.slane %v1690, 1
      %v1693 = vsel %vm388, %v1688, %v1692
      %v1694 = vshrl.u32 %v1661, 16
      %v1696 = vor.u32 %v1694, %v1692
      %v1698 = vshll.u32 %v1662, 16
      %v1700 = vrot.slane %v1698, 1
      %v1701 = vsel %vm388, %v1696, %v1700
      %v1702 = vshrl.u32 %v1662, 16
      %v1704 = vor.u32 %v1702, %v1700
      %v1706 = vshll.u32 %v1663, 16
      %v1708 = vrot.slane %v1706, 1
      %v1709 = vsel %vm388, %v1704, %v1708
      %v1710 = vshrl.u32 %v1663, 16
      %v1712 = vor.u32 %v1710, %v1708
      %v1714 = vshll.u32 %v1664, 16
      %v1716 = vrot.slane %v1714, 1
      %v1717 = vsel %vm388, %v1712, %v1716
      %v1718 = vshrl.u32 %v1664, 16
      %v1720 = vor.u32 %v1718, %v1716
      %v1722 = vshll.u32 %v1665, 16
      %v1724 = vrot.slane %v1722, 1
      %v1725 = vsel %vm388, %v1720, %v1724
      %v1726 = vshrl.u32 %v1665, 16
      %v1728 = vor.u32 %v1726, %v1724
      %v1730 = vshll.u32 %v1666, 16
      %v1732 = vrot.slane %v1730, 1
      %v1733 = vsel %vm388, %v1728, %v1732
      %v1734 = vshrl.u32 %v1666, 16
      %v1736 = vor.u32 %v1734, %v1732
      %v1738 = vshll.u32 %v1667, 16
      %v1740 = vrot.slane %v1738, 1
      %v1741 = vsel %vm388, %v1736, %v1740
      %v1742 = vshrl.u32 %v1667, 16
      %v1744 = vor.u32 %v1742, %v1740
      %v1746 = vshll.u32 %v1668, 16
      %v1748 = vrot.slane %v1746, 1
      %v1749 = vsel %vm388, %v1744, %v1748
      %v1750 = vshrl.u32 %v1668, 16
      %v1752 = vor.u32 %v1750, %v1748
      %v1754 = vshll.u32 %v1669, 16
      %v1756 = vrot.slane %v1754, 1
      %v1757 = vsel %vm388, %v1752, %v1756
      %v1758 = vshrl.u32 %v1669, 16
      %v1760 = vor.u32 %v1758, %v1756
      %v1762 = vshll.u32 %v1670, 16
      %v1764 = vrot.slane %v1762, 1
      %v1765 = vsel %vm388, %v1760, %v1764
      %v1766 = vshrl.u32 %v1670, 16
      %v1768 = vor.u32 %v1766, %v1764
      %v1770 = vshll.u32 %v1671, 16
      %v1772 = vrot.slane %v1770, 1
      %v1773 = vsel %vm388, %v1768, %v1772
      %v1774 = vshrl.u32 %v1671, 16
      %v1776 = vor.u32 %v1774, %v1772
      %v1778 = vshll.u32 %v1672, 16
      %v1780 = vrot.slane %v1778, 1
      %v1781 = vsel %vm388, %v1776, %v1780
      %v1782 = vshrl.u32 %v1672, 16
      %v1784 = vor.u32 %v1782, %v1780
      %v1786 = vshll.u32 %v1673, 16
      %v1788 = vrot.slane %v1786, 1
      %v1789 = vsel %vm388, %v1784, %v1788
      %v1820 = vunpack.c.l.b16 %v1585
      %v1821 = vunpack.c.l.b16 %v1586
      %v1822 = vunpack.c.l.b16 %v1587
      %v1823 = vunpack.c.l.b16 %v1588
      %v1824 = vunpack.c.l.b16 %v1589
      %v1825 = vunpack.c.l.b16 %v1590
      %v1826 = vunpack.c.l.b16 %v1591
      %v1827 = vunpack.c.l.b16 %v1592
      %v1828 = vunpack.c.l.b16 %v1593
      %v1829 = vunpack.c.l.b16 %v1594
      %v1830 = vunpack.c.l.b16 %v1595
      %v1831 = vunpack.c.l.b16 %v1596
      %v1832 = vunpack.c.l.b16 %v1597
      %v1833 = vunpack.c.l.b16 %v1598
      %v1834 = vunpack.c.l.b16 %v1599
      %v1835 = vunpack.c.l.b16 %v1600
      %v1836 = vpack.c.b16 %v1821, %v1820
      %v1837 = vpack.c.b16 %v1823, %v1822
      %v1838 = vpack.c.b16 %v1825, %v1824
      %v1839 = vpack.c.b16 %v1827, %v1826
      %v1840 = vpack.c.b16 %v1829, %v1828
      %v1841 = vpack.c.b16 %v1831, %v1830
      %v1842 = vpack.c.b16 %v1833, %v1832
      %v1843 = vpack.c.b16 %v1835, %v1834
      %1852 = vmatprep.subr.bf16.mxu0 0
      %1853 = vmatpush1.bf16.msra.mxu0 %v1836
      %1854 = vmatprep.subr.bf16.mxu0 0
      %1855 = vmatpush1.bf16.msra.mxu0 %v1837
      %1856 = vmatprep.subr.bf16.mxu0 0
      %1857 = vmatpush1.bf16.msra.mxu0 %v1838
      %1858 = vmatprep.subr.bf16.mxu0 0
      %1859 = vmatpush1.bf16.msra.mxu0 %v1839
      %1860 = vmatprep.subr.bf16.mxu0 0
      %1861 = vmatpush1.bf16.msra.mxu0 %v1840
      %1862 = vmatprep.subr.bf16.mxu0 0
      %1863 = vmatpush1.bf16.msra.mxu0 %v1841
      %1864 = vmatprep.subr.bf16.mxu0 0
      %1865 = vmatpush1.bf16.msra.mxu0 %v1842
      %1866 = vmatprep.subr.bf16.mxu0 0
      %1867 = vmatpush1.bf16.msra.mxu0 %v1843
      %1868 = vmatprep.subr.bf16.mxu0 0
      %1869 = vmatpush1.bf16.msra.mxu0 0
      %1870 = vmatprep.subr.bf16.mxu0 0
      %1871 = vmatpush1.bf16.msra.mxu0 0
      %1872 = vmatprep.subr.bf16.mxu0 0
      %1873 = vmatpush1.bf16.msra.mxu0 0
      %1874 = vmatprep.subr.bf16.mxu0 0
      %1875 = vmatpush1.bf16.msra.mxu0 0
      %1876 = vmatprep.subr.bf16.mxu0 0
      %1877 = vmatpush1.bf16.msra.mxu0 0
      %1878 = vmatprep.subr.bf16.mxu0 0
      %1879 = vmatpush1.bf16.msra.mxu0 0
      %1880 = vmatprep.subr.bf16.mxu0 0
      %1881 = vmatpush1.bf16.msra.mxu0 0
      %1882 = vmatprep.subr.bf16.mxu0 0
      %1883 = vmatpush1.bf16.msra.mxu0 0
      %1884 = vmatprep.mubr.bf16.mxu0 0
      %1885 = vmatmul.mubr.bf16.gmra.mrb[0].mxu0 %v1685
      %v1886 = vpop.f32.mrb[0].mxu0
      %v1887 = vadd.f32 0.0, %v1886
      %v1888 = vpop.f32.mrb[0].mxu0
      %v1889 = vpop.f32.mrb[0].mxu0
      %v1890 = vadd.f32 0.0, %v1889
      %v1891 = vpop.f32.mrb[0].mxu0
      %1892 = vmatprep.mubr.bf16.mxu0 0
      %1893 = vmatmul.mubr.bf16.gmra.mrb[0].mxu0 %v1693
      %v1894 = vpop.f32.mrb[0].mxu0
      %v1895 = vadd.f32 0.0, %v1894
      %v1896 = vpop.f32.mrb[0].mxu0
      %v1897 = vpop.f32.mrb[0].mxu0
      %v1898 = vadd.f32 0.0, %v1897
      %v1899 = vpop.f32.mrb[0].mxu0
      %1900 = vmatprep.mubr.bf16.mxu0 0
      %1901 = vmatmul.mubr.bf16.gmra.mrb[0].mxu0 %v1701
      %v1902 = vpop.f32.mrb[0].mxu0
      %v1903 = vadd.f32 0.0, %v1902
      %v1904 = vpop.f32.mrb[0].mxu0
      %v1905 = vpop.f32.mrb[0].mxu0
      %v1906 = vadd.f32 0.0, %v1905
      %v1907 = vpop.f32.mrb[0].mxu0
      %1908 = vmatprep.mubr.bf16.mxu0 0
      %1909 = vmatmul.mubr.bf16.gmra.mrb[0].mxu0 %v1709
      %v1910 = vpop.f32.mrb[0].mxu0
      %v1911 = vadd.f32 0.0, %v1910
      %v1912 = vpop.f32.mrb[0].mxu0
      %v1913 = vpop.f32.mrb[0].mxu0
      %v1914 = vadd.f32 0.0, %v1913
      %v1915 = vpop.f32.mrb[0].mxu0
      %1916 = vmatprep.mubr.bf16.mxu0 0
      %1917 = vmatmul.mubr.bf16.gmra.mrb[0].mxu0 %v1717
      %v1918 = vpop.f32.mrb[0].mxu0
      %v1919 = vadd.f32 0.0, %v1918
      %v1920 = vpop.f32.mrb[0].mxu0
      %v1921 = vpop.f32.mrb[0].mxu0
      %v1922 = vadd.f32 0.0, %v1921
      %v1923 = vpop.f32.mrb[0].mxu0
      %1924 = vmatprep.mubr.bf16.mxu0 0
      %1925 = vmatmul.mubr.bf16.gmra.mrb[0].mxu0 %v1725
      %v1926 = vpop.f32.mrb[0].mxu0
      %v1927 = vadd.f32 0.0, %v1926
      %v1928 = vpop.f32.mrb[0].mxu0
      %v1929 = vpop.f32.mrb[0].mxu0
      %v1930 = vadd.f32 0.0, %v1929
      %v1931 = vpop.f32.mrb[0].mxu0
      %1932 = vmatprep.mubr.bf16.mxu0 0
      %1933 = vmatmul.mubr.bf16.gmra.mrb[0].mxu0 %v1733
      %v1934 = vpop.f32.mrb[0].mxu0
      %v1935 = vadd.f32 0.0, %v1934
      %v1936 = vpop.f32.mrb[0].mxu0
      %v1937 = vpop.f32.mrb[0].mxu0
      %v1938 = vadd.f32 0.0, %v1937
      %v1939 = vpop.f32.mrb[0].mxu0
      %1940 = vmatprep.mubr.bf16.mxu0 0
      %1941 = vmatmul.mubr.bf16.gmra.mrb[0].mxu0 %v1741
      %v1942 = vpop.f32.mrb[0].mxu0
      %v1943 = vadd.f32 0.0, %v1942
      %v1944 = vpop.f32.mrb[0].mxu0
      %v1945 = vpop.f32.mrb[0].mxu0
      %v1946 = vadd.f32 0.0, %v1945
      %v1947 = vpop.f32.mrb[0].mxu0
      %1948 = vmatprep.mubr.bf16.mxu0 0
      %1949 = vmatmul.mubr.bf16.gmra.mrb[0].mxu0 %v1749
      %v1950 = vpop.f32.mrb[0].mxu0
      %v1951 = vadd.f32 0.0, %v1950
      %v1952 = vpop.f32.mrb[0].mxu0
      %v1953 = vpop.f32.mrb[0].mxu0
      %v1954 = vadd.f32 0.0, %v1953
      %v1955 = vpop.f32.mrb[0].mxu0
      %1956 = vmatprep.mubr.bf16.mxu0 0
      %1957 = vmatmul.mubr.bf16.gmra.mrb[0].mxu0 %v1757
      %v1958 = vpop.f32.mrb[0].mxu0
      %v1959 = vadd.f32 0.0, %v1958
      %v1960 = vpop.f32.mrb[0].mxu0
      %v1961 = vpop.f32.mrb[0].mxu0
      %v1962 = vadd.f32 0.0, %v1961
      %v1963 = vpop.f32.mrb[0].mxu0
      %1964 = vmatprep.mubr.bf16.mxu0 0
      %1965 = vmatmul.mubr.bf16.gmra.mrb[0].mxu0 %v1765
      %v1966 = vpop.f32.mrb[0].mxu0
      %v1967 = vadd.f32 0.0, %v1966
      %v1968 = vpop.f32.mrb[0].mxu0
      %v1969 = vpop.f32.mrb[0].mxu0
      %v1970 = vadd.f32 0.0, %v1969
      %v1971 = vpop.f32.mrb[0].mxu0
      %1972 = vmatprep.mubr.bf16.mxu0 0
      %1973 = vmatmul.mubr.bf16.gmra.mrb[0].mxu0 %v1773
      %v1974 = vpop.f32.mrb[0].mxu0
      %v1975 = vadd.f32 0.0, %v1974
      %v1976 = vpop.f32.mrb[0].mxu0
      %v1977 = vpop.f32.mrb[0].mxu0
      %v1978 = vadd.f32 0.0, %v1977
      %v1979 = vpop.f32.mrb[0].mxu0
      %1980 = vmatprep.mubr.bf16.mxu0 0
      %1981 = vmatmul.mubr.bf16.gmra.mrb[0].mxu0 %v1781
      %v1982 = vpop.f32.mrb[0].mxu0
      %v1983 = vadd.f32 0.0, %v1982
      %v1984 = vpop.f32.mrb[0].mxu0
      %v1985 = vpop.f32.mrb[0].mxu0
      %v1986 = vadd.f32 0.0, %v1985
      %v1987 = vpop.f32.mrb[0].mxu0
      %1988 = vmatprep.mubr.bf16.mxu0 0
      %1989 = vmatmul.mubr.bf16.gmra.mrb[0].mxu0 %v1789
      %v1990 = vpop.f32.mrb[0].mxu0
      %v1991 = vadd.f32 0.0, %v1990
      %v1992 = vpop.f32.mrb[0].mxu0
      %v1993 = vpop.f32.mrb[0].mxu0
      %v1994 = vadd.f32 0.0, %v1993
      %v1995 = vpop.f32.mrb[0].mxu0
      %1996 = vdwg.mxu0
      %v1997 = vadd.f32 %v1527, %v1887
      %v1998 = vadd.f32 %v1528, %v1890
      %v1999 = vadd.f32 %v1529, %v1895
      %v2000 = vadd.f32 %v1530, %v1898
      %v2001 = vadd.f32 %v1531, %v1903
      %v2002 = vadd.f32 %v1532, %v1906
      %v2003 = vadd.f32 %v1533, %v1911
      %v2004 = vadd.f32 %v1534, %v1914
      %v2005 = vadd.f32 %v1535, %v1919
      %v2006 = vadd.f32 %v1536, %v1922
      %v2007 = vadd.f32 %v1537, %v1927
      %v2008 = vadd.f32 %v1538, %v1930
      %v2009 = vadd.f32 %v1539, %v1935
      %v2010 = vadd.f32 %v1540, %v1938
      %v2011 = vadd.f32 %v1541, %v1943
      %v2012 = vadd.f32 %v1542, %v1946
      %v2013 = vadd.f32 %v1543, %v1951
      %v2014 = vadd.f32 %v1544, %v1954
      %v2015 = vadd.f32 %v1545, %v1959
      %v2016 = vadd.f32 %v1546, %v1962
      %v2017 = vadd.f32 %v1547, %v1967
      %v2018 = vadd.f32 %v1548, %v1970
      %v2019 = vadd.f32 %v1549, %v1975
      %v2020 = vadd.f32 %v1550, %v1978
      %v2021 = vadd.f32 %v1551, %v1983
      %v2022 = vadd.f32 %v1552, %v1986
      %v2023 = vadd.f32 %v1553, %v1991
      %v2024 = vadd.f32 %v1554, %v1994
      %v2025 = vld [vmem:[%s246 + $0x8] sm:$0xe]
      %s2026 = scalar_lea.vmem %s1, 320
      %v2027 = vld [vmem:[%s2026] sm:$0xf]
      %v2028 = vld [vmem:[%s2026 + $0x4] sm:$0xf]
      %v2029 = vld [vmem:[%s2026 + $0x8] sm:$0xf]
      %v2030 = vld [vmem:[%s2026 + $0xc] sm:$0xf]
      %v2031 = vld [vmem:[%s2026 + $0x10] sm:$0xf]
      %v2032 = vld [vmem:[%s2026 + $0x14] sm:$0xf]
      %v2033 = vld [vmem:[%s2026 + $0x18] sm:$0xf]
      %v2034 = vld [vmem:[%s2026 + $0x1c] sm:$0xf]
      %v2035 = vld [vmem:[%s2026 + $0x20] sm:$0xf]
      %v2036 = vld [vmem:[%s2026 + $0x24] sm:$0xf]
      %v2037 = vld [vmem:[%s2026 + $0x28] sm:$0xf]
      %v2038 = vld [vmem:[%s2026 + $0x2c] sm:$0xf]
      %v2039 = vld [vmem:[%s2026 + $0x30] sm:$0xf]
      %v2040 = vld [vmem:[%s2026 + $0x34] sm:$0xf]
      %v2041 = vld [vmem:[%s2026 + $0x38] sm:$0xf]
      %v2042 = vld [vmem:[%s2026 + $0x3c] sm:$0xf]
      %v2044 = vunpack.c.l.b16 %v2025
      %v2045 = vpack.c.b16 %v1631, %v2044
      %v2046 = vrot.slane %v2045, 1
      %v2047 = vrot.slane %v1660, 1
      %v2048 = vsel %vm940, %v2046, %v2047
      %v2049 = vrot.slane %v1661, 1
      %v2050 = vsel %vm940, %v2047, %v2049
      %v2051 = vrot.slane %v1662, 1
      %v2052 = vsel %vm940, %v2049, %v2051
      %v2053 = vrot.slane %v1663, 1
      %v2054 = vsel %vm940, %v2051, %v2053
      %v2055 = vrot.slane %v1664, 1
      %v2056 = vsel %vm940, %v2053, %v2055
      %v2057 = vrot.slane %v1665, 1
      %v2058 = vsel %vm940, %v2055, %v2057
      %v2059 = vrot.slane %v1666, 1
      %v2060 = vsel %vm940, %v2057, %v2059
      %v2061 = vrot.slane %v1667, 1
      %v2062 = vsel %vm940, %v2059, %v2061
      %v2063 = vrot.slane %v1668, 1
      %v2064 = vsel %vm940, %v2061, %v2063
      %v2065 = vrot.slane %v1669, 1
      %v2066 = vsel %vm940, %v2063, %v2065
      %v2067 = vrot.slane %v1670, 1
      %v2068 = vsel %vm940, %v2065, %v2067
      %v2069 = vrot.slane %v1671, 1
      %v2070 = vsel %vm940, %v2067, %v2069
      %v2071 = vrot.slane %v1672, 1
      %v2072 = vsel %vm940, %v2069, %v2071
      %v2073 = vrot.slane %v1673, 1
      %v2074 = vsel %vm940, %v2071, %v2073
      %v2105 = vunpack.c.l.b16 %v2027
      %v2106 = vunpack.c.l.b16 %v2028
      %v2107 = vunpack.c.l.b16 %v2029
      %v2108 = vunpack.c.l.b16 %v2030
      %v2109 = vunpack.c.l.b16 %v2031
      %v2110 = vunpack.c.l.b16 %v2032
      %v2111 = vunpack.c.l.b16 %v2033
      %v2112 = vunpack.c.l.b16 %v2034
      %v2113 = vunpack.c.l.b16 %v2035
      %v2114 = vunpack.c.l.b16 %v2036
      %v2115 = vunpack.c.l.b16 %v2037
      %v2116 = vunpack.c.l.b16 %v2038
      %v2117 = vunpack.c.l.b16 %v2039
      %v2118 = vunpack.c.l.b16 %v2040
      %v2119 = vunpack.c.l.b16 %v2041
      %v2120 = vunpack.c.l.b16 %v2042
      %v2121 = vpack.c.b16 %v2106, %v2105
      %v2122 = vpack.c.b16 %v2108, %v2107
      %v2123 = vpack.c.b16 %v2110, %v2109
      %v2124 = vpack.c.b16 %v2112, %v2111
      %v2125 = vpack.c.b16 %v2114, %v2113
      %v2126 = vpack.c.b16 %v2116, %v2115
      %v2127 = vpack.c.b16 %v2118, %v2117
      %v2128 = vpack.c.b16 %v2120, %v2119
      %2137 = vmatprep.subr.bf16.mxu0 0
      %2138 = vmatpush1.bf16.msra.mxu0 %v2121
      %2139 = vmatprep.subr.bf16.mxu0 0
      %2140 = vmatpush1.bf16.msra.mxu0 %v2122
      %2141 = vmatprep.subr.bf16.mxu0 0
      %2142 = vmatpush1.bf16.msra.mxu0 %v2123
      %2143 = vmatprep.subr.bf16.mxu0 0
      %2144 = vmatpush1.bf16.msra.mxu0 %v2124
      %2145 = vmatprep.subr.bf16.mxu0 0
      %2146 = vmatpush1.bf16.msra.mxu0 %v2125
      %2147 = vmatprep.subr.bf16.mxu0 0
      %2148 = vmatpush1.bf16.msra.mxu0 %v2126
      %2149 = vmatprep.subr.bf16.mxu0 0
      %2150 = vmatpush1.bf16.msra.mxu0 %v2127
      %2151 = vmatprep.subr.bf16.mxu0 0
      %2152 = vmatpush1.bf16.msra.mxu0 %v2128
      %2153 = vmatprep.subr.bf16.mxu0 0
      %2154 = vmatpush1.bf16.msra.mxu0 0
      %2155 = vmatprep.subr.bf16.mxu0 0
      %2156 = vmatpush1.bf16.msra.mxu0 0
      %2157 = vmatprep.subr.bf16.mxu0 0
      %2158 = vmatpush1.bf16.msra.mxu0 0
      %2159 = vmatprep.subr.bf16.mxu0 0
      %2160 = vmatpush1.bf16.msra.mxu0 0
      %2161 = vmatprep.subr.bf16.mxu0 0
      %2162 = vmatpush1.bf16.msra.mxu0 0
      %2163 = vmatprep.subr.bf16.mxu0 0
      %2164 = vmatpush1.bf16.msra.mxu0 0
      %2165 = vmatprep.subr.bf16.mxu0 0
      %2166 = vmatpush1.bf16.msra.mxu0 0
      %2167 = vmatprep.subr.bf16.mxu0 0
      %2168 = vmatpush1.bf16.msra.mxu0 0
      %2169 = vmatprep.mubr.bf16.mxu0 0
      %2170 = vmatmul.mubr.bf16.gmra.mrb[0].mxu0 %v2048
      %v2171 = vpop.f32.mrb[0].mxu0
      %v2172 = vadd.f32 0.0, %v2171
      %v2173 = vpop.f32.mrb[0].mxu0
      %v2174 = vpop.f32.mrb[0].mxu0
      %v2175 = vadd.f32 0.0, %v2174
      %v2176 = vpop.f32.mrb[0].mxu0
      %2177 = vmatprep.mubr.bf16.mxu0 0
      %2178 = vmatmul.mubr.bf16.gmra.mrb[0].mxu0 %v2050
      %v2179 = vpop.f32.mrb[0].mxu0
      %v2180 = vadd.f32 0.0, %v2179
      %v2181 = vpop.f32.mrb[0].mxu0
      %v2182 = vpop.f32.mrb[0].mxu0
      %v2183 = vadd.f32 0.0, %v2182
      %v2184 = vpop.f32.mrb[0].mxu0
      %2185 = vmatprep.mubr.bf16.mxu0 0
      %2186 = vmatmul.mubr.bf16.gmra.mrb[0].mxu0 %v2052
      %v2187 = vpop.f32.mrb[0].mxu0
      %v2188 = vadd.f32 0.0, %v2187
      %v2189 = vpop.f32.mrb[0].mxu0
      %v2190 = vpop.f32.mrb[0].mxu0
      %v2191 = vadd.f32 0.0, %v2190
      %v2192 = vpop.f32.mrb[0].mxu0
      %2193 = vmatprep.mubr.bf16.mxu0 0
      %2194 = vmatmul.mubr.bf16.gmra.mrb[0].mxu0 %v2054
      %v2195 = vpop.f32.mrb[0].mxu0
      %v2196 = vadd.f32 0.0, %v2195
      %v2197 = vpop.f32.mrb[0].mxu0
      %v2198 = vpop.f32.mrb[0].mxu0
      %v2199 = vadd.f32 0.0, %v2198
      %v2200 = vpop.f32.mrb[0].mxu0
      %2201 = vmatprep.mubr.bf16.mxu0 0
      %2202 = vmatmul.mubr.bf16.gmra.mrb[0].mxu0 %v2056
      %v2203 = vpop.f32.mrb[0].mxu0
      %v2204 = vadd.f32 0.0, %v2203
      %v2205 = vpop.f32.mrb[0].mxu0
      %v2206 = vpop.f32.mrb[0].mxu0
      %v2207 = vadd.f32 0.0, %v2206
      %v2208 = vpop.f32.mrb[0].mxu0
      %2209 = vmatprep.mubr.bf16.mxu0 0
      %2210 = vmatmul.mubr.bf16.gmra.mrb[0].mxu0 %v2058
      %v2211 = vpop.f32.mrb[0].mxu0
      %v2212 = vadd.f32 0.0, %v2211
      %v2213 = vpop.f32.mrb[0].mxu0
      %v2214 = vpop.f32.mrb[0].mxu0
      %v2215 = vadd.f32 0.0, %v2214
      %v2216 = vpop.f32.mrb[0].mxu0
      %2217 = vmatprep.mubr.bf16.mxu0 0
      %2218 = vmatmul.mubr.bf16.gmra.mrb[0].mxu0 %v2060
      %v2219 = vpop.f32.mrb[0].mxu0
      %v2220 = vadd.f32 0.0, %v2219
      %v2221 = vpop.f32.mrb[0].mxu0
      %v2222 = vpop.f32.mrb[0].mxu0
      %v2223 = vadd.f32 0.0, %v2222
      %v2224 = vpop.f32.mrb[0].mxu0
      %2225 = vmatprep.mubr.bf16.mxu0 0
      %2226 = vmatmul.mubr.bf16.gmra.mrb[0].mxu0 %v2062
      %v2227 = vpop.f32.mrb[0].mxu0
      %v2228 = vadd.f32 0.0, %v2227
      %v2229 = vpop.f32.mrb[0].mxu0
      %v2230 = vpop.f32.mrb[0].mxu0
      %v2231 = vadd.f32 0.0, %v2230
      %v2232 = vpop.f32.mrb[0].mxu0
      %2233 = vmatprep.mubr.bf16.mxu0 0
      %2234 = vmatmul.mubr.bf16.gmra.mrb[0].mxu0 %v2064
      %v2235 = vpop.f32.mrb[0].mxu0
      %v2236 = vadd.f32 0.0, %v2235
      %v2237 = vpop.f32.mrb[0].mxu0
      %v2238 = vpop.f32.mrb[0].mxu0
      %v2239 = vadd.f32 0.0, %v2238
      %v2240 = vpop.f32.mrb[0].mxu0
      %2241 = vmatprep.mubr.bf16.mxu0 0
      %2242 = vmatmul.mubr.bf16.gmra.mrb[0].mxu0 %v2066
      %v2243 = vpop.f32.mrb[0].mxu0
      %v2244 = vadd.f32 0.0, %v2243
      %v2245 = vpop.f32.mrb[0].mxu0
      %v2246 = vpop.f32.mrb[0].mxu0
      %v2247 = vadd.f32 0.0, %v2246
      %v2248 = vpop.f32.mrb[0].mxu0
      %2249 = vmatprep.mubr.bf16.mxu0 0
      %2250 = vmatmul.mubr.bf16.gmra.mrb[0].mxu0 %v2068
      %v2251 = vpop.f32.mrb[0].mxu0
      %v2252 = vadd.f32 0.0, %v2251
      %v2253 = vpop.f32.mrb[0].mxu0
      %v2254 = vpop.f32.mrb[0].mxu0
      %v2255 = vadd.f32 0.0, %v2254
      %v2256 = vpop.f32.mrb[0].mxu0
      %2257 = vmatprep.mubr.bf16.mxu0 0
      %2258 = vmatmul.mubr.bf16.gmra.mrb[0].mxu0 %v2070
      %v2259 = vpop.f32.mrb[0].mxu0
      %v2260 = vadd.f32 0.0, %v2259
      %v2261 = vpop.f32.mrb[0].mxu0
      %v2262 = vpop.f32.mrb[0].mxu0
      %v2263 = vadd.f32 0.0, %v2262
      %v2264 = vpop.f32.mrb[0].mxu0
      %2265 = vmatprep.mubr.bf16.mxu0 0
      %2266 = vmatmul.mubr.bf16.gmra.mrb[0].mxu0 %v2072
      %v2267 = vpop.f32.mrb[0].mxu0
      %v2268 = vadd.f32 0.0, %v2267
      %v2269 = vpop.f32.mrb[0].mxu0
      %v2270 = vpop.f32.mrb[0].mxu0
      %v2271 = vadd.f32 0.0, %v2270
      %v2272 = vpop.f32.mrb[0].mxu0
      %2273 = vmatprep.mubr.bf16.mxu0 0
      %2274 = vmatmul.mubr.bf16.gmra.mrb[0].mxu0 %v2074
      %v2275 = vpop.f32.mrb[0].mxu0
      %v2276 = vadd.f32 0.0, %v2275
      %v2277 = vpop.f32.mrb[0].mxu0
      %v2278 = vpop.f32.mrb[0].mxu0
      %v2279 = vadd.f32 0.0, %v2278
      %v2280 = vpop.f32.mrb[0].mxu0
      %2281 = vdwg.mxu0
      %v2282 = vadd.f32 %v1997, %v2172
      %v2283 = vadd.f32 %v1998, %v2175
      %v2284 = vadd.f32 %v1999, %v2180
      %v2285 = vadd.f32 %v2000, %v2183
      %v2286 = vadd.f32 %v2001, %v2188
      %v2287 = vadd.f32 %v2002, %v2191
      %v2288 = vadd.f32 %v2003, %v2196
      %v2289 = vadd.f32 %v2004, %v2199
      %v2290 = vadd.f32 %v2005, %v2204
      %v2291 = vadd.f32 %v2006, %v2207
      %v2292 = vadd.f32 %v2007, %v2212
      %v2293 = vadd.f32 %v2008, %v2215
      %v2294 = vadd.f32 %v2009, %v2220
      %v2295 = vadd.f32 %v2010, %v2223
      %v2296 = vadd.f32 %v2011, %v2228
      %v2297 = vadd.f32 %v2012, %v2231
      %v2298 = vadd.f32 %v2013, %v2236
      %v2299 = vadd.f32 %v2014, %v2239
      %v2300 = vadd.f32 %v2015, %v2244
      %v2301 = vadd.f32 %v2016, %v2247
      %v2302 = vadd.f32 %v2017, %v2252
      %v2303 = vadd.f32 %v2018, %v2255
      %v2304 = vadd.f32 %v2019, %v2260
      %v2305 = vadd.f32 %v2020, %v2263
      %v2306 = vadd.f32 %v2021, %v2268
      %v2307 = vadd.f32 %v2022, %v2271
      %v2308 = vadd.f32 %v2023, %v2276
      %v2309 = vadd.f32 %v2024, %v2279
      %v2310 = vld [vmem:[%s246 + $0x10] sm:$0xf]
      %v2311 = vld [vmem:[%s246 + $0x14] sm:$0xf]
      %v2312 = vld [vmem:[%s246 + $0x18] sm:$0xf]
      %v2313 = vld [vmem:[%s246 + $0x1c] sm:$0xf]
      %v2314 = vld [vmem:[%s246 + $0x20] sm:$0xf]
      %v2315 = vld [vmem:[%s246 + $0x24] sm:$0xf]
      %v2316 = vld [vmem:[%s246 + $0x28] sm:$0xf]
      %v2317 = vld [vmem:[%s246 + $0x2c] sm:$0xf]
      %v2318 = vld [vmem:[%s246 + $0x30] sm:$0xf]
      %v2319 = vld [vmem:[%s246 + $0x34] sm:$0xf]
      %v2320 = vld [vmem:[%s246 + $0x38] sm:$0xf]
      %v2321 = vld [vmem:[%s246 + $0x3c] sm:$0xf]
      %v2322 = vld [vmem:[%s246 + $0x40] sm:$0xf]
      %v2323 = vld [vmem:[%s246 + $0x44] sm:$0xf]
      %v2324 = vld [vmem:[%s246 + $0x48] sm:$0xf]
      %v2325 = vld [vmem:[%s246 + $0x4c] sm:$0xf]
      %v2326 = vld [vmem:[%s246 + $0x50] sm:$0xf]
      %v2327 = vld [vmem:[%s246 + $0x54] sm:$0xf]
      %v2328 = vld [vmem:[%s246 + $0x58] sm:$0xf]
      %v2329 = vld [vmem:[%s246 + $0x5c] sm:$0xf]
      %v2330 = vld [vmem:[%s246 + $0x60] sm:$0xf]
      %v2331 = vld [vmem:[%s246 + $0x64] sm:$0xf]
      %v2332 = vld [vmem:[%s246 + $0x68] sm:$0xf]
      %v2333 = vld [vmem:[%s246 + $0x6c] sm:$0xf]
      %v2334 = vld [vmem:[%s246 + $0x70] sm:$0xf]
      %v2335 = vld [vmem:[%s246 + $0x74] sm:$0xf]
      %v2336 = vld [vmem:[%s246 + $0x78] sm:$0xf]
      %v2337 = vld [vmem:[%s246 + $0x7c] sm:$0xf]
      %s2338 = scalar_lea.vmem %s1, 384
      %v2339 = vld [vmem:[%s2338] sm:$0xf]
      %v2340 = vld [vmem:[%s2338 + $0x4] sm:$0xf]
      %v2341 = vld [vmem:[%s2338 + $0x8] sm:$0xf]
      %v2342 = vld [vmem:[%s2338 + $0xc] sm:$0xf]
      %v2343 = vld [vmem:[%s2338 + $0x10] sm:$0xf]
      %v2344 = vld [vmem:[%s2338 + $0x14] sm:$0xf]
      %v2345 = vld [vmem:[%s2338 + $0x18] sm:$0xf]
      %v2346 = vld [vmem:[%s2338 + $0x1c] sm:$0xf]
      %v2347 = vld [vmem:[%s2338 + $0x20] sm:$0xf]
      %v2348 = vld [vmem:[%s2338 + $0x24] sm:$0xf]
      %v2349 = vld [vmem:[%s2338 + $0x28] sm:$0xf]
      %v2350 = vld [vmem:[%s2338 + $0x2c] sm:$0xf]
      %v2351 = vld [vmem:[%s2338 + $0x30] sm:$0xf]
      %v2352 = vld [vmem:[%s2338 + $0x34] sm:$0xf]
      %v2353 = vld [vmem:[%s2338 + $0x38] sm:$0xf]
      %v2354 = vld [vmem:[%s2338 + $0x3c] sm:$0xf]
      %v2383 = vunpack.c.l.b16 %v2310
      %v2384 = vunpack.c.l.b16 %v2311
      %v2385 = vunpack.c.l.b16 %v2312
      %v2386 = vunpack.c.l.b16 %v2313
      %v2387 = vunpack.c.l.b16 %v2314
      %v2388 = vunpack.c.l.b16 %v2315
      %v2389 = vunpack.c.l.b16 %v2316
      %v2390 = vunpack.c.l.b16 %v2317
      %v2391 = vunpack.c.l.b16 %v2318
      %v2392 = vunpack.c.l.b16 %v2319
      %v2393 = vunpack.c.l.b16 %v2320
      %v2394 = vunpack.c.l.b16 %v2321
      %v2395 = vunpack.c.l.b16 %v2322
      %v2396 = vunpack.c.l.b16 %v2323
      %v2397 = vunpack.c.l.b16 %v2324
      %v2398 = vunpack.c.l.b16 %v2325
      %v2399 = vunpack.c.l.b16 %v2326
      %v2400 = vunpack.c.l.b16 %v2327
      %v2401 = vunpack.c.l.b16 %v2328
      %v2402 = vunpack.c.l.b16 %v2329
      %v2403 = vunpack.c.l.b16 %v2330
      %v2404 = vunpack.c.l.b16 %v2331
      %v2405 = vunpack.c.l.b16 %v2332
      %v2406 = vunpack.c.l.b16 %v2333
      %v2407 = vunpack.c.l.b16 %v2334
      %v2408 = vunpack.c.l.b16 %v2335
      %v2409 = vunpack.c.l.b16 %v2336
      %v2410 = vunpack.c.l.b16 %v2337
      %v2411 = vpack.c.b16 %v2384, %v2383
      %v2412 = vpack.c.b16 %v2386, %v2385
      %v2413 = vpack.c.b16 %v2388, %v2387
      %v2414 = vpack.c.b16 %v2390, %v2389
      %v2415 = vpack.c.b16 %v2392, %v2391
      %v2416 = vpack.c.b16 %v2394, %v2393
      %v2417 = vpack.c.b16 %v2396, %v2395
      %v2418 = vpack.c.b16 %v2398, %v2397
      %v2419 = vpack.c.b16 %v2400, %v2399
      %v2420 = vpack.c.b16 %v2402, %v2401
      %v2421 = vpack.c.b16 %v2404, %v2403
      %v2422 = vpack.c.b16 %v2406, %v2405
      %v2423 = vpack.c.b16 %v2408, %v2407
      %v2424 = vpack.c.b16 %v2410, %v2409
      %v2455 = vunpack.c.l.b16 %v2339
      %v2456 = vunpack.c.l.b16 %v2340
      %v2457 = vunpack.c.l.b16 %v2341
      %v2458 = vunpack.c.l.b16 %v2342
      %v2459 = vunpack.c.l.b16 %v2343
      %v2460 = vunpack.c.l.b16 %v2344
      %v2461 = vunpack.c.l.b16 %v2345
      %v2462 = vunpack.c.l.b16 %v2346
      %v2463 = vunpack.c.l.b16 %v2347
      %v2464 = vunpack.c.l.b16 %v2348
      %v2465 = vunpack.c.l.b16 %v2349
      %v2466 = vunpack.c.l.b16 %v2350
      %v2467 = vunpack.c.l.b16 %v2351
      %v2468 = vunpack.c.l.b16 %v2352
      %v2469 = vunpack.c.l.b16 %v2353
      %v2470 = vunpack.c.l.b16 %v2354
      %v2471 = vpack.c.b16 %v2456, %v2455
      %v2472 = vpack.c.b16 %v2458, %v2457
      %v2473 = vpack.c.b16 %v2460, %v2459
      %v2474 = vpack.c.b16 %v2462, %v2461
      %v2475 = vpack.c.b16 %v2464, %v2463
      %v2476 = vpack.c.b16 %v2466, %v2465
      %v2477 = vpack.c.b16 %v2468, %v2467
      %v2478 = vpack.c.b16 %v2470, %v2469
      %2487 = vmatprep.subr.bf16.mxu0 0
      %2488 = vmatpush1.bf16.msra.mxu0 %v2471
      %2489 = vmatprep.subr.bf16.mxu0 0
      %2490 = vmatpush1.bf16.msra.mxu0 %v2472
      %2491 = vmatprep.subr.bf16.mxu0 0
      %2492 = vmatpush1.bf16.msra.mxu0 %v2473
      %2493 = vmatprep.subr.bf16.mxu0 0
      %2494 = vmatpush1.bf16.msra.mxu0 %v2474
      %2495 = vmatprep.subr.bf16.mxu0 0
      %2496 = vmatpush1.bf16.msra.mxu0 %v2475
      %2497 = vmatprep.subr.bf16.mxu0 0
      %2498 = vmatpush1.bf16.msra.mxu0 %v2476
      %2499 = vmatprep.subr.bf16.mxu0 0
      %2500 = vmatpush1.bf16.msra.mxu0 %v2477
      %2501 = vmatprep.subr.bf16.mxu0 0
      %2502 = vmatpush1.bf16.msra.mxu0 %v2478
      %2503 = vmatprep.subr.bf16.mxu0 0
      %2504 = vmatpush1.bf16.msra.mxu0 0
      %2505 = vmatprep.subr.bf16.mxu0 0
      %2506 = vmatpush1.bf16.msra.mxu0 0
      %2507 = vmatprep.subr.bf16.mxu0 0
      %2508 = vmatpush1.bf16.msra.mxu0 0
      %2509 = vmatprep.subr.bf16.mxu0 0
      %2510 = vmatpush1.bf16.msra.mxu0 0
      %2511 = vmatprep.subr.bf16.mxu0 0
      %2512 = vmatpush1.bf16.msra.mxu0 0
      %2513 = vmatprep.subr.bf16.mxu0 0
      %2514 = vmatpush1.bf16.msra.mxu0 0
      %2515 = vmatprep.subr.bf16.mxu0 0
      %2516 = vmatpush1.bf16.msra.mxu0 0
      %2517 = vmatprep.subr.bf16.mxu0 0
      %2518 = vmatpush1.bf16.msra.mxu0 0
      %2519 = vmatprep.mubr.bf16.mxu0 0
      %2520 = vmatmul.mubr.bf16.gmra.mrb[0].mxu0 %v2411
      %v2521 = vpop.f32.mrb[0].mxu0
      %v2522 = vadd.f32 0.0, %v2521
      %v2523 = vpop.f32.mrb[0].mxu0
      %v2524 = vpop.f32.mrb[0].mxu0
      %v2525 = vadd.f32 0.0, %v2524
      %v2526 = vpop.f32.mrb[0].mxu0
      %2527 = vmatprep.mubr.bf16.mxu0 0
      %2528 = vmatmul.mubr.bf16.gmra.mrb[0].mxu0 %v2412
      %v2529 = vpop.f32.mrb[0].mxu0
      %v2530 = vadd.f32 0.0, %v2529
      %v2531 = vpop.f32.mrb[0].mxu0
      %v2532 = vpop.f32.mrb[0].mxu0
      %v2533 = vadd.f32 0.0, %v2532
      %v2534 = vpop.f32.mrb[0].mxu0
      %2535 = vmatprep.mubr.bf16.mxu0 0
      %2536 = vmatmul.mubr.bf16.gmra.mrb[0].mxu0 %v2413
      %v2537 = vpop.f32.mrb[0].mxu0
      %v2538 = vadd.f32 0.0, %v2537
      %v2539 = vpop.f32.mrb[0].mxu0
      %v2540 = vpop.f32.mrb[0].mxu0
      %v2541 = vadd.f32 0.0, %v2540
      %v2542 = vpop.f32.mrb[0].mxu0
      %2543 = vmatprep.mubr.bf16.mxu0 0
      %2544 = vmatmul.mubr.bf16.gmra.mrb[0].mxu0 %v2414
      %v2545 = vpop.f32.mrb[0].mxu0
      %v2546 = vadd.f32 0.0, %v2545
      %v2547 = vpop.f32.mrb[0].mxu0
      %v2548 = vpop.f32.mrb[0].mxu0
      %v2549 = vadd.f32 0.0, %v2548
      %v2550 = vpop.f32.mrb[0].mxu0
      %2551 = vmatprep.mubr.bf16.mxu0 0
      %2552 = vmatmul.mubr.bf16.gmra.mrb[0].mxu0 %v2415
      %v2553 = vpop.f32.mrb[0].mxu0
      %v2554 = vadd.f32 0.0, %v2553
      %v2555 = vpop.f32.mrb[0].mxu0
      %v2556 = vpop.f32.mrb[0].mxu0
      %v2557 = vadd.f32 0.0, %v2556
      %v2558 = vpop.f32.mrb[0].mxu0
      %2559 = vmatprep.mubr.bf16.mxu0 0
      %2560 = vmatmul.mubr.bf16.gmra.mrb[0].mxu0 %v2416
      %v2561 = vpop.f32.mrb[0].mxu0
      %v2562 = vadd.f32 0.0, %v2561
      %v2563 = vpop.f32.mrb[0].mxu0
      %v2564 = vpop.f32.mrb[0].mxu0
      %v2565 = vadd.f32 0.0, %v2564
      %v2566 = vpop.f32.mrb[0].mxu0
      %2567 = vmatprep.mubr.bf16.mxu0 0
      %2568 = vmatmul.mubr.bf16.gmra.mrb[0].mxu0 %v2417
      %v2569 = vpop.f32.mrb[0].mxu0
      %v2570 = vadd.f32 0.0, %v2569
      %v2571 = vpop.f32.mrb[0].mxu0
      %v2572 = vpop.f32.mrb[0].mxu0
      %v2573 = vadd.f32 0.0, %v2572
      %v2574 = vpop.f32.mrb[0].mxu0
      %2575 = vmatprep.mubr.bf16.mxu0 0
      %2576 = vmatmul.mubr.bf16.gmra.mrb[0].mxu0 %v2418
      %v2577 = vpop.f32.mrb[0].mxu0
      %v2578 = vadd.f32 0.0, %v2577
      %v2579 = vpop.f32.mrb[0].mxu0
      %v2580 = vpop.f32.mrb[0].mxu0
      %v2581 = vadd.f32 0.0, %v2580
      %v2582 = vpop.f32.mrb[0].mxu0
      %2583 = vmatprep.mubr.bf16.mxu0 0
      %2584 = vmatmul.mubr.bf16.gmra.mrb[0].mxu0 %v2419
      %v2585 = vpop.f32.mrb[0].mxu0
      %v2586 = vadd.f32 0.0, %v2585
      %v2587 = vpop.f32.mrb[0].mxu0
      %v2588 = vpop.f32.mrb[0].mxu0
      %v2589 = vadd.f32 0.0, %v2588
      %v2590 = vpop.f32.mrb[0].mxu0
      %2591 = vmatprep.mubr.bf16.mxu0 0
      %2592 = vmatmul.mubr.bf16.gmra.mrb[0].mxu0 %v2420
      %v2593 = vpop.f32.mrb[0].mxu0
      %v2594 = vadd.f32 0.0, %v2593
      %v2595 = vpop.f32.mrb[0].mxu0
      %v2596 = vpop.f32.mrb[0].mxu0
      %v2597 = vadd.f32 0.0, %v2596
      %v2598 = vpop.f32.mrb[0].mxu0
      %2599 = vmatprep.mubr.bf16.mxu0 0
      %2600 = vmatmul.mubr.bf16.gmra.mrb[0].mxu0 %v2421
      %v2601 = vpop.f32.mrb[0].mxu0
      %v2602 = vadd.f32 0.0, %v2601
      %v2603 = vpop.f32.mrb[0].mxu0
      %v2604 = vpop.f32.mrb[0].mxu0
      %v2605 = vadd.f32 0.0, %v2604
      %v2606 = vpop.f32.mrb[0].mxu0
      %2607 = vmatprep.mubr.bf16.mxu0 0
      %2608 = vmatmul.mubr.bf16.gmra.mrb[0].mxu0 %v2422
      %v2609 = vpop.f32.mrb[0].mxu0
      %v2610 = vadd.f32 0.0, %v2609
      %v2611 = vpop.f32.mrb[0].mxu0
      %v2612 = vpop.f32.mrb[0].mxu0
      %v2613 = vadd.f32 0.0, %v2612
      %v2614 = vpop.f32.mrb[0].mxu0
      %2615 = vmatprep.mubr.bf16.mxu0 0
      %2616 = vmatmul.mubr.bf16.gmra.mrb[0].mxu0 %v2423
      %v2617 = vpop.f32.mrb[0].mxu0
      %v2618 = vadd.f32 0.0, %v2617
      %v2619 = vpop.f32.mrb[0].mxu0
      %v2620 = vpop.f32.mrb[0].mxu0
      %v2621 = vadd.f32 0.0, %v2620
      %v2622 = vpop.f32.mrb[0].mxu0
      %2623 = vmatprep.mubr.bf16.mxu0 0
      %2624 = vmatmul.mubr.bf16.gmra.mrb[0].mxu0 %v2424
      %v2625 = vpop.f32.mrb[0].mxu0
      %v2626 = vadd.f32 0.0, %v2625
      %v2627 = vpop.f32.mrb[0].mxu0
      %v2628 = vpop.f32.mrb[0].mxu0
      %v2629 = vadd.f32 0.0, %v2628
      %v2630 = vpop.f32.mrb[0].mxu0
      %2631 = vdwg.mxu0
      %v2632 = vadd.f32 %v2282, %v2522
      %v2633 = vadd.f32 %v2283, %v2525
      %v2634 = vadd.f32 %v2284, %v2530
      %v2635 = vadd.f32 %v2285, %v2533
      %v2636 = vadd.f32 %v2286, %v2538
      %v2637 = vadd.f32 %v2287, %v2541
      %v2638 = vadd.f32 %v2288, %v2546
      %v2639 = vadd.f32 %v2289, %v2549
      %v2640 = vadd.f32 %v2290, %v2554
      %v2641 = vadd.f32 %v2291, %v2557
      %v2642 = vadd.f32 %v2292, %v2562
      %v2643 = vadd.f32 %v2293, %v2565
      %v2644 = vadd.f32 %v2294, %v2570
      %v2645 = vadd.f32 %v2295, %v2573
      %v2646 = vadd.f32 %v2296, %v2578
      %v2647 = vadd.f32 %v2297, %v2581
      %v2648 = vadd.f32 %v2298, %v2586
      %v2649 = vadd.f32 %v2299, %v2589
      %v2650 = vadd.f32 %v2300, %v2594
      %v2651 = vadd.f32 %v2301, %v2597
      %v2652 = vadd.f32 %v2302, %v2602
      %v2653 = vadd.f32 %v2303, %v2605
      %v2654 = vadd.f32 %v2304, %v2610
      %v2655 = vadd.f32 %v2305, %v2613
      %v2656 = vadd.f32 %v2306, %v2618
      %v2657 = vadd.f32 %v2307, %v2621
      %v2658 = vadd.f32 %v2308, %v2626
      %v2659 = vadd.f32 %v2309, %v2629
      %v2660 = vld [vmem:[%s246 + $0x10] sm:$0xf]
      %v2661 = vld [vmem:[%s246 + $0x14] sm:$0xf]
      %v2662 = vld [vmem:[%s246 + $0x18] sm:$0xf]
      %v2663 = vld [vmem:[%s246 + $0x1c] sm:$0xf]
      %v2664 = vld [vmem:[%s246 + $0x20] sm:$0xf]
      %v2665 = vld [vmem:[%s246 + $0x24] sm:$0xf]
      %v2666 = vld [vmem:[%s246 + $0x28] sm:$0xf]
      %v2667 = vld [vmem:[%s246 + $0x2c] sm:$0xf]
      %v2668 = vld [vmem:[%s246 + $0x30] sm:$0xf]
      %v2669 = vld [vmem:[%s246 + $0x34] sm:$0xf]
      %v2670 = vld [vmem:[%s246 + $0x38] sm:$0xf]
      %v2671 = vld [vmem:[%s246 + $0x3c] sm:$0xf]
      %v2672 = vld [vmem:[%s246 + $0x40] sm:$0xf]
      %v2673 = vld [vmem:[%s246 + $0x44] sm:$0xf]
      %v2674 = vld [vmem:[%s246 + $0x48] sm:$0xf]
      %v2675 = vld [vmem:[%s246 + $0x4c] sm:$0xf]
      %v2676 = vld [vmem:[%s246 + $0x50] sm:$0xf]
      %v2677 = vld [vmem:[%s246 + $0x54] sm:$0xf]
      %v2678 = vld [vmem:[%s246 + $0x58] sm:$0xf]
      %v2679 = vld [vmem:[%s246 + $0x5c] sm:$0xf]
      %v2680 = vld [vmem:[%s246 + $0x60] sm:$0xf]
      %v2681 = vld [vmem:[%s246 + $0x64] sm:$0xf]
      %v2682 = vld [vmem:[%s246 + $0x68] sm:$0xf]
      %v2683 = vld [vmem:[%s246 + $0x6c] sm:$0xf]
      %v2684 = vld [vmem:[%s246 + $0x70] sm:$0xf]
      %v2685 = vld [vmem:[%s246 + $0x74] sm:$0xf]
      %v2686 = vld [vmem:[%s246 + $0x78] sm:$0xf]
      %v2687 = vld [vmem:[%s246 + $0x7c] sm:$0xf]
      %v2688 = vld [vmem:[%s246 + $0x80] sm:$0x1]
      %s2689 = scalar_lea.vmem %s1, 448
      %v2690 = vld [vmem:[%s2689] sm:$0xf]
      %v2691 = vld [vmem:[%s2689 + $0x4] sm:$0xf]
      %v2692 = vld [vmem:[%s2689 + $0x8] sm:$0xf]
      %v2693 = vld [vmem:[%s2689 + $0xc] sm:$0xf]
      %v2694 = vld [vmem:[%s2689 + $0x10] sm:$0xf]
      %v2695 = vld [vmem:[%s2689 + $0x14] sm:$0xf]
      %v2696 = vld [vmem:[%s2689 + $0x18] sm:$0xf]
      %v2697 = vld [vmem:[%s2689 + $0x1c] sm:$0xf]
      %v2698 = vld [vmem:[%s2689 + $0x20] sm:$0xf]
      %v2699 = vld [vmem:[%s2689 + $0x24] sm:$0xf]
      %v2700 = vld [vmem:[%s2689 + $0x28] sm:$0xf]
      %v2701 = vld [vmem:[%s2689 + $0x2c] sm:$0xf]
      %v2702 = vld [vmem:[%s2689 + $0x30] sm:$0xf]
      %v2703 = vld [vmem:[%s2689 + $0x34] sm:$0xf]
      %v2704 = vld [vmem:[%s2689 + $0x38] sm:$0xf]
      %v2705 = vld [vmem:[%s2689 + $0x3c] sm:$0xf]
      %v2735 = vunpack.c.l.b16 %v2660
      %v2736 = vunpack.c.l.b16 %v2661
      %v2737 = vunpack.c.l.b16 %v2662
      %v2738 = vunpack.c.l.b16 %v2663
      %v2739 = vunpack.c.l.b16 %v2664
      %v2740 = vunpack.c.l.b16 %v2665
      %v2741 = vunpack.c.l.b16 %v2666
      %v2742 = vunpack.c.l.b16 %v2667
      %v2743 = vunpack.c.l.b16 %v2668
      %v2744 = vunpack.c.l.b16 %v2669
      %v2745 = vunpack.c.l.b16 %v2670
      %v2746 = vunpack.c.l.b16 %v2671
      %v2747 = vunpack.c.l.b16 %v2672
      %v2748 = vunpack.c.l.b16 %v2673
      %v2749 = vunpack.c.l.b16 %v2674
      %v2750 = vunpack.c.l.b16 %v2675
      %v2751 = vunpack.c.l.b16 %v2676
      %v2752 = vunpack.c.l.b16 %v2677
      %v2753 = vunpack.c.l.b16 %v2678
      %v2754 = vunpack.c.l.b16 %v2679
      %v2755 = vunpack.c.l.b16 %v2680
      %v2756 = vunpack.c.l.b16 %v2681
      %v2757 = vunpack.c.l.b16 %v2682
      %v2758 = vunpack.c.l.b16 %v2683
      %v2759 = vunpack.c.l.b16 %v2684
      %v2760 = vunpack.c.l.b16 %v2685
      %v2761 = vunpack.c.l.b16 %v2686
      %v2762 = vunpack.c.l.b16 %v2687
      %v2763 = vunpack.c.l.b16 %v2688
      %v2764 = vpack.c.b16 %v2736, %v2735
      %v2765 = vpack.c.b16 %v2738, %v2737
      %v2766 = vpack.c.b16 %v2740, %v2739
      %v2767 = vpack.c.b16 %v2742, %v2741
      %v2768 = vpack.c.b16 %v2744, %v2743
      %v2769 = vpack.c.b16 %v2746, %v2745
      %v2770 = vpack.c.b16 %v2748, %v2747
      %v2771 = vpack.c.b16 %v2750, %v2749
      %v2772 = vpack.c.b16 %v2752, %v2751
      %v2773 = vpack.c.b16 %v2754, %v2753
      %v2774 = vpack.c.b16 %v2756, %v2755
      %v2775 = vpack.c.b16 %v2758, %v2757
      %v2776 = vpack.c.b16 %v2760, %v2759
      %v2777 = vpack.c.b16 %v2762, %v2761
      %v2778 = vpack.c.b16 %v2763, %v2763
      %v2780 = vshrl.u32 %v2764, 16
      %v2782 = vshll.u32 %v2764, 16
      %v2784 = vrot.slane %v2782, 1
      %v2785 = vor.u32 %v2780, %v2784
      %v2787 = vshll.u32 %v2765, 16
      %v2789 = vrot.slane %v2787, 1
      %v2790 = vsel %vm388, %v2785, %v2789
      %v2791 = vshrl.u32 %v2765, 16
      %v2793 = vor.u32 %v2791, %v2789
      %v2795 = vshll.u32 %v2766, 16
      %v2797 = vrot.slane %v2795, 1
      %v2798 = vsel %vm388, %v2793, %v2797
      %v2799 = vshrl.u32 %v2766, 16
      %v2801 = vor.u32 %v2799, %v2797
      %v2803 = vshll.u32 %v2767, 16
      %v2805 = vrot.slane %v2803, 1
      %v2806 = vsel %vm388, %v2801, %v2805
      %v2807 = vshrl.u32 %v2767, 16
      %v2809 = vor.u32 %v2807, %v2805
      %v2811 = vshll.u32 %v2768, 16
      %v2813 = vrot.slane %v2811, 1
      %v2814 = vsel %vm388, %v2809, %v2813
      %v2815 = vshrl.u32 %v2768, 16
      %v2817 = vor.u32 %v2815, %v2813
      %v2819 = vshll.u32 %v2769, 16
      %v2821 = vrot.slane %v2819, 1
      %v2822 = vsel %vm388, %v2817, %v2821
      %v2823 = vshrl.u32 %v2769, 16
      %v2825 = vor.u32 %v2823, %v2821
      %v2827 = vshll.u32 %v2770, 16
      %v2829 = vrot.slane %v2827, 1
      %v2830 = vsel %vm388, %v2825, %v2829
      %v2831 = vshrl.u32 %v2770, 16
      %v2833 = vor.u32 %v2831, %v2829
      %v2835 = vshll.u32 %v2771, 16
      %v2837 = vrot.slane %v2835, 1
      %v2838 = vsel %vm388, %v2833, %v2837
      %v2839 = vshrl.u32 %v2771, 16
      %v2841 = vor.u32 %v2839, %v2837
      %v2843 = vshll.u32 %v2772, 16
      %v2845 = vrot.slane %v2843, 1
      %v2846 = vsel %vm388, %v2841, %v2845
      %v2847 = vshrl.u32 %v2772, 16
      %v2849 = vor.u32 %v2847, %v2845
      %v2851 = vshll.u32 %v2773, 16
      %v2853 = vrot.slane %v2851, 1
      %v2854 = vsel %vm388, %v2849, %v2853
      %v2855 = vshrl.u32 %v2773, 16
      %v2857 = vor.u32 %v2855, %v2853
      %v2859 = vshll.u32 %v2774, 16
      %v2861 = vrot.slane %v2859, 1
      %v2862 = vsel %vm388, %v2857, %v2861
      %v2863 = vshrl.u32 %v2774, 16
      %v2865 = vor.u32 %v2863, %v2861
      %v2867 = vshll.u32 %v2775, 16
      %v2869 = vrot.slane %v2867, 1
      %v2870 = vsel %vm388, %v2865, %v2869
      %v2871 = vshrl.u32 %v2775, 16
      %v2873 = vor.u32 %v2871, %v2869
      %v2875 = vshll.u32 %v2776, 16
      %v2877 = vrot.slane %v2875, 1
      %v2878 = vsel %vm388, %v2873, %v2877
      %v2879 = vshrl.u32 %v2776, 16
      %v2881 = vor.u32 %v2879, %v2877
      %v2883 = vshll.u32 %v2777, 16
      %v2885 = vrot.slane %v2883, 1
      %v2886 = vsel %vm388, %v2881, %v2885
      %v2887 = vshrl.u32 %v2777, 16
      %v2889 = vor.u32 %v2887, %v2885
      %v2891 = vshll.u32 %v2778, 16
      %v2893 = vrot.slane %v2891, 1
      %v2894 = vsel %vm388, %v2889, %v2893
      %v2925 = vunpack.c.l.b16 %v2690
      %v2926 = vunpack.c.l.b16 %v2691
      %v2927 = vunpack.c.l.b16 %v2692
      %v2928 = vunpack.c.l.b16 %v2693
      %v2929 = vunpack.c.l.b16 %v2694
      %v2930 = vunpack.c.l.b16 %v2695
      %v2931 = vunpack.c.l.b16 %v2696
      %v2932 = vunpack.c.l.b16 %v2697
      %v2933 = vunpack.c.l.b16 %v2698
      %v2934 = vunpack.c.l.b16 %v2699
      %v2935 = vunpack.c.l.b16 %v2700
      %v2936 = vunpack.c.l.b16 %v2701
      %v2937 = vunpack.c.l.b16 %v2702
      %v2938 = vunpack.c.l.b16 %v2703
      %v2939 = vunpack.c.l.b16 %v2704
      %v2940 = vunpack.c.l.b16 %v2705
      %v2941 = vpack.c.b16 %v2926, %v2925
      %v2942 = vpack.c.b16 %v2928, %v2927
      %v2943 = vpack.c.b16 %v2930, %v2929
      %v2944 = vpack.c.b16 %v2932, %v2931
      %v2945 = vpack.c.b16 %v2934, %v2933
      %v2946 = vpack.c.b16 %v2936, %v2935
      %v2947 = vpack.c.b16 %v2938, %v2937
      %v2948 = vpack.c.b16 %v2940, %v2939
      %2957 = vmatprep.subr.bf16.mxu0 0
      %2958 = vmatpush1.bf16.msra.mxu0 %v2941
      %2959 = vmatprep.subr.bf16.mxu0 0
      %2960 = vmatpush1.bf16.msra.mxu0 %v2942
      %2961 = vmatprep.subr.bf16.mxu0 0
      %2962 = vmatpush1.bf16.msra.mxu0 %v2943
      %2963 = vmatprep.subr.bf16.mxu0 0
      %2964 = vmatpush1.bf16.msra.mxu0 %v2944
      %2965 = vmatprep.subr.bf16.mxu0 0
      %2966 = vmatpush1.bf16.msra.mxu0 %v2945
      %2967 = vmatprep.subr.bf16.mxu0 0
      %2968 = vmatpush1.bf16.msra.mxu0 %v2946
      %2969 = vmatprep.subr.bf16.mxu0 0
      %2970 = vmatpush1.bf16.msra.mxu0 %v2947
      %2971 = vmatprep.subr.bf16.mxu0 0
      %2972 = vmatpush1.bf16.msra.mxu0 %v2948
      %2973 = vmatprep.subr.bf16.mxu0 0
      %2974 = vmatpush1.bf16.msra.mxu0 0
      %2975 = vmatprep.subr.bf16.mxu0 0
      %2976 = vmatpush1.bf16.msra.mxu0 0
      %2977 = vmatprep.subr.bf16.mxu0 0
      %2978 = vmatpush1.bf16.msra.mxu0 0
      %2979 = vmatprep.subr.bf16.mxu0 0
      %2980 = vmatpush1.bf16.msra.mxu0 0
      %2981 = vmatprep.subr.bf16.mxu0 0
      %2982 = vmatpush1.bf16.msra.mxu0 0
      %2983 = vmatprep.subr.bf16.mxu0 0
      %2984 = vmatpush1.bf16.msra.mxu0 0
      %2985 = vmatprep.subr.bf16.mxu0 0
      %2986 = vmatpush1.bf16.msra.mxu0 0
      %2987 = vmatprep.subr.bf16.mxu0 0
      %2988 = vmatpush1.bf16.msra.mxu0 0
      %2989 = vmatprep.mubr.bf16.mxu0 0
      %2990 = vmatmul.mubr.bf16.gmra.mrb[0].mxu0 %v2790
      %v2991 = vpop.f32.mrb[0].mxu0
      %v2992 = vadd.f32 0.0, %v2991
      %v2993 = vpop.f32.mrb[0].mxu0
      %v2994 = vpop.f32.mrb[0].mxu0
      %v2995 = vadd.f32 0.0, %v2994
      %v2996 = vpop.f32.mrb[0].mxu0
      %2997 = vmatprep.mubr.bf16.mxu0 0
      %2998 = vmatmul.mubr.bf16.gmra.mrb[0].mxu0 %v2798
      %v2999 = vpop.f32.mrb[0].mxu0
      %v3000 = vadd.f32 0.0, %v2999
      %v3001 = vpop.f32.mrb[0].mxu0
      %v3002 = vpop.f32.mrb[0].mxu0
      %v3003 = vadd.f32 0.0, %v3002
      %v3004 = vpop.f32.mrb[0].mxu0
      %3005 = vmatprep.mubr.bf16.mxu0 0
      %3006 = vmatmul.mubr.bf16.gmra.mrb[0].mxu0 %v2806
      %v3007 = vpop.f32.mrb[0].mxu0
      %v3008 = vadd.f32 0.0, %v3007
      %v3009 = vpop.f32.mrb[0].mxu0
      %v3010 = vpop.f32.mrb[0].mxu0
      %v3011 = vadd.f32 0.0, %v3010
      %v3012 = vpop.f32.mrb[0].mxu0
      %3013 = vmatprep.mubr.bf16.mxu0 0
      %3014 = vmatmul.mubr.bf16.gmra.mrb[0].mxu0 %v2814
      %v3015 = vpop.f32.mrb[0].mxu0
      %v3016 = vadd.f32 0.0, %v3015
      %v3017 = vpop.f32.mrb[0].mxu0
      %v3018 = vpop.f32.mrb[0].mxu0
      %v3019 = vadd.f32 0.0, %v3018
      %v3020 = vpop.f32.mrb[0].mxu0
      %3021 = vmatprep.mubr.bf16.mxu0 0
      %3022 = vmatmul.mubr.bf16.gmra.mrb[0].mxu0 %v2822
      %v3023 = vpop.f32.mrb[0].mxu0
      %v3024 = vadd.f32 0.0, %v3023
      %v3025 = vpop.f32.mrb[0].mxu0
      %v3026 = vpop.f32.mrb[0].mxu0
      %v3027 = vadd.f32 0.0, %v3026
      %v3028 = vpop.f32.mrb[0].mxu0
      %3029 = vmatprep.mubr.bf16.mxu0 0
      %3030 = vmatmul.mubr.bf16.gmra.mrb[0].mxu0 %v2830
      %v3031 = vpop.f32.mrb[0].mxu0
      %v3032 = vadd.f32 0.0, %v3031
      %v3033 = vpop.f32.mrb[0].mxu0
      %v3034 = vpop.f32.mrb[0].mxu0
      %v3035 = vadd.f32 0.0, %v3034
      %v3036 = vpop.f32.mrb[0].mxu0
      %3037 = vmatprep.mubr.bf16.mxu0 0
      %3038 = vmatmul.mubr.bf16.gmra.mrb[0].mxu0 %v2838
      %v3039 = vpop.f32.mrb[0].mxu0
      %v3040 = vadd.f32 0.0, %v3039
      %v3041 = vpop.f32.mrb[0].mxu0
      %v3042 = vpop.f32.mrb[0].mxu0
      %v3043 = vadd.f32 0.0, %v3042
      %v3044 = vpop.f32.mrb[0].mxu0
      %3045 = vmatprep.mubr.bf16.mxu0 0
      %3046 = vmatmul.mubr.bf16.gmra.mrb[0].mxu0 %v2846
      %v3047 = vpop.f32.mrb[0].mxu0
      %v3048 = vadd.f32 0.0, %v3047
      %v3049 = vpop.f32.mrb[0].mxu0
      %v3050 = vpop.f32.mrb[0].mxu0
      %v3051 = vadd.f32 0.0, %v3050
      %v3052 = vpop.f32.mrb[0].mxu0
      %3053 = vmatprep.mubr.bf16.mxu0 0
      %3054 = vmatmul.mubr.bf16.gmra.mrb[0].mxu0 %v2854
      %v3055 = vpop.f32.mrb[0].mxu0
      %v3056 = vadd.f32 0.0, %v3055
      %v3057 = vpop.f32.mrb[0].mxu0
      %v3058 = vpop.f32.mrb[0].mxu0
      %v3059 = vadd.f32 0.0, %v3058
      %v3060 = vpop.f32.mrb[0].mxu0
      %3061 = vmatprep.mubr.bf16.mxu0 0
      %3062 = vmatmul.mubr.bf16.gmra.mrb[0].mxu0 %v2862
      %v3063 = vpop.f32.mrb[0].mxu0
      %v3064 = vadd.f32 0.0, %v3063
      %v3065 = vpop.f32.mrb[0].mxu0
      %v3066 = vpop.f32.mrb[0].mxu0
      %v3067 = vadd.f32 0.0, %v3066
      %v3068 = vpop.f32.mrb[0].mxu0
      %3069 = vmatprep.mubr.bf16.mxu0 0
      %3070 = vmatmul.mubr.bf16.gmra.mrb[0].mxu0 %v2870
      %v3071 = vpop.f32.mrb[0].mxu0
      %v3072 = vadd.f32 0.0, %v3071
      %v3073 = vpop.f32.mrb[0].mxu0
      %v3074 = vpop.f32.mrb[0].mxu0
      %v3075 = vadd.f32 0.0, %v3074
      %v3076 = vpop.f32.mrb[0].mxu0
      %3077 = vmatprep.mubr.bf16.mxu0 0
      %3078 = vmatmul.mubr.bf16.gmra.mrb[0].mxu0 %v2878
      %v3079 = vpop.f32.mrb[0].mxu0
      %v3080 = vadd.f32 0.0, %v3079
      %v3081 = vpop.f32.mrb[0].mxu0
      %v3082 = vpop.f32.mrb[0].mxu0
      %v3083 = vadd.f32 0.0, %v3082
      %v3084 = vpop.f32.mrb[0].mxu0
      %3085 = vmatprep.mubr.bf16.mxu0 0
      %3086 = vmatmul.mubr.bf16.gmra.mrb[0].mxu0 %v2886
      %v3087 = vpop.f32.mrb[0].mxu0
      %v3088 = vadd.f32 0.0, %v3087
      %v3089 = vpop.f32.mrb[0].mxu0
      %v3090 = vpop.f32.mrb[0].mxu0
      %v3091 = vadd.f32 0.0, %v3090
      %v3092 = vpop.f32.mrb[0].mxu0
      %3093 = vmatprep.mubr.bf16.mxu0 0
      %3094 = vmatmul.mubr.bf16.gmra.mrb[0].mxu0 %v2894
      %v3095 = vpop.f32.mrb[0].mxu0
      %v3096 = vadd.f32 0.0, %v3095
      %v3097 = vpop.f32.mrb[0].mxu0
      %v3098 = vpop.f32.mrb[0].mxu0
      %v3099 = vadd.f32 0.0, %v3098
      %v3100 = vpop.f32.mrb[0].mxu0
      %3101 = vdwg.mxu0
      %v3102 = vadd.f32 %v2632, %v2992
      %v3103 = vadd.f32 %v2633, %v2995
      %v3104 = vadd.f32 %v2634, %v3000
      %v3105 = vadd.f32 %v2635, %v3003
      %v3106 = vadd.f32 %v2636, %v3008
      %v3107 = vadd.f32 %v2637, %v3011
      %v3108 = vadd.f32 %v2638, %v3016
      %v3109 = vadd.f32 %v2639, %v3019
      %v3110 = vadd.f32 %v2640, %v3024
      %v3111 = vadd.f32 %v2641, %v3027
      %v3112 = vadd.f32 %v2642, %v3032
      %v3113 = vadd.f32 %v2643, %v3035
      %v3114 = vadd.f32 %v2644, %v3040
      %v3115 = vadd.f32 %v2645, %v3043
      %v3116 = vadd.f32 %v2646, %v3048
      %v3117 = vadd.f32 %v2647, %v3051
      %v3118 = vadd.f32 %v2648, %v3056
      %v3119 = vadd.f32 %v2649, %v3059
      %v3120 = vadd.f32 %v2650, %v3064
      %v3121 = vadd.f32 %v2651, %v3067
      %v3122 = vadd.f32 %v2652, %v3072
      %v3123 = vadd.f32 %v2653, %v3075
      %v3124 = vadd.f32 %v2654, %v3080
      %v3125 = vadd.f32 %v2655, %v3083
      %v3126 = vadd.f32 %v2656, %v3088
      %v3127 = vadd.f32 %v2657, %v3091
      %v3128 = vadd.f32 %v2658, %v3096
      %v3129 = vadd.f32 %v2659, %v3099
      %v3130 = vld [vmem:[%s246 + $0x10] sm:$0xe]
      %s3131 = scalar_lea.vmem %s1, 512
      %v3132 = vld [vmem:[%s3131] sm:$0xf]
      %v3133 = vld [vmem:[%s3131 + $0x4] sm:$0xf]
      %v3134 = vld [vmem:[%s3131 + $0x8] sm:$0xf]
      %v3135 = vld [vmem:[%s3131 + $0xc] sm:$0xf]
      %v3136 = vld [vmem:[%s3131 + $0x10] sm:$0xf]
      %v3137 = vld [vmem:[%s3131 + $0x14] sm:$0xf]
      %v3138 = vld [vmem:[%s3131 + $0x18] sm:$0xf]
      %v3139 = vld [vmem:[%s3131 + $0x1c] sm:$0xf]
      %v3140 = vld [vmem:[%s3131 + $0x20] sm:$0xf]
      %v3141 = vld [vmem:[%s3131 + $0x24] sm:$0xf]
      %v3142 = vld [vmem:[%s3131 + $0x28] sm:$0xf]
      %v3143 = vld [vmem:[%s3131 + $0x2c] sm:$0xf]
      %v3144 = vld [vmem:[%s3131 + $0x30] sm:$0xf]
      %v3145 = vld [vmem:[%s3131 + $0x34] sm:$0xf]
      %v3146 = vld [vmem:[%s3131 + $0x38] sm:$0xf]
      %v3147 = vld [vmem:[%s3131 + $0x3c] sm:$0xf]
      %v3149 = vunpack.c.l.b16 %v3130
      %v3150 = vpack.c.b16 %v2736, %v3149
      %v3151 = vrot.slane %v3150, 1
      %v3152 = vrot.slane %v2765, 1
      %v3153 = vsel %vm940, %v3151, %v3152
      %v3154 = vrot.slane %v2766, 1
      %v3155 = vsel %vm940, %v3152, %v3154
      %v3156 = vrot.slane %v2767, 1
      %v3157 = vsel %vm940, %v3154, %v3156
      %v3158 = vrot.slane %v2768, 1
      %v3159 = vsel %vm940, %v3156, %v3158
      %v3160 = vrot.slane %v2769, 1
      %v3161 = vsel %vm940, %v3158, %v3160
      %v3162 = vrot.slane %v2770, 1
      %v3163 = vsel %vm940, %v3160, %v3162
      %v3164 = vrot.slane %v2771, 1
      %v3165 = vsel %vm940, %v3162, %v3164
      %v3166 = vrot.slane %v2772, 1
      %v3167 = vsel %vm940, %v3164, %v3166
      %v3168 = vrot.slane %v2773, 1
      %v3169 = vsel %vm940, %v3166, %v3168
      %v3170 = vrot.slane %v2774, 1
      %v3171 = vsel %vm940, %v3168, %v3170
      %v3172 = vrot.slane %v2775, 1
      %v3173 = vsel %vm940, %v3170, %v3172
      %v3174 = vrot.slane %v2776, 1
      %v3175 = vsel %vm940, %v3172, %v3174
      %v3176 = vrot.slane %v2777, 1
      %v3177 = vsel %vm940, %v3174, %v3176
      %v3178 = vrot.slane %v2778, 1
      %v3179 = vsel %vm940, %v3176, %v3178
      %v3210 = vunpack.c.l.b16 %v3132
      %v3211 = vunpack.c.l.b16 %v3133
      %v3212 = vunpack.c.l.b16 %v3134
      %v3213 = vunpack.c.l.b16 %v3135
      %v3214 = vunpack.c.l.b16 %v3136
      %v3215 = vunpack.c.l.b16 %v3137
      %v3216 = vunpack.c.l.b16 %v3138
      %v3217 = vunpack.c.l.b16 %v3139
      %v3218 = vunpack.c.l.b16 %v3140
      %v3219 = vunpack.c.l.b16 %v3141
      %v3220 = vunpack.c.l.b16 %v3142
      %v3221 = vunpack.c.l.b16 %v3143
      %v3222 = vunpack.c.l.b16 %v3144
      %v3223 = vunpack.c.l.b16 %v3145
      %v3224 = vunpack.c.l.b16 %v3146
      %v3225 = vunpack.c.l.b16 %v3147
      %v3226 = vpack.c.b16 %v3211, %v3210
      %v3227 = vpack.c.b16 %v3213, %v3212
      %v3228 = vpack.c.b16 %v3215, %v3214
      %v3229 = vpack.c.b16 %v3217, %v3216
      %v3230 = vpack.c.b16 %v3219, %v3218
      %v3231 = vpack.c.b16 %v3221, %v3220
      %v3232 = vpack.c.b16 %v3223, %v3222
      %v3233 = vpack.c.b16 %v3225, %v3224
      %3242 = vmatprep.subr.bf16.mxu0 0
      %3243 = vmatpush1.bf16.msra.mxu0 %v3226
      %3244 = vmatprep.subr.bf16.mxu0 0
      %3245 = vmatpush1.bf16.msra.mxu0 %v3227
      %3246 = vmatprep.subr.bf16.mxu0 0
      %3247 = vmatpush1.bf16.msra.mxu0 %v3228
      %3248 = vmatprep.subr.bf16.mxu0 0
      %3249 = vmatpush1.bf16.msra.mxu0 %v3229
      %3250 = vmatprep.subr.bf16.mxu0 0
      %3251 = vmatpush1.bf16.msra.mxu0 %v3230
      %3252 = vmatprep.subr.bf16.mxu0 0
      %3253 = vmatpush1.bf16.msra.mxu0 %v3231
      %3254 = vmatprep.subr.bf16.mxu0 0
      %3255 = vmatpush1.bf16.msra.mxu0 %v3232
      %3256 = vmatprep.subr.bf16.mxu0 0
      %3257 = vmatpush1.bf16.msra.mxu0 %v3233
      %3258 = vmatprep.subr.bf16.mxu0 0
      %3259 = vmatpush1.bf16.msra.mxu0 0
      %3260 = vmatprep.subr.bf16.mxu0 0
      %3261 = vmatpush1.bf16.msra.mxu0 0
      %3262 = vmatprep.subr.bf16.mxu0 0
      %3263 = vmatpush1.bf16.msra.mxu0 0
      %3264 = vmatprep.subr.bf16.mxu0 0
      %3265 = vmatpush1.bf16.msra.mxu0 0
      %3266 = vmatprep.subr.bf16.mxu0 0
      %3267 = vmatpush1.bf16.msra.mxu0 0
      %3268 = vmatprep.subr.bf16.mxu0 0
      %3269 = vmatpush1.bf16.msra.mxu0 0
      %3270 = vmatprep.subr.bf16.mxu0 0
      %3271 = vmatpush1.bf16.msra.mxu0 0
      %3272 = vmatprep.subr.bf16.mxu0 0
      %3273 = vmatpush1.bf16.msra.mxu0 0
      %3274 = vmatprep.mubr.bf16.mxu0 0
      %3275 = vmatmul.mubr.bf16.gmra.mrb[0].mxu0 %v3153
      %v3276 = vpop.f32.mrb[0].mxu0
      %v3277 = vadd.f32 0.0, %v3276
      %v3278 = vpop.f32.mrb[0].mxu0
      %v3279 = vpop.f32.mrb[0].mxu0
      %v3280 = vadd.f32 0.0, %v3279
      %v3281 = vpop.f32.mrb[0].mxu0
      %3282 = vmatprep.mubr.bf16.mxu0 0
      %3283 = vmatmul.mubr.bf16.gmra.mrb[0].mxu0 %v3155
      %v3284 = vpop.f32.mrb[0].mxu0
      %v3285 = vadd.f32 0.0, %v3284
      %v3286 = vpop.f32.mrb[0].mxu0
      %v3287 = vpop.f32.mrb[0].mxu0
      %v3288 = vadd.f32 0.0, %v3287
      %v3289 = vpop.f32.mrb[0].mxu0
      %3290 = vmatprep.mubr.bf16.mxu0 0
      %3291 = vmatmul.mubr.bf16.gmra.mrb[0].mxu0 %v3157
      %v3292 = vpop.f32.mrb[0].mxu0
      %v3293 = vadd.f32 0.0, %v3292
      %v3294 = vpop.f32.mrb[0].mxu0
      %v3295 = vpop.f32.mrb[0].mxu0
      %v3296 = vadd.f32 0.0, %v3295
      %v3297 = vpop.f32.mrb[0].mxu0
      %3298 = vmatprep.mubr.bf16.mxu0 0
      %3299 = vmatmul.mubr.bf16.gmra.mrb[0].mxu0 %v3159
      %v3300 = vpop.f32.mrb[0].mxu0
      %v3301 = vadd.f32 0.0, %v3300
      %v3302 = vpop.f32.mrb[0].mxu0
      %v3303 = vpop.f32.mrb[0].mxu0
      %v3304 = vadd.f32 0.0, %v3303
      %v3305 = vpop.f32.mrb[0].mxu0
      %3306 = vmatprep.mubr.bf16.mxu0 0
      %3307 = vmatmul.mubr.bf16.gmra.mrb[0].mxu0 %v3161
      %v3308 = vpop.f32.mrb[0].mxu0
      %v3309 = vadd.f32 0.0, %v3308
      %v3310 = vpop.f32.mrb[0].mxu0
      %v3311 = vpop.f32.mrb[0].mxu0
      %v3312 = vadd.f32 0.0, %v3311
      %v3313 = vpop.f32.mrb[0].mxu0
      %3314 = vmatprep.mubr.bf16.mxu0 0
      %3315 = vmatmul.mubr.bf16.gmra.mrb[0].mxu0 %v3163
      %v3316 = vpop.f32.mrb[0].mxu0
      %v3317 = vadd.f32 0.0, %v3316
      %v3318 = vpop.f32.mrb[0].mxu0
      %v3319 = vpop.f32.mrb[0].mxu0
      %v3320 = vadd.f32 0.0, %v3319
      %v3321 = vpop.f32.mrb[0].mxu0
      %3322 = vmatprep.mubr.bf16.mxu0 0
      %3323 = vmatmul.mubr.bf16.gmra.mrb[0].mxu0 %v3165
      %v3324 = vpop.f32.mrb[0].mxu0
      %v3325 = vadd.f32 0.0, %v3324
      %v3326 = vpop.f32.mrb[0].mxu0
      %v3327 = vpop.f32.mrb[0].mxu0
      %v3328 = vadd.f32 0.0, %v3327
      %v3329 = vpop.f32.mrb[0].mxu0
      %3330 = vmatprep.mubr.bf16.mxu0 0
      %3331 = vmatmul.mubr.bf16.gmra.mrb[0].mxu0 %v3167
      %v3332 = vpop.f32.mrb[0].mxu0
      %v3333 = vadd.f32 0.0, %v3332
      %v3334 = vpop.f32.mrb[0].mxu0
      %v3335 = vpop.f32.mrb[0].mxu0
      %v3336 = vadd.f32 0.0, %v3335
      %v3337 = vpop.f32.mrb[0].mxu0
      %3338 = vmatprep.mubr.bf16.mxu0 0
      %3339 = vmatmul.mubr.bf16.gmra.mrb[0].mxu0 %v3169
      %v3340 = vpop.f32.mrb[0].mxu0
      %v3341 = vadd.f32 0.0, %v3340
      %v3342 = vpop.f32.mrb[0].mxu0
      %v3343 = vpop.f32.mrb[0].mxu0
      %v3344 = vadd.f32 0.0, %v3343
      %v3345 = vpop.f32.mrb[0].mxu0
      %3346 = vmatprep.mubr.bf16.mxu0 0
      %3347 = vmatmul.mubr.bf16.gmra.mrb[0].mxu0 %v3171
      %v3348 = vpop.f32.mrb[0].mxu0
      %v3349 = vadd.f32 0.0, %v3348
      %v3350 = vpop.f32.mrb[0].mxu0
      %v3351 = vpop.f32.mrb[0].mxu0
      %v3352 = vadd.f32 0.0, %v3351
      %v3353 = vpop.f32.mrb[0].mxu0
      %3354 = vmatprep.mubr.bf16.mxu0 0
      %3355 = vmatmul.mubr.bf16.gmra.mrb[0].mxu0 %v3173
      %v3356 = vpop.f32.mrb[0].mxu0
      %v3357 = vadd.f32 0.0, %v3356
      %v3358 = vpop.f32.mrb[0].mxu0
      %v3359 = vpop.f32.mrb[0].mxu0
      %v3360 = vadd.f32 0.0, %v3359
      %v3361 = vpop.f32.mrb[0].mxu0
      %3362 = vmatprep.mubr.bf16.mxu0 0
      %3363 = vmatmul.mubr.bf16.gmra.mrb[0].mxu0 %v3175
      %v3364 = vpop.f32.mrb[0].mxu0
      %v3365 = vadd.f32 0.0, %v3364
      %v3366 = vpop.f32.mrb[0].mxu0
      %v3367 = vpop.f32.mrb[0].mxu0
      %v3368 = vadd.f32 0.0, %v3367
      %v3369 = vpop.f32.mrb[0].mxu0
      %3370 = vmatprep.mubr.bf16.mxu0 0
      %3371 = vmatmul.mubr.bf16.gmra.mrb[0].mxu0 %v3177
      %v3372 = vpop.f32.mrb[0].mxu0
      %v3373 = vadd.f32 0.0, %v3372
      %v3374 = vpop.f32.mrb[0].mxu0
      %v3375 = vpop.f32.mrb[0].mxu0
      %v3376 = vadd.f32 0.0, %v3375
      %v3377 = vpop.f32.mrb[0].mxu0
      %3378 = vmatprep.mubr.bf16.mxu0 0
      %3379 = vmatmul.mubr.bf16.gmra.mrb[0].mxu0 %v3179
      %v3380 = vpop.f32.mrb[0].mxu0
      %v3381 = vadd.f32 0.0, %v3380
      %v3382 = vpop.f32.mrb[0].mxu0
      %v3383 = vpop.f32.mrb[0].mxu0
      %v3384 = vadd.f32 0.0, %v3383
      %v3385 = vpop.f32.mrb[0].mxu0
      %3386 = vdwg.mxu0
      %v3387 = vadd.f32 %v3102, %v3277
      %v3388 = vadd.f32 %v3103, %v3280
      %v3389 = vadd.f32 %v3104, %v3285
      %v3390 = vadd.f32 %v3105, %v3288
      %v3391 = vadd.f32 %v3106, %v3293
      %v3392 = vadd.f32 %v3107, %v3296
      %v3393 = vadd.f32 %v3108, %v3301
      %v3394 = vadd.f32 %v3109, %v3304
      %v3395 = vadd.f32 %v3110, %v3309
      %v3396 = vadd.f32 %v3111, %v3312
      %v3397 = vadd.f32 %v3112, %v3317
      %v3398 = vadd.f32 %v3113, %v3320
      %v3399 = vadd.f32 %v3114, %v3325
      %v3400 = vadd.f32 %v3115, %v3328
      %v3401 = vadd.f32 %v3116, %v3333
      %v3402 = vadd.f32 %v3117, %v3336
      %v3403 = vadd.f32 %v3118, %v3341
      %v3404 = vadd.f32 %v3119, %v3344
      %v3405 = vadd.f32 %v3120, %v3349
      %v3406 = vadd.f32 %v3121, %v3352
      %v3407 = vadd.f32 %v3122, %v3357
      %v3408 = vadd.f32 %v3123, %v3360
      %v3409 = vadd.f32 %v3124, %v3365
      %v3410 = vadd.f32 %v3125, %v3368
      %v3411 = vadd.f32 %v3126, %v3373
      %v3412 = vadd.f32 %v3127, %v3376
      %v3413 = vadd.f32 %v3128, %v3381
      %v3414 = vadd.f32 %v3129, %v3384
      %v3415 = vld [vmem:[%s2] sm:$0x1]
      %v3417 = vlaneseq
      %v3418 = vshrl.u32 %v3417, 7
      %v3419 = vsub.s32 0, %v3418
      %v3420 = vrot.slane %v3415, %v3419
      %v3422 = vadd.f32 %v3387, %v3420
      %v3423 = vadd.f32 %v3388, %v3420
      %v3424 = vadd.f32 %v3389, %v3420
      %v3425 = vadd.f32 %v3390, %v3420
      %v3426 = vadd.f32 %v3391, %v3420
      %v3427 = vadd.f32 %v3392, %v3420
      %v3428 = vadd.f32 %v3393, %v3420
      %v3429 = vadd.f32 %v3394, %v3420
      %v3430 = vadd.f32 %v3395, %v3420
      %v3431 = vadd.f32 %v3396, %v3420
      %v3432 = vadd.f32 %v3397, %v3420
      %v3433 = vadd.f32 %v3398, %v3420
      %v3434 = vadd.f32 %v3399, %v3420
      %v3435 = vadd.f32 %v3400, %v3420
      %v3436 = vadd.f32 %v3401, %v3420
      %v3437 = vadd.f32 %v3402, %v3420
      %v3438 = vadd.f32 %v3403, %v3420
      %v3439 = vadd.f32 %v3404, %v3420
      %v3440 = vadd.f32 %v3405, %v3420
      %v3441 = vadd.f32 %v3406, %v3420
      %v3442 = vadd.f32 %v3407, %v3420
      %v3443 = vadd.f32 %v3408, %v3420
      %v3444 = vadd.f32 %v3409, %v3420
      %v3445 = vadd.f32 %v3410, %v3420
      %v3446 = vadd.f32 %v3411, %v3420
      %v3447 = vadd.f32 %v3412, %v3420
      %v3448 = vadd.f32 %v3413, %v3420
      %v3449 = vadd.f32 %v3414, %v3420
      %v3450 = vmax.f32 %v3422, 0.0
      %v3451 = vmax.f32 %v3423, 0.0
      %v3452 = vmax.f32 %v3424, 0.0
      %v3453 = vmax.f32 %v3425, 0.0
      %v3454 = vmax.f32 %v3426, 0.0
      %v3455 = vmax.f32 %v3427, 0.0
      %v3456 = vmax.f32 %v3428, 0.0
      %v3457 = vmax.f32 %v3429, 0.0
      %v3458 = vmax.f32 %v3430, 0.0
      %v3459 = vmax.f32 %v3431, 0.0
      %v3460 = vmax.f32 %v3432, 0.0
      %v3461 = vmax.f32 %v3433, 0.0
      %v3462 = vmax.f32 %v3434, 0.0
      %v3463 = vmax.f32 %v3435, 0.0
      %v3464 = vmax.f32 %v3436, 0.0
      %v3465 = vmax.f32 %v3437, 0.0
      %v3466 = vmax.f32 %v3438, 0.0
      %v3467 = vmax.f32 %v3439, 0.0
      %v3468 = vmax.f32 %v3440, 0.0
      %v3469 = vmax.f32 %v3441, 0.0
      %v3470 = vmax.f32 %v3442, 0.0
      %v3471 = vmax.f32 %v3443, 0.0
      %v3472 = vmax.f32 %v3444, 0.0
      %v3473 = vmax.f32 %v3445, 0.0
      %v3474 = vmax.f32 %v3446, 0.0
      %v3475 = vmax.f32 %v3447, 0.0
      %v3476 = vmax.f32 %v3448, 0.0
      %v3477 = vmax.f32 %v3449, 0.0
      %v3478 = vlaneseq
      %v3479 = vshrl.u32 %v3478, 7
      %v3480 = vadd.s32 %v3479, 8
      %v3481 = vadd.s32 %v3479, 16
      %v3482 = vadd.s32 %v3479, 24
      %v3483 = vadd.s32 %v3479, 32
      %v3484 = vadd.s32 %v3479, 40
      %v3485 = vadd.s32 %v3479, 48
      %v3486 = vadd.s32 %v3479, 56
      %v3487 = vadd.s32 %v3479, 64
      %v3488 = vadd.s32 %v3479, 72
      %v3489 = vadd.s32 %v3479, 80
      %v3490 = vadd.s32 %v3479, 88
      %v3491 = vadd.s32 %v3479, 96
      %v3492 = vadd.s32 %v3479, 104
      %v3493 = vadd.s32 %v3479, 112
      %v3494 = vadd.s32 %v3479, 120
      %v3495 = vadd.s32 %v3479, 128
      %v3496 = vadd.s32 %v3479, 136
      %v3497 = vadd.s32 %v3479, 144
      %v3498 = vadd.s32 %v3479, 152
      %v3499 = vadd.s32 %v3479, 160
      %v3500 = vadd.s32 %v3479, 168
      %v3501 = vadd.s32 %v3479, 176
      %v3502 = vadd.s32 %v3479, 184
      %v3503 = vadd.s32 %v3479, 192
      %v3504 = vadd.s32 %v3479, 200
      %v3505 = vadd.s32 %v3479, 208
      %v3506 = vadd.s32 %v3479, 216
      %vm3507 = vcmp.lt.s32.totalorder %v3479, 0
      %v3508 = vsub.s32 0, %v3479
      %v3509 = vsel %vm3507, %v3508, %v3479
      %v3510 = vshrl.u32 %v3509, 4
      %v3511 = vand.u32 %v3509, 15
      %v3512 = vsub.s32 0, %v3511
      %v3513 = vsel %vm3507, %v3512, %v3511
      %vm3514 = vcmp.lt.s32.totalorder %v3480, 0
      %v3515 = vsub.s32 0, %v3480
      %v3516 = vsel %vm3514, %v3515, %v3480
      %v3517 = vshrl.u32 %v3516, 4
      %v3518 = vand.u32 %v3516, 15
      %v3519 = vsub.s32 0, %v3518
      %v3520 = vsel %vm3514, %v3519, %v3518
      %vm3521 = vcmp.lt.s32.totalorder %v3481, 0
      %v3522 = vsub.s32 0, %v3481
      %v3523 = vsel %vm3521, %v3522, %v3481
      %v3524 = vshrl.u32 %v3523, 4
      %v3525 = vand.u32 %v3523, 15
      %v3526 = vsub.s32 0, %v3525
      %v3527 = vsel %vm3521, %v3526, %v3525
      %vm3528 = vcmp.lt.s32.totalorder %v3482, 0
      %v3529 = vsub.s32 0, %v3482
      %v3530 = vsel %vm3528, %v3529, %v3482
      %v3531 = vshrl.u32 %v3530, 4
      %v3532 = vand.u32 %v3530, 15
      %v3533 = vsub.s32 0, %v3532
      %v3534 = vsel %vm3528, %v3533, %v3532
      %vm3535 = vcmp.lt.s32.totalorder %v3483, 0
      %v3536 = vsub.s32 0, %v3483
      %v3537 = vsel %vm3535, %v3536, %v3483
      %v3538 = vshrl.u32 %v3537, 4
      %v3539 = vand.u32 %v3537, 15
      %v3540 = vsub.s32 0, %v3539
      %v3541 = vsel %vm3535, %v3540, %v3539
      %vm3542 = vcmp.lt.s32.totalorder %v3484, 0
      %v3543 = vsub.s32 0, %v3484
      %v3544 = vsel %vm3542, %v3543, %v3484
      %v3545 = vshrl.u32 %v3544, 4
      %v3546 = vand.u32 %v3544, 15
      %v3547 = vsub.s32 0, %v3546
      %v3548 = vsel %vm3542, %v3547, %v3546
      %vm3549 = vcmp.lt.s32.totalorder %v3485, 0
      %v3550 = vsub.s32 0, %v3485
      %v3551 = vsel %vm3549, %v3550, %v3485
      %v3552 = vshrl.u32 %v3551, 4
      %v3553 = vand.u32 %v3551, 15
      %v3554 = vsub.s32 0, %v3553
      %v3555 = vsel %vm3549, %v3554, %v3553
      %vm3556 = vcmp.lt.s32.totalorder %v3486, 0
      %v3557 = vsub.s32 0, %v3486
      %v3558 = vsel %vm3556, %v3557, %v3486
      %v3559 = vshrl.u32 %v3558, 4
      %v3560 = vand.u32 %v3558, 15
      %v3561 = vsub.s32 0, %v3560
      %v3562 = vsel %vm3556, %v3561, %v3560
      %vm3563 = vcmp.lt.s32.totalorder %v3487, 0
      %v3564 = vsub.s32 0, %v3487
      %v3565 = vsel %vm3563, %v3564, %v3487
      %v3566 = vshrl.u32 %v3565, 4
      %v3567 = vand.u32 %v3565, 15
      %v3568 = vsub.s32 0, %v3567
      %v3569 = vsel %vm3563, %v3568, %v3567
      %vm3570 = vcmp.lt.s32.totalorder %v3488, 0
      %v3571 = vsub.s32 0, %v3488
      %v3572 = vsel %vm3570, %v3571, %v3488
      %v3573 = vshrl.u32 %v3572, 4
      %v3574 = vand.u32 %v3572, 15
      %v3575 = vsub.s32 0, %v3574
      %v3576 = vsel %vm3570, %v3575, %v3574
      %vm3577 = vcmp.lt.s32.totalorder %v3489, 0
      %v3578 = vsub.s32 0, %v3489
      %v3579 = vsel %vm3577, %v3578, %v3489
      %v3580 = vshrl.u32 %v3579, 4
      %v3581 = vand.u32 %v3579, 15
      %v3582 = vsub.s32 0, %v3581
      %v3583 = vsel %vm3577, %v3582, %v3581
      %vm3584 = vcmp.lt.s32.totalorder %v3490, 0
      %v3585 = vsub.s32 0, %v3490
      %v3586 = vsel %vm3584, %v3585, %v3490
      %v3587 = vshrl.u32 %v3586, 4
      %v3588 = vand.u32 %v3586, 15
      %v3589 = vsub.s32 0, %v3588
      %v3590 = vsel %vm3584, %v3589, %v3588
      %vm3591 = vcmp.lt.s32.totalorder %v3491, 0
      %v3592 = vsub.s32 0, %v3491
      %v3593 = vsel %vm3591, %v3592, %v3491
      %v3594 = vshrl.u32 %v3593, 4
      %v3595 = vand.u32 %v3593, 15
      %v3596 = vsub.s32 0, %v3595
      %v3597 = vsel %vm3591, %v3596, %v3595
      %vm3598 = vcmp.lt.s32.totalorder %v3492, 0
      %v3599 = vsub.s32 0, %v3492
      %v3600 = vsel %vm3598, %v3599, %v3492
      %v3601 = vshrl.u32 %v3600, 4
      %v3602 = vand.u32 %v3600, 15
      %v3603 = vsub.s32 0, %v3602
      %v3604 = vsel %vm3598, %v3603, %v3602
      %vm3605 = vcmp.lt.s32.totalorder %v3493, 0
      %v3606 = vsub.s32 0, %v3493
      %v3607 = vsel %vm3605, %v3606, %v3493
      %v3608 = vshrl.u32 %v3607, 4
      %v3609 = vand.u32 %v3607, 15
      %v3610 = vsub.s32 0, %v3609
      %v3611 = vsel %vm3605, %v3610, %v3609
      %vm3612 = vcmp.lt.s32.totalorder %v3494, 0
      %v3613 = vsub.s32 0, %v3494
      %v3614 = vsel %vm3612, %v3613, %v3494
      %v3615 = vshrl.u32 %v3614, 4
      %v3616 = vand.u32 %v3614, 15
      %v3617 = vsub.s32 0, %v3616
      %v3618 = vsel %vm3612, %v3617, %v3616
      %vm3619 = vcmp.lt.s32.totalorder %v3495, 0
      %v3620 = vsub.s32 0, %v3495
      %v3621 = vsel %vm3619, %v3620, %v3495
      %v3622 = vshrl.u32 %v3621, 4
      %v3623 = vand.u32 %v3621, 15
      %v3624 = vsub.s32 0, %v3623
      %v3625 = vsel %vm3619, %v3624, %v3623
      %vm3626 = vcmp.lt.s32.totalorder %v3496, 0
      %v3627 = vsub.s32 0, %v3496
      %v3628 = vsel %vm3626, %v3627, %v3496
      %v3629 = vshrl.u32 %v3628, 4
      %v3630 = vand.u32 %v3628, 15
      %v3631 = vsub.s32 0, %v3630
      %v3632 = vsel %vm3626, %v3631, %v3630
      %vm3633 = vcmp.lt.s32.totalorder %v3497, 0
      %v3634 = vsub.s32 0, %v3497
      %v3635 = vsel %vm3633, %v3634, %v3497
      %v3636 = vshrl.u32 %v3635, 4
      %v3637 = vand.u32 %v3635, 15
      %v3638 = vsub.s32 0, %v3637
      %v3639 = vsel %vm3633, %v3638, %v3637
      %vm3640 = vcmp.lt.s32.totalorder %v3498, 0
      %v3641 = vsub.s32 0, %v3498
      %v3642 = vsel %vm3640, %v3641, %v3498
      %v3643 = vshrl.u32 %v3642, 4
      %v3644 = vand.u32 %v3642, 15
      %v3645 = vsub.s32 0, %v3644
      %v3646 = vsel %vm3640, %v3645, %v3644
      %vm3647 = vcmp.lt.s32.totalorder %v3499, 0
      %v3648 = vsub.s32 0, %v3499
      %v3649 = vsel %vm3647, %v3648, %v3499
      %v3650 = vshrl.u32 %v3649, 4
      %v3651 = vand.u32 %v3649, 15
      %v3652 = vsub.s32 0, %v3651
      %v3653 = vsel %vm3647, %v3652, %v3651
      %vm3654 = vcmp.lt.s32.totalorder %v3500, 0
      %v3655 = vsub.s32 0, %v3500
      %v3656 = vsel %vm3654, %v3655, %v3500
      %v3657 = vshrl.u32 %v3656, 4
      %v3658 = vand.u32 %v3656, 15
      %v3659 = vsub.s32 0, %v3658
      %v3660 = vsel %vm3654, %v3659, %v3658
      %vm3661 = vcmp.lt.s32.totalorder %v3501, 0
      %v3662 = vsub.s32 0, %v3501
      %v3663 = vsel %vm3661, %v3662, %v3501
      %v3664 = vshrl.u32 %v3663, 4
      %v3665 = vand.u32 %v3663, 15
      %v3666 = vsub.s32 0, %v3665
      %v3667 = vsel %vm3661, %v3666, %v3665
      %vm3668 = vcmp.lt.s32.totalorder %v3502, 0
      %v3669 = vsub.s32 0, %v3502
      %v3670 = vsel %vm3668, %v3669, %v3502
      %v3671 = vshrl.u32 %v3670, 4
      %v3672 = vand.u32 %v3670, 15
      %v3673 = vsub.s32 0, %v3672
      %v3674 = vsel %vm3668, %v3673, %v3672
      %vm3675 = vcmp.lt.s32.totalorder %v3503, 0
      %v3676 = vsub.s32 0, %v3503
      %v3677 = vsel %vm3675, %v3676, %v3503
      %v3678 = vshrl.u32 %v3677, 4
      %v3679 = vand.u32 %v3677, 15
      %v3680 = vsub.s32 0, %v3679
      %v3681 = vsel %vm3675, %v3680, %v3679
      %vm3682 = vcmp.lt.s32.totalorder %v3504, 0
      %v3683 = vsub.s32 0, %v3504
      %v3684 = vsel %vm3682, %v3683, %v3504
      %v3685 = vshrl.u32 %v3684, 4
      %v3686 = vand.u32 %v3684, 15
      %v3687 = vsub.s32 0, %v3686
      %v3688 = vsel %vm3682, %v3687, %v3686
      %vm3689 = vcmp.lt.s32.totalorder %v3505, 0
      %v3690 = vsub.s32 0, %v3505
      %v3691 = vsel %vm3689, %v3690, %v3505
      %v3692 = vshrl.u32 %v3691, 4
      %v3693 = vand.u32 %v3691, 15
      %v3694 = vsub.s32 0, %v3693
      %v3695 = vsel %vm3689, %v3694, %v3693
      %vm3696 = vcmp.lt.s32.totalorder %v3506, 0
      %v3697 = vsub.s32 0, %v3506
      %v3698 = vsel %vm3696, %v3697, %v3506
      %v3699 = vshrl.u32 %v3698, 4
      %v3700 = vand.u32 %v3698, 15
      %v3701 = vsub.s32 0, %v3700
      %v3702 = vsel %vm3696, %v3701, %v3700
      %vm3703 = vcmp.ne.s32.totalorder %v3513, 0
      %vm3704 = vcmp.ne.s32.totalorder %v3520, 0
      %vm3705 = vcmp.ne.s32.totalorder %v3527, 0
      %vm3706 = vcmp.ne.s32.totalorder %v3534, 0
      %vm3707 = vcmp.ne.s32.totalorder %v3541, 0
      %vm3708 = vcmp.ne.s32.totalorder %v3548, 0
      %vm3709 = vcmp.ne.s32.totalorder %v3555, 0
      %vm3710 = vcmp.ne.s32.totalorder %v3562, 0
      %vm3711 = vcmp.ne.s32.totalorder %v3569, 0
      %vm3712 = vcmp.ne.s32.totalorder %v3576, 0
      %vm3713 = vcmp.ne.s32.totalorder %v3583, 0
      %vm3714 = vcmp.ne.s32.totalorder %v3590, 0
      %vm3715 = vcmp.ne.s32.totalorder %v3597, 0
      %vm3716 = vcmp.ne.s32.totalorder %v3604, 0
      %vm3717 = vcmp.ne.s32.totalorder %v3611, 0
      %vm3718 = vcmp.ne.s32.totalorder %v3618, 0
      %vm3719 = vcmp.ne.s32.totalorder %v3625, 0
      %vm3720 = vcmp.ne.s32.totalorder %v3632, 0
      %vm3721 = vcmp.ne.s32.totalorder %v3639, 0
      %vm3722 = vcmp.ne.s32.totalorder %v3646, 0
      %vm3723 = vcmp.ne.s32.totalorder %v3653, 0
      %vm3724 = vcmp.ne.s32.totalorder %v3660, 0
      %vm3725 = vcmp.ne.s32.totalorder %v3667, 0
      %vm3726 = vcmp.ne.s32.totalorder %v3674, 0
      %vm3727 = vcmp.ne.s32.totalorder %v3681, 0
      %vm3728 = vcmp.ne.s32.totalorder %v3688, 0
      %vm3729 = vcmp.ne.s32.totalorder %v3695, 0
      %vm3730 = vcmp.ne.s32.totalorder %v3702, 0
      %vm3731 = vcmp.lt.s32.totalorder %v3513, 0
      %vm3732 = vcmp.lt.s32.totalorder %v3520, 0
      %vm3733 = vcmp.lt.s32.totalorder %v3527, 0
      %vm3734 = vcmp.lt.s32.totalorder %v3534, 0
      %vm3735 = vcmp.lt.s32.totalorder %v3541, 0
      %vm3736 = vcmp.lt.s32.totalorder %v3548, 0
      %vm3737 = vcmp.lt.s32.totalorder %v3555, 0
      %vm3738 = vcmp.lt.s32.totalorder %v3562, 0
      %vm3739 = vcmp.lt.s32.totalorder %v3569, 0
      %vm3740 = vcmp.lt.s32.totalorder %v3576, 0
      %vm3741 = vcmp.lt.s32.totalorder %v3583, 0
      %vm3742 = vcmp.lt.s32.totalorder %v3590, 0
      %vm3743 = vcmp.lt.s32.totalorder %v3597, 0
      %vm3744 = vcmp.lt.s32.totalorder %v3604, 0
      %vm3745 = vcmp.lt.s32.totalorder %v3611, 0
      %vm3746 = vcmp.lt.s32.totalorder %v3618, 0
      %vm3747 = vcmp.lt.s32.totalorder %v3625, 0
      %vm3748 = vcmp.lt.s32.totalorder %v3632, 0
      %vm3749 = vcmp.lt.s32.totalorder %v3639, 0
      %vm3750 = vcmp.lt.s32.totalorder %v3646, 0
      %vm3751 = vcmp.lt.s32.totalorder %v3653, 0
      %vm3752 = vcmp.lt.s32.totalorder %v3660, 0
      %vm3753 = vcmp.lt.s32.totalorder %v3667, 0
      %vm3754 = vcmp.lt.s32.totalorder %v3674, 0
      %vm3755 = vcmp.lt.s32.totalorder %v3681, 0
      %vm3756 = vcmp.lt.s32.totalorder %v3688, 0
      %vm3757 = vcmp.lt.s32.totalorder %v3695, 0
      %vm3758 = vcmp.lt.s32.totalorder %v3702, 0
      %vm3759 = vmand %vm3731, %vm3703
      %vm3760 = vmand %vm3732, %vm3704
      %vm3761 = vmand %vm3733, %vm3705
      %vm3762 = vmand %vm3734, %vm3706
      %vm3763 = vmand %vm3735, %vm3707
      %vm3764 = vmand %vm3736, %vm3708
      %vm3765 = vmand %vm3737, %vm3709
      %vm3766 = vmand %vm3738, %vm3710
      %vm3767 = vmand %vm3739, %vm3711
      %vm3768 = vmand %vm3740, %vm3712
      %vm3769 = vmand %vm3741, %vm3713
      %vm3770 = vmand %vm3742, %vm3714
      %vm3771 = vmand %vm3743, %vm3715
      %vm3772 = vmand %vm3744, %vm3716
      %vm3773 = vmand %vm3745, %vm3717
      %vm3774 = vmand %vm3746, %vm3718
      %vm3775 = vmand %vm3747, %vm3719
      %vm3776 = vmand %vm3748, %vm3720
      %vm3777 = vmand %vm3749, %vm3721
      %vm3778 = vmand %vm3750, %vm3722
      %vm3779 = vmand %vm3751, %vm3723
      %vm3780 = vmand %vm3752, %vm3724
      %vm3781 = vmand %vm3753, %vm3725
      %vm3782 = vmand %vm3754, %vm3726
      %vm3783 = vmand %vm3755, %vm3727
      %vm3784 = vmand %vm3756, %vm3728
      %vm3785 = vmand %vm3757, %vm3729
      %vm3786 = vmand %vm3758, %vm3730
      %v3787 = vadd.s32 %v3513, 16
      %v3788 = vadd.s32 %v3520, 16
      %v3789 = vadd.s32 %v3527, 16
      %v3790 = vadd.s32 %v3534, 16
      %v3791 = vadd.s32 %v3541, 16
      %v3792 = vadd.s32 %v3548, 16
      %v3793 = vadd.s32 %v3555, 16
      %v3794 = vadd.s32 %v3562, 16
      %v3795 = vadd.s32 %v3569, 16
      %v3796 = vadd.s32 %v3576, 16
      %v3797 = vadd.s32 %v3583, 16
      %v3798 = vadd.s32 %v3590, 16
      %v3799 = vadd.s32 %v3597, 16
      %v3800 = vadd.s32 %v3604, 16
      %v3801 = vadd.s32 %v3611, 16
      %v3802 = vadd.s32 %v3618, 16
      %v3803 = vadd.s32 %v3625, 16
      %v3804 = vadd.s32 %v3632, 16
      %v3805 = vadd.s32 %v3639, 16
      %v3806 = vadd.s32 %v3646, 16
      %v3807 = vadd.s32 %v3653, 16
      %v3808 = vadd.s32 %v3660, 16
      %v3809 = vadd.s32 %v3667, 16
      %v3810 = vadd.s32 %v3674, 16
      %v3811 = vadd.s32 %v3681, 16
      %v3812 = vadd.s32 %v3688, 16
      %v3813 = vadd.s32 %v3695, 16
      %v3814 = vadd.s32 %v3702, 16
      %v3815 = vsel %vm3759, %v3787, %v3513
      %v3816 = vsel %vm3760, %v3788, %v3520
      %v3817 = vsel %vm3761, %v3789, %v3527
      %v3818 = vsel %vm3762, %v3790, %v3534
      %v3819 = vsel %vm3763, %v3791, %v3541
      %v3820 = vsel %vm3764, %v3792, %v3548
      %v3821 = vsel %vm3765, %v3793, %v3555
      %v3822 = vsel %vm3766, %v3794, %v3562
      %v3823 = vsel %vm3767, %v3795, %v3569
      %v3824 = vsel %vm3768, %v3796, %v3576
      %v3825 = vsel %vm3769, %v3797, %v3583
      %v3826 = vsel %vm3770, %v3798, %v3590
      %v3827 = vsel %vm3771, %v3799, %v3597
      %v3828 = vsel %vm3772, %v3800, %v3604
      %v3829 = vsel %vm3773, %v3801, %v3611
      %v3830 = vsel %vm3774, %v3802, %v3618
      %v3831 = vsel %vm3775, %v3803, %v3625
      %v3832 = vsel %vm3776, %v3804, %v3632
      %v3833 = vsel %vm3777, %v3805, %v3639
      %v3834 = vsel %vm3778, %v3806, %v3646
      %v3835 = vsel %vm3779, %v3807, %v3653
      %v3836 = vsel %vm3780, %v3808, %v3660
      %v3837 = vsel %vm3781, %v3809, %v3667
      %v3838 = vsel %vm3782, %v3810, %v3674
      %v3839 = vsel %vm3783, %v3811, %v3681
      %v3840 = vsel %vm3784, %v3812, %v3688
      %v3841 = vsel %vm3785, %v3813, %v3695
      %v3842 = vsel %vm3786, %v3814, %v3702
      %vm3843 = vcmp.lt.s32.totalorder %v3815, 14
      %vm3844 = vcmp.lt.s32.totalorder %v3816, 14
      %vm3845 = vcmp.lt.s32.totalorder %v3817, 14
      %vm3846 = vcmp.lt.s32.totalorder %v3818, 14
      %vm3847 = vcmp.lt.s32.totalorder %v3819, 14
      %vm3848 = vcmp.lt.s32.totalorder %v3820, 14
      %vm3849 = vcmp.lt.s32.totalorder %v3821, 14
      %vm3850 = vcmp.lt.s32.totalorder %v3822, 14
      %vm3851 = vcmp.lt.s32.totalorder %v3823, 14
      %vm3852 = vcmp.lt.s32.totalorder %v3824, 14
      %vm3853 = vcmp.lt.s32.totalorder %v3825, 14
      %vm3854 = vcmp.lt.s32.totalorder %v3826, 14
      %vm3855 = vcmp.lt.s32.totalorder %v3827, 14
      %vm3856 = vcmp.lt.s32.totalorder %v3828, 14
      %vm3857 = vcmp.lt.s32.totalorder %v3829, 14
      %vm3858 = vcmp.lt.s32.totalorder %v3830, 14
      %vm3859 = vcmp.lt.s32.totalorder %v3831, 14
      %vm3860 = vcmp.lt.s32.totalorder %v3832, 14
      %vm3861 = vcmp.lt.s32.totalorder %v3833, 14
      %vm3862 = vcmp.lt.s32.totalorder %v3834, 14
      %vm3863 = vcmp.lt.s32.totalorder %v3835, 14
      %vm3864 = vcmp.lt.s32.totalorder %v3836, 14
      %vm3865 = vcmp.lt.s32.totalorder %v3837, 14
      %vm3866 = vcmp.lt.s32.totalorder %v3838, 14
      %vm3867 = vcmp.lt.s32.totalorder %v3839, 14
      %vm3868 = vcmp.lt.s32.totalorder %v3840, 14
      %vm3869 = vcmp.lt.s32.totalorder %v3841, 14
      %vm3870 = vcmp.lt.s32.totalorder %v3842, 14
      %v3871 = vsel %vm3843, %v3450, 0.0
      %v3872 = vsel %vm3844, %v3451, 0.0
      %v3873 = vsel %vm3845, %v3452, 0.0
      %v3874 = vsel %vm3846, %v3453, 0.0
      %v3875 = vsel %vm3847, %v3454, 0.0
      %v3876 = vsel %vm3848, %v3455, 0.0
      %v3877 = vsel %vm3849, %v3456, 0.0
      %v3878 = vsel %vm3850, %v3457, 0.0
      %v3879 = vsel %vm3851, %v3458, 0.0
      %v3880 = vsel %vm3852, %v3459, 0.0
      %v3881 = vsel %vm3853, %v3460, 0.0
      %v3882 = vsel %vm3854, %v3461, 0.0
      %v3883 = vsel %vm3855, %v3462, 0.0
      %v3884 = vsel %vm3856, %v3463, 0.0
      %v3885 = vsel %vm3857, %v3464, 0.0
      %v3886 = vsel %vm3858, %v3465, 0.0
      %v3887 = vsel %vm3859, %v3466, 0.0
      %v3888 = vsel %vm3860, %v3467, 0.0
      %v3889 = vsel %vm3861, %v3468, 0.0
      %v3890 = vsel %vm3862, %v3469, 0.0
      %v3891 = vsel %vm3863, %v3470, 0.0
      %v3892 = vsel %vm3864, %v3471, 0.0
      %v3893 = vsel %vm3865, %v3472, 0.0
      %v3894 = vsel %vm3866, %v3473, 0.0
      %v3895 = vsel %vm3867, %v3474, 0.0
      %v3896 = vsel %vm3868, %v3475, 0.0
      %v3897 = vsel %vm3869, %v3476, 0.0
      %v3898 = vsel %vm3870, %v3477, 0.0
      %3899 = vst [vmem:[#allocation2] sm:$0xff] 0
      %3900 = vst [vmem:[#allocation2 + $0x8] sm:$0xff] 0
      %3901 = vst [vmem:[#allocation2 + $0x80] sm:$0xff] 0
      %3902 = vst [vmem:[#allocation2 + $0x88] sm:$0xff] 0
      %v3903 = vpack.c.bf16 %v3872, %v3871
      %v3904 = vpack.c.bf16 %v3874, %v3873
      %v3905 = vpack.c.bf16 %v3876, %v3875
      %v3906 = vpack.c.bf16 %v3878, %v3877
      %v3907 = vpack.c.bf16 %v3880, %v3879
      %v3908 = vpack.c.bf16 %v3882, %v3881
      %v3909 = vpack.c.bf16 %v3884, %v3883
      %v3910 = vpack.c.bf16 %v3886, %v3885
      %v3911 = vpack.c.bf16 %v3888, %v3887
      %v3912 = vpack.c.bf16 %v3890, %v3889
      %v3913 = vpack.c.bf16 %v3892, %v3891
      %v3914 = vpack.c.bf16 %v3894, %v3893
      %v3915 = vpack.c.bf16 %v3896, %v3895
      %v3916 = vpack.c.bf16 %v3898, %v3897
      %3917 = vst [vmem:[#allocation2 + $0x10] sm:$0xff] %v3903
      %3918 = vst [vmem:[#allocation2 + $0x18] sm:$0xff] %v3904
      %3919 = vst [vmem:[#allocation2 + $0x20] sm:$0xff] %v3905
      %3920 = vst [vmem:[#allocation2 + $0x28] sm:$0xff] %v3906
      %3921 = vst [vmem:[#allocation2 + $0x30] sm:$0xff] %v3907
      %3922 = vst [vmem:[#allocation2 + $0x38] sm:$0xff] %v3908
      %3923 = vst [vmem:[#allocation2 + $0x40] sm:$0xff] %v3909
      %3924 = vst [vmem:[#allocation2 + $0x48] sm:$0xff] %v3910
      %3925 = vst [vmem:[#allocation2 + $0x50] sm:$0xff] %v3911
      %3926 = vst [vmem:[#allocation2 + $0x58] sm:$0xff] %v3912
      %3927 = vst [vmem:[#allocation2 + $0x60] sm:$0xff] %v3913
      %3928 = vst [vmem:[#allocation2 + $0x68] sm:$0xff] %v3914
      %3929 = vst [vmem:[#allocation2 + $0x70] sm:$0xff] %v3915
      %3930 = vst [vmem:[#allocation2 + $0x78] sm:$0xff] %v3916
      %v3931 = vld [vmem:[#allocation2] sm:$0x80]
      %v3932 = vld [vmem:[#allocation2 + $0x8] sm:$0xff]
      %v3933 = vld [vmem:[#allocation2 + $0x10] sm:$0xff]
      %v3934 = vld [vmem:[#allocation2 + $0x18] sm:$0xff]
      %v3935 = vld [vmem:[#allocation2 + $0x20] sm:$0xff]
      %v3936 = vld [vmem:[#allocation2 + $0x28] sm:$0xff]
      %v3937 = vld [vmem:[#allocation2 + $0x30] sm:$0xff]
      %v3938 = vld [vmem:[#allocation2 + $0x38] sm:$0xff]
      %v3939 = vld [vmem:[#allocation2 + $0x40] sm:$0xff]
      %v3940 = vld [vmem:[#allocation2 + $0x48] sm:$0xff]
      %v3941 = vld [vmem:[#allocation2 + $0x50] sm:$0xff]
      %v3942 = vld [vmem:[#allocation2 + $0x58] sm:$0xff]
      %v3943 = vld [vmem:[#allocation2 + $0x60] sm:$0xff]
      %v3944 = vld [vmem:[#allocation2 + $0x68] sm:$0xff]
      %v3945 = vld [vmem:[#allocation2 + $0x70] sm:$0xff]
      %v3946 = vld [vmem:[%s3] sm:$0xf]
      %v3947 = vld [vmem:[%s3 + $0x4] sm:$0xf]
      %v3948 = vld [vmem:[%s3 + $0x8] sm:$0xf]
      %v3949 = vld [vmem:[%s3 + $0xc] sm:$0xf]
      %v3950 = vld [vmem:[%s3 + $0x10] sm:$0xf]
      %v3951 = vld [vmem:[%s3 + $0x14] sm:$0xf]
      %v3952 = vld [vmem:[%s3 + $0x18] sm:$0xf]
      %v3953 = vld [vmem:[%s3 + $0x1c] sm:$0xf]
      %v3954 = vld [vmem:[%s3 + $0x20] sm:$0xf]
      %v3955 = vld [vmem:[%s3 + $0x24] sm:$0xf]
      %v3956 = vld [vmem:[%s3 + $0x28] sm:$0xf]
      %v3957 = vld [vmem:[%s3 + $0x2c] sm:$0xf]
      %v3958 = vld [vmem:[%s3 + $0x30] sm:$0xf]
      %v3959 = vld [vmem:[%s3 + $0x34] sm:$0xf]
      %v3960 = vld [vmem:[%s3 + $0x38] sm:$0xf]
      %v3961 = vld [vmem:[%s3 + $0x3c] sm:$0xf]
      %s3962 = scalar_lea.vmem %s3, 64
      %v3963 = vld [vmem:[%s3962] sm:$0xf]
      %v3964 = vld [vmem:[%s3962 + $0x4] sm:$0xf]
      %v3965 = vld [vmem:[%s3962 + $0x8] sm:$0xf]
      %v3966 = vld [vmem:[%s3962 + $0xc] sm:$0xf]
      %v3967 = vld [vmem:[%s3962 + $0x10] sm:$0xf]
      %v3968 = vld [vmem:[%s3962 + $0x14] sm:$0xf]
      %v3969 = vld [vmem:[%s3962 + $0x18] sm:$0xf]
      %v3970 = vld [vmem:[%s3962 + $0x1c] sm:$0xf]
      %v3971 = vld [vmem:[%s3962 + $0x20] sm:$0xf]
      %v3972 = vld [vmem:[%s3962 + $0x24] sm:$0xf]
      %v3973 = vld [vmem:[%s3962 + $0x28] sm:$0xf]
      %v3974 = vld [vmem:[%s3962 + $0x2c] sm:$0xf]
      %v3975 = vld [vmem:[%s3962 + $0x30] sm:$0xf]
      %v3976 = vld [vmem:[%s3962 + $0x34] sm:$0xf]
      %v3977 = vld [vmem:[%s3962 + $0x38] sm:$0xf]
      %v3978 = vld [vmem:[%s3962 + $0x3c] sm:$0xf]
      %v3995 = vunpack.c.l.b16 %v3963
      %v3996 = vunpack.c.l.b16 %v3964
      %v3997 = vunpack.c.l.b16 %v3965
      %v3998 = vunpack.c.l.b16 %v3966
      %v3999 = vunpack.c.l.b16 %v3967
      %v4000 = vunpack.c.l.b16 %v3968
      %v4001 = vunpack.c.l.b16 %v3969
      %v4002 = vunpack.c.l.b16 %v3970
      %v4003 = vunpack.c.l.b16 %v3971
      %v4004 = vunpack.c.l.b16 %v3972
      %v4005 = vunpack.c.l.b16 %v3973
      %v4006 = vunpack.c.l.b16 %v3974
      %v4007 = vunpack.c.l.b16 %v3975
      %v4008 = vunpack.c.l.b16 %v3976
      %v4009 = vunpack.c.l.b16 %v3977
      %v4010 = vunpack.c.l.b16 %v3978
      %v4011 = vpack.c.b16 %v3996, %v3995
      %v4012 = vpack.c.b16 %v3998, %v3997
      %v4013 = vpack.c.b16 %v4000, %v3999
      %v4014 = vpack.c.b16 %v4002, %v4001
      %v4015 = vpack.c.b16 %v4004, %v4003
      %v4016 = vpack.c.b16 %v4006, %v4005
      %v4017 = vpack.c.b16 %v4008, %v4007
      %v4018 = vpack.c.b16 %v4010, %v4009
      %4027 = vmatprep.subr.bf16.mxu0 0
      %4028 = vmatpush1.bf16.msra.mxu0 %v4011
      %4029 = vmatprep.subr.bf16.mxu0 0
      %4030 = vmatpush1.bf16.msra.mxu0 %v4012
      %4031 = vmatprep.subr.bf16.mxu0 0
      %4032 = vmatpush1.bf16.msra.mxu0 %v4013
      %4033 = vmatprep.subr.bf16.mxu0 0
      %4034 = vmatpush1.bf16.msra.mxu0 %v4014
      %4035 = vmatprep.subr.bf16.mxu0 0
      %4036 = vmatpush1.bf16.msra.mxu0 %v4015
      %4037 = vmatprep.subr.bf16.mxu0 0
      %4038 = vmatpush1.bf16.msra.mxu0 %v4016
      %4039 = vmatprep.subr.bf16.mxu0 0
      %4040 = vmatpush1.bf16.msra.mxu0 %v4017
      %4041 = vmatprep.subr.bf16.mxu0 0
      %4042 = vmatpush1.bf16.msra.mxu0 %v4018
      %4043 = vmatprep.subr.bf16.mxu0 0
      %4044 = vmatpush1.bf16.msra.mxu0 0
      %4045 = vmatprep.subr.bf16.mxu0 0
      %4046 = vmatpush1.bf16.msra.mxu0 0
      %4047 = vmatprep.subr.bf16.mxu0 0
      %4048 = vmatpush1.bf16.msra.mxu0 0
      %4049 = vmatprep.subr.bf16.mxu0 0
      %4050 = vmatpush1.bf16.msra.mxu0 0
      %4051 = vmatprep.subr.bf16.mxu0 0
      %4052 = vmatpush1.bf16.msra.mxu0 0
      %4053 = vmatprep.subr.bf16.mxu0 0
      %4054 = vmatpush1.bf16.msra.mxu0 0
      %4055 = vmatprep.subr.bf16.mxu0 0
      %4056 = vmatpush1.bf16.msra.mxu0 0
      %4057 = vmatprep.subr.bf16.mxu0 0
      %4058 = vmatpush1.bf16.msra.mxu0 0
      %4059 = vmatprep.mubr.bf16.mxu0 0
      %4060 = vmatmul.mubr.bf16.gmra.mrb[0].mxu0 %v3932
      %v4061 = vpop.f32.mrb[0].mxu0
      %v4062 = vadd.f32 0.0, %v4061
      %v4063 = vpop.f32.mrb[0].mxu0
      %v4064 = vpop.f32.mrb[0].mxu0
      %v4065 = vadd.f32 0.0, %v4064
      %v4066 = vpop.f32.mrb[0].mxu0
      %4067 = vmatprep.mubr.bf16.mxu0 0
      %4068 = vmatmul.mubr.bf16.gmra.mrb[0].mxu0 %v3933
      %v4069 = vpop.f32.mrb[0].mxu0
      %v4070 = vadd.f32 0.0, %v4069
      %v4071 = vpop.f32.mrb[0].mxu0
      %v4072 = vpop.f32.mrb[0].mxu0
      %v4073 = vadd.f32 0.0, %v4072
      %v4074 = vpop.f32.mrb[0].mxu0
      %4075 = vmatprep.mubr.bf16.mxu0 0
      %4076 = vmatmul.mubr.bf16.gmra.mrb[0].mxu0 %v3934
      %v4077 = vpop.f32.mrb[0].mxu0
      %v4078 = vadd.f32 0.0, %v4077
      %v4079 = vpop.f32.mrb[0].mxu0
      %v4080 = vpop.f32.mrb[0].mxu0
      %v4081 = vadd.f32 0.0, %v4080
      %v4082 = vpop.f32.mrb[0].mxu0
      %4083 = vmatprep.mubr.bf16.mxu0 0
      %4084 = vmatmul.mubr.bf16.gmra.mrb[0].mxu0 %v3935
      %v4085 = vpop.f32.mrb[0].mxu0
      %v4086 = vadd.f32 0.0, %v4085
      %v4087 = vpop.f32.mrb[0].mxu0
      %v4088 = vpop.f32.mrb[0].mxu0
      %v4089 = vadd.f32 0.0, %v4088
      %v4090 = vpop.f32.mrb[0].mxu0
      %4091 = vmatprep.mubr.bf16.mxu0 0
      %4092 = vmatmul.mubr.bf16.gmra.mrb[0].mxu0 %v3936
      %v4093 = vpop.f32.mrb[0].mxu0
      %v4094 = vadd.f32 0.0, %v4093
      %v4095 = vpop.f32.mrb[0].mxu0
      %v4096 = vpop.f32.mrb[0].mxu0
      %v4097 = vadd.f32 0.0, %v4096
      %v4098 = vpop.f32.mrb[0].mxu0
      %4099 = vmatprep.mubr.bf16.mxu0 0
      %4100 = vmatmul.mubr.bf16.gmra.mrb[0].mxu0 %v3937
      %v4101 = vpop.f32.mrb[0].mxu0
      %v4102 = vadd.f32 0.0, %v4101
      %v4103 = vpop.f32.mrb[0].mxu0
      %v4104 = vpop.f32.mrb[0].mxu0
      %v4105 = vadd.f32 0.0, %v4104
      %v4106 = vpop.f32.mrb[0].mxu0
      %4107 = vmatprep.mubr.bf16.mxu0 0
      %4108 = vmatmul.mubr.bf16.gmra.mrb[0].mxu0 %v3938
      %v4109 = vpop.f32.mrb[0].mxu0
      %v4110 = vadd.f32 0.0, %v4109
      %v4111 = vpop.f32.mrb[0].mxu0
      %v4112 = vpop.f32.mrb[0].mxu0
      %v4113 = vadd.f32 0.0, %v4112
      %v4114 = vpop.f32.mrb[0].mxu0
      %4115 = vmatprep.mubr.bf16.mxu0 0
      %4116 = vmatmul.mubr.bf16.gmra.mrb[0].mxu0 %v3939
      %v4117 = vpop.f32.mrb[0].mxu0
      %v4118 = vadd.f32 0.0, %v4117
      %v4119 = vpop.f32.mrb[0].mxu0
      %v4120 = vpop.f32.mrb[0].mxu0
      %v4121 = vadd.f32 0.0, %v4120
      %v4122 = vpop.f32.mrb[0].mxu0
      %4123 = vmatprep.mubr.bf16.mxu0 0
      %4124 = vmatmul.mubr.bf16.gmra.mrb[0].mxu0 %v3940
      %v4125 = vpop.f32.mrb[0].mxu0
      %v4126 = vadd.f32 0.0, %v4125
      %v4127 = vpop.f32.mrb[0].mxu0
      %v4128 = vpop.f32.mrb[0].mxu0
      %v4129 = vadd.f32 0.0, %v4128
      %v4130 = vpop.f32.mrb[0].mxu0
      %4131 = vmatprep.mubr.bf16.mxu0 0
      %4132 = vmatmul.mubr.bf16.gmra.mrb[0].mxu0 %v3941
      %v4133 = vpop.f32.mrb[0].mxu0
      %v4134 = vadd.f32 0.0, %v4133
      %v4135 = vpop.f32.mrb[0].mxu0
      %v4136 = vpop.f32.mrb[0].mxu0
      %v4137 = vadd.f32 0.0, %v4136
      %v4138 = vpop.f32.mrb[0].mxu0
      %4139 = vmatprep.mubr.bf16.mxu0 0
      %4140 = vmatmul.mubr.bf16.gmra.mrb[0].mxu0 %v3942
      %v4141 = vpop.f32.mrb[0].mxu0
      %v4142 = vadd.f32 0.0, %v4141
      %v4143 = vpop.f32.mrb[0].mxu0
      %v4144 = vpop.f32.mrb[0].mxu0
      %v4145 = vadd.f32 0.0, %v4144
      %v4146 = vpop.f32.mrb[0].mxu0
      %4147 = vmatprep.mubr.bf16.mxu0 0
      %4148 = vmatmul.mubr.bf16.gmra.mrb[0].mxu0 %v3943
      %v4149 = vpop.f32.mrb[0].mxu0
      %v4150 = vadd.f32 0.0, %v4149
      %v4151 = vpop.f32.mrb[0].mxu0
      %v4152 = vpop.f32.mrb[0].mxu0
      %v4153 = vadd.f32 0.0, %v4152
      %v4154 = vpop.f32.mrb[0].mxu0
      %4155 = vmatprep.mubr.bf16.mxu0 0
      %4156 = vmatmul.mubr.bf16.gmra.mrb[0].mxu0 %v3944
      %v4157 = vpop.f32.mrb[0].mxu0
      %v4158 = vadd.f32 0.0, %v4157
      %v4159 = vpop.f32.mrb[0].mxu0
      %v4160 = vpop.f32.mrb[0].mxu0
      %v4161 = vadd.f32 0.0, %v4160
      %v4162 = vpop.f32.mrb[0].mxu0
      %4163 = vmatprep.mubr.bf16.mxu0 0
      %4164 = vmatmul.mubr.bf16.gmra.mrb[0].mxu0 %v3945
      %v4165 = vpop.f32.mrb[0].mxu0
      %v4166 = vadd.f32 0.0, %v4165
      %v4167 = vpop.f32.mrb[0].mxu0
      %v4168 = vpop.f32.mrb[0].mxu0
      %v4169 = vadd.f32 0.0, %v4168
      %v4170 = vpop.f32.mrb[0].mxu0
      %4171 = vdwg.mxu0
      %vm4172 = vsmask.f32 256
      %v4174 = vshrl.u32 %v3931, 16
      %v4176 = vrot.slane %v4174, 7
      %v4178 = vshrl.u32 %v3932, 16
      %v4180 = vrot.slane %v4178, 7
      %v4181 = vshll.u32 %v3932, 16
      %v4183 = vor.u32 %v4180, %v4181
      %v4184 = vsel %vm4172, %v4176, %v4183
      %v4186 = vshrl.u32 %v3933, 16
      %v4188 = vrot.slane %v4186, 7
      %v4189 = vshll.u32 %v3933, 16
      %v4191 = vor.u32 %v4188, %v4189
      %v4192 = vsel %vm4172, %v4180, %v4191
      %v4194 = vshrl.u32 %v3934, 16
      %v4196 = vrot.slane %v4194, 7
      %v4197 = vshll.u32 %v3934, 16
      %v4199 = vor.u32 %v4196, %v4197
      %v4200 = vsel %vm4172, %v4188, %v4199
      %v4202 = vshrl.u32 %v3935, 16
      %v4204 = vrot.slane %v4202, 7
      %v4205 = vshll.u32 %v3935, 16
      %v4207 = vor.u32 %v4204, %v4205
      %v4208 = vsel %vm4172, %v4196, %v4207
      %v4210 = vshrl.u32 %v3936, 16
      %v4212 = vrot.slane %v4210, 7
      %v4213 = vshll.u32 %v3936, 16
      %v4215 = vor.u32 %v4212, %v4213
      %v4216 = vsel %vm4172, %v4204, %v4215
      %v4218 = vshrl.u32 %v3937, 16
      %v4220 = vrot.slane %v4218, 7
      %v4221 = vshll.u32 %v3937, 16
      %v4223 = vor.u32 %v4220, %v4221
      %v4224 = vsel %vm4172, %v4212, %v4223
      %v4226 = vshrl.u32 %v3938, 16
      %v4228 = vrot.slane %v4226, 7
      %v4229 = vshll.u32 %v3938, 16
      %v4231 = vor.u32 %v4228, %v4229
      %v4232 = vsel %vm4172, %v4220, %v4231
      %v4234 = vshrl.u32 %v3939, 16
      %v4236 = vrot.slane %v4234, 7
      %v4237 = vshll.u32 %v3939, 16
      %v4239 = vor.u32 %v4236, %v4237
      %v4240 = vsel %vm4172, %v4228, %v4239
      %v4242 = vshrl.u32 %v3940, 16
      %v4244 = vrot.slane %v4242, 7
      %v4245 = vshll.u32 %v3940, 16
      %v4247 = vor.u32 %v4244, %v4245
      %v4248 = vsel %vm4172, %v4236, %v4247
      %v4250 = vshrl.u32 %v3941, 16
      %v4252 = vrot.slane %v4250, 7
      %v4253 = vshll.u32 %v3941, 16
      %v4255 = vor.u32 %v4252, %v4253
      %v4256 = vsel %vm4172, %v4244, %v4255
      %v4258 = vshrl.u32 %v3942, 16
      %v4260 = vrot.slane %v4258, 7
      %v4261 = vshll.u32 %v3942, 16
      %v4263 = vor.u32 %v4260, %v4261
      %v4264 = vsel %vm4172, %v4252, %v4263
      %v4266 = vshrl.u32 %v3943, 16
      %v4268 = vrot.slane %v4266, 7
      %v4269 = vshll.u32 %v3943, 16
      %v4271 = vor.u32 %v4268, %v4269
      %v4272 = vsel %vm4172, %v4260, %v4271
      %v4274 = vshrl.u32 %v3944, 16
      %v4276 = vrot.slane %v4274, 7
      %v4277 = vshll.u32 %v3944, 16
      %v4279 = vor.u32 %v4276, %v4277
      %v4280 = vsel %vm4172, %v4268, %v4279
      %v4282 = vshrl.u32 %v3945, 16
      %v4284 = vrot.slane %v4282, 7
      %v4285 = vshll.u32 %v3945, 16
      %v4287 = vor.u32 %v4284, %v4285
      %v4288 = vsel %vm4172, %v4276, %v4287
      %v4319 = vunpack.c.l.b16 %v3946
      %v4320 = vunpack.c.l.b16 %v3947
      %v4321 = vunpack.c.l.b16 %v3948
      %v4322 = vunpack.c.l.b16 %v3949
      %v4323 = vunpack.c.l.b16 %v3950
      %v4324 = vunpack.c.l.b16 %v3951
      %v4325 = vunpack.c.l.b16 %v3952
      %v4326 = vunpack.c.l.b16 %v3953
      %v4327 = vunpack.c.l.b16 %v3954
      %v4328 = vunpack.c.l.b16 %v3955
      %v4329 = vunpack.c.l.b16 %v3956
      %v4330 = vunpack.c.l.b16 %v3957
      %v4331 = vunpack.c.l.b16 %v3958
      %v4332 = vunpack.c.l.b16 %v3959
      %v4333 = vunpack.c.l.b16 %v3960
      %v4334 = vunpack.c.l.b16 %v3961
      %v4335 = vpack.c.b16 %v4320, %v4319
      %v4336 = vpack.c.b16 %v4322, %v4321
      %v4337 = vpack.c.b16 %v4324, %v4323
      %v4338 = vpack.c.b16 %v4326, %v4325
      %v4339 = vpack.c.b16 %v4328, %v4327
      %v4340 = vpack.c.b16 %v4330, %v4329
      %v4341 = vpack.c.b16 %v4332, %v4331
      %v4342 = vpack.c.b16 %v4334, %v4333
      %4351 = vmatprep.subr.bf16.mxu0 0
      %4352 = vmatpush1.bf16.msra.mxu0 %v4335
      %4353 = vmatprep.subr.bf16.mxu0 0
      %4354 = vmatpush1.bf16.msra.mxu0 %v4336
      %4355 = vmatprep.subr.bf16.mxu0 0
      %4356 = vmatpush1.bf16.msra.mxu0 %v4337
      %4357 = vmatprep.subr.bf16.mxu0 0
      %4358 = vmatpush1.bf16.msra.mxu0 %v4338
      %4359 = vmatprep.subr.bf16.mxu0 0
      %4360 = vmatpush1.bf16.msra.mxu0 %v4339
      %4361 = vmatprep.subr.bf16.mxu0 0
      %4362 = vmatpush1.bf16.msra.mxu0 %v4340
      %4363 = vmatprep.subr.bf16.mxu0 0
      %4364 = vmatpush1.bf16.msra.mxu0 %v4341
      %4365 = vmatprep.subr.bf16.mxu0 0
      %4366 = vmatpush1.bf16.msra.mxu0 %v4342
      %4367 = vmatprep.subr.bf16.mxu0 0
      %4368 = vmatpush1.bf16.msra.mxu0 0
      %4369 = vmatprep.subr.bf16.mxu0 0
      %4370 = vmatpush1.bf16.msra.mxu0 0
      %4371 = vmatprep.subr.bf16.mxu0 0
      %4372 = vmatpush1.bf16.msra.mxu0 0
      %4373 = vmatprep.subr.bf16.mxu0 0
      %4374 = vmatpush1.bf16.msra.mxu0 0
      %4375 = vmatprep.subr.bf16.mxu0 0
      %4376 = vmatpush1.bf16.msra.mxu0 0
      %4377 = vmatprep.subr.bf16.mxu0 0
      %4378 = vmatpush1.bf16.msra.mxu0 0
      %4379 = vmatprep.subr.bf16.mxu0 0
      %4380 = vmatpush1.bf16.msra.mxu0 0
      %4381 = vmatprep.subr.bf16.mxu0 0
      %4382 = vmatpush1.bf16.msra.mxu0 0
      %4383 = vmatprep.mubr.bf16.mxu0 0
      %4384 = vmatmul.mubr.bf16.gmra.mrb[0].mxu0 %v4184
      %v4385 = vpop.f32.mrb[0].mxu0
      %v4386 = vadd.f32 %v4062, %v4385
      %v4387 = vpop.f32.mrb[0].mxu0
      %v4388 = vpop.f32.mrb[0].mxu0
      %v4389 = vadd.f32 %v4065, %v4388
      %v4390 = vpop.f32.mrb[0].mxu0
      %4391 = vmatprep.mubr.bf16.mxu0 0
      %4392 = vmatmul.mubr.bf16.gmra.mrb[0].mxu0 %v4192
      %v4393 = vpop.f32.mrb[0].mxu0
      %v4394 = vadd.f32 %v4070, %v4393
      %v4395 = vpop.f32.mrb[0].mxu0
      %v4396 = vpop.f32.mrb[0].mxu0
      %v4397 = vadd.f32 %v4073, %v4396
      %v4398 = vpop.f32.mrb[0].mxu0
      %4399 = vmatprep.mubr.bf16.mxu0 0
      %4400 = vmatmul.mubr.bf16.gmra.mrb[0].mxu0 %v4200
      %v4401 = vpop.f32.mrb[0].mxu0
      %v4402 = vadd.f32 %v4078, %v4401
      %v4403 = vpop.f32.mrb[0].mxu0
      %v4404 = vpop.f32.mrb[0].mxu0
      %v4405 = vadd.f32 %v4081, %v4404
      %v4406 = vpop.f32.mrb[0].mxu0
      %4407 = vmatprep.mubr.bf16.mxu0 0
      %4408 = vmatmul.mubr.bf16.gmra.mrb[0].mxu0 %v4208
      %v4409 = vpop.f32.mrb[0].mxu0
      %v4410 = vadd.f32 %v4086, %v4409
      %v4411 = vpop.f32.mrb[0].mxu0
      %v4412 = vpop.f32.mrb[0].mxu0
      %v4413 = vadd.f32 %v4089, %v4412
      %v4414 = vpop.f32.mrb[0].mxu0
      %4415 = vmatprep.mubr.bf16.mxu0 0
      %4416 = vmatmul.mubr.bf16.gmra.mrb[0].mxu0 %v4216
      %v4417 = vpop.f32.mrb[0].mxu0
      %v4418 = vadd.f32 %v4094, %v4417
      %v4419 = vpop.f32.mrb[0].mxu0
      %v4420 = vpop.f32.mrb[0].mxu0
      %v4421 = vadd.f32 %v4097, %v4420
      %v4422 = vpop.f32.mrb[0].mxu0
      %4423 = vmatprep.mubr.bf16.mxu0 0
      %4424 = vmatmul.mubr.bf16.gmra.mrb[0].mxu0 %v4224
      %v4425 = vpop.f32.mrb[0].mxu0
      %v4426 = vadd.f32 %v4102, %v4425
      %v4427 = vpop.f32.mrb[0].mxu0
      %v4428 = vpop.f32.mrb[0].mxu0
      %v4429 = vadd.f32 %v4105, %v4428
      %v4430 = vpop.f32.mrb[0].mxu0
      %4431 = vmatprep.mubr.bf16.mxu0 0
      %4432 = vmatmul.mubr.bf16.gmra.mrb[0].mxu0 %v4232
      %v4433 = vpop.f32.mrb[0].mxu0
      %v4434 = vadd.f32 %v4110, %v4433
      %v4435 = vpop.f32.mrb[0].mxu0
      %v4436 = vpop.f32.mrb[0].mxu0
      %v4437 = vadd.f32 %v4113, %v4436
      %v4438 = vpop.f32.mrb[0].mxu0
      %4439 = vmatprep.mubr.bf16.mxu0 0
      %4440 = vmatmul.mubr.bf16.gmra.mrb[0].mxu0 %v4240
      %v4441 = vpop.f32.mrb[0].mxu0
      %v4442 = vadd.f32 %v4118, %v4441
      %v4443 = vpop.f32.mrb[0].mxu0
      %v4444 = vpop.f32.mrb[0].mxu0
      %v4445 = vadd.f32 %v4121, %v4444
      %v4446 = vpop.f32.mrb[0].mxu0
      %4447 = vmatprep.mubr.bf16.mxu0 0
      %4448 = vmatmul.mubr.bf16.gmra.mrb[0].mxu0 %v4248
      %v4449 = vpop.f32.mrb[0].mxu0
      %v4450 = vadd.f32 %v4126, %v4449
      %v4451 = vpop.f32.mrb[0].mxu0
      %v4452 = vpop.f32.mrb[0].mxu0
      %v4453 = vadd.f32 %v4129, %v4452
      %v4454 = vpop.f32.mrb[0].mxu0
      %4455 = vmatprep.mubr.bf16.mxu0 0
      %4456 = vmatmul.mubr.bf16.gmra.mrb[0].mxu0 %v4256
      %v4457 = vpop.f32.mrb[0].mxu0
      %v4458 = vadd.f32 %v4134, %v4457
      %v4459 = vpop.f32.mrb[0].mxu0
      %v4460 = vpop.f32.mrb[0].mxu0
      %v4461 = vadd.f32 %v4137, %v4460
      %v4462 = vpop.f32.mrb[0].mxu0
      %4463 = vmatprep.mubr.bf16.mxu0 0
      %4464 = vmatmul.mubr.bf16.gmra.mrb[0].mxu0 %v4264
      %v4465 = vpop.f32.mrb[0].mxu0
      %v4466 = vadd.f32 %v4142, %v4465
      %v4467 = vpop.f32.mrb[0].mxu0
      %v4468 = vpop.f32.mrb[0].mxu0
      %v4469 = vadd.f32 %v4145, %v4468
      %v4470 = vpop.f32.mrb[0].mxu0
      %4471 = vmatprep.mubr.bf16.mxu0 0
      %4472 = vmatmul.mubr.bf16.gmra.mrb[0].mxu0 %v4272
      %v4473 = vpop.f32.mrb[0].mxu0
      %v4474 = vadd.f32 %v4150, %v4473
      %v4475 = vpop.f32.mrb[0].mxu0
      %v4476 = vpop.f32.mrb[0].mxu0
      %v4477 = vadd.f32 %v4153, %v4476
      %v4478 = vpop.f32.mrb[0].mxu0
      %4479 = vmatprep.mubr.bf16.mxu0 0
      %4480 = vmatmul.mubr.bf16.gmra.mrb[0].mxu0 %v4280
      %v4481 = vpop.f32.mrb[0].mxu0
      %v4482 = vadd.f32 %v4158, %v4481
      %v4483 = vpop.f32.mrb[0].mxu0
      %v4484 = vpop.f32.mrb[0].mxu0
      %v4485 = vadd.f32 %v4161, %v4484
      %v4486 = vpop.f32.mrb[0].mxu0
      %4487 = vmatprep.mubr.bf16.mxu0 0
      %4488 = vmatmul.mubr.bf16.gmra.mrb[0].mxu0 %v4288
      %v4489 = vpop.f32.mrb[0].mxu0
      %v4490 = vadd.f32 %v4166, %v4489
      %v4491 = vpop.f32.mrb[0].mxu0
      %v4492 = vpop.f32.mrb[0].mxu0
      %v4493 = vadd.f32 %v4169, %v4492
      %v4494 = vpop.f32.mrb[0].mxu0
      %4495 = vdwg.mxu0
      %v4496 = vld [vmem:[#allocation2 + $0x8] sm:$0xff]
      %v4497 = vld [vmem:[#allocation2 + $0x10] sm:$0xff]
      %v4498 = vld [vmem:[#allocation2 + $0x18] sm:$0xff]
      %v4499 = vld [vmem:[#allocation2 + $0x20] sm:$0xff]
      %v4500 = vld [vmem:[#allocation2 + $0x28] sm:$0xff]
      %v4501 = vld [vmem:[#allocation2 + $0x30] sm:$0xff]
      %v4502 = vld [vmem:[#allocation2 + $0x38] sm:$0xff]
      %v4503 = vld [vmem:[#allocation2 + $0x40] sm:$0xff]
      %v4504 = vld [vmem:[#allocation2 + $0x48] sm:$0xff]
      %v4505 = vld [vmem:[#allocation2 + $0x50] sm:$0xff]
      %v4506 = vld [vmem:[#allocation2 + $0x58] sm:$0xff]
      %v4507 = vld [vmem:[#allocation2 + $0x60] sm:$0xff]
      %v4508 = vld [vmem:[#allocation2 + $0x68] sm:$0xff]
      %v4509 = vld [vmem:[#allocation2 + $0x70] sm:$0xff]
      %v4510 = vld [vmem:[#allocation2 + $0x78] sm:$0x1]
      %s4511 = scalar_lea.vmem %s3, 128
      %v4512 = vld [vmem:[%s4511] sm:$0xf]
      %v4513 = vld [vmem:[%s4511 + $0x4] sm:$0xf]
      %v4514 = vld [vmem:[%s4511 + $0x8] sm:$0xf]
      %v4515 = vld [vmem:[%s4511 + $0xc] sm:$0xf]
      %v4516 = vld [vmem:[%s4511 + $0x10] sm:$0xf]
      %v4517 = vld [vmem:[%s4511 + $0x14] sm:$0xf]
      %v4518 = vld [vmem:[%s4511 + $0x18] sm:$0xf]
      %v4519 = vld [vmem:[%s4511 + $0x1c] sm:$0xf]
      %v4520 = vld [vmem:[%s4511 + $0x20] sm:$0xf]
      %v4521 = vld [vmem:[%s4511 + $0x24] sm:$0xf]
      %v4522 = vld [vmem:[%s4511 + $0x28] sm:$0xf]
      %v4523 = vld [vmem:[%s4511 + $0x2c] sm:$0xf]
      %v4524 = vld [vmem:[%s4511 + $0x30] sm:$0xf]
      %v4525 = vld [vmem:[%s4511 + $0x34] sm:$0xf]
      %v4526 = vld [vmem:[%s4511 + $0x38] sm:$0xf]
      %v4527 = vld [vmem:[%s4511 + $0x3c] sm:$0xf]
      %v4529 = vshrl.u32 %v4496, 16
      %v4531 = vshll.u32 %v4496, 16
      %v4533 = vrot.slane %v4531, 1
      %v4534 = vor.u32 %v4529, %v4533
      %v4536 = vshll.u32 %v4497, 16
      %v4538 = vrot.slane %v4536, 1
      %v4539 = vsel %vm388, %v4534, %v4538
      %v4540 = vshrl.u32 %v4497, 16
      %v4542 = vor.u32 %v4540, %v4538
      %v4544 = vshll.u32 %v4498, 16
      %v4546 = vrot.slane %v4544, 1
      %v4547 = vsel %vm388, %v4542, %v4546
      %v4548 = vshrl.u32 %v4498, 16
      %v4550 = vor.u32 %v4548, %v4546
      %v4552 = vshll.u32 %v4499, 16
      %v4554 = vrot.slane %v4552, 1
      %v4555 = vsel %vm388, %v4550, %v4554
      %v4556 = vshrl.u32 %v4499, 16
      %v4558 = vor.u32 %v4556, %v4554
      %v4560 = vshll.u32 %v4500, 16
      %v4562 = vrot.slane %v4560, 1
      %v4563 = vsel %vm388, %v4558, %v4562
      %v4564 = vshrl.u32 %v4500, 16
      %v4566 = vor.u32 %v4564, %v4562
      %v4568 = vshll.u32 %v4501, 16
      %v4570 = vrot.slane %v4568, 1
      %v4571 = vsel %vm388, %v4566, %v4570
      %v4572 = vshrl.u32 %v4501, 16
      %v4574 = vor.u32 %v4572, %v4570
      %v4576 = vshll.u32 %v4502, 16
      %v4578 = vrot.slane %v4576, 1
      %v4579 = vsel %vm388, %v4574, %v4578
      %v4580 = vshrl.u32 %v4502, 16
      %v4582 = vor.u32 %v4580, %v4578
      %v4584 = vshll.u32 %v4503, 16
      %v4586 = vrot.slane %v4584, 1
      %v4587 = vsel %vm388, %v4582, %v4586
      %v4588 = vshrl.u32 %v4503, 16
      %v4590 = vor.u32 %v4588, %v4586
      %v4592 = vshll.u32 %v4504, 16
      %v4594 = vrot.slane %v4592, 1
      %v4595 = vsel %vm388, %v4590, %v4594
      %v4596 = vshrl.u32 %v4504, 16
      %v4598 = vor.u32 %v4596, %v4594
      %v4600 = vshll.u32 %v4505, 16
      %v4602 = vrot.slane %v4600, 1
      %v4603 = vsel %vm388, %v4598, %v4602
      %v4604 = vshrl.u32 %v4505, 16
      %v4606 = vor.u32 %v4604, %v4602
      %v4608 = vshll.u32 %v4506, 16
      %v4610 = vrot.slane %v4608, 1
      %v4611 = vsel %vm388, %v4606, %v4610
      %v4612 = vshrl.u32 %v4506, 16
      %v4614 = vor.u32 %v4612, %v4610
      %v4616 = vshll.u32 %v4507, 16
      %v4618 = vrot.slane %v4616, 1
      %v4619 = vsel %vm388, %v4614, %v4618
      %v4620 = vshrl.u32 %v4507, 16
      %v4622 = vor.u32 %v4620, %v4618
      %v4624 = vshll.u32 %v4508, 16
      %v4626 = vrot.slane %v4624, 1
      %v4627 = vsel %vm388, %v4622, %v4626
      %v4628 = vshrl.u32 %v4508, 16
      %v4630 = vor.u32 %v4628, %v4626
      %v4632 = vshll.u32 %v4509, 16
      %v4634 = vrot.slane %v4632, 1
      %v4635 = vsel %vm388, %v4630, %v4634
      %v4636 = vshrl.u32 %v4509, 16
      %v4638 = vor.u32 %v4636, %v4634
      %v4640 = vshll.u32 %v4510, 16
      %v4642 = vrot.slane %v4640, 1
      %v4643 = vsel %vm388, %v4638, %v4642
      %v4674 = vunpack.c.l.b16 %v4512
      %v4675 = vunpack.c.l.b16 %v4513
      %v4676 = vunpack.c.l.b16 %v4514
      %v4677 = vunpack.c.l.b16 %v4515
      %v4678 = vunpack.c.l.b16 %v4516
      %v4679 = vunpack.c.l.b16 %v4517
      %v4680 = vunpack.c.l.b16 %v4518
      %v4681 = vunpack.c.l.b16 %v4519
      %v4682 = vunpack.c.l.b16 %v4520
      %v4683 = vunpack.c.l.b16 %v4521
      %v4684 = vunpack.c.l.b16 %v4522
      %v4685 = vunpack.c.l.b16 %v4523
      %v4686 = vunpack.c.l.b16 %v4524
      %v4687 = vunpack.c.l.b16 %v4525
      %v4688 = vunpack.c.l.b16 %v4526
      %v4689 = vunpack.c.l.b16 %v4527
      %v4690 = vpack.c.b16 %v4675, %v4674
      %v4691 = vpack.c.b16 %v4677, %v4676
      %v4692 = vpack.c.b16 %v4679, %v4678
      %v4693 = vpack.c.b16 %v4681, %v4680
      %v4694 = vpack.c.b16 %v4683, %v4682
      %v4695 = vpack.c.b16 %v4685, %v4684
      %v4696 = vpack.c.b16 %v4687, %v4686
      %v4697 = vpack.c.b16 %v4689, %v4688
      %4706 = vmatprep.subr.bf16.mxu0 0
      %4707 = vmatpush1.bf16.msra.mxu0 %v4690
      %4708 = vmatprep.subr.bf16.mxu0 0
      %4709 = vmatpush1.bf16.msra.mxu0 %v4691
      %4710 = vmatprep.subr.bf16.mxu0 0
      %4711 = vmatpush1.bf16.msra.mxu0 %v4692
      %4712 = vmatprep.subr.bf16.mxu0 0
      %4713 = vmatpush1.bf16.msra.mxu0 %v4693
      %4714 = vmatprep.subr.bf16.mxu0 0
      %4715 = vmatpush1.bf16.msra.mxu0 %v4694
      %4716 = vmatprep.subr.bf16.mxu0 0
      %4717 = vmatpush1.bf16.msra.mxu0 %v4695
      %4718 = vmatprep.subr.bf16.mxu0 0
      %4719 = vmatpush1.bf16.msra.mxu0 %v4696
      %4720 = vmatprep.subr.bf16.mxu0 0
      %4721 = vmatpush1.bf16.msra.mxu0 %v4697
      %4722 = vmatprep.subr.bf16.mxu0 0
      %4723 = vmatpush1.bf16.msra.mxu0 0
      %4724 = vmatprep.subr.bf16.mxu0 0
      %4725 = vmatpush1.bf16.msra.mxu0 0
      %4726 = vmatprep.subr.bf16.mxu0 0
      %4727 = vmatpush1.bf16.msra.mxu0 0
      %4728 = vmatprep.subr.bf16.mxu0 0
      %4729 = vmatpush1.bf16.msra.mxu0 0
      %4730 = vmatprep.subr.bf16.mxu0 0
      %4731 = vmatpush1.bf16.msra.mxu0 0
      %4732 = vmatprep.subr.bf16.mxu0 0
      %4733 = vmatpush1.bf16.msra.mxu0 0
      %4734 = vmatprep.subr.bf16.mxu0 0
      %4735 = vmatpush1.bf16.msra.mxu0 0
      %4736 = vmatprep.subr.bf16.mxu0 0
      %4737 = vmatpush1.bf16.msra.mxu0 0
      %4738 = vmatprep.mubr.bf16.mxu0 0
      %4739 = vmatmul.mubr.bf16.gmra.mrb[0].mxu0 %v4539
      %v4740 = vpop.f32.mrb[0].mxu0
      %v4741 = vadd.f32 0.0, %v4740
      %v4742 = vpop.f32.mrb[0].mxu0
      %v4743 = vpop.f32.mrb[0].mxu0
      %v4744 = vadd.f32 0.0, %v4743
      %v4745 = vpop.f32.mrb[0].mxu0
      %4746 = vmatprep.mubr.bf16.mxu0 0
      %4747 = vmatmul.mubr.bf16.gmra.mrb[0].mxu0 %v4547
      %v4748 = vpop.f32.mrb[0].mxu0
      %v4749 = vadd.f32 0.0, %v4748
      %v4750 = vpop.f32.mrb[0].mxu0
      %v4751 = vpop.f32.mrb[0].mxu0
      %v4752 = vadd.f32 0.0, %v4751
      %v4753 = vpop.f32.mrb[0].mxu0
      %4754 = vmatprep.mubr.bf16.mxu0 0
      %4755 = vmatmul.mubr.bf16.gmra.mrb[0].mxu0 %v4555
      %v4756 = vpop.f32.mrb[0].mxu0
      %v4757 = vadd.f32 0.0, %v4756
      %v4758 = vpop.f32.mrb[0].mxu0
      %v4759 = vpop.f32.mrb[0].mxu0
      %v4760 = vadd.f32 0.0, %v4759
      %v4761 = vpop.f32.mrb[0].mxu0
      %4762 = vmatprep.mubr.bf16.mxu0 0
      %4763 = vmatmul.mubr.bf16.gmra.mrb[0].mxu0 %v4563
      %v4764 = vpop.f32.mrb[0].mxu0
      %v4765 = vadd.f32 0.0, %v4764
      %v4766 = vpop.f32.mrb[0].mxu0
      %v4767 = vpop.f32.mrb[0].mxu0
      %v4768 = vadd.f32 0.0, %v4767
      %v4769 = vpop.f32.mrb[0].mxu0
      %4770 = vmatprep.mubr.bf16.mxu0 0
      %4771 = vmatmul.mubr.bf16.gmra.mrb[0].mxu0 %v4571
      %v4772 = vpop.f32.mrb[0].mxu0
      %v4773 = vadd.f32 0.0, %v4772
      %v4774 = vpop.f32.mrb[0].mxu0
      %v4775 = vpop.f32.mrb[0].mxu0
      %v4776 = vadd.f32 0.0, %v4775
      %v4777 = vpop.f32.mrb[0].mxu0
      %4778 = vmatprep.mubr.bf16.mxu0 0
      %4779 = vmatmul.mubr.bf16.gmra.mrb[0].mxu0 %v4579
      %v4780 = vpop.f32.mrb[0].mxu0
      %v4781 = vadd.f32 0.0, %v4780
      %v4782 = vpop.f32.mrb[0].mxu0
      %v4783 = vpop.f32.mrb[0].mxu0
      %v4784 = vadd.f32 0.0, %v4783
      %v4785 = vpop.f32.mrb[0].mxu0
      %4786 = vmatprep.mubr.bf16.mxu0 0
      %4787 = vmatmul.mubr.bf16.gmra.mrb[0].mxu0 %v4587
      %v4788 = vpop.f32.mrb[0].mxu0
      %v4789 = vadd.f32 0.0, %v4788
      %v4790 = vpop.f32.mrb[0].mxu0
      %v4791 = vpop.f32.mrb[0].mxu0
      %v4792 = vadd.f32 0.0, %v4791
      %v4793 = vpop.f32.mrb[0].mxu0
      %4794 = vmatprep.mubr.bf16.mxu0 0
      %4795 = vmatmul.mubr.bf16.gmra.mrb[0].mxu0 %v4595
      %v4796 = vpop.f32.mrb[0].mxu0
      %v4797 = vadd.f32 0.0, %v4796
      %v4798 = vpop.f32.mrb[0].mxu0
      %v4799 = vpop.f32.mrb[0].mxu0
      %v4800 = vadd.f32 0.0, %v4799
      %v4801 = vpop.f32.mrb[0].mxu0
      %4802 = vmatprep.mubr.bf16.mxu0 0
      %4803 = vmatmul.mubr.bf16.gmra.mrb[0].mxu0 %v4603
      %v4804 = vpop.f32.mrb[0].mxu0
      %v4805 = vadd.f32 0.0, %v4804
      %v4806 = vpop.f32.mrb[0].mxu0
      %v4807 = vpop.f32.mrb[0].mxu0
      %v4808 = vadd.f32 0.0, %v4807
      %v4809 = vpop.f32.mrb[0].mxu0
      %4810 = vmatprep.mubr.bf16.mxu0 0
      %4811 = vmatmul.mubr.bf16.gmra.mrb[0].mxu0 %v4611
      %v4812 = vpop.f32.mrb[0].mxu0
      %v4813 = vadd.f32 0.0, %v4812
      %v4814 = vpop.f32.mrb[0].mxu0
      %v4815 = vpop.f32.mrb[0].mxu0
      %v4816 = vadd.f32 0.0, %v4815
      %v4817 = vpop.f32.mrb[0].mxu0
      %4818 = vmatprep.mubr.bf16.mxu0 0
      %4819 = vmatmul.mubr.bf16.gmra.mrb[0].mxu0 %v4619
      %v4820 = vpop.f32.mrb[0].mxu0
      %v4821 = vadd.f32 0.0, %v4820
      %v4822 = vpop.f32.mrb[0].mxu0
      %v4823 = vpop.f32.mrb[0].mxu0
      %v4824 = vadd.f32 0.0, %v4823
      %v4825 = vpop.f32.mrb[0].mxu0
      %4826 = vmatprep.mubr.bf16.mxu0 0
      %4827 = vmatmul.mubr.bf16.gmra.mrb[0].mxu0 %v4627
      %v4828 = vpop.f32.mrb[0].mxu0
      %v4829 = vadd.f32 0.0, %v4828
      %v4830 = vpop.f32.mrb[0].mxu0
      %v4831 = vpop.f32.mrb[0].mxu0
      %v4832 = vadd.f32 0.0, %v4831
      %v4833 = vpop.f32.mrb[0].mxu0
      %4834 = vmatprep.mubr.bf16.mxu0 0
      %4835 = vmatmul.mubr.bf16.gmra.mrb[0].mxu0 %v4635
      %v4836 = vpop.f32.mrb[0].mxu0
      %v4837 = vadd.f32 0.0, %v4836
      %v4838 = vpop.f32.mrb[0].mxu0
      %v4839 = vpop.f32.mrb[0].mxu0
      %v4840 = vadd.f32 0.0, %v4839
      %v4841 = vpop.f32.mrb[0].mxu0
      %4842 = vmatprep.mubr.bf16.mxu0 0
      %4843 = vmatmul.mubr.bf16.gmra.mrb[0].mxu0 %v4643
      %v4844 = vpop.f32.mrb[0].mxu0
      %v4845 = vadd.f32 0.0, %v4844
      %v4846 = vpop.f32.mrb[0].mxu0
      %v4847 = vpop.f32.mrb[0].mxu0
      %v4848 = vadd.f32 0.0, %v4847
      %v4849 = vpop.f32.mrb[0].mxu0
      %4850 = vdwg.mxu0
      %v4851 = vadd.f32 %v4386, %v4741
      %v4852 = vadd.f32 %v4389, %v4744
      %v4853 = vadd.f32 %v4394, %v4749
      %v4854 = vadd.f32 %v4397, %v4752
      %v4855 = vadd.f32 %v4402, %v4757
      %v4856 = vadd.f32 %v4405, %v4760
      %v4857 = vadd.f32 %v4410, %v4765
      %v4858 = vadd.f32 %v4413, %v4768
      %v4859 = vadd.f32 %v4418, %v4773
      %v4860 = vadd.f32 %v4421, %v4776
      %v4861 = vadd.f32 %v4426, %v4781
      %v4862 = vadd.f32 %v4429, %v4784
      %v4863 = vadd.f32 %v4434, %v4789
      %v4864 = vadd.f32 %v4437, %v4792
      %v4865 = vadd.f32 %v4442, %v4797
      %v4866 = vadd.f32 %v4445, %v4800
      %v4867 = vadd.f32 %v4450, %v4805
      %v4868 = vadd.f32 %v4453, %v4808
      %v4869 = vadd.f32 %v4458, %v4813
      %v4870 = vadd.f32 %v4461, %v4816
      %v4871 = vadd.f32 %v4466, %v4821
      %v4872 = vadd.f32 %v4469, %v4824
      %v4873 = vadd.f32 %v4474, %v4829
      %v4874 = vadd.f32 %v4477, %v4832
      %v4875 = vadd.f32 %v4482, %v4837
      %v4876 = vadd.f32 %v4485, %v4840
      %v4877 = vadd.f32 %v4490, %v4845
      %v4878 = vadd.f32 %v4493, %v4848
      %v4879 = vld [vmem:[#allocation2 + $0x8] sm:$0x80]
      %v4880 = vld [vmem:[#allocation2 + $0x78] sm:$0xff]
      %s4881 = scalar_lea.vmem %s3, 192
      %v4882 = vld [vmem:[%s4881] sm:$0xf]
      %v4883 = vld [vmem:[%s4881 + $0x4] sm:$0xf]
      %v4884 = vld [vmem:[%s4881 + $0x8] sm:$0xf]
      %v4885 = vld [vmem:[%s4881 + $0xc] sm:$0xf]
      %v4886 = vld [vmem:[%s4881 + $0x10] sm:$0xf]
      %v4887 = vld [vmem:[%s4881 + $0x14] sm:$0xf]
      %v4888 = vld [vmem:[%s4881 + $0x18] sm:$0xf]
      %v4889 = vld [vmem:[%s4881 + $0x1c] sm:$0xf]
      %v4890 = vld [vmem:[%s4881 + $0x20] sm:$0xf]
      %v4891 = vld [vmem:[%s4881 + $0x24] sm:$0xf]
      %v4892 = vld [vmem:[%s4881 + $0x28] sm:$0xf]
      %v4893 = vld [vmem:[%s4881 + $0x2c] sm:$0xf]
      %v4894 = vld [vmem:[%s4881 + $0x30] sm:$0xf]
      %v4895 = vld [vmem:[%s4881 + $0x34] sm:$0xf]
      %v4896 = vld [vmem:[%s4881 + $0x38] sm:$0xf]
      %v4897 = vld [vmem:[%s4881 + $0x3c] sm:$0xf]
      %v4899 = vshrl.u32 %v4879, 16
      %v4901 = vrot.slane %v4899, 7
      %v4902 = vrot.slane %v4540, 7
      %v4903 = vor.u32 %v4902, %v4536
      %v4904 = vsel %vm4172, %v4901, %v4903
      %v4905 = vrot.slane %v4548, 7
      %v4906 = vor.u32 %v4905, %v4544
      %v4907 = vsel %vm4172, %v4902, %v4906
      %v4908 = vrot.slane %v4556, 7
      %v4909 = vor.u32 %v4908, %v4552
      %v4910 = vsel %vm4172, %v4905, %v4909
      %v4911 = vrot.slane %v4564, 7
      %v4912 = vor.u32 %v4911, %v4560
      %v4913 = vsel %vm4172, %v4908, %v4912
      %v4914 = vrot.slane %v4572, 7
      %v4915 = vor.u32 %v4914, %v4568
      %v4916 = vsel %vm4172, %v4911, %v4915
      %v4917 = vrot.slane %v4580, 7
      %v4918 = vor.u32 %v4917, %v4576
      %v4919 = vsel %vm4172, %v4914, %v4918
      %v4920 = vrot.slane %v4588, 7
      %v4921 = vor.u32 %v4920, %v4584
      %v4922 = vsel %vm4172, %v4917, %v4921
      %v4923 = vrot.slane %v4596, 7
      %v4924 = vor.u32 %v4923, %v4592
      %v4925 = vsel %vm4172, %v4920, %v4924
      %v4926 = vrot.slane %v4604, 7
      %v4927 = vor.u32 %v4926, %v4600
      %v4928 = vsel %vm4172, %v4923, %v4927
      %v4929 = vrot.slane %v4612, 7
      %v4930 = vor.u32 %v4929, %v4608
      %v4931 = vsel %vm4172, %v4926, %v4930
      %v4932 = vrot.slane %v4620, 7
      %v4933 = vor.u32 %v4932, %v4616
      %v4934 = vsel %vm4172, %v4929, %v4933
      %v4935 = vrot.slane %v4628, 7
      %v4936 = vor.u32 %v4935, %v4624
      %v4937 = vsel %vm4172, %v4932, %v4936
      %v4938 = vrot.slane %v4636, 7
      %v4939 = vor.u32 %v4938, %v4632
      %v4940 = vsel %vm4172, %v4935, %v4939
      %v4942 = vshrl.u32 %v4880, 16
      %v4944 = vrot.slane %v4942, 7
      %v4945 = vshll.u32 %v4880, 16
      %v4947 = vor.u32 %v4944, %v4945
      %v4948 = vsel %vm4172, %v4938, %v4947
      %v4979 = vunpack.c.l.b16 %v4882
      %v4980 = vunpack.c.l.b16 %v4883
      %v4981 = vunpack.c.l.b16 %v4884
      %v4982 = vunpack.c.l.b16 %v4885
      %v4983 = vunpack.c.l.b16 %v4886
      %v4984 = vunpack.c.l.b16 %v4887
      %v4985 = vunpack.c.l.b16 %v4888
      %v4986 = vunpack.c.l.b16 %v4889
      %v4987 = vunpack.c.l.b16 %v4890
      %v4988 = vunpack.c.l.b16 %v4891
      %v4989 = vunpack.c.l.b16 %v4892
      %v4990 = vunpack.c.l.b16 %v4893
      %v4991 = vunpack.c.l.b16 %v4894
      %v4992 = vunpack.c.l.b16 %v4895
      %v4993 = vunpack.c.l.b16 %v4896
      %v4994 = vunpack.c.l.b16 %v4897
      %v4995 = vpack.c.b16 %v4980, %v4979
      %v4996 = vpack.c.b16 %v4982, %v4981
      %v4997 = vpack.c.b16 %v4984, %v4983
      %v4998 = vpack.c.b16 %v4986, %v4985
      %v4999 = vpack.c.b16 %v4988, %v4987
      %v5000 = vpack.c.b16 %v4990, %v4989
      %v5001 = vpack.c.b16 %v4992, %v4991
      %v5002 = vpack.c.b16 %v4994, %v4993
      %5011 = vmatprep.subr.bf16.mxu0 0
      %5012 = vmatpush1.bf16.msra.mxu0 %v4995
      %5013 = vmatprep.subr.bf16.mxu0 0
      %5014 = vmatpush1.bf16.msra.mxu0 %v4996
      %5015 = vmatprep.subr.bf16.mxu0 0
      %5016 = vmatpush1.bf16.msra.mxu0 %v4997
      %5017 = vmatprep.subr.bf16.mxu0 0
      %5018 = vmatpush1.bf16.msra.mxu0 %v4998
      %5019 = vmatprep.subr.bf16.mxu0 0
      %5020 = vmatpush1.bf16.msra.mxu0 %v4999
      %5021 = vmatprep.subr.bf16.mxu0 0
      %5022 = vmatpush1.bf16.msra.mxu0 %v5000
      %5023 = vmatprep.subr.bf16.mxu0 0
      %5024 = vmatpush1.bf16.msra.mxu0 %v5001
      %5025 = vmatprep.subr.bf16.mxu0 0
      %5026 = vmatpush1.bf16.msra.mxu0 %v5002
      %5027 = vmatprep.subr.bf16.mxu0 0
      %5028 = vmatpush1.bf16.msra.mxu0 0
      %5029 = vmatprep.subr.bf16.mxu0 0
      %5030 = vmatpush1.bf16.msra.mxu0 0
      %5031 = vmatprep.subr.bf16.mxu0 0
      %5032 = vmatpush1.bf16.msra.mxu0 0
      %5033 = vmatprep.subr.bf16.mxu0 0
      %5034 = vmatpush1.bf16.msra.mxu0 0
      %5035 = vmatprep.subr.bf16.mxu0 0
      %5036 = vmatpush1.bf16.msra.mxu0 0
      %5037 = vmatprep.subr.bf16.mxu0 0
      %5038 = vmatpush1.bf16.msra.mxu0 0
      %5039 = vmatprep.subr.bf16.mxu0 0
      %5040 = vmatpush1.bf16.msra.mxu0 0
      %5041 = vmatprep.subr.bf16.mxu0 0
      %5042 = vmatpush1.bf16.msra.mxu0 0
      %5043 = vmatprep.mubr.bf16.mxu0 0
      %5044 = vmatmul.mubr.bf16.gmra.mrb[0].mxu0 %v4904
      %v5045 = vpop.f32.mrb[0].mxu0
      %v5046 = vadd.f32 0.0, %v5045
      %v5047 = vpop.f32.mrb[0].mxu0
      %v5048 = vpop.f32.mrb[0].mxu0
      %v5049 = vadd.f32 0.0, %v5048
      %v5050 = vpop.f32.mrb[0].mxu0
      %5051 = vmatprep.mubr.bf16.mxu0 0
      %5052 = vmatmul.mubr.bf16.gmra.mrb[0].mxu0 %v4907
      %v5053 = vpop.f32.mrb[0].mxu0
      %v5054 = vadd.f32 0.0, %v5053
      %v5055 = vpop.f32.mrb[0].mxu0
      %v5056 = vpop.f32.mrb[0].mxu0
      %v5057 = vadd.f32 0.0, %v5056
      %v5058 = vpop.f32.mrb[0].mxu0
      %5059 = vmatprep.mubr.bf16.mxu0 0
      %5060 = vmatmul.mubr.bf16.gmra.mrb[0].mxu0 %v4910
      %v5061 = vpop.f32.mrb[0].mxu0
      %v5062 = vadd.f32 0.0, %v5061
      %v5063 = vpop.f32.mrb[0].mxu0
      %v5064 = vpop.f32.mrb[0].mxu0
      %v5065 = vadd.f32 0.0, %v5064
      %v5066 = vpop.f32.mrb[0].mxu0
      %5067 = vmatprep.mubr.bf16.mxu0 0
      %5068 = vmatmul.mubr.bf16.gmra.mrb[0].mxu0 %v4913
      %v5069 = vpop.f32.mrb[0].mxu0
      %v5070 = vadd.f32 0.0, %v5069
      %v5071 = vpop.f32.mrb[0].mxu0
      %v5072 = vpop.f32.mrb[0].mxu0
      %v5073 = vadd.f32 0.0, %v5072
      %v5074 = vpop.f32.mrb[0].mxu0
      %5075 = vmatprep.mubr.bf16.mxu0 0
      %5076 = vmatmul.mubr.bf16.gmra.mrb[0].mxu0 %v4916
      %v5077 = vpop.f32.mrb[0].mxu0
      %v5078 = vadd.f32 0.0, %v5077
      %v5079 = vpop.f32.mrb[0].mxu0
      %v5080 = vpop.f32.mrb[0].mxu0
      %v5081 = vadd.f32 0.0, %v5080
      %v5082 = vpop.f32.mrb[0].mxu0
      %5083 = vmatprep.mubr.bf16.mxu0 0
      %5084 = vmatmul.mubr.bf16.gmra.mrb[0].mxu0 %v4919
      %v5085 = vpop.f32.mrb[0].mxu0
      %v5086 = vadd.f32 0.0, %v5085
      %v5087 = vpop.f32.mrb[0].mxu0
      %v5088 = vpop.f32.mrb[0].mxu0
      %v5089 = vadd.f32 0.0, %v5088
      %v5090 = vpop.f32.mrb[0].mxu0
      %5091 = vmatprep.mubr.bf16.mxu0 0
      %5092 = vmatmul.mubr.bf16.gmra.mrb[0].mxu0 %v4922
      %v5093 = vpop.f32.mrb[0].mxu0
      %v5094 = vadd.f32 0.0, %v5093
      %v5095 = vpop.f32.mrb[0].mxu0
      %v5096 = vpop.f32.mrb[0].mxu0
      %v5097 = vadd.f32 0.0, %v5096
      %v5098 = vpop.f32.mrb[0].mxu0
      %5099 = vmatprep.mubr.bf16.mxu0 0
      %5100 = vmatmul.mubr.bf16.gmra.mrb[0].mxu0 %v4925
      %v5101 = vpop.f32.mrb[0].mxu0
      %v5102 = vadd.f32 0.0, %v5101
      %v5103 = vpop.f32.mrb[0].mxu0
      %v5104 = vpop.f32.mrb[0].mxu0
      %v5105 = vadd.f32 0.0, %v5104
      %v5106 = vpop.f32.mrb[0].mxu0
      %5107 = vmatprep.mubr.bf16.mxu0 0
      %5108 = vmatmul.mubr.bf16.gmra.mrb[0].mxu0 %v4928
      %v5109 = vpop.f32.mrb[0].mxu0
      %v5110 = vadd.f32 0.0, %v5109
      %v5111 = vpop.f32.mrb[0].mxu0
      %v5112 = vpop.f32.mrb[0].mxu0
      %v5113 = vadd.f32 0.0, %v5112
      %v5114 = vpop.f32.mrb[0].mxu0
      %5115 = vmatprep.mubr.bf16.mxu0 0
      %5116 = vmatmul.mubr.bf16.gmra.mrb[0].mxu0 %v4931
      %v5117 = vpop.f32.mrb[0].mxu0
      %v5118 = vadd.f32 0.0, %v5117
      %v5119 = vpop.f32.mrb[0].mxu0
      %v5120 = vpop.f32.mrb[0].mxu0
      %v5121 = vadd.f32 0.0, %v5120
      %v5122 = vpop.f32.mrb[0].mxu0
      %5123 = vmatprep.mubr.bf16.mxu0 0
      %5124 = vmatmul.mubr.bf16.gmra.mrb[0].mxu0 %v4934
      %v5125 = vpop.f32.mrb[0].mxu0
      %v5126 = vadd.f32 0.0, %v5125
      %v5127 = vpop.f32.mrb[0].mxu0
      %v5128 = vpop.f32.mrb[0].mxu0
      %v5129 = vadd.f32 0.0, %v5128
      %v5130 = vpop.f32.mrb[0].mxu0
      %5131 = vmatprep.mubr.bf16.mxu0 0
      %5132 = vmatmul.mubr.bf16.gmra.mrb[0].mxu0 %v4937
      %v5133 = vpop.f32.mrb[0].mxu0
      %v5134 = vadd.f32 0.0, %v5133
      %v5135 = vpop.f32.mrb[0].mxu0
      %v5136 = vpop.f32.mrb[0].mxu0
      %v5137 = vadd.f32 0.0, %v5136
      %v5138 = vpop.f32.mrb[0].mxu0
      %5139 = vmatprep.mubr.bf16.mxu0 0
      %5140 = vmatmul.mubr.bf16.gmra.mrb[0].mxu0 %v4940
      %v5141 = vpop.f32.mrb[0].mxu0
      %v5142 = vadd.f32 0.0, %v5141
      %v5143 = vpop.f32.mrb[0].mxu0
      %v5144 = vpop.f32.mrb[0].mxu0
      %v5145 = vadd.f32 0.0, %v5144
      %v5146 = vpop.f32.mrb[0].mxu0
      %5147 = vmatprep.mubr.bf16.mxu0 0
      %5148 = vmatmul.mubr.bf16.gmra.mrb[0].mxu0 %v4948
      %v5149 = vpop.f32.mrb[0].mxu0
      %v5150 = vadd.f32 0.0, %v5149
      %v5151 = vpop.f32.mrb[0].mxu0
      %v5152 = vpop.f32.mrb[0].mxu0
      %v5153 = vadd.f32 0.0, %v5152
      %v5154 = vpop.f32.mrb[0].mxu0
      %5155 = vdwg.mxu0
      %v5156 = vadd.f32 %v4851, %v5046
      %v5157 = vadd.f32 %v4852, %v5049
      %v5158 = vadd.f32 %v4853, %v5054
      %v5159 = vadd.f32 %v4854, %v5057
      %v5160 = vadd.f32 %v4855, %v5062
      %v5161 = vadd.f32 %v4856, %v5065
      %v5162 = vadd.f32 %v4857, %v5070
      %v5163 = vadd.f32 %v4858, %v5073
      %v5164 = vadd.f32 %v4859, %v5078
      %v5165 = vadd.f32 %v4860, %v5081
      %v5166 = vadd.f32 %v4861, %v5086
      %v5167 = vadd.f32 %v4862, %v5089
      %v5168 = vadd.f32 %v4863, %v5094
      %v5169 = vadd.f32 %v4864, %v5097
      %v5170 = vadd.f32 %v4865, %v5102
      %v5171 = vadd.f32 %v4866, %v5105
      %v5172 = vadd.f32 %v4867, %v5110
      %v5173 = vadd.f32 %v4868, %v5113
      %v5174 = vadd.f32 %v4869, %v5118
      %v5175 = vadd.f32 %v4870, %v5121
      %v5176 = vadd.f32 %v4871, %v5126
      %v5177 = vadd.f32 %v4872, %v5129
      %v5178 = vadd.f32 %v4873, %v5134
      %v5179 = vadd.f32 %v4874, %v5137
      %v5180 = vadd.f32 %v4875, %v5142
      %v5181 = vadd.f32 %v4876, %v5145
      %v5182 = vadd.f32 %v4877, %v5150
      %v5183 = vadd.f32 %v4878, %v5153
      %s5184 = scalar_lea.vmem %s3, 256
      %v5185 = vld [vmem:[%s5184] sm:$0xf]
      %v5186 = vld [vmem:[%s5184 + $0x4] sm:$0xf]
      %v5187 = vld [vmem:[%s5184 + $0x8] sm:$0xf]
      %v5188 = vld [vmem:[%s5184 + $0xc] sm:$0xf]
      %v5189 = vld [vmem:[%s5184 + $0x10] sm:$0xf]
      %v5190 = vld [vmem:[%s5184 + $0x14] sm:$0xf]
      %v5191 = vld [vmem:[%s5184 + $0x18] sm:$0xf]
      %v5192 = vld [vmem:[%s5184 + $0x1c] sm:$0xf]
      %v5193 = vld [vmem:[%s5184 + $0x20] sm:$0xf]
      %v5194 = vld [vmem:[%s5184 + $0x24] sm:$0xf]
      %v5195 = vld [vmem:[%s5184 + $0x28] sm:$0xf]
      %v5196 = vld [vmem:[%s5184 + $0x2c] sm:$0xf]
      %v5197 = vld [vmem:[%s5184 + $0x30] sm:$0xf]
      %v5198 = vld [vmem:[%s5184 + $0x34] sm:$0xf]
      %v5199 = vld [vmem:[%s5184 + $0x38] sm:$0xf]
      %v5200 = vld [vmem:[%s5184 + $0x3c] sm:$0xf]
      %v5217 = vunpack.c.l.b16 %v5185
      %v5218 = vunpack.c.l.b16 %v5186
      %v5219 = vunpack.c.l.b16 %v5187
      %v5220 = vunpack.c.l.b16 %v5188
      %v5221 = vunpack.c.l.b16 %v5189
      %v5222 = vunpack.c.l.b16 %v5190
      %v5223 = vunpack.c.l.b16 %v5191
      %v5224 = vunpack.c.l.b16 %v5192
      %v5225 = vunpack.c.l.b16 %v5193
      %v5226 = vunpack.c.l.b16 %v5194
      %v5227 = vunpack.c.l.b16 %v5195
      %v5228 = vunpack.c.l.b16 %v5196
      %v5229 = vunpack.c.l.b16 %v5197
      %v5230 = vunpack.c.l.b16 %v5198
      %v5231 = vunpack.c.l.b16 %v5199
      %v5232 = vunpack.c.l.b16 %v5200
      %v5233 = vpack.c.b16 %v5218, %v5217
      %v5234 = vpack.c.b16 %v5220, %v5219
      %v5235 = vpack.c.b16 %v5222, %v5221
      %v5236 = vpack.c.b16 %v5224, %v5223
      %v5237 = vpack.c.b16 %v5226, %v5225
      %v5238 = vpack.c.b16 %v5228, %v5227
      %v5239 = vpack.c.b16 %v5230, %v5229
      %v5240 = vpack.c.b16 %v5232, %v5231
      %5249 = vmatprep.subr.bf16.mxu0 0
      %5250 = vmatpush1.bf16.msra.mxu0 %v5233
      %5251 = vmatprep.subr.bf16.mxu0 0
      %5252 = vmatpush1.bf16.msra.mxu0 %v5234
      %5253 = vmatprep.subr.bf16.mxu0 0
      %5254 = vmatpush1.bf16.msra.mxu0 %v5235
      %5255 = vmatprep.subr.bf16.mxu0 0
      %5256 = vmatpush1.bf16.msra.mxu0 %v5236
      %5257 = vmatprep.subr.bf16.mxu0 0
      %5258 = vmatpush1.bf16.msra.mxu0 %v5237
      %5259 = vmatprep.subr.bf16.mxu0 0
      %5260 = vmatpush1.bf16.msra.mxu0 %v5238
      %5261 = vmatprep.subr.bf16.mxu0 0
      %5262 = vmatpush1.bf16.msra.mxu0 %v5239
      %5263 = vmatprep.subr.bf16.mxu0 0
      %5264 = vmatpush1.bf16.msra.mxu0 %v5240
      %5265 = vmatprep.subr.bf16.mxu0 0
      %5266 = vmatpush1.bf16.msra.mxu0 0
      %5267 = vmatprep.subr.bf16.mxu0 0
      %5268 = vmatpush1.bf16.msra.mxu0 0
      %5269 = vmatprep.subr.bf16.mxu0 0
      %5270 = vmatpush1.bf16.msra.mxu0 0
      %5271 = vmatprep.subr.bf16.mxu0 0
      %5272 = vmatpush1.bf16.msra.mxu0 0
      %5273 = vmatprep.subr.bf16.mxu0 0
      %5274 = vmatpush1.bf16.msra.mxu0 0
      %5275 = vmatprep.subr.bf16.mxu0 0
      %5276 = vmatpush1.bf16.msra.mxu0 0
      %5277 = vmatprep.subr.bf16.mxu0 0
      %5278 = vmatpush1.bf16.msra.mxu0 0
      %5279 = vmatprep.subr.bf16.mxu0 0
      %5280 = vmatpush1.bf16.msra.mxu0 0
      %5281 = vmatprep.mubr.bf16.mxu0 0
      %5282 = vmatmul.mubr.bf16.gmra.mrb[0].mxu0 %v4497
      %v5283 = vpop.f32.mrb[0].mxu0
      %v5284 = vadd.f32 0.0, %v5283
      %v5285 = vpop.f32.mrb[0].mxu0
      %v5286 = vpop.f32.mrb[0].mxu0
      %v5287 = vadd.f32 0.0, %v5286
      %v5288 = vpop.f32.mrb[0].mxu0
      %5289 = vmatprep.mubr.bf16.mxu0 0
      %5290 = vmatmul.mubr.bf16.gmra.mrb[0].mxu0 %v4498
      %v5291 = vpop.f32.mrb[0].mxu0
      %v5292 = vadd.f32 0.0, %v5291
      %v5293 = vpop.f32.mrb[0].mxu0
      %v5294 = vpop.f32.mrb[0].mxu0
      %v5295 = vadd.f32 0.0, %v5294
      %v5296 = vpop.f32.mrb[0].mxu0
      %5297 = vmatprep.mubr.bf16.mxu0 0
      %5298 = vmatmul.mubr.bf16.gmra.mrb[0].mxu0 %v4499
      %v5299 = vpop.f32.mrb[0].mxu0
      %v5300 = vadd.f32 0.0, %v5299
      %v5301 = vpop.f32.mrb[0].mxu0
      %v5302 = vpop.f32.mrb[0].mxu0
      %v5303 = vadd.f32 0.0, %v5302
      %v5304 = vpop.f32.mrb[0].mxu0
      %5305 = vmatprep.mubr.bf16.mxu0 0
      %5306 = vmatmul.mubr.bf16.gmra.mrb[0].mxu0 %v4500
      %v5307 = vpop.f32.mrb[0].mxu0
      %v5308 = vadd.f32 0.0, %v5307
      %v5309 = vpop.f32.mrb[0].mxu0
      %v5310 = vpop.f32.mrb[0].mxu0
      %v5311 = vadd.f32 0.0, %v5310
      %v5312 = vpop.f32.mrb[0].mxu0
      %5313 = vmatprep.mubr.bf16.mxu0 0
      %5314 = vmatmul.mubr.bf16.gmra.mrb[0].mxu0 %v4501
      %v5315 = vpop.f32.mrb[0].mxu0
      %v5316 = vadd.f32 0.0, %v5315
      %v5317 = vpop.f32.mrb[0].mxu0
      %v5318 = vpop.f32.mrb[0].mxu0
      %v5319 = vadd.f32 0.0, %v5318
      %v5320 = vpop.f32.mrb[0].mxu0
      %5321 = vmatprep.mubr.bf16.mxu0 0
      %5322 = vmatmul.mubr.bf16.gmra.mrb[0].mxu0 %v4502
      %v5323 = vpop.f32.mrb[0].mxu0
      %v5324 = vadd.f32 0.0, %v5323
      %v5325 = vpop.f32.mrb[0].mxu0
      %v5326 = vpop.f32.mrb[0].mxu0
      %v5327 = vadd.f32 0.0, %v5326
      %v5328 = vpop.f32.mrb[0].mxu0
      %5329 = vmatprep.mubr.bf16.mxu0 0
      %5330 = vmatmul.mubr.bf16.gmra.mrb[0].mxu0 %v4503
      %v5331 = vpop.f32.mrb[0].mxu0
      %v5332 = vadd.f32 0.0, %v5331
      %v5333 = vpop.f32.mrb[0].mxu0
      %v5334 = vpop.f32.mrb[0].mxu0
      %v5335 = vadd.f32 0.0, %v5334
      %v5336 = vpop.f32.mrb[0].mxu0
      %5337 = vmatprep.mubr.bf16.mxu0 0
      %5338 = vmatmul.mubr.bf16.gmra.mrb[0].mxu0 %v4504
      %v5339 = vpop.f32.mrb[0].mxu0
      %v5340 = vadd.f32 0.0, %v5339
      %v5341 = vpop.f32.mrb[0].mxu0
      %v5342 = vpop.f32.mrb[0].mxu0
      %v5343 = vadd.f32 0.0, %v5342
      %v5344 = vpop.f32.mrb[0].mxu0
      %5345 = vmatprep.mubr.bf16.mxu0 0
      %5346 = vmatmul.mubr.bf16.gmra.mrb[0].mxu0 %v4505
      %v5347 = vpop.f32.mrb[0].mxu0
      %v5348 = vadd.f32 0.0, %v5347
      %v5349 = vpop.f32.mrb[0].mxu0
      %v5350 = vpop.f32.mrb[0].mxu0
      %v5351 = vadd.f32 0.0, %v5350
      %v5352 = vpop.f32.mrb[0].mxu0
      %5353 = vmatprep.mubr.bf16.mxu0 0
      %5354 = vmatmul.mubr.bf16.gmra.mrb[0].mxu0 %v4506
      %v5355 = vpop.f32.mrb[0].mxu0
      %v5356 = vadd.f32 0.0, %v5355
      %v5357 = vpop.f32.mrb[0].mxu0
      %v5358 = vpop.f32.mrb[0].mxu0
      %v5359 = vadd.f32 0.0, %v5358
      %v5360 = vpop.f32.mrb[0].mxu0
      %5361 = vmatprep.mubr.bf16.mxu0 0
      %5362 = vmatmul.mubr.bf16.gmra.mrb[0].mxu0 %v4507
      %v5363 = vpop.f32.mrb[0].mxu0
      %v5364 = vadd.f32 0.0, %v5363
      %v5365 = vpop.f32.mrb[0].mxu0
      %v5366 = vpop.f32.mrb[0].mxu0
      %v5367 = vadd.f32 0.0, %v5366
      %v5368 = vpop.f32.mrb[0].mxu0
      %5369 = vmatprep.mubr.bf16.mxu0 0
      %5370 = vmatmul.mubr.bf16.gmra.mrb[0].mxu0 %v4508
      %v5371 = vpop.f32.mrb[0].mxu0
      %v5372 = vadd.f32 0.0, %v5371
      %v5373 = vpop.f32.mrb[0].mxu0
      %v5374 = vpop.f32.mrb[0].mxu0
      %v5375 = vadd.f32 0.0, %v5374
      %v5376 = vpop.f32.mrb[0].mxu0
      %5377 = vmatprep.mubr.bf16.mxu0 0
      %5378 = vmatmul.mubr.bf16.gmra.mrb[0].mxu0 %v4509
      %v5379 = vpop.f32.mrb[0].mxu0
      %v5380 = vadd.f32 0.0, %v5379
      %v5381 = vpop.f32.mrb[0].mxu0
      %v5382 = vpop.f32.mrb[0].mxu0
      %v5383 = vadd.f32 0.0, %v5382
      %v5384 = vpop.f32.mrb[0].mxu0
      %5385 = vmatprep.mubr.bf16.mxu0 0
      %5386 = vmatmul.mubr.bf16.gmra.mrb[0].mxu0 %v4880
      %v5387 = vpop.f32.mrb[0].mxu0
      %v5388 = vadd.f32 0.0, %v5387
      %v5389 = vpop.f32.mrb[0].mxu0
      %v5390 = vpop.f32.mrb[0].mxu0
      %v5391 = vadd.f32 0.0, %v5390
      %v5392 = vpop.f32.mrb[0].mxu0
      %5393 = vdwg.mxu0
      %v5394 = vadd.f32 %v5156, %v5284
      %v5395 = vadd.f32 %v5157, %v5287
      %v5396 = vadd.f32 %v5158, %v5292
      %v5397 = vadd.f32 %v5159, %v5295
      %v5398 = vadd.f32 %v5160, %v5300
      %v5399 = vadd.f32 %v5161, %v5303
      %v5400 = vadd.f32 %v5162, %v5308
      %v5401 = vadd.f32 %v5163, %v5311
      %v5402 = vadd.f32 %v5164, %v5316
      %v5403 = vadd.f32 %v5165, %v5319
      %v5404 = vadd.f32 %v5166, %v5324
      %v5405 = vadd.f32 %v5167, %v5327
      %v5406 = vadd.f32 %v5168, %v5332
      %v5407 = vadd.f32 %v5169, %v5335
      %v5408 = vadd.f32 %v5170, %v5340
      %v5409 = vadd.f32 %v5171, %v5343
      %v5410 = vadd.f32 %v5172, %v5348
      %v5411 = vadd.f32 %v5173, %v5351
      %v5412 = vadd.f32 %v5174, %v5356
      %v5413 = vadd.f32 %v5175, %v5359
      %v5414 = vadd.f32 %v5176, %v5364
      %v5415 = vadd.f32 %v5177, %v5367
      %v5416 = vadd.f32 %v5178, %v5372
      %v5417 = vadd.f32 %v5179, %v5375
      %v5418 = vadd.f32 %v5180, %v5380
      %v5419 = vadd.f32 %v5181, %v5383
      %v5420 = vadd.f32 %v5182, %v5388
      %v5421 = vadd.f32 %v5183, %v5391
      %v5422 = vld [vmem:[#allocation2 + $0x10] sm:$0xff]
      %v5423 = vld [vmem:[#allocation2 + $0x18] sm:$0xff]
      %v5424 = vld [vmem:[#allocation2 + $0x20] sm:$0xff]
      %v5425 = vld [vmem:[#allocation2 + $0x28] sm:$0xff]
      %v5426 = vld [vmem:[#allocation2 + $0x30] sm:$0xff]
      %v5427 = vld [vmem:[#allocation2 + $0x38] sm:$0xff]
      %v5428 = vld [vmem:[#allocation2 + $0x40] sm:$0xff]
      %v5429 = vld [vmem:[#allocation2 + $0x48] sm:$0xff]
      %v5430 = vld [vmem:[#allocation2 + $0x50] sm:$0xff]
      %v5431 = vld [vmem:[#allocation2 + $0x58] sm:$0xff]
      %v5432 = vld [vmem:[#allocation2 + $0x60] sm:$0xff]
      %v5433 = vld [vmem:[#allocation2 + $0x68] sm:$0xff]
      %v5434 = vld [vmem:[#allocation2 + $0x70] sm:$0xff]
      %v5435 = vld [vmem:[#allocation2 + $0x78] sm:$0xff]
      %v5436 = vld [vmem:[#allocation2 + $0x80] sm:$0x1]
      %s5437 = scalar_lea.vmem %s3, 320
      %v5438 = vld [vmem:[%s5437] sm:$0xf]
      %v5439 = vld [vmem:[%s5437 + $0x4] sm:$0xf]
      %v5440 = vld [vmem:[%s5437 + $0x8] sm:$0xf]
      %v5441 = vld [vmem:[%s5437 + $0xc] sm:$0xf]
      %v5442 = vld [vmem:[%s5437 + $0x10] sm:$0xf]
      %v5443 = vld [vmem:[%s5437 + $0x14] sm:$0xf]
      %v5444 = vld [vmem:[%s5437 + $0x18] sm:$0xf]
      %v5445 = vld [vmem:[%s5437 + $0x1c] sm:$0xf]
      %v5446 = vld [vmem:[%s5437 + $0x20] sm:$0xf]
      %v5447 = vld [vmem:[%s5437 + $0x24] sm:$0xf]
      %v5448 = vld [vmem:[%s5437 + $0x28] sm:$0xf]
      %v5449 = vld [vmem:[%s5437 + $0x2c] sm:$0xf]
      %v5450 = vld [vmem:[%s5437 + $0x30] sm:$0xf]
      %v5451 = vld [vmem:[%s5437 + $0x34] sm:$0xf]
      %v5452 = vld [vmem:[%s5437 + $0x38] sm:$0xf]
      %v5453 = vld [vmem:[%s5437 + $0x3c] sm:$0xf]
      %v5455 = vshrl.u32 %v5422, 16
      %v5457 = vshll.u32 %v5422, 16
      %v5459 = vrot.slane %v5457, 1
      %v5460 = vor.u32 %v5455, %v5459
      %v5462 = vshll.u32 %v5423, 16
      %v5464 = vrot.slane %v5462, 1
      %v5465 = vsel %vm388, %v5460, %v5464
      %v5466 = vshrl.u32 %v5423, 16
      %v5468 = vor.u32 %v5466, %v5464
      %v5470 = vshll.u32 %v5424, 16
      %v5472 = vrot.slane %v5470, 1
      %v5473 = vsel %vm388, %v5468, %v5472
      %v5474 = vshrl.u32 %v5424, 16
      %v5476 = vor.u32 %v5474, %v5472
      %v5478 = vshll.u32 %v5425, 16
      %v5480 = vrot.slane %v5478, 1
      %v5481 = vsel %vm388, %v5476, %v5480
      %v5482 = vshrl.u32 %v5425, 16
      %v5484 = vor.u32 %v5482, %v5480
      %v5486 = vshll.u32 %v5426, 16
      %v5488 = vrot.slane %v5486, 1
      %v5489 = vsel %vm388, %v5484, %v5488
      %v5490 = vshrl.u32 %v5426, 16
      %v5492 = vor.u32 %v5490, %v5488
      %v5494 = vshll.u32 %v5427, 16
      %v5496 = vrot.slane %v5494, 1
      %v5497 = vsel %vm388, %v5492, %v5496
      %v5498 = vshrl.u32 %v5427, 16
      %v5500 = vor.u32 %v5498, %v5496
      %v5502 = vshll.u32 %v5428, 16
      %v5504 = vrot.slane %v5502, 1
      %v5505 = vsel %vm388, %v5500, %v5504
      %v5506 = vshrl.u32 %v5428, 16
      %v5508 = vor.u32 %v5506, %v5504
      %v5510 = vshll.u32 %v5429, 16
      %v5512 = vrot.slane %v5510, 1
      %v5513 = vsel %vm388, %v5508, %v5512
      %v5514 = vshrl.u32 %v5429, 16
      %v5516 = vor.u32 %v5514, %v5512
      %v5518 = vshll.u32 %v5430, 16
      %v5520 = vrot.slane %v5518, 1
      %v5521 = vsel %vm388, %v5516, %v5520
      %v5522 = vshrl.u32 %v5430, 16
      %v5524 = vor.u32 %v5522, %v5520
      %v5526 = vshll.u32 %v5431, 16
      %v5528 = vrot.slane %v5526, 1
      %v5529 = vsel %vm388, %v5524, %v5528
      %v5530 = vshrl.u32 %v5431, 16
      %v5532 = vor.u32 %v5530, %v5528
      %v5534 = vshll.u32 %v5432, 16
      %v5536 = vrot.slane %v5534, 1
      %v5537 = vsel %vm388, %v5532, %v5536
      %v5538 = vshrl.u32 %v5432, 16
      %v5540 = vor.u32 %v5538, %v5536
      %v5542 = vshll.u32 %v5433, 16
      %v5544 = vrot.slane %v5542, 1
      %v5545 = vsel %vm388, %v5540, %v5544
      %v5546 = vshrl.u32 %v5433, 16
      %v5548 = vor.u32 %v5546, %v5544
      %v5550 = vshll.u32 %v5434, 16
      %v5552 = vrot.slane %v5550, 1
      %v5553 = vsel %vm388, %v5548, %v5552
      %v5554 = vshrl.u32 %v5434, 16
      %v5556 = vor.u32 %v5554, %v5552
      %v5558 = vshll.u32 %v5435, 16
      %v5560 = vrot.slane %v5558, 1
      %v5561 = vsel %vm388, %v5556, %v5560
      %v5562 = vshrl.u32 %v5435, 16
      %v5564 = vor.u32 %v5562, %v5560
      %v5566 = vshll.u32 %v5436, 16
      %v5568 = vrot.slane %v5566, 1
      %v5569 = vsel %vm388, %v5564, %v5568
      %v5600 = vunpack.c.l.b16 %v5438
      %v5601 = vunpack.c.l.b16 %v5439
      %v5602 = vunpack.c.l.b16 %v5440
      %v5603 = vunpack.c.l.b16 %v5441
      %v5604 = vunpack.c.l.b16 %v5442
      %v5605 = vunpack.c.l.b16 %v5443
      %v5606 = vunpack.c.l.b16 %v5444
      %v5607 = vunpack.c.l.b16 %v5445
      %v5608 = vunpack.c.l.b16 %v5446
      %v5609 = vunpack.c.l.b16 %v5447
      %v5610 = vunpack.c.l.b16 %v5448
      %v5611 = vunpack.c.l.b16 %v5449
      %v5612 = vunpack.c.l.b16 %v5450
      %v5613 = vunpack.c.l.b16 %v5451
      %v5614 = vunpack.c.l.b16 %v5452
      %v5615 = vunpack.c.l.b16 %v5453
      %v5616 = vpack.c.b16 %v5601, %v5600
      %v5617 = vpack.c.b16 %v5603, %v5602
      %v5618 = vpack.c.b16 %v5605, %v5604
      %v5619 = vpack.c.b16 %v5607, %v5606
      %v5620 = vpack.c.b16 %v5609, %v5608
      %v5621 = vpack.c.b16 %v5611, %v5610
      %v5622 = vpack.c.b16 %v5613, %v5612
      %v5623 = vpack.c.b16 %v5615, %v5614
      %5632 = vmatprep.subr.bf16.mxu0 0
      %5633 = vmatpush1.bf16.msra.mxu0 %v5616
      %5634 = vmatprep.subr.bf16.mxu0 0
      %5635 = vmatpush1.bf16.msra.mxu0 %v5617
      %5636 = vmatprep.subr.bf16.mxu0 0
      %5637 = vmatpush1.bf16.msra.mxu0 %v5618
      %5638 = vmatprep.subr.bf16.mxu0 0
      %5639 = vmatpush1.bf16.msra.mxu0 %v5619
      %5640 = vmatprep.subr.bf16.mxu0 0
      %5641 = vmatpush1.bf16.msra.mxu0 %v5620
      %5642 = vmatprep.subr.bf16.mxu0 0
      %5643 = vmatpush1.bf16.msra.mxu0 %v5621
      %5644 = vmatprep.subr.bf16.mxu0 0
      %5645 = vmatpush1.bf16.msra.mxu0 %v5622
      %5646 = vmatprep.subr.bf16.mxu0 0
      %5647 = vmatpush1.bf16.msra.mxu0 %v5623
      %5648 = vmatprep.subr.bf16.mxu0 0
      %5649 = vmatpush1.bf16.msra.mxu0 0
      %5650 = vmatprep.subr.bf16.mxu0 0
      %5651 = vmatpush1.bf16.msra.mxu0 0
      %5652 = vmatprep.subr.bf16.mxu0 0
      %5653 = vmatpush1.bf16.msra.mxu0 0
      %5654 = vmatprep.subr.bf16.mxu0 0
      %5655 = vmatpush1.bf16.msra.mxu0 0
      %5656 = vmatprep.subr.bf16.mxu0 0
      %5657 = vmatpush1.bf16.msra.mxu0 0
      %5658 = vmatprep.subr.bf16.mxu0 0
      %5659 = vmatpush1.bf16.msra.mxu0 0
      %5660 = vmatprep.subr.bf16.mxu0 0
      %5661 = vmatpush1.bf16.msra.mxu0 0
      %5662 = vmatprep.subr.bf16.mxu0 0
      %5663 = vmatpush1.bf16.msra.mxu0 0
      %5664 = vmatprep.mubr.bf16.mxu0 0
      %5665 = vmatmul.mubr.bf16.gmra.mrb[0].mxu0 %v5465
      %v5666 = vpop.f32.mrb[0].mxu0
      %v5667 = vadd.f32 0.0, %v5666
      %v5668 = vpop.f32.mrb[0].mxu0
      %v5669 = vpop.f32.mrb[0].mxu0
      %v5670 = vadd.f32 0.0, %v5669
      %v5671 = vpop.f32.mrb[0].mxu0
      %5672 = vmatprep.mubr.bf16.mxu0 0
      %5673 = vmatmul.mubr.bf16.gmra.mrb[0].mxu0 %v5473
      %v5674 = vpop.f32.mrb[0].mxu0
      %v5675 = vadd.f32 0.0, %v5674
      %v5676 = vpop.f32.mrb[0].mxu0
      %v5677 = vpop.f32.mrb[0].mxu0
      %v5678 = vadd.f32 0.0, %v5677
      %v5679 = vpop.f32.mrb[0].mxu0
      %5680 = vmatprep.mubr.bf16.mxu0 0
      %5681 = vmatmul.mubr.bf16.gmra.mrb[0].mxu0 %v5481
      %v5682 = vpop.f32.mrb[0].mxu0
      %v5683 = vadd.f32 0.0, %v5682
      %v5684 = vpop.f32.mrb[0].mxu0
      %v5685 = vpop.f32.mrb[0].mxu0
      %v5686 = vadd.f32 0.0, %v5685
      %v5687 = vpop.f32.mrb[0].mxu0
      %5688 = vmatprep.mubr.bf16.mxu0 0
      %5689 = vmatmul.mubr.bf16.gmra.mrb[0].mxu0 %v5489
      %v5690 = vpop.f32.mrb[0].mxu0
      %v5691 = vadd.f32 0.0, %v5690
      %v5692 = vpop.f32.mrb[0].mxu0
      %v5693 = vpop.f32.mrb[0].mxu0
      %v5694 = vadd.f32 0.0, %v5693
      %v5695 = vpop.f32.mrb[0].mxu0
      %5696 = vmatprep.mubr.bf16.mxu0 0
      %5697 = vmatmul.mubr.bf16.gmra.mrb[0].mxu0 %v5497
      %v5698 = vpop.f32.mrb[0].mxu0
      %v5699 = vadd.f32 0.0, %v5698
      %v5700 = vpop.f32.mrb[0].mxu0
      %v5701 = vpop.f32.mrb[0].mxu0
      %v5702 = vadd.f32 0.0, %v5701
      %v5703 = vpop.f32.mrb[0].mxu0
      %5704 = vmatprep.mubr.bf16.mxu0 0
      %5705 = vmatmul.mubr.bf16.gmra.mrb[0].mxu0 %v5505
      %v5706 = vpop.f32.mrb[0].mxu0
      %v5707 = vadd.f32 0.0, %v5706
      %v5708 = vpop.f32.mrb[0].mxu0
      %v5709 = vpop.f32.mrb[0].mxu0
      %v5710 = vadd.f32 0.0, %v5709
      %v5711 = vpop.f32.mrb[0].mxu0
      %5712 = vmatprep.mubr.bf16.mxu0 0
      %5713 = vmatmul.mubr.bf16.gmra.mrb[0].mxu0 %v5513
      %v5714 = vpop.f32.mrb[0].mxu0
      %v5715 = vadd.f32 0.0, %v5714
      %v5716 = vpop.f32.mrb[0].mxu0
      %v5717 = vpop.f32.mrb[0].mxu0
      %v5718 = vadd.f32 0.0, %v5717
      %v5719 = vpop.f32.mrb[0].mxu0
      %5720 = vmatprep.mubr.bf16.mxu0 0
      %5721 = vmatmul.mubr.bf16.gmra.mrb[0].mxu0 %v5521
      %v5722 = vpop.f32.mrb[0].mxu0
      %v5723 = vadd.f32 0.0, %v5722
      %v5724 = vpop.f32.mrb[0].mxu0
      %v5725 = vpop.f32.mrb[0].mxu0
      %v5726 = vadd.f32 0.0, %v5725
      %v5727 = vpop.f32.mrb[0].mxu0
      %5728 = vmatprep.mubr.bf16.mxu0 0
      %5729 = vmatmul.mubr.bf16.gmra.mrb[0].mxu0 %v5529
      %v5730 = vpop.f32.mrb[0].mxu0
      %v5731 = vadd.f32 0.0, %v5730
      %v5732 = vpop.f32.mrb[0].mxu0
      %v5733 = vpop.f32.mrb[0].mxu0
      %v5734 = vadd.f32 0.0, %v5733
      %v5735 = vpop.f32.mrb[0].mxu0
      %5736 = vmatprep.mubr.bf16.mxu0 0
      %5737 = vmatmul.mubr.bf16.gmra.mrb[0].mxu0 %v5537
      %v5738 = vpop.f32.mrb[0].mxu0
      %v5739 = vadd.f32 0.0, %v5738
      %v5740 = vpop.f32.mrb[0].mxu0
      %v5741 = vpop.f32.mrb[0].mxu0
      %v5742 = vadd.f32 0.0, %v5741
      %v5743 = vpop.f32.mrb[0].mxu0
      %5744 = vmatprep.mubr.bf16.mxu0 0
      %5745 = vmatmul.mubr.bf16.gmra.mrb[0].mxu0 %v5545
      %v5746 = vpop.f32.mrb[0].mxu0
      %v5747 = vadd.f32 0.0, %v5746
      %v5748 = vpop.f32.mrb[0].mxu0
      %v5749 = vpop.f32.mrb[0].mxu0
      %v5750 = vadd.f32 0.0, %v5749
      %v5751 = vpop.f32.mrb[0].mxu0
      %5752 = vmatprep.mubr.bf16.mxu0 0
      %5753 = vmatmul.mubr.bf16.gmra.mrb[0].mxu0 %v5553
      %v5754 = vpop.f32.mrb[0].mxu0
      %v5755 = vadd.f32 0.0, %v5754
      %v5756 = vpop.f32.mrb[0].mxu0
      %v5757 = vpop.f32.mrb[0].mxu0
      %v5758 = vadd.f32 0.0, %v5757
      %v5759 = vpop.f32.mrb[0].mxu0
      %5760 = vmatprep.mubr.bf16.mxu0 0
      %5761 = vmatmul.mubr.bf16.gmra.mrb[0].mxu0 %v5561
      %v5762 = vpop.f32.mrb[0].mxu0
      %v5763 = vadd.f32 0.0, %v5762
      %v5764 = vpop.f32.mrb[0].mxu0
      %v5765 = vpop.f32.mrb[0].mxu0
      %v5766 = vadd.f32 0.0, %v5765
      %v5767 = vpop.f32.mrb[0].mxu0
      %5768 = vmatprep.mubr.bf16.mxu0 0
      %5769 = vmatmul.mubr.bf16.gmra.mrb[0].mxu0 %v5569
      %v5770 = vpop.f32.mrb[0].mxu0
      %v5771 = vadd.f32 0.0, %v5770
      %v5772 = vpop.f32.mrb[0].mxu0
      %v5773 = vpop.f32.mrb[0].mxu0
      %v5774 = vadd.f32 0.0, %v5773
      %v5775 = vpop.f32.mrb[0].mxu0
      %5776 = vdwg.mxu0
      %v5777 = vadd.f32 %v5394, %v5667
      %v5778 = vadd.f32 %v5395, %v5670
      %v5779 = vadd.f32 %v5396, %v5675
      %v5780 = vadd.f32 %v5397, %v5678
      %v5781 = vadd.f32 %v5398, %v5683
      %v5782 = vadd.f32 %v5399, %v5686
      %v5783 = vadd.f32 %v5400, %v5691
      %v5784 = vadd.f32 %v5401, %v5694
      %v5785 = vadd.f32 %v5402, %v5699
      %v5786 = vadd.f32 %v5403, %v5702
      %v5787 = vadd.f32 %v5404, %v5707
      %v5788 = vadd.f32 %v5405, %v5710
      %v5789 = vadd.f32 %v5406, %v5715
      %v5790 = vadd.f32 %v5407, %v5718
      %v5791 = vadd.f32 %v5408, %v5723
      %v5792 = vadd.f32 %v5409, %v5726
      %v5793 = vadd.f32 %v5410, %v5731
      %v5794 = vadd.f32 %v5411, %v5734
      %v5795 = vadd.f32 %v5412, %v5739
      %v5796 = vadd.f32 %v5413, %v5742
      %v5797 = vadd.f32 %v5414, %v5747
      %v5798 = vadd.f32 %v5415, %v5750
      %v5799 = vadd.f32 %v5416, %v5755
      %v5800 = vadd.f32 %v5417, %v5758
      %v5801 = vadd.f32 %v5418, %v5763
      %v5802 = vadd.f32 %v5419, %v5766
      %v5803 = vadd.f32 %v5420, %v5771
      %v5804 = vadd.f32 %v5421, %v5774
      %v5805 = vld [vmem:[#allocation2 + $0x10] sm:$0x80]
      %v5806 = vld [vmem:[#allocation2 + $0x80] sm:$0xff]
      %s5807 = scalar_lea.vmem %s3, 384
      %v5808 = vld [vmem:[%s5807] sm:$0xf]
      %v5809 = vld [vmem:[%s5807 + $0x4] sm:$0xf]
      %v5810 = vld [vmem:[%s5807 + $0x8] sm:$0xf]
      %v5811 = vld [vmem:[%s5807 + $0xc] sm:$0xf]
      %v5812 = vld [vmem:[%s5807 + $0x10] sm:$0xf]
      %v5813 = vld [vmem:[%s5807 + $0x14] sm:$0xf]
      %v5814 = vld [vmem:[%s5807 + $0x18] sm:$0xf]
      %v5815 = vld [vmem:[%s5807 + $0x1c] sm:$0xf]
      %v5816 = vld [vmem:[%s5807 + $0x20] sm:$0xf]
      %v5817 = vld [vmem:[%s5807 + $0x24] sm:$0xf]
      %v5818 = vld [vmem:[%s5807 + $0x28] sm:$0xf]
      %v5819 = vld [vmem:[%s5807 + $0x2c] sm:$0xf]
      %v5820 = vld [vmem:[%s5807 + $0x30] sm:$0xf]
      %v5821 = vld [vmem:[%s5807 + $0x34] sm:$0xf]
      %v5822 = vld [vmem:[%s5807 + $0x38] sm:$0xf]
      %v5823 = vld [vmem:[%s5807 + $0x3c] sm:$0xf]
      %v5825 = vshrl.u32 %v5805, 16
      %v5827 = vrot.slane %v5825, 7
      %v5828 = vrot.slane %v5466, 7
      %v5829 = vor.u32 %v5828, %v5462
      %v5830 = vsel %vm4172, %v5827, %v5829
      %v5831 = vrot.slane %v5474, 7
      %v5832 = vor.u32 %v5831, %v5470
      %v5833 = vsel %vm4172, %v5828, %v5832
      %v5834 = vrot.slane %v5482, 7
      %v5835 = vor.u32 %v5834, %v5478
      %v5836 = vsel %vm4172, %v5831, %v5835
      %v5837 = vrot.slane %v5490, 7
      %v5838 = vor.u32 %v5837, %v5486
      %v5839 = vsel %vm4172, %v5834, %v5838
      %v5840 = vrot.slane %v5498, 7
      %v5841 = vor.u32 %v5840, %v5494
      %v5842 = vsel %vm4172, %v5837, %v5841
      %v5843 = vrot.slane %v5506, 7
      %v5844 = vor.u32 %v5843, %v5502
      %v5845 = vsel %vm4172, %v5840, %v5844
      %v5846 = vrot.slane %v5514, 7
      %v5847 = vor.u32 %v5846, %v5510
      %v5848 = vsel %vm4172, %v5843, %v5847
      %v5849 = vrot.slane %v5522, 7
      %v5850 = vor.u32 %v5849, %v5518
      %v5851 = vsel %vm4172, %v5846, %v5850
      %v5852 = vrot.slane %v5530, 7
      %v5853 = vor.u32 %v5852, %v5526
      %v5854 = vsel %vm4172, %v5849, %v5853
      %v5855 = vrot.slane %v5538, 7
      %v5856 = vor.u32 %v5855, %v5534
      %v5857 = vsel %vm4172, %v5852, %v5856
      %v5858 = vrot.slane %v5546, 7
      %v5859 = vor.u32 %v5858, %v5542
      %v5860 = vsel %vm4172, %v5855, %v5859
      %v5861 = vrot.slane %v5554, 7
      %v5862 = vor.u32 %v5861, %v5550
      %v5863 = vsel %vm4172, %v5858, %v5862
      %v5864 = vrot.slane %v5562, 7
      %v5865 = vor.u32 %v5864, %v5558
      %v5866 = vsel %vm4172, %v5861, %v5865
      %v5868 = vshrl.u32 %v5806, 16
      %v5870 = vrot.slane %v5868, 7
      %v5871 = vshll.u32 %v5806, 16
      %v5873 = vor.u32 %v5870, %v5871
      %v5874 = vsel %vm4172, %v5864, %v5873
      %v5905 = vunpack.c.l.b16 %v5808
      %v5906 = vunpack.c.l.b16 %v5809
      %v5907 = vunpack.c.l.b16 %v5810
      %v5908 = vunpack.c.l.b16 %v5811
      %v5909 = vunpack.c.l.b16 %v5812
      %v5910 = vunpack.c.l.b16 %v5813
      %v5911 = vunpack.c.l.b16 %v5814
      %v5912 = vunpack.c.l.b16 %v5815
      %v5913 = vunpack.c.l.b16 %v5816
      %v5914 = vunpack.c.l.b16 %v5817
      %v5915 = vunpack.c.l.b16 %v5818
      %v5916 = vunpack.c.l.b16 %v5819
      %v5917 = vunpack.c.l.b16 %v5820
      %v5918 = vunpack.c.l.b16 %v5821
      %v5919 = vunpack.c.l.b16 %v5822
      %v5920 = vunpack.c.l.b16 %v5823
      %v5921 = vpack.c.b16 %v5906, %v5905
      %v5922 = vpack.c.b16 %v5908, %v5907
      %v5923 = vpack.c.b16 %v5910, %v5909
      %v5924 = vpack.c.b16 %v5912, %v5911
      %v5925 = vpack.c.b16 %v5914, %v5913
      %v5926 = vpack.c.b16 %v5916, %v5915
      %v5927 = vpack.c.b16 %v5918, %v5917
      %v5928 = vpack.c.b16 %v5920, %v5919
      %5937 = vmatprep.subr.bf16.mxu0 0
      %5938 = vmatpush1.bf16.msra.mxu0 %v5921
      %5939 = vmatprep.subr.bf16.mxu0 0
      %5940 = vmatpush1.bf16.msra.mxu0 %v5922
      %5941 = vmatprep.subr.bf16.mxu0 0
      %5942 = vmatpush1.bf16.msra.mxu0 %v5923
      %5943 = vmatprep.subr.bf16.mxu0 0
      %5944 = vmatpush1.bf16.msra.mxu0 %v5924
      %5945 = vmatprep.subr.bf16.mxu0 0
      %5946 = vmatpush1.bf16.msra.mxu0 %v5925
      %5947 = vmatprep.subr.bf16.mxu0 0
      %5948 = vmatpush1.bf16.msra.mxu0 %v5926
      %5949 = vmatprep.subr.bf16.mxu0 0
      %5950 = vmatpush1.bf16.msra.mxu0 %v5927
      %5951 = vmatprep.subr.bf16.mxu0 0
      %5952 = vmatpush1.bf16.msra.mxu0 %v5928
      %5953 = vmatprep.subr.bf16.mxu0 0
      %5954 = vmatpush1.bf16.msra.mxu0 0
      %5955 = vmatprep.subr.bf16.mxu0 0
      %5956 = vmatpush1.bf16.msra.mxu0 0
      %5957 = vmatprep.subr.bf16.mxu0 0
      %5958 = vmatpush1.bf16.msra.mxu0 0
      %5959 = vmatprep.subr.bf16.mxu0 0
      %5960 = vmatpush1.bf16.msra.mxu0 0
      %5961 = vmatprep.subr.bf16.mxu0 0
      %5962 = vmatpush1.bf16.msra.mxu0 0
      %5963 = vmatprep.subr.bf16.mxu0 0
      %5964 = vmatpush1.bf16.msra.mxu0 0
      %5965 = vmatprep.subr.bf16.mxu0 0
      %5966 = vmatpush1.bf16.msra.mxu0 0
      %5967 = vmatprep.subr.bf16.mxu0 0
      %5968 = vmatpush1.bf16.msra.mxu0 0
      %5969 = vmatprep.mubr.bf16.mxu0 0
      %5970 = vmatmul.mubr.bf16.gmra.mrb[0].mxu0 %v5830
      %v5971 = vpop.f32.mrb[0].mxu0
      %v5972 = vadd.f32 0.0, %v5971
      %v5973 = vpop.f32.mrb[0].mxu0
      %v5974 = vpop.f32.mrb[0].mxu0
      %v5975 = vadd.f32 0.0, %v5974
      %v5976 = vpop.f32.mrb[0].mxu0
      %5977 = vmatprep.mubr.bf16.mxu0 0
      %5978 = vmatmul.mubr.bf16.gmra.mrb[0].mxu0 %v5833
      %v5979 = vpop.f32.mrb[0].mxu0
      %v5980 = vadd.f32 0.0, %v5979
      %v5981 = vpop.f32.mrb[0].mxu0
      %v5982 = vpop.f32.mrb[0].mxu0
      %v5983 = vadd.f32 0.0, %v5982
      %v5984 = vpop.f32.mrb[0].mxu0
      %5985 = vmatprep.mubr.bf16.mxu0 0
      %5986 = vmatmul.mubr.bf16.gmra.mrb[0].mxu0 %v5836
      %v5987 = vpop.f32.mrb[0].mxu0
      %v5988 = vadd.f32 0.0, %v5987
      %v5989 = vpop.f32.mrb[0].mxu0
      %v5990 = vpop.f32.mrb[0].mxu0
      %v5991 = vadd.f32 0.0, %v5990
      %v5992 = vpop.f32.mrb[0].mxu0
      %5993 = vmatprep.mubr.bf16.mxu0 0
      %5994 = vmatmul.mubr.bf16.gmra.mrb[0].mxu0 %v5839
      %v5995 = vpop.f32.mrb[0].mxu0
      %v5996 = vadd.f32 0.0, %v5995
      %v5997 = vpop.f32.mrb[0].mxu0
      %v5998 = vpop.f32.mrb[0].mxu0
      %v5999 = vadd.f32 0.0, %v5998
      %v6000 = vpop.f32.mrb[0].mxu0
      %6001 = vmatprep.mubr.bf16.mxu0 0
      %6002 = vmatmul.mubr.bf16.gmra.mrb[0].mxu0 %v5842
      %v6003 = vpop.f32.mrb[0].mxu0
      %v6004 = vadd.f32 0.0, %v6003
      %v6005 = vpop.f32.mrb[0].mxu0
      %v6006 = vpop.f32.mrb[0].mxu0
      %v6007 = vadd.f32 0.0, %v6006
      %v6008 = vpop.f32.mrb[0].mxu0
      %6009 = vmatprep.mubr.bf16.mxu0 0
      %6010 = vmatmul.mubr.bf16.gmra.mrb[0].mxu0 %v5845
      %v6011 = vpop.f32.mrb[0].mxu0
      %v6012 = vadd.f32 0.0, %v6011
      %v6013 = vpop.f32.mrb[0].mxu0
      %v6014 = vpop.f32.mrb[0].mxu0
      %v6015 = vadd.f32 0.0, %v6014
      %v6016 = vpop.f32.mrb[0].mxu0
      %6017 = vmatprep.mubr.bf16.mxu0 0
      %6018 = vmatmul.mubr.bf16.gmra.mrb[0].mxu0 %v5848
      %v6019 = vpop.f32.mrb[0].mxu0
      %v6020 = vadd.f32 0.0, %v6019
      %v6021 = vpop.f32.mrb[0].mxu0
      %v6022 = vpop.f32.mrb[0].mxu0
      %v6023 = vadd.f32 0.0, %v6022
      %v6024 = vpop.f32.mrb[0].mxu0
      %6025 = vmatprep.mubr.bf16.mxu0 0
      %6026 = vmatmul.mubr.bf16.gmra.mrb[0].mxu0 %v5851
      %v6027 = vpop.f32.mrb[0].mxu0
      %v6028 = vadd.f32 0.0, %v6027
      %v6029 = vpop.f32.mrb[0].mxu0
      %v6030 = vpop.f32.mrb[0].mxu0
      %v6031 = vadd.f32 0.0, %v6030
      %v6032 = vpop.f32.mrb[0].mxu0
      %6033 = vmatprep.mubr.bf16.mxu0 0
      %6034 = vmatmul.mubr.bf16.gmra.mrb[0].mxu0 %v5854
      %v6035 = vpop.f32.mrb[0].mxu0
      %v6036 = vadd.f32 0.0, %v6035
      %v6037 = vpop.f32.mrb[0].mxu0
      %v6038 = vpop.f32.mrb[0].mxu0
      %v6039 = vadd.f32 0.0, %v6038
      %v6040 = vpop.f32.mrb[0].mxu0
      %6041 = vmatprep.mubr.bf16.mxu0 0
      %6042 = vmatmul.mubr.bf16.gmra.mrb[0].mxu0 %v5857
      %v6043 = vpop.f32.mrb[0].mxu0
      %v6044 = vadd.f32 0.0, %v6043
      %v6045 = vpop.f32.mrb[0].mxu0
      %v6046 = vpop.f32.mrb[0].mxu0
      %v6047 = vadd.f32 0.0, %v6046
      %v6048 = vpop.f32.mrb[0].mxu0
      %6049 = vmatprep.mubr.bf16.mxu0 0
      %6050 = vmatmul.mubr.bf16.gmra.mrb[0].mxu0 %v5860
      %v6051 = vpop.f32.mrb[0].mxu0
      %v6052 = vadd.f32 0.0, %v6051
      %v6053 = vpop.f32.mrb[0].mxu0
      %v6054 = vpop.f32.mrb[0].mxu0
      %v6055 = vadd.f32 0.0, %v6054
      %v6056 = vpop.f32.mrb[0].mxu0
      %6057 = vmatprep.mubr.bf16.mxu0 0
      %6058 = vmatmul.mubr.bf16.gmra.mrb[0].mxu0 %v5863
      %v6059 = vpop.f32.mrb[0].mxu0
      %v6060 = vadd.f32 0.0, %v6059
      %v6061 = vpop.f32.mrb[0].mxu0
      %v6062 = vpop.f32.mrb[0].mxu0
      %v6063 = vadd.f32 0.0, %v6062
      %v6064 = vpop.f32.mrb[0].mxu0
      %6065 = vmatprep.mubr.bf16.mxu0 0
      %6066 = vmatmul.mubr.bf16.gmra.mrb[0].mxu0 %v5866
      %v6067 = vpop.f32.mrb[0].mxu0
      %v6068 = vadd.f32 0.0, %v6067
      %v6069 = vpop.f32.mrb[0].mxu0
      %v6070 = vpop.f32.mrb[0].mxu0
      %v6071 = vadd.f32 0.0, %v6070
      %v6072 = vpop.f32.mrb[0].mxu0
      %6073 = vmatprep.mubr.bf16.mxu0 0
      %6074 = vmatmul.mubr.bf16.gmra.mrb[0].mxu0 %v5874
      %v6075 = vpop.f32.mrb[0].mxu0
      %v6076 = vadd.f32 0.0, %v6075
      %v6077 = vpop.f32.mrb[0].mxu0
      %v6078 = vpop.f32.mrb[0].mxu0
      %v6079 = vadd.f32 0.0, %v6078
      %v6080 = vpop.f32.mrb[0].mxu0
      %6081 = vdwg.mxu0
      %v6082 = vadd.f32 %v5777, %v5972
      %v6083 = vadd.f32 %v5778, %v5975
      %v6084 = vadd.f32 %v5779, %v5980
      %v6085 = vadd.f32 %v5780, %v5983
      %v6086 = vadd.f32 %v5781, %v5988
      %v6087 = vadd.f32 %v5782, %v5991
      %v6088 = vadd.f32 %v5783, %v5996
      %v6089 = vadd.f32 %v5784, %v5999
      %v6090 = vadd.f32 %v5785, %v6004
      %v6091 = vadd.f32 %v5786, %v6007
      %v6092 = vadd.f32 %v5787, %v6012
      %v6093 = vadd.f32 %v5788, %v6015
      %v6094 = vadd.f32 %v5789, %v6020
      %v6095 = vadd.f32 %v5790, %v6023
      %v6096 = vadd.f32 %v5791, %v6028
      %v6097 = vadd.f32 %v5792, %v6031
      %v6098 = vadd.f32 %v5793, %v6036
      %v6099 = vadd.f32 %v5794, %v6039
      %v6100 = vadd.f32 %v5795, %v6044
      %v6101 = vadd.f32 %v5796, %v6047
      %v6102 = vadd.f32 %v5797, %v6052
      %v6103 = vadd.f32 %v5798, %v6055
      %v6104 = vadd.f32 %v5799, %v6060
      %v6105 = vadd.f32 %v5800, %v6063
      %v6106 = vadd.f32 %v5801, %v6068
      %v6107 = vadd.f32 %v5802, %v6071
      %v6108 = vadd.f32 %v5803, %v6076
      %v6109 = vadd.f32 %v5804, %v6079
      %s6110 = scalar_lea.vmem %s3, 448
      %v6111 = vld [vmem:[%s6110] sm:$0xf]
      %v6112 = vld [vmem:[%s6110 + $0x4] sm:$0xf]
      %v6113 = vld [vmem:[%s6110 + $0x8] sm:$0xf]
      %v6114 = vld [vmem:[%s6110 + $0xc] sm:$0xf]
      %v6115 = vld [vmem:[%s6110 + $0x10] sm:$0xf]
      %v6116 = vld [vmem:[%s6110 + $0x14] sm:$0xf]
      %v6117 = vld [vmem:[%s6110 + $0x18] sm:$0xf]
      %v6118 = vld [vmem:[%s6110 + $0x1c] sm:$0xf]
      %v6119 = vld [vmem:[%s6110 + $0x20] sm:$0xf]
      %v6120 = vld [vmem:[%s6110 + $0x24] sm:$0xf]
      %v6121 = vld [vmem:[%s6110 + $0x28] sm:$0xf]
      %v6122 = vld [vmem:[%s6110 + $0x2c] sm:$0xf]
      %v6123 = vld [vmem:[%s6110 + $0x30] sm:$0xf]
      %v6124 = vld [vmem:[%s6110 + $0x34] sm:$0xf]
      %v6125 = vld [vmem:[%s6110 + $0x38] sm:$0xf]
      %v6126 = vld [vmem:[%s6110 + $0x3c] sm:$0xf]
      %v6143 = vunpack.c.l.b16 %v6111
      %v6144 = vunpack.c.l.b16 %v6112
      %v6145 = vunpack.c.l.b16 %v6113
      %v6146 = vunpack.c.l.b16 %v6114
      %v6147 = vunpack.c.l.b16 %v6115
      %v6148 = vunpack.c.l.b16 %v6116
      %v6149 = vunpack.c.l.b16 %v6117
      %v6150 = vunpack.c.l.b16 %v6118
      %v6151 = vunpack.c.l.b16 %v6119
      %v6152 = vunpack.c.l.b16 %v6120
      %v6153 = vunpack.c.l.b16 %v6121
      %v6154 = vunpack.c.l.b16 %v6122
      %v6155 = vunpack.c.l.b16 %v6123
      %v6156 = vunpack.c.l.b16 %v6124
      %v6157 = vunpack.c.l.b16 %v6125
      %v6158 = vunpack.c.l.b16 %v6126
      %v6159 = vpack.c.b16 %v6144, %v6143
      %v6160 = vpack.c.b16 %v6146, %v6145
      %v6161 = vpack.c.b16 %v6148, %v6147
      %v6162 = vpack.c.b16 %v6150, %v6149
      %v6163 = vpack.c.b16 %v6152, %v6151
      %v6164 = vpack.c.b16 %v6154, %v6153
      %v6165 = vpack.c.b16 %v6156, %v6155
      %v6166 = vpack.c.b16 %v6158, %v6157
      %6175 = vmatprep.subr.bf16.mxu0 0
      %6176 = vmatpush1.bf16.msra.mxu0 %v6159
      %6177 = vmatprep.subr.bf16.mxu0 0
      %6178 = vmatpush1.bf16.msra.mxu0 %v6160
      %6179 = vmatprep.subr.bf16.mxu0 0
      %6180 = vmatpush1.bf16.msra.mxu0 %v6161
      %6181 = vmatprep.subr.bf16.mxu0 0
      %6182 = vmatpush1.bf16.msra.mxu0 %v6162
      %6183 = vmatprep.subr.bf16.mxu0 0
      %6184 = vmatpush1.bf16.msra.mxu0 %v6163
      %6185 = vmatprep.subr.bf16.mxu0 0
      %6186 = vmatpush1.bf16.msra.mxu0 %v6164
      %6187 = vmatprep.subr.bf16.mxu0 0
      %6188 = vmatpush1.bf16.msra.mxu0 %v6165
      %6189 = vmatprep.subr.bf16.mxu0 0
      %6190 = vmatpush1.bf16.msra.mxu0 %v6166
      %6191 = vmatprep.subr.bf16.mxu0 0
      %6192 = vmatpush1.bf16.msra.mxu0 0
      %6193 = vmatprep.subr.bf16.mxu0 0
      %6194 = vmatpush1.bf16.msra.mxu0 0
      %6195 = vmatprep.subr.bf16.mxu0 0
      %6196 = vmatpush1.bf16.msra.mxu0 0
      %6197 = vmatprep.subr.bf16.mxu0 0
      %6198 = vmatpush1.bf16.msra.mxu0 0
      %6199 = vmatprep.subr.bf16.mxu0 0
      %6200 = vmatpush1.bf16.msra.mxu0 0
      %6201 = vmatprep.subr.bf16.mxu0 0
      %6202 = vmatpush1.bf16.msra.mxu0 0
      %6203 = vmatprep.subr.bf16.mxu0 0
      %6204 = vmatpush1.bf16.msra.mxu0 0
      %6205 = vmatprep.subr.bf16.mxu0 0
      %6206 = vmatpush1.bf16.msra.mxu0 0
      %6207 = vmatprep.mubr.bf16.mxu0 0
      %6208 = vmatmul.mubr.bf16.gmra.mrb[0].mxu0 %v5423
      %v6209 = vpop.f32.mrb[0].mxu0
      %v6210 = vadd.f32 0.0, %v6209
      %v6211 = vpop.f32.mrb[0].mxu0
      %v6212 = vpop.f32.mrb[0].mxu0
      %v6213 = vadd.f32 0.0, %v6212
      %v6214 = vpop.f32.mrb[0].mxu0
      %6215 = vmatprep.mubr.bf16.mxu0 0
      %6216 = vmatmul.mubr.bf16.gmra.mrb[0].mxu0 %v5424
      %v6217 = vpop.f32.mrb[0].mxu0
      %v6218 = vadd.f32 0.0, %v6217
      %v6219 = vpop.f32.mrb[0].mxu0
      %v6220 = vpop.f32.mrb[0].mxu0
      %v6221 = vadd.f32 0.0, %v6220
      %v6222 = vpop.f32.mrb[0].mxu0
      %6223 = vmatprep.mubr.bf16.mxu0 0
      %6224 = vmatmul.mubr.bf16.gmra.mrb[0].mxu0 %v5425
      %v6225 = vpop.f32.mrb[0].mxu0
      %v6226 = vadd.f32 0.0, %v6225
      %v6227 = vpop.f32.mrb[0].mxu0
      %v6228 = vpop.f32.mrb[0].mxu0
      %v6229 = vadd.f32 0.0, %v6228
      %v6230 = vpop.f32.mrb[0].mxu0
      %6231 = vmatprep.mubr.bf16.mxu0 0
      %6232 = vmatmul.mubr.bf16.gmra.mrb[0].mxu0 %v5426
      %v6233 = vpop.f32.mrb[0].mxu0
      %v6234 = vadd.f32 0.0, %v6233
      %v6235 = vpop.f32.mrb[0].mxu0
      %v6236 = vpop.f32.mrb[0].mxu0
      %v6237 = vadd.f32 0.0, %v6236
      %v6238 = vpop.f32.mrb[0].mxu0
      %6239 = vmatprep.mubr.bf16.mxu0 0
      %6240 = vmatmul.mubr.bf16.gmra.mrb[0].mxu0 %v5427
      %v6241 = vpop.f32.mrb[0].mxu0
      %v6242 = vadd.f32 0.0, %v6241
      %v6243 = vpop.f32.mrb[0].mxu0
      %v6244 = vpop.f32.mrb[0].mxu0
      %v6245 = vadd.f32 0.0, %v6244
      %v6246 = vpop.f32.mrb[0].mxu0
      %6247 = vmatprep.mubr.bf16.mxu0 0
      %6248 = vmatmul.mubr.bf16.gmra.mrb[0].mxu0 %v5428
      %v6249 = vpop.f32.mrb[0].mxu0
      %v6250 = vadd.f32 0.0, %v6249
      %v6251 = vpop.f32.mrb[0].mxu0
      %v6252 = vpop.f32.mrb[0].mxu0
      %v6253 = vadd.f32 0.0, %v6252
      %v6254 = vpop.f32.mrb[0].mxu0
      %6255 = vmatprep.mubr.bf16.mxu0 0
      %6256 = vmatmul.mubr.bf16.gmra.mrb[0].mxu0 %v5429
      %v6257 = vpop.f32.mrb[0].mxu0
      %v6258 = vadd.f32 0.0, %v6257
      %v6259 = vpop.f32.mrb[0].mxu0
      %v6260 = vpop.f32.mrb[0].mxu0
      %v6261 = vadd.f32 0.0, %v6260
      %v6262 = vpop.f32.mrb[0].mxu0
      %6263 = vmatprep.mubr.bf16.mxu0 0
      %6264 = vmatmul.mubr.bf16.gmra.mrb[0].mxu0 %v5430
      %v6265 = vpop.f32.mrb[0].mxu0
      %v6266 = vadd.f32 0.0, %v6265
      %v6267 = vpop.f32.mrb[0].mxu0
      %v6268 = vpop.f32.mrb[0].mxu0
      %v6269 = vadd.f32 0.0, %v6268
      %v6270 = vpop.f32.mrb[0].mxu0
      %6271 = vmatprep.mubr.bf16.mxu0 0
      %6272 = vmatmul.mubr.bf16.gmra.mrb[0].mxu0 %v5431
      %v6273 = vpop.f32.mrb[0].mxu0
      %v6274 = vadd.f32 0.0, %v6273
      %v6275 = vpop.f32.mrb[0].mxu0
      %v6276 = vpop.f32.mrb[0].mxu0
      %v6277 = vadd.f32 0.0, %v6276
      %v6278 = vpop.f32.mrb[0].mxu0
      %6279 = vmatprep.mubr.bf16.mxu0 0
      %6280 = vmatmul.mubr.bf16.gmra.mrb[0].mxu0 %v5432
      %v6281 = vpop.f32.mrb[0].mxu0
      %v6282 = vadd.f32 0.0, %v6281
      %v6283 = vpop.f32.mrb[0].mxu0
      %v6284 = vpop.f32.mrb[0].mxu0
      %v6285 = vadd.f32 0.0, %v6284
      %v6286 = vpop.f32.mrb[0].mxu0
      %6287 = vmatprep.mubr.bf16.mxu0 0
      %6288 = vmatmul.mubr.bf16.gmra.mrb[0].mxu0 %v5433
      %v6289 = vpop.f32.mrb[0].mxu0
      %v6290 = vadd.f32 0.0, %v6289
      %v6291 = vpop.f32.mrb[0].mxu0
      %v6292 = vpop.f32.mrb[0].mxu0
      %v6293 = vadd.f32 0.0, %v6292
      %v6294 = vpop.f32.mrb[0].mxu0
      %6295 = vmatprep.mubr.bf16.mxu0 0
      %6296 = vmatmul.mubr.bf16.gmra.mrb[0].mxu0 %v5434
      %v6297 = vpop.f32.mrb[0].mxu0
      %v6298 = vadd.f32 0.0, %v6297
      %v6299 = vpop.f32.mrb[0].mxu0
      %v6300 = vpop.f32.mrb[0].mxu0
      %v6301 = vadd.f32 0.0, %v6300
      %v6302 = vpop.f32.mrb[0].mxu0
      %6303 = vmatprep.mubr.bf16.mxu0 0
      %6304 = vmatmul.mubr.bf16.gmra.mrb[0].mxu0 %v5435
      %v6305 = vpop.f32.mrb[0].mxu0
      %v6306 = vadd.f32 0.0, %v6305
      %v6307 = vpop.f32.mrb[0].mxu0
      %v6308 = vpop.f32.mrb[0].mxu0
      %v6309 = vadd.f32 0.0, %v6308
      %v6310 = vpop.f32.mrb[0].mxu0
      %6311 = vmatprep.mubr.bf16.mxu0 0
      %6312 = vmatmul.mubr.bf16.gmra.mrb[0].mxu0 %v5806
      %v6313 = vpop.f32.mrb[0].mxu0
      %v6314 = vadd.f32 0.0, %v6313
      %v6315 = vpop.f32.mrb[0].mxu0
      %v6316 = vpop.f32.mrb[0].mxu0
      %v6317 = vadd.f32 0.0, %v6316
      %v6318 = vpop.f32.mrb[0].mxu0
      %6319 = vdwg.mxu0
      %v6320 = vadd.f32 %v6082, %v6210
      %v6321 = vadd.f32 %v6083, %v6213
      %v6322 = vadd.f32 %v6084, %v6218
      %v6323 = vadd.f32 %v6085, %v6221
      %v6324 = vadd.f32 %v6086, %v6226
      %v6325 = vadd.f32 %v6087, %v6229
      %v6326 = vadd.f32 %v6088, %v6234
      %v6327 = vadd.f32 %v6089, %v6237
      %v6328 = vadd.f32 %v6090, %v6242
      %v6329 = vadd.f32 %v6091, %v6245
      %v6330 = vadd.f32 %v6092, %v6250
      %v6331 = vadd.f32 %v6093, %v6253
      %v6332 = vadd.f32 %v6094, %v6258
      %v6333 = vadd.f32 %v6095, %v6261
      %v6334 = vadd.f32 %v6096, %v6266
      %v6335 = vadd.f32 %v6097, %v6269
      %v6336 = vadd.f32 %v6098, %v6274
      %v6337 = vadd.f32 %v6099, %v6277
      %v6338 = vadd.f32 %v6100, %v6282
      %v6339 = vadd.f32 %v6101, %v6285
      %v6340 = vadd.f32 %v6102, %v6290
      %v6341 = vadd.f32 %v6103, %v6293
      %v6342 = vadd.f32 %v6104, %v6298
      %v6343 = vadd.f32 %v6105, %v6301
      %v6344 = vadd.f32 %v6106, %v6306
      %v6345 = vadd.f32 %v6107, %v6309
      %v6346 = vadd.f32 %v6108, %v6314
      %v6347 = vadd.f32 %v6109, %v6317
      %v6348 = vld [vmem:[#allocation2 + $0x18] sm:$0xff]
      %v6349 = vld [vmem:[#allocation2 + $0x20] sm:$0xff]
      %v6350 = vld [vmem:[#allocation2 + $0x28] sm:$0xff]
      %v6351 = vld [vmem:[#allocation2 + $0x30] sm:$0xff]
      %v6352 = vld [vmem:[#allocation2 + $0x38] sm:$0xff]
      %v6353 = vld [vmem:[#allocation2 + $0x40] sm:$0xff]
      %v6354 = vld [vmem:[#allocation2 + $0x48] sm:$0xff]
      %v6355 = vld [vmem:[#allocation2 + $0x50] sm:$0xff]
      %v6356 = vld [vmem:[#allocation2 + $0x58] sm:$0xff]
      %v6357 = vld [vmem:[#allocation2 + $0x60] sm:$0xff]
      %v6358 = vld [vmem:[#allocation2 + $0x68] sm:$0xff]
      %v6359 = vld [vmem:[#allocation2 + $0x70] sm:$0xff]
      %v6360 = vld [vmem:[#allocation2 + $0x78] sm:$0xff]
      %v6361 = vld [vmem:[#allocation2 + $0x80] sm:$0xff]
      %v6362 = vld [vmem:[#allocation2 + $0x88] sm:$0x1]
      %s6363 = scalar_lea.vmem %s3, 512
      %v6364 = vld [vmem:[%s6363] sm:$0xf]
      %v6365 = vld [vmem:[%s6363 + $0x4] sm:$0xf]
      %v6366 = vld [vmem:[%s6363 + $0x8] sm:$0xf]
      %v6367 = vld [vmem:[%s6363 + $0xc] sm:$0xf]
      %v6368 = vld [vmem:[%s6363 + $0x10] sm:$0xf]
      %v6369 = vld [vmem:[%s6363 + $0x14] sm:$0xf]
      %v6370 = vld [vmem:[%s6363 + $0x18] sm:$0xf]
      %v6371 = vld [vmem:[%s6363 + $0x1c] sm:$0xf]
      %v6372 = vld [vmem:[%s6363 + $0x20] sm:$0xf]
      %v6373 = vld [vmem:[%s6363 + $0x24] sm:$0xf]
      %v6374 = vld [vmem:[%s6363 + $0x28] sm:$0xf]
      %v6375 = vld [vmem:[%s6363 + $0x2c] sm:$0xf]
      %v6376 = vld [vmem:[%s6363 + $0x30] sm:$0xf]
      %v6377 = vld [vmem:[%s6363 + $0x34] sm:$0xf]
      %v6378 = vld [vmem:[%s6363 + $0x38] sm:$0xf]
      %v6379 = vld [vmem:[%s6363 + $0x3c] sm:$0xf]
      %v6381 = vshrl.u32 %v6348, 16
      %v6383 = vshll.u32 %v6348, 16
      %v6385 = vrot.slane %v6383, 1
      %v6386 = vor.u32 %v6381, %v6385
      %v6388 = vshll.u32 %v6349, 16
      %v6390 = vrot.slane %v6388, 1
      %v6391 = vsel %vm388, %v6386, %v6390
      %v6392 = vshrl.u32 %v6349, 16
      %v6394 = vor.u32 %v6392, %v6390
      %v6396 = vshll.u32 %v6350, 16
      %v6398 = vrot.slane %v6396, 1
      %v6399 = vsel %vm388, %v6394, %v6398
      %v6400 = vshrl.u32 %v6350, 16
      %v6402 = vor.u32 %v6400, %v6398
      %v6404 = vshll.u32 %v6351, 16
      %v6406 = vrot.slane %v6404, 1
      %v6407 = vsel %vm388, %v6402, %v6406
      %v6408 = vshrl.u32 %v6351, 16
      %v6410 = vor.u32 %v6408, %v6406
      %v6412 = vshll.u32 %v6352, 16
      %v6414 = vrot.slane %v6412, 1
      %v6415 = vsel %vm388, %v6410, %v6414
      %v6416 = vshrl.u32 %v6352, 16
      %v6418 = vor.u32 %v6416, %v6414
      %v6420 = vshll.u32 %v6353, 16
      %v6422 = vrot.slane %v6420, 1
      %v6423 = vsel %vm388, %v6418, %v6422
      %v6424 = vshrl.u32 %v6353, 16
      %v6426 = vor.u32 %v6424, %v6422
      %v6428 = vshll.u32 %v6354, 16
      %v6430 = vrot.slane %v6428, 1
      %v6431 = vsel %vm388, %v6426, %v6430
      %v6432 = vshrl.u32 %v6354, 16
      %v6434 = vor.u32 %v6432, %v6430
      %v6436 = vshll.u32 %v6355, 16
      %v6438 = vrot.slane %v6436, 1
      %v6439 = vsel %vm388, %v6434, %v6438
      %v6440 = vshrl.u32 %v6355, 16
      %v6442 = vor.u32 %v6440, %v6438
      %v6444 = vshll.u32 %v6356, 16
      %v6446 = vrot.slane %v6444, 1
      %v6447 = vsel %vm388, %v6442, %v6446
      %v6448 = vshrl.u32 %v6356, 16
      %v6450 = vor.u32 %v6448, %v6446
      %v6452 = vshll.u32 %v6357, 16
      %v6454 = vrot.slane %v6452, 1
      %v6455 = vsel %vm388, %v6450, %v6454
      %v6456 = vshrl.u32 %v6357, 16
      %v6458 = vor.u32 %v6456, %v6454
      %v6460 = vshll.u32 %v6358, 16
      %v6462 = vrot.slane %v6460, 1
      %v6463 = vsel %vm388, %v6458, %v6462
      %v6464 = vshrl.u32 %v6358, 16
      %v6466 = vor.u32 %v6464, %v6462
      %v6468 = vshll.u32 %v6359, 16
      %v6470 = vrot.slane %v6468, 1
      %v6471 = vsel %vm388, %v6466, %v6470
      %v6472 = vshrl.u32 %v6359, 16
      %v6474 = vor.u32 %v6472, %v6470
      %v6476 = vshll.u32 %v6360, 16
      %v6478 = vrot.slane %v6476, 1
      %v6479 = vsel %vm388, %v6474, %v6478
      %v6480 = vshrl.u32 %v6360, 16
      %v6482 = vor.u32 %v6480, %v6478
      %v6484 = vshll.u32 %v6361, 16
      %v6486 = vrot.slane %v6484, 1
      %v6487 = vsel %vm388, %v6482, %v6486
      %v6488 = vshrl.u32 %v6361, 16
      %v6490 = vor.u32 %v6488, %v6486
      %v6492 = vshll.u32 %v6362, 16
      %v6494 = vrot.slane %v6492, 1
      %v6495 = vsel %vm388, %v6490, %v6494
      %v6526 = vunpack.c.l.b16 %v6364
      %v6527 = vunpack.c.l.b16 %v6365
      %v6528 = vunpack.c.l.b16 %v6366
      %v6529 = vunpack.c.l.b16 %v6367
      %v6530 = vunpack.c.l.b16 %v6368
      %v6531 = vunpack.c.l.b16 %v6369
      %v6532 = vunpack.c.l.b16 %v6370
      %v6533 = vunpack.c.l.b16 %v6371
      %v6534 = vunpack.c.l.b16 %v6372
      %v6535 = vunpack.c.l.b16 %v6373
      %v6536 = vunpack.c.l.b16 %v6374
      %v6537 = vunpack.c.l.b16 %v6375
      %v6538 = vunpack.c.l.b16 %v6376
      %v6539 = vunpack.c.l.b16 %v6377
      %v6540 = vunpack.c.l.b16 %v6378
      %v6541 = vunpack.c.l.b16 %v6379
      %v6542 = vpack.c.b16 %v6527, %v6526
      %v6543 = vpack.c.b16 %v6529, %v6528
      %v6544 = vpack.c.b16 %v6531, %v6530
      %v6545 = vpack.c.b16 %v6533, %v6532
      %v6546 = vpack.c.b16 %v6535, %v6534
      %v6547 = vpack.c.b16 %v6537, %v6536
      %v6548 = vpack.c.b16 %v6539, %v6538
      %v6549 = vpack.c.b16 %v6541, %v6540
      %6558 = vmatprep.subr.bf16.mxu0 0
      %6559 = vmatpush1.bf16.msra.mxu0 %v6542
      %6560 = vmatprep.subr.bf16.mxu0 0
      %6561 = vmatpush1.bf16.msra.mxu0 %v6543
      %6562 = vmatprep.subr.bf16.mxu0 0
      %6563 = vmatpush1.bf16.msra.mxu0 %v6544
      %6564 = vmatprep.subr.bf16.mxu0 0
      %6565 = vmatpush1.bf16.msra.mxu0 %v6545
      %6566 = vmatprep.subr.bf16.mxu0 0
      %6567 = vmatpush1.bf16.msra.mxu0 %v6546
      %6568 = vmatprep.subr.bf16.mxu0 0
      %6569 = vmatpush1.bf16.msra.mxu0 %v6547
      %6570 = vmatprep.subr.bf16.mxu0 0
      %6571 = vmatpush1.bf16.msra.mxu0 %v6548
      %6572 = vmatprep.subr.bf16.mxu0 0
      %6573 = vmatpush1.bf16.msra.mxu0 %v6549
      %6574 = vmatprep.subr.bf16.mxu0 0
      %6575 = vmatpush1.bf16.msra.mxu0 0
      %6576 = vmatprep.subr.bf16.mxu0 0
      %6577 = vmatpush1.bf16.msra.mxu0 0
      %6578 = vmatprep.subr.bf16.mxu0 0
      %6579 = vmatpush1.bf16.msra.mxu0 0
      %6580 = vmatprep.subr.bf16.mxu0 0
      %6581 = vmatpush1.bf16.msra.mxu0 0
      %6582 = vmatprep.subr.bf16.mxu0 0
      %6583 = vmatpush1.bf16.msra.mxu0 0
      %6584 = vmatprep.subr.bf16.mxu0 0
      %6585 = vmatpush1.bf16.msra.mxu0 0
      %6586 = vmatprep.subr.bf16.mxu0 0
      %6587 = vmatpush1.bf16.msra.mxu0 0
      %6588 = vmatprep.subr.bf16.mxu0 0
      %6589 = vmatpush1.bf16.msra.mxu0 0
      %6590 = vmatprep.mubr.bf16.mxu0 0
      %6591 = vmatmul.mubr.bf16.gmra.mrb[0].mxu0 %v6391
      %v6592 = vpop.f32.mrb[0].mxu0
      %v6593 = vadd.f32 0.0, %v6592
      %v6594 = vpop.f32.mrb[0].mxu0
      %v6595 = vpop.f32.mrb[0].mxu0
      %v6596 = vadd.f32 0.0, %v6595
      %v6597 = vpop.f32.mrb[0].mxu0
      %6598 = vmatprep.mubr.bf16.mxu0 0
      %6599 = vmatmul.mubr.bf16.gmra.mrb[0].mxu0 %v6399
      %v6600 = vpop.f32.mrb[0].mxu0
      %v6601 = vadd.f32 0.0, %v6600
      %v6602 = vpop.f32.mrb[0].mxu0
      %v6603 = vpop.f32.mrb[0].mxu0
      %v6604 = vadd.f32 0.0, %v6603
      %v6605 = vpop.f32.mrb[0].mxu0
      %6606 = vmatprep.mubr.bf16.mxu0 0
      %6607 = vmatmul.mubr.bf16.gmra.mrb[0].mxu0 %v6407
      %v6608 = vpop.f32.mrb[0].mxu0
      %v6609 = vadd.f32 0.0, %v6608
      %v6610 = vpop.f32.mrb[0].mxu0
      %v6611 = vpop.f32.mrb[0].mxu0
      %v6612 = vadd.f32 0.0, %v6611
      %v6613 = vpop.f32.mrb[0].mxu0
      %6614 = vmatprep.mubr.bf16.mxu0 0
      %6615 = vmatmul.mubr.bf16.gmra.mrb[0].mxu0 %v6415
      %v6616 = vpop.f32.mrb[0].mxu0
      %v6617 = vadd.f32 0.0, %v6616
      %v6618 = vpop.f32.mrb[0].mxu0
      %v6619 = vpop.f32.mrb[0].mxu0
      %v6620 = vadd.f32 0.0, %v6619
      %v6621 = vpop.f32.mrb[0].mxu0
      %6622 = vmatprep.mubr.bf16.mxu0 0
      %6623 = vmatmul.mubr.bf16.gmra.mrb[0].mxu0 %v6423
      %v6624 = vpop.f32.mrb[0].mxu0
      %v6625 = vadd.f32 0.0, %v6624
      %v6626 = vpop.f32.mrb[0].mxu0
      %v6627 = vpop.f32.mrb[0].mxu0
      %v6628 = vadd.f32 0.0, %v6627
      %v6629 = vpop.f32.mrb[0].mxu0
      %6630 = vmatprep.mubr.bf16.mxu0 0
      %6631 = vmatmul.mubr.bf16.gmra.mrb[0].mxu0 %v6431
      %v6632 = vpop.f32.mrb[0].mxu0
      %v6633 = vadd.f32 0.0, %v6632
      %v6634 = vpop.f32.mrb[0].mxu0
      %v6635 = vpop.f32.mrb[0].mxu0
      %v6636 = vadd.f32 0.0, %v6635
      %v6637 = vpop.f32.mrb[0].mxu0
      %6638 = vmatprep.mubr.bf16.mxu0 0
      %6639 = vmatmul.mubr.bf16.gmra.mrb[0].mxu0 %v6439
      %v6640 = vpop.f32.mrb[0].mxu0
      %v6641 = vadd.f32 0.0, %v6640
      %v6642 = vpop.f32.mrb[0].mxu0
      %v6643 = vpop.f32.mrb[0].mxu0
      %v6644 = vadd.f32 0.0, %v6643
      %v6645 = vpop.f32.mrb[0].mxu0
      %6646 = vmatprep.mubr.bf16.mxu0 0
      %6647 = vmatmul.mubr.bf16.gmra.mrb[0].mxu0 %v6447
      %v6648 = vpop.f32.mrb[0].mxu0
      %v6649 = vadd.f32 0.0, %v6648
      %v6650 = vpop.f32.mrb[0].mxu0
      %v6651 = vpop.f32.mrb[0].mxu0
      %v6652 = vadd.f32 0.0, %v6651
      %v6653 = vpop.f32.mrb[0].mxu0
      %6654 = vmatprep.mubr.bf16.mxu0 0
      %6655 = vmatmul.mubr.bf16.gmra.mrb[0].mxu0 %v6455
      %v6656 = vpop.f32.mrb[0].mxu0
      %v6657 = vadd.f32 0.0, %v6656
      %v6658 = vpop.f32.mrb[0].mxu0
      %v6659 = vpop.f32.mrb[0].mxu0
      %v6660 = vadd.f32 0.0, %v6659
      %v6661 = vpop.f32.mrb[0].mxu0
      %6662 = vmatprep.mubr.bf16.mxu0 0
      %6663 = vmatmul.mubr.bf16.gmra.mrb[0].mxu0 %v6463
      %v6664 = vpop.f32.mrb[0].mxu0
      %v6665 = vadd.f32 0.0, %v6664
      %v6666 = vpop.f32.mrb[0].mxu0
      %v6667 = vpop.f32.mrb[0].mxu0
      %v6668 = vadd.f32 0.0, %v6667
      %v6669 = vpop.f32.mrb[0].mxu0
      %6670 = vmatprep.mubr.bf16.mxu0 0
      %6671 = vmatmul.mubr.bf16.gmra.mrb[0].mxu0 %v6471
      %v6672 = vpop.f32.mrb[0].mxu0
      %v6673 = vadd.f32 0.0, %v6672
      %v6674 = vpop.f32.mrb[0].mxu0
      %v6675 = vpop.f32.mrb[0].mxu0
      %v6676 = vadd.f32 0.0, %v6675
      %v6677 = vpop.f32.mrb[0].mxu0
      %6678 = vmatprep.mubr.bf16.mxu0 0
      %6679 = vmatmul.mubr.bf16.gmra.mrb[0].mxu0 %v6479
      %v6680 = vpop.f32.mrb[0].mxu0
      %v6681 = vadd.f32 0.0, %v6680
      %v6682 = vpop.f32.mrb[0].mxu0
      %v6683 = vpop.f32.mrb[0].mxu0
      %v6684 = vadd.f32 0.0, %v6683
      %v6685 = vpop.f32.mrb[0].mxu0
      %6686 = vmatprep.mubr.bf16.mxu0 0
      %6687 = vmatmul.mubr.bf16.gmra.mrb[0].mxu0 %v6487
      %v6688 = vpop.f32.mrb[0].mxu0
      %v6689 = vadd.f32 0.0, %v6688
      %v6690 = vpop.f32.mrb[0].mxu0
      %v6691 = vpop.f32.mrb[0].mxu0
      %v6692 = vadd.f32 0.0, %v6691
      %v6693 = vpop.f32.mrb[0].mxu0
      %6694 = vmatprep.mubr.bf16.mxu0 0
      %6695 = vmatmul.mubr.bf16.gmra.mrb[0].mxu0 %v6495
      %v6696 = vpop.f32.mrb[0].mxu0
      %v6697 = vadd.f32 0.0, %v6696
      %v6698 = vpop.f32.mrb[0].mxu0
      %v6699 = vpop.f32.mrb[0].mxu0
      %v6700 = vadd.f32 0.0, %v6699
      %v6701 = vpop.f32.mrb[0].mxu0
      %6702 = vdwg.mxu0
      %v6703 = vadd.f32 %v6320, %v6593
      %v6704 = vadd.f32 %v6321, %v6596
      %v6705 = vadd.f32 %v6322, %v6601
      %v6706 = vadd.f32 %v6323, %v6604
      %v6707 = vadd.f32 %v6324, %v6609
      %v6708 = vadd.f32 %v6325, %v6612
      %v6709 = vadd.f32 %v6326, %v6617
      %v6710 = vadd.f32 %v6327, %v6620
      %v6711 = vadd.f32 %v6328, %v6625
      %v6712 = vadd.f32 %v6329, %v6628
      %v6713 = vadd.f32 %v6330, %v6633
      %v6714 = vadd.f32 %v6331, %v6636
      %v6715 = vadd.f32 %v6332, %v6641
      %v6716 = vadd.f32 %v6333, %v6644
      %v6717 = vadd.f32 %v6334, %v6649
      %v6718 = vadd.f32 %v6335, %v6652
      %v6719 = vadd.f32 %v6336, %v6657
      %v6720 = vadd.f32 %v6337, %v6660
      %v6721 = vadd.f32 %v6338, %v6665
      %v6722 = vadd.f32 %v6339, %v6668
      %v6723 = vadd.f32 %v6340, %v6673
      %v6724 = vadd.f32 %v6341, %v6676
      %v6725 = vadd.f32 %v6342, %v6681
      %v6726 = vadd.f32 %v6343, %v6684
      %v6727 = vadd.f32 %v6344, %v6689
      %v6728 = vadd.f32 %v6345, %v6692
      %v6729 = vadd.f32 %v6346, %v6697
      %v6730 = vadd.f32 %v6347, %v6700
      %v6731 = vld [vmem:[%s4] sm:$0x1]
      %v6733 = vlaneseq
      %v6734 = vshrl.u32 %v6733, 7
      %v6735 = vsub.s32 0, %v6734
      %v6736 = vrot.slane %v6731, %v6735
      %v6738 = vadd.f32 %v6703, %v6736
      %v6739 = vadd.f32 %v6704, %v6736
      %v6740 = vadd.f32 %v6705, %v6736
      %v6741 = vadd.f32 %v6706, %v6736
      %v6742 = vadd.f32 %v6707, %v6736
      %v6743 = vadd.f32 %v6708, %v6736
      %v6744 = vadd.f32 %v6709, %v6736
      %v6745 = vadd.f32 %v6710, %v6736
      %v6746 = vadd.f32 %v6711, %v6736
      %v6747 = vadd.f32 %v6712, %v6736
      %v6748 = vadd.f32 %v6713, %v6736
      %v6749 = vadd.f32 %v6714, %v6736
      %v6750 = vadd.f32 %v6715, %v6736
      %v6751 = vadd.f32 %v6716, %v6736
      %v6752 = vadd.f32 %v6717, %v6736
      %v6753 = vadd.f32 %v6718, %v6736
      %v6754 = vadd.f32 %v6719, %v6736
      %v6755 = vadd.f32 %v6720, %v6736
      %v6756 = vadd.f32 %v6721, %v6736
      %v6757 = vadd.f32 %v6722, %v6736
      %v6758 = vadd.f32 %v6723, %v6736
      %v6759 = vadd.f32 %v6724, %v6736
      %v6760 = vadd.f32 %v6725, %v6736
      %v6761 = vadd.f32 %v6726, %v6736
      %v6762 = vadd.f32 %v6727, %v6736
      %v6763 = vadd.f32 %v6728, %v6736
      %v6764 = vadd.f32 %v6729, %v6736
      %v6765 = vadd.f32 %v6730, %v6736
      %v6766 = vmax.f32 %v6738, 0.0
      %v6767 = vmax.f32 %v6739, 0.0
      %v6768 = vmax.f32 %v6740, 0.0
      %v6769 = vmax.f32 %v6741, 0.0
      %v6770 = vmax.f32 %v6742, 0.0
      %v6771 = vmax.f32 %v6743, 0.0
      %v6772 = vmax.f32 %v6744, 0.0
      %v6773 = vmax.f32 %v6745, 0.0
      %v6774 = vmax.f32 %v6746, 0.0
      %v6775 = vmax.f32 %v6747, 0.0
      %v6776 = vmax.f32 %v6748, 0.0
      %v6777 = vmax.f32 %v6749, 0.0
      %v6778 = vmax.f32 %v6750, 0.0
      %v6779 = vmax.f32 %v6751, 0.0
      %v6780 = vmax.f32 %v6752, 0.0
      %v6781 = vmax.f32 %v6753, 0.0
      %v6782 = vmax.f32 %v6754, 0.0
      %v6783 = vmax.f32 %v6755, 0.0
      %v6784 = vmax.f32 %v6756, 0.0
      %v6785 = vmax.f32 %v6757, 0.0
      %v6786 = vmax.f32 %v6758, 0.0
      %v6787 = vmax.f32 %v6759, 0.0
      %v6788 = vmax.f32 %v6760, 0.0
      %v6789 = vmax.f32 %v6761, 0.0
      %v6790 = vmax.f32 %v6762, 0.0
      %v6791 = vmax.f32 %v6763, 0.0
      %v6792 = vmax.f32 %v6764, 0.0
      %v6793 = vmax.f32 %v6765, 0.0
      %6794 = vst [vmem:[#allocation3] sm:$0xff] %v6766
      %6795 = vst [vmem:[#allocation3 + $0x10] sm:$0xff] %v6767
      %6796 = vst [vmem:[#allocation3 + $0x20] sm:$0xff] %v6768
      %6797 = vst [vmem:[#allocation3 + $0x30] sm:$0xff] %v6769
      %6798 = vst [vmem:[#allocation3 + $0x40] sm:$0xff] %v6770
      %6799 = vst [vmem:[#allocation3 + $0x50] sm:$0xff] %v6771
      %6800 = vst [vmem:[#allocation3 + $0x60] sm:$0xff] %v6772
      %6801 = vst [vmem:[#allocation3 + $0x70] sm:$0xff] %v6773
      %6802 = vst [vmem:[#allocation3 + $0x80] sm:$0xff] %v6774
      %6803 = vst [vmem:[#allocation3 + $0x90] sm:$0xff] %v6775
      %6804 = vst [vmem:[#allocation3 + $0xa0] sm:$0xff] %v6776
      %6805 = vst [vmem:[#allocation3 + $0xb0] sm:$0xff] %v6777
      %6806 = vst [vmem:[#allocation3 + $0xc0] sm:$0xff] %v6778
      %6807 = vst [vmem:[#allocation3 + $0xd0] sm:$0xff] %v6779
      %6808 = vst [vmem:[#allocation3 + $0xe0] sm:$0xff] %v6780
      %6809 = vst [vmem:[#allocation3 + $0xf0] sm:$0xff] %v6781
      %6810 = vst [vmem:[#allocation3 + $0x100] sm:$0xff] %v6782
      %6811 = vst [vmem:[#allocation3 + $0x110] sm:$0xff] %v6783
      %6812 = vst [vmem:[#allocation3 + $0x120] sm:$0xff] %v6784
      %6813 = vst [vmem:[#allocation3 + $0x130] sm:$0xff] %v6785
      %6814 = vst [vmem:[#allocation3 + $0x140] sm:$0xff] %v6786
      %6815 = vst [vmem:[#allocation3 + $0x150] sm:$0xff] %v6787
      %6816 = vst [vmem:[#allocation3 + $0x160] sm:$0xff] %v6788
      %6817 = vst [vmem:[#allocation3 + $0x170] sm:$0xff] %v6789
      %6818 = vst [vmem:[#allocation3 + $0x180] sm:$0xff] %v6790
      %6819 = vst [vmem:[#allocation3 + $0x190] sm:$0xff] %v6791
      %6820 = vst [vmem:[#allocation3 + $0x1a0] sm:$0xff] %v6792
      %6821 = vst [vmem:[#allocation3 + $0x1b0] sm:$0xff] %v6793
      %v6822 = vld [vmem:[#allocation2] sm:$0x80]
      %v6823 = vld [vmem:[#allocation2 + $0x8] sm:$0xff]
      %v6824 = vld [vmem:[#allocation2 + $0x10] sm:$0xff]
      %v6825 = vld [vmem:[#allocation2 + $0x18] sm:$0xff]
      %v6826 = vld [vmem:[#allocation2 + $0x20] sm:$0xff]
      %v6827 = vld [vmem:[#allocation2 + $0x28] sm:$0xff]
      %v6828 = vld [vmem:[#allocation2 + $0x30] sm:$0xff]
      %v6829 = vld [vmem:[#allocation2 + $0x38] sm:$0xff]
      %v6830 = vld [vmem:[#allocation2 + $0x40] sm:$0xff]
      %v6831 = vld [vmem:[#allocation2 + $0x48] sm:$0xff]
      %v6832 = vld [vmem:[#allocation2 + $0x50] sm:$0xff]
      %v6833 = vld [vmem:[#allocation2 + $0x58] sm:$0xff]
      %v6834 = vld [vmem:[#allocation2 + $0x60] sm:$0xff]
      %v6835 = vld [vmem:[#allocation2 + $0x68] sm:$0xff]
      %v6836 = vld [vmem:[#allocation2 + $0x70] sm:$0xff]
      %s6837 = scalar_lea.vmem %s3, 576
      %v6838 = vld [vmem:[%s6837] sm:$0xf]
      %v6839 = vld [vmem:[%s6837 + $0x4] sm:$0xf]
      %v6840 = vld [vmem:[%s6837 + $0x8] sm:$0xf]
      %v6841 = vld [vmem:[%s6837 + $0xc] sm:$0xf]
      %v6842 = vld [vmem:[%s6837 + $0x10] sm:$0xf]
      %v6843 = vld [vmem:[%s6837 + $0x14] sm:$0xf]
      %v6844 = vld [vmem:[%s6837 + $0x18] sm:$0xf]
      %v6845 = vld [vmem:[%s6837 + $0x1c] sm:$0xf]
      %v6846 = vld [vmem:[%s6837 + $0x20] sm:$0xf]
      %v6847 = vld [vmem:[%s6837 + $0x24] sm:$0xf]
      %v6848 = vld [vmem:[%s6837 + $0x28] sm:$0xf]
      %v6849 = vld [vmem:[%s6837 + $0x2c] sm:$0xf]
      %v6850 = vld [vmem:[%s6837 + $0x30] sm:$0xf]
      %v6851 = vld [vmem:[%s6837 + $0x34] sm:$0xf]
      %v6852 = vld [vmem:[%s6837 + $0x38] sm:$0xf]
      %v6853 = vld [vmem:[%s6837 + $0x3c] sm:$0xf]
      %s6854 = scalar_lea.vmem %s3, 640
      %v6855 = vld [vmem:[%s6854] sm:$0xf]
      %v6856 = vld [vmem:[%s6854 + $0x4] sm:$0xf]
      %v6857 = vld [vmem:[%s6854 + $0x8] sm:$0xf]
      %v6858 = vld [vmem:[%s6854 + $0xc] sm:$0xf]
      %v6859 = vld [vmem:[%s6854 + $0x10] sm:$0xf]
      %v6860 = vld [vmem:[%s6854 + $0x14] sm:$0xf]
      %v6861 = vld [vmem:[%s6854 + $0x18] sm:$0xf]
      %v6862 = vld [vmem:[%s6854 + $0x1c] sm:$0xf]
      %v6863 = vld [vmem:[%s6854 + $0x20] sm:$0xf]
      %v6864 = vld [vmem:[%s6854 + $0x24] sm:$0xf]
      %v6865 = vld [vmem:[%s6854 + $0x28] sm:$0xf]
      %v6866 = vld [vmem:[%s6854 + $0x2c] sm:$0xf]
      %v6867 = vld [vmem:[%s6854 + $0x30] sm:$0xf]
      %v6868 = vld [vmem:[%s6854 + $0x34] sm:$0xf]
      %v6869 = vld [vmem:[%s6854 + $0x38] sm:$0xf]
      %v6870 = vld [vmem:[%s6854 + $0x3c] sm:$0xf]
      %v6887 = vunpack.c.l.b16 %v6855
      %v6888 = vunpack.c.l.b16 %v6856
      %v6889 = vunpack.c.l.b16 %v6857
      %v6890 = vunpack.c.l.b16 %v6858
      %v6891 = vunpack.c.l.b16 %v6859
      %v6892 = vunpack.c.l.b16 %v6860
      %v6893 = vunpack.c.l.b16 %v6861
      %v6894 = vunpack.c.l.b16 %v6862
      %v6895 = vunpack.c.l.b16 %v6863
      %v6896 = vunpack.c.l.b16 %v6864
      %v6897 = vunpack.c.l.b16 %v6865
      %v6898 = vunpack.c.l.b16 %v6866
      %v6899 = vunpack.c.l.b16 %v6867
      %v6900 = vunpack.c.l.b16 %v6868
      %v6901 = vunpack.c.l.b16 %v6869
      %v6902 = vunpack.c.l.b16 %v6870
      %v6903 = vpack.c.b16 %v6888, %v6887
      %v6904 = vpack.c.b16 %v6890, %v6889
      %v6905 = vpack.c.b16 %v6892, %v6891
      %v6906 = vpack.c.b16 %v6894, %v6893
      %v6907 = vpack.c.b16 %v6896, %v6895
      %v6908 = vpack.c.b16 %v6898, %v6897
      %v6909 = vpack.c.b16 %v6900, %v6899
      %v6910 = vpack.c.b16 %v6902, %v6901
      %6919 = vmatprep.subr.bf16.mxu0 0
      %6920 = vmatpush1.bf16.msra.mxu0 %v6903
      %6921 = vmatprep.subr.bf16.mxu0 0
      %6922 = vmatpush1.bf16.msra.mxu0 %v6904
      %6923 = vmatprep.subr.bf16.mxu0 0
      %6924 = vmatpush1.bf16.msra.mxu0 %v6905
      %6925 = vmatprep.subr.bf16.mxu0 0
      %6926 = vmatpush1.bf16.msra.mxu0 %v6906
      %6927 = vmatprep.subr.bf16.mxu0 0
      %6928 = vmatpush1.bf16.msra.mxu0 %v6907
      %6929 = vmatprep.subr.bf16.mxu0 0
      %6930 = vmatpush1.bf16.msra.mxu0 %v6908
      %6931 = vmatprep.subr.bf16.mxu0 0
      %6932 = vmatpush1.bf16.msra.mxu0 %v6909
      %6933 = vmatprep.subr.bf16.mxu0 0
      %6934 = vmatpush1.bf16.msra.mxu0 %v6910
      %6935 = vmatprep.subr.bf16.mxu0 0
      %6936 = vmatpush1.bf16.msra.mxu0 0
      %6937 = vmatprep.subr.bf16.mxu0 0
      %6938 = vmatpush1.bf16.msra.mxu0 0
      %6939 = vmatprep.subr.bf16.mxu0 0
      %6940 = vmatpush1.bf16.msra.mxu0 0
      %6941 = vmatprep.subr.bf16.mxu0 0
      %6942 = vmatpush1.bf16.msra.mxu0 0
      %6943 = vmatprep.subr.bf16.mxu0 0
      %6944 = vmatpush1.bf16.msra.mxu0 0
      %6945 = vmatprep.subr.bf16.mxu0 0
      %6946 = vmatpush1.bf16.msra.mxu0 0
      %6947 = vmatprep.subr.bf16.mxu0 0
      %6948 = vmatpush1.bf16.msra.mxu0 0
      %6949 = vmatprep.subr.bf16.mxu0 0
      %6950 = vmatpush1.bf16.msra.mxu0 0
      %6951 = vmatprep.mubr.bf16.mxu0 0
      %6952 = vmatmul.mubr.bf16.gmra.mrb[0].mxu0 %v6823
      %v6953 = vpop.f32.mrb[0].mxu0
      %v6954 = vadd.f32 0.0, %v6953
      %v6955 = vpop.f32.mrb[0].mxu0
      %v6956 = vpop.f32.mrb[0].mxu0
      %v6957 = vadd.f32 0.0, %v6956
      %v6958 = vpop.f32.mrb[0].mxu0
      %6959 = vmatprep.mubr.bf16.mxu0 0
      %6960 = vmatmul.mubr.bf16.gmra.mrb[0].mxu0 %v6824
      %v6961 = vpop.f32.mrb[0].mxu0
      %v6962 = vadd.f32 0.0, %v6961
      %v6963 = vpop.f32.mrb[0].mxu0
      %v6964 = vpop.f32.mrb[0].mxu0
      %v6965 = vadd.f32 0.0, %v6964
      %v6966 = vpop.f32.mrb[0].mxu0
      %6967 = vmatprep.mubr.bf16.mxu0 0
      %6968 = vmatmul.mubr.bf16.gmra.mrb[0].mxu0 %v6825
      %v6969 = vpop.f32.mrb[0].mxu0
      %v6970 = vadd.f32 0.0, %v6969
      %v6971 = vpop.f32.mrb[0].mxu0
      %v6972 = vpop.f32.mrb[0].mxu0
      %v6973 = vadd.f32 0.0, %v6972
      %v6974 = vpop.f32.mrb[0].mxu0
      %6975 = vmatprep.mubr.bf16.mxu0 0
      %6976 = vmatmul.mubr.bf16.gmra.mrb[0].mxu0 %v6826
      %v6977 = vpop.f32.mrb[0].mxu0
      %v6978 = vadd.f32 0.0, %v6977
      %v6979 = vpop.f32.mrb[0].mxu0
      %v6980 = vpop.f32.mrb[0].mxu0
      %v6981 = vadd.f32 0.0, %v6980
      %v6982 = vpop.f32.mrb[0].mxu0
      %6983 = vmatprep.mubr.bf16.mxu0 0
      %6984 = vmatmul.mubr.bf16.gmra.mrb[0].mxu0 %v6827
      %v6985 = vpop.f32.mrb[0].mxu0
      %v6986 = vadd.f32 0.0, %v6985
      %v6987 = vpop.f32.mrb[0].mxu0
      %v6988 = vpop.f32.mrb[0].mxu0
      %v6989 = vadd.f32 0.0, %v6988
      %v6990 = vpop.f32.mrb[0].mxu0
      %6991 = vmatprep.mubr.bf16.mxu0 0
      %6992 = vmatmul.mubr.bf16.gmra.mrb[0].mxu0 %v6828
      %v6993 = vpop.f32.mrb[0].mxu0
      %v6994 = vadd.f32 0.0, %v6993
      %v6995 = vpop.f32.mrb[0].mxu0
      %v6996 = vpop.f32.mrb[0].mxu0
      %v6997 = vadd.f32 0.0, %v6996
      %v6998 = vpop.f32.mrb[0].mxu0
      %6999 = vmatprep.mubr.bf16.mxu0 0
      %7000 = vmatmul.mubr.bf16.gmra.mrb[0].mxu0 %v6829
      %v7001 = vpop.f32.mrb[0].mxu0
      %v7002 = vadd.f32 0.0, %v7001
      %v7003 = vpop.f32.mrb[0].mxu0
      %v7004 = vpop.f32.mrb[0].mxu0
      %v7005 = vadd.f32 0.0, %v7004
      %v7006 = vpop.f32.mrb[0].mxu0
      %7007 = vmatprep.mubr.bf16.mxu0 0
      %7008 = vmatmul.mubr.bf16.gmra.mrb[0].mxu0 %v6830
      %v7009 = vpop.f32.mrb[0].mxu0
      %v7010 = vadd.f32 0.0, %v7009
      %v7011 = vpop.f32.mrb[0].mxu0
      %v7012 = vpop.f32.mrb[0].mxu0
      %v7013 = vadd.f32 0.0, %v7012
      %v7014 = vpop.f32.mrb[0].mxu0
      %7015 = vmatprep.mubr.bf16.mxu0 0
      %7016 = vmatmul.mubr.bf16.gmra.mrb[0].mxu0 %v6831
      %v7017 = vpop.f32.mrb[0].mxu0
      %v7018 = vadd.f32 0.0, %v7017
      %v7019 = vpop.f32.mrb[0].mxu0
      %v7020 = vpop.f32.mrb[0].mxu0
      %v7021 = vadd.f32 0.0, %v7020
      %v7022 = vpop.f32.mrb[0].mxu0
      %7023 = vmatprep.mubr.bf16.mxu0 0
      %7024 = vmatmul.mubr.bf16.gmra.mrb[0].mxu0 %v6832
      %v7025 = vpop.f32.mrb[0].mxu0
      %v7026 = vadd.f32 0.0, %v7025
      %v7027 = vpop.f32.mrb[0].mxu0
      %v7028 = vpop.f32.mrb[0].mxu0
      %v7029 = vadd.f32 0.0, %v7028
      %v7030 = vpop.f32.mrb[0].mxu0
      %7031 = vmatprep.mubr.bf16.mxu0 0
      %7032 = vmatmul.mubr.bf16.gmra.mrb[0].mxu0 %v6833
      %v7033 = vpop.f32.mrb[0].mxu0
      %v7034 = vadd.f32 0.0, %v7033
      %v7035 = vpop.f32.mrb[0].mxu0
      %v7036 = vpop.f32.mrb[0].mxu0
      %v7037 = vadd.f32 0.0, %v7036
      %v7038 = vpop.f32.mrb[0].mxu0
      %7039 = vmatprep.mubr.bf16.mxu0 0
      %7040 = vmatmul.mubr.bf16.gmra.mrb[0].mxu0 %v6834
      %v7041 = vpop.f32.mrb[0].mxu0
      %v7042 = vadd.f32 0.0, %v7041
      %v7043 = vpop.f32.mrb[0].mxu0
      %v7044 = vpop.f32.mrb[0].mxu0
      %v7045 = vadd.f32 0.0, %v7044
      %v7046 = vpop.f32.mrb[0].mxu0
      %7047 = vmatprep.mubr.bf16.mxu0 0
      %7048 = vmatmul.mubr.bf16.gmra.mrb[0].mxu0 %v6835
      %v7049 = vpop.f32.mrb[0].mxu0
      %v7050 = vadd.f32 0.0, %v7049
      %v7051 = vpop.f32.mrb[0].mxu0
      %v7052 = vpop.f32.mrb[0].mxu0
      %v7053 = vadd.f32 0.0, %v7052
      %v7054 = vpop.f32.mrb[0].mxu0
      %7055 = vmatprep.mubr.bf16.mxu0 0
      %7056 = vmatmul.mubr.bf16.gmra.mrb[0].mxu0 %v6836
      %v7057 = vpop.f32.mrb[0].mxu0
      %v7058 = vadd.f32 0.0, %v7057
      %v7059 = vpop.f32.mrb[0].mxu0
      %v7060 = vpop.f32.mrb[0].mxu0
      %v7061 = vadd.f32 0.0, %v7060
      %v7062 = vpop.f32.mrb[0].mxu0
      %7063 = vdwg.mxu0
      %v7065 = vshrl.u32 %v6822, 16
      %v7067 = vrot.slane %v7065, 7
      %v7069 = vshrl.u32 %v6823, 16
      %v7071 = vrot.slane %v7069, 7
      %v7072 = vshll.u32 %v6823, 16
      %v7074 = vor.u32 %v7071, %v7072
      %v7075 = vsel %vm4172, %v7067, %v7074
      %v7077 = vshrl.u32 %v6824, 16
      %v7079 = vrot.slane %v7077, 7
      %v7080 = vshll.u32 %v6824, 16
      %v7082 = vor.u32 %v7079, %v7080
      %v7083 = vsel %vm4172, %v7071, %v7082
      %v7085 = vshrl.u32 %v6825, 16
      %v7087 = vrot.slane %v7085, 7
      %v7088 = vshll.u32 %v6825, 16
      %v7090 = vor.u32 %v7087, %v7088
      %v7091 = vsel %vm4172, %v7079, %v7090
      %v7093 = vshrl.u32 %v6826, 16
      %v7095 = vrot.slane %v7093, 7
      %v7096 = vshll.u32 %v6826, 16
      %v7098 = vor.u32 %v7095, %v7096
      %v7099 = vsel %vm4172, %v7087, %v7098
      %v7101 = vshrl.u32 %v6827, 16
      %v7103 = vrot.slane %v7101, 7
      %v7104 = vshll.u32 %v6827, 16
      %v7106 = vor.u32 %v7103, %v7104
      %v7107 = vsel %vm4172, %v7095, %v7106
      %v7109 = vshrl.u32 %v6828, 16
      %v7111 = vrot.slane %v7109, 7
      %v7112 = vshll.u32 %v6828, 16
      %v7114 = vor.u32 %v7111, %v7112
      %v7115 = vsel %vm4172, %v7103, %v7114
      %v7117 = vshrl.u32 %v6829, 16
      %v7119 = vrot.slane %v7117, 7
      %v7120 = vshll.u32 %v6829, 16
      %v7122 = vor.u32 %v7119, %v7120
      %v7123 = vsel %vm4172, %v7111, %v7122
      %v7125 = vshrl.u32 %v6830, 16
      %v7127 = vrot.slane %v7125, 7
      %v7128 = vshll.u32 %v6830, 16
      %v7130 = vor.u32 %v7127, %v7128
      %v7131 = vsel %vm4172, %v7119, %v7130
      %v7133 = vshrl.u32 %v6831, 16
      %v7135 = vrot.slane %v7133, 7
      %v7136 = vshll.u32 %v6831, 16
      %v7138 = vor.u32 %v7135, %v7136
      %v7139 = vsel %vm4172, %v7127, %v7138
      %v7141 = vshrl.u32 %v6832, 16
      %v7143 = vrot.slane %v7141, 7
      %v7144 = vshll.u32 %v6832, 16
      %v7146 = vor.u32 %v7143, %v7144
      %v7147 = vsel %vm4172, %v7135, %v7146
      %v7149 = vshrl.u32 %v6833, 16
      %v7151 = vrot.slane %v7149, 7
      %v7152 = vshll.u32 %v6833, 16
      %v7154 = vor.u32 %v7151, %v7152
      %v7155 = vsel %vm4172, %v7143, %v7154
      %v7157 = vshrl.u32 %v6834, 16
      %v7159 = vrot.slane %v7157, 7
      %v7160 = vshll.u32 %v6834, 16
      %v7162 = vor.u32 %v7159, %v7160
      %v7163 = vsel %vm4172, %v7151, %v7162
      %v7165 = vshrl.u32 %v6835, 16
      %v7167 = vrot.slane %v7165, 7
      %v7168 = vshll.u32 %v6835, 16
      %v7170 = vor.u32 %v7167, %v7168
      %v7171 = vsel %vm4172, %v7159, %v7170
      %v7173 = vshrl.u32 %v6836, 16
      %v7175 = vrot.slane %v7173, 7
      %v7176 = vshll.u32 %v6836, 16
      %v7178 = vor.u32 %v7175, %v7176
      %v7179 = vsel %vm4172, %v7167, %v7178
      %v7210 = vunpack.c.l.b16 %v6838
      %v7211 = vunpack.c.l.b16 %v6839
      %v7212 = vunpack.c.l.b16 %v6840
      %v7213 = vunpack.c.l.b16 %v6841
      %v7214 = vunpack.c.l.b16 %v6842
      %v7215 = vunpack.c.l.b16 %v6843
      %v7216 = vunpack.c.l.b16 %v6844
      %v7217 = vunpack.c.l.b16 %v6845
      %v7218 = vunpack.c.l.b16 %v6846
      %v7219 = vunpack.c.l.b16 %v6847
      %v7220 = vunpack.c.l.b16 %v6848
      %v7221 = vunpack.c.l.b16 %v6849
      %v7222 = vunpack.c.l.b16 %v6850
      %v7223 = vunpack.c.l.b16 %v6851
      %v7224 = vunpack.c.l.b16 %v6852
      %v7225 = vunpack.c.l.b16 %v6853
      %v7226 = vpack.c.b16 %v7211, %v7210
      %v7227 = vpack.c.b16 %v7213, %v7212
      %v7228 = vpack.c.b16 %v7215, %v7214
      %v7229 = vpack.c.b16 %v7217, %v7216
      %v7230 = vpack.c.b16 %v7219, %v7218
      %v7231 = vpack.c.b16 %v7221, %v7220
      %v7232 = vpack.c.b16 %v7223, %v7222
      %v7233 = vpack.c.b16 %v7225, %v7224
      %7242 = vmatprep.subr.bf16.mxu0 0
      %7243 = vmatpush1.bf16.msra.mxu0 %v7226
      %7244 = vmatprep.subr.bf16.mxu0 0
      %7245 = vmatpush1.bf16.msra.mxu0 %v7227
      %7246 = vmatprep.subr.bf16.mxu0 0
      %7247 = vmatpush1.bf16.msra.mxu0 %v7228
      %7248 = vmatprep.subr.bf16.mxu0 0
      %7249 = vmatpush1.bf16.msra.mxu0 %v7229
      %7250 = vmatprep.subr.bf16.mxu0 0
      %7251 = vmatpush1.bf16.msra.mxu0 %v7230
      %7252 = vmatprep.subr.bf16.mxu0 0
      %7253 = vmatpush1.bf16.msra.mxu0 %v7231
      %7254 = vmatprep.subr.bf16.mxu0 0
      %7255 = vmatpush1.bf16.msra.mxu0 %v7232
      %7256 = vmatprep.subr.bf16.mxu0 0
      %7257 = vmatpush1.bf16.msra.mxu0 %v7233
      %7258 = vmatprep.subr.bf16.mxu0 0
      %7259 = vmatpush1.bf16.msra.mxu0 0
      %7260 = vmatprep.subr.bf16.mxu0 0
      %7261 = vmatpush1.bf16.msra.mxu0 0
      %7262 = vmatprep.subr.bf16.mxu0 0
      %7263 = vmatpush1.bf16.msra.mxu0 0
      %7264 = vmatprep.subr.bf16.mxu0 0
      %7265 = vmatpush1.bf16.msra.mxu0 0
      %7266 = vmatprep.subr.bf16.mxu0 0
      %7267 = vmatpush1.bf16.msra.mxu0 0
      %7268 = vmatprep.subr.bf16.mxu0 0
      %7269 = vmatpush1.bf16.msra.mxu0 0
      %7270 = vmatprep.subr.bf16.mxu0 0
      %7271 = vmatpush1.bf16.msra.mxu0 0
      %7272 = vmatprep.subr.bf16.mxu0 0
      %7273 = vmatpush1.bf16.msra.mxu0 0
      %7274 = vmatprep.mubr.bf16.mxu0 0
      %7275 = vmatmul.mubr.bf16.gmra.mrb[0].mxu0 %v7075
      %v7276 = vpop.f32.mrb[0].mxu0
      %v7277 = vadd.f32 %v6954, %v7276
      %v7278 = vpop.f32.mrb[0].mxu0
      %v7279 = vpop.f32.mrb[0].mxu0
      %v7280 = vadd.f32 %v6957, %v7279
      %v7281 = vpop.f32.mrb[0].mxu0
      %7282 = vmatprep.mubr.bf16.mxu0 0
      %7283 = vmatmul.mubr.bf16.gmra.mrb[0].mxu0 %v7083
      %v7284 = vpop.f32.mrb[0].mxu0
      %v7285 = vadd.f32 %v6962, %v7284
      %v7286 = vpop.f32.mrb[0].mxu0
      %v7287 = vpop.f32.mrb[0].mxu0
      %v7288 = vadd.f32 %v6965, %v7287
      %v7289 = vpop.f32.mrb[0].mxu0
      %7290 = vmatprep.mubr.bf16.mxu0 0
      %7291 = vmatmul.mubr.bf16.gmra.mrb[0].mxu0 %v7091
      %v7292 = vpop.f32.mrb[0].mxu0
      %v7293 = vadd.f32 %v6970, %v7292
      %v7294 = vpop.f32.mrb[0].mxu0
      %v7295 = vpop.f32.mrb[0].mxu0
      %v7296 = vadd.f32 %v6973, %v7295
      %v7297 = vpop.f32.mrb[0].mxu0
      %7298 = vmatprep.mubr.bf16.mxu0 0
      %7299 = vmatmul.mubr.bf16.gmra.mrb[0].mxu0 %v7099
      %v7300 = vpop.f32.mrb[0].mxu0
      %v7301 = vadd.f32 %v6978, %v7300
      %v7302 = vpop.f32.mrb[0].mxu0
      %v7303 = vpop.f32.mrb[0].mxu0
      %v7304 = vadd.f32 %v6981, %v7303
      %v7305 = vpop.f32.mrb[0].mxu0
      %7306 = vmatprep.mubr.bf16.mxu0 0
      %7307 = vmatmul.mubr.bf16.gmra.mrb[0].mxu0 %v7107
      %v7308 = vpop.f32.mrb[0].mxu0
      %v7309 = vadd.f32 %v6986, %v7308
      %v7310 = vpop.f32.mrb[0].mxu0
      %v7311 = vpop.f32.mrb[0].mxu0
      %v7312 = vadd.f32 %v6989, %v7311
      %v7313 = vpop.f32.mrb[0].mxu0
      %7314 = vmatprep.mubr.bf16.mxu0 0
      %7315 = vmatmul.mubr.bf16.gmra.mrb[0].mxu0 %v7115
      %v7316 = vpop.f32.mrb[0].mxu0
      %v7317 = vadd.f32 %v6994, %v7316
      %v7318 = vpop.f32.mrb[0].mxu0
      %v7319 = vpop.f32.mrb[0].mxu0
      %v7320 = vadd.f32 %v6997, %v7319
      %v7321 = vpop.f32.mrb[0].mxu0
      %7322 = vmatprep.mubr.bf16.mxu0 0
      %7323 = vmatmul.mubr.bf16.gmra.mrb[0].mxu0 %v7123
      %v7324 = vpop.f32.mrb[0].mxu0
      %v7325 = vadd.f32 %v7002, %v7324
      %v7326 = vpop.f32.mrb[0].mxu0
      %v7327 = vpop.f32.mrb[0].mxu0
      %v7328 = vadd.f32 %v7005, %v7327
      %v7329 = vpop.f32.mrb[0].mxu0
      %7330 = vmatprep.mubr.bf16.mxu0 0
      %7331 = vmatmul.mubr.bf16.gmra.mrb[0].mxu0 %v7131
      %v7332 = vpop.f32.mrb[0].mxu0
      %v7333 = vadd.f32 %v7010, %v7332
      %v7334 = vpop.f32.mrb[0].mxu0
      %v7335 = vpop.f32.mrb[0].mxu0
      %v7336 = vadd.f32 %v7013, %v7335
      %v7337 = vpop.f32.mrb[0].mxu0
      %7338 = vmatprep.mubr.bf16.mxu0 0
      %7339 = vmatmul.mubr.bf16.gmra.mrb[0].mxu0 %v7139
      %v7340 = vpop.f32.mrb[0].mxu0
      %v7341 = vadd.f32 %v7018, %v7340
      %v7342 = vpop.f32.mrb[0].mxu0
      %v7343 = vpop.f32.mrb[0].mxu0
      %v7344 = vadd.f32 %v7021, %v7343
      %v7345 = vpop.f32.mrb[0].mxu0
      %7346 = vmatprep.mubr.bf16.mxu0 0
      %7347 = vmatmul.mubr.bf16.gmra.mrb[0].mxu0 %v7147
      %v7348 = vpop.f32.mrb[0].mxu0
      %v7349 = vadd.f32 %v7026, %v7348
      %v7350 = vpop.f32.mrb[0].mxu0
      %v7351 = vpop.f32.mrb[0].mxu0
      %v7352 = vadd.f32 %v7029, %v7351
      %v7353 = vpop.f32.mrb[0].mxu0
      %7354 = vmatprep.mubr.bf16.mxu0 0
      %7355 = vmatmul.mubr.bf16.gmra.mrb[0].mxu0 %v7155
      %v7356 = vpop.f32.mrb[0].mxu0
      %v7357 = vadd.f32 %v7034, %v7356
      %v7358 = vpop.f32.mrb[0].mxu0
      %v7359 = vpop.f32.mrb[0].mxu0
      %v7360 = vadd.f32 %v7037, %v7359
      %v7361 = vpop.f32.mrb[0].mxu0
      %7362 = vmatprep.mubr.bf16.mxu0 0
      %7363 = vmatmul.mubr.bf16.gmra.mrb[0].mxu0 %v7163
      %v7364 = vpop.f32.mrb[0].mxu0
      %v7365 = vadd.f32 %v7042, %v7364
      %v7366 = vpop.f32.mrb[0].mxu0
      %v7367 = vpop.f32.mrb[0].mxu0
      %v7368 = vadd.f32 %v7045, %v7367
      %v7369 = vpop.f32.mrb[0].mxu0
      %7370 = vmatprep.mubr.bf16.mxu0 0
      %7371 = vmatmul.mubr.bf16.gmra.mrb[0].mxu0 %v7171
      %v7372 = vpop.f32.mrb[0].mxu0
      %v7373 = vadd.f32 %v7050, %v7372
      %v7374 = vpop.f32.mrb[0].mxu0
      %v7375 = vpop.f32.mrb[0].mxu0
      %v7376 = vadd.f32 %v7053, %v7375
      %v7377 = vpop.f32.mrb[0].mxu0
      %7378 = vmatprep.mubr.bf16.mxu0 0
      %7379 = vmatmul.mubr.bf16.gmra.mrb[0].mxu0 %v7179
      %v7380 = vpop.f32.mrb[0].mxu0
      %v7381 = vadd.f32 %v7058, %v7380
      %v7382 = vpop.f32.mrb[0].mxu0
      %v7383 = vpop.f32.mrb[0].mxu0
      %v7384 = vadd.f32 %v7061, %v7383
      %v7385 = vpop.f32.mrb[0].mxu0
      %7386 = vdwg.mxu0
      %v7387 = vld [vmem:[#allocation2 + $0x8] sm:$0xff]
      %v7388 = vld [vmem:[#allocation2 + $0x10] sm:$0xff]
      %v7389 = vld [vmem:[#allocation2 + $0x18] sm:$0xff]
      %v7390 = vld [vmem:[#allocation2 + $0x20] sm:$0xff]
      %v7391 = vld [vmem:[#allocation2 + $0x28] sm:$0xff]
      %v7392 = vld [vmem:[#allocation2 + $0x30] sm:$0xff]
      %v7393 = vld [vmem:[#allocation2 + $0x38] sm:$0xff]
      %v7394 = vld [vmem:[#allocation2 + $0x40] sm:$0xff]
      %v7395 = vld [vmem:[#allocation2 + $0x48] sm:$0xff]
      %v7396 = vld [vmem:[#allocation2 + $0x50] sm:$0xff]
      %v7397 = vld [vmem:[#allocation2 + $0x58] sm:$0xff]
      %v7398 = vld [vmem:[#allocation2 + $0x60] sm:$0xff]
      %v7399 = vld [vmem:[#allocation2 + $0x68] sm:$0xff]
      %v7400 = vld [vmem:[#allocation2 + $0x70] sm:$0xff]
      %v7401 = vld [vmem:[#allocation2 + $0x78] sm:$0x1]
      %s7402 = scalar_lea.vmem %s3, 704
      %v7403 = vld [vmem:[%s7402] sm:$0xf]
      %v7404 = vld [vmem:[%s7402 + $0x4] sm:$0xf]
      %v7405 = vld [vmem:[%s7402 + $0x8] sm:$0xf]
      %v7406 = vld [vmem:[%s7402 + $0xc] sm:$0xf]
      %v7407 = vld [vmem:[%s7402 + $0x10] sm:$0xf]
      %v7408 = vld [vmem:[%s7402 + $0x14] sm:$0xf]
      %v7409 = vld [vmem:[%s7402 + $0x18] sm:$0xf]
      %v7410 = vld [vmem:[%s7402 + $0x1c] sm:$0xf]
      %v7411 = vld [vmem:[%s7402 + $0x20] sm:$0xf]
      %v7412 = vld [vmem:[%s7402 + $0x24] sm:$0xf]
      %v7413 = vld [vmem:[%s7402 + $0x28] sm:$0xf]
      %v7414 = vld [vmem:[%s7402 + $0x2c] sm:$0xf]
      %v7415 = vld [vmem:[%s7402 + $0x30] sm:$0xf]
      %v7416 = vld [vmem:[%s7402 + $0x34] sm:$0xf]
      %v7417 = vld [vmem:[%s7402 + $0x38] sm:$0xf]
      %v7418 = vld [vmem:[%s7402 + $0x3c] sm:$0xf]
      %v7420 = vshrl.u32 %v7387, 16
      %v7422 = vshll.u32 %v7387, 16
      %v7424 = vrot.slane %v7422, 1
      %v7425 = vor.u32 %v7420, %v7424
      %v7427 = vshll.u32 %v7388, 16
      %v7429 = vrot.slane %v7427, 1
      %v7430 = vsel %vm388, %v7425, %v7429
      %v7431 = vshrl.u32 %v7388, 16
      %v7433 = vor.u32 %v7431, %v7429
      %v7435 = vshll.u32 %v7389, 16
      %v7437 = vrot.slane %v7435, 1
      %v7438 = vsel %vm388, %v7433, %v7437
      %v7439 = vshrl.u32 %v7389, 16
      %v7441 = vor.u32 %v7439, %v7437
      %v7443 = vshll.u32 %v7390, 16
      %v7445 = vrot.slane %v7443, 1
      %v7446 = vsel %vm388, %v7441, %v7445
      %v7447 = vshrl.u32 %v7390, 16
      %v7449 = vor.u32 %v7447, %v7445
      %v7451 = vshll.u32 %v7391, 16
      %v7453 = vrot.slane %v7451, 1
      %v7454 = vsel %vm388, %v7449, %v7453
      %v7455 = vshrl.u32 %v7391, 16
      %v7457 = vor.u32 %v7455, %v7453
      %v7459 = vshll.u32 %v7392, 16
      %v7461 = vrot.slane %v7459, 1
      %v7462 = vsel %vm388, %v7457, %v7461
      %v7463 = vshrl.u32 %v7392, 16
      %v7465 = vor.u32 %v7463, %v7461
      %v7467 = vshll.u32 %v7393, 16
      %v7469 = vrot.slane %v7467, 1
      %v7470 = vsel %vm388, %v7465, %v7469
      %v7471 = vshrl.u32 %v7393, 16
      %v7473 = vor.u32 %v7471, %v7469
      %v7475 = vshll.u32 %v7394, 16
      %v7477 = vrot.slane %v7475, 1
      %v7478 = vsel %vm388, %v7473, %v7477
      %v7479 = vshrl.u32 %v7394, 16
      %v7481 = vor.u32 %v7479, %v7477
      %v7483 = vshll.u32 %v7395, 16
      %v7485 = vrot.slane %v7483, 1
      %v7486 = vsel %vm388, %v7481, %v7485
      %v7487 = vshrl.u32 %v7395, 16
      %v7489 = vor.u32 %v7487, %v7485
      %v7491 = vshll.u32 %v7396, 16
      %v7493 = vrot.slane %v7491, 1
      %v7494 = vsel %vm388, %v7489, %v7493
      %v7495 = vshrl.u32 %v7396, 16
      %v7497 = vor.u32 %v7495, %v7493
      %v7499 = vshll.u32 %v7397, 16
      %v7501 = vrot.slane %v7499, 1
      %v7502 = vsel %vm388, %v7497, %v7501
      %v7503 = vshrl.u32 %v7397, 16
      %v7505 = vor.u32 %v7503, %v7501
      %v7507 = vshll.u32 %v7398, 16
      %v7509 = vrot.slane %v7507, 1
      %v7510 = vsel %vm388, %v7505, %v7509
      %v7511 = vshrl.u32 %v7398, 16
      %v7513 = vor.u32 %v7511, %v7509
      %v7515 = vshll.u32 %v7399, 16
      %v7517 = vrot.slane %v7515, 1
      %v7518 = vsel %vm388, %v7513, %v7517
      %v7519 = vshrl.u32 %v7399, 16
      %v7521 = vor.u32 %v7519, %v7517
      %v7523 = vshll.u32 %v7400, 16
      %v7525 = vrot.slane %v7523, 1
      %v7526 = vsel %vm388, %v7521, %v7525
      %v7527 = vshrl.u32 %v7400, 16
      %v7529 = vor.u32 %v7527, %v7525
      %v7531 = vshll.u32 %v7401, 16
      %v7533 = vrot.slane %v7531, 1
      %v7534 = vsel %vm388, %v7529, %v7533
      %v7565 = vunpack.c.l.b16 %v7403
      %v7566 = vunpack.c.l.b16 %v7404
      %v7567 = vunpack.c.l.b16 %v7405
      %v7568 = vunpack.c.l.b16 %v7406
      %v7569 = vunpack.c.l.b16 %v7407
      %v7570 = vunpack.c.l.b16 %v7408
      %v7571 = vunpack.c.l.b16 %v7409
      %v7572 = vunpack.c.l.b16 %v7410
      %v7573 = vunpack.c.l.b16 %v7411
      %v7574 = vunpack.c.l.b16 %v7412
      %v7575 = vunpack.c.l.b16 %v7413
      %v7576 = vunpack.c.l.b16 %v7414
      %v7577 = vunpack.c.l.b16 %v7415
      %v7578 = vunpack.c.l.b16 %v7416
      %v7579 = vunpack.c.l.b16 %v7417
      %v7580 = vunpack.c.l.b16 %v7418
      %v7581 = vpack.c.b16 %v7566, %v7565
      %v7582 = vpack.c.b16 %v7568, %v7567
      %v7583 = vpack.c.b16 %v7570, %v7569
      %v7584 = vpack.c.b16 %v7572, %v7571
      %v7585 = vpack.c.b16 %v7574, %v7573
      %v7586 = vpack.c.b16 %v7576, %v7575
      %v7587 = vpack.c.b16 %v7578, %v7577
      %v7588 = vpack.c.b16 %v7580, %v7579
      %7597 = vmatprep.subr.bf16.mxu0 0
      %7598 = vmatpush1.bf16.msra.mxu0 %v7581
      %7599 = vmatprep.subr.bf16.mxu0 0
      %7600 = vmatpush1.bf16.msra.mxu0 %v7582
      %7601 = vmatprep.subr.bf16.mxu0 0
      %7602 = vmatpush1.bf16.msra.mxu0 %v7583
      %7603 = vmatprep.subr.bf16.mxu0 0
      %7604 = vmatpush1.bf16.msra.mxu0 %v7584
      %7605 = vmatprep.subr.bf16.mxu0 0
      %7606 = vmatpush1.bf16.msra.mxu0 %v7585
      %7607 = vmatprep.subr.bf16.mxu0 0
      %7608 = vmatpush1.bf16.msra.mxu0 %v7586
      %7609 = vmatprep.subr.bf16.mxu0 0
      %7610 = vmatpush1.bf16.msra.mxu0 %v7587
      %7611 = vmatprep.subr.bf16.mxu0 0
      %7612 = vmatpush1.bf16.msra.mxu0 %v7588
      %7613 = vmatprep.subr.bf16.mxu0 0
      %7614 = vmatpush1.bf16.msra.mxu0 0
      %7615 = vmatprep.subr.bf16.mxu0 0
      %7616 = vmatpush1.bf16.msra.mxu0 0
      %7617 = vmatprep.subr.bf16.mxu0 0
      %7618 = vmatpush1.bf16.msra.mxu0 0
      %7619 = vmatprep.subr.bf16.mxu0 0
      %7620 = vmatpush1.bf16.msra.mxu0 0
      %7621 = vmatprep.subr.bf16.mxu0 0
      %7622 = vmatpush1.bf16.msra.mxu0 0
      %7623 = vmatprep.subr.bf16.mxu0 0
      %7624 = vmatpush1.bf16.msra.mxu0 0
      %7625 = vmatprep.subr.bf16.mxu0 0
      %7626 = vmatpush1.bf16.msra.mxu0 0
      %7627 = vmatprep.subr.bf16.mxu0 0
      %7628 = vmatpush1.bf16.msra.mxu0 0
      %7629 = vmatprep.mubr.bf16.mxu0 0
      %7630 = vmatmul.mubr.bf16.gmra.mrb[0].mxu0 %v7430
      %v7631 = vpop.f32.mrb[0].mxu0
      %v7632 = vadd.f32 0.0, %v7631
      %v7633 = vpop.f32.mrb[0].mxu0
      %v7634 = vpop.f32.mrb[0].mxu0
      %v7635 = vadd.f32 0.0, %v7634
      %v7636 = vpop.f32.mrb[0].mxu0
      %7637 = vmatprep.mubr.bf16.mxu0 0
      %7638 = vmatmul.mubr.bf16.gmra.mrb[0].mxu0 %v7438
      %v7639 = vpop.f32.mrb[0].mxu0
      %v7640 = vadd.f32 0.0, %v7639
      %v7641 = vpop.f32.mrb[0].mxu0
      %v7642 = vpop.f32.mrb[0].mxu0
      %v7643 = vadd.f32 0.0, %v7642
      %v7644 = vpop.f32.mrb[0].mxu0
      %7645 = vmatprep.mubr.bf16.mxu0 0
      %7646 = vmatmul.mubr.bf16.gmra.mrb[0].mxu0 %v7446
      %v7647 = vpop.f32.mrb[0].mxu0
      %v7648 = vadd.f32 0.0, %v7647
      %v7649 = vpop.f32.mrb[0].mxu0
      %v7650 = vpop.f32.mrb[0].mxu0
      %v7651 = vadd.f32 0.0, %v7650
      %v7652 = vpop.f32.mrb[0].mxu0
      %7653 = vmatprep.mubr.bf16.mxu0 0
      %7654 = vmatmul.mubr.bf16.gmra.mrb[0].mxu0 %v7454
      %v7655 = vpop.f32.mrb[0].mxu0
      %v7656 = vadd.f32 0.0, %v7655
      %v7657 = vpop.f32.mrb[0].mxu0
      %v7658 = vpop.f32.mrb[0].mxu0
      %v7659 = vadd.f32 0.0, %v7658
      %v7660 = vpop.f32.mrb[0].mxu0
      %7661 = vmatprep.mubr.bf16.mxu0 0
      %7662 = vmatmul.mubr.bf16.gmra.mrb[0].mxu0 %v7462
      %v7663 = vpop.f32.mrb[0].mxu0
      %v7664 = vadd.f32 0.0, %v7663
      %v7665 = vpop.f32.mrb[0].mxu0
      %v7666 = vpop.f32.mrb[0].mxu0
      %v7667 = vadd.f32 0.0, %v7666
      %v7668 = vpop.f32.mrb[0].mxu0
      %7669 = vmatprep.mubr.bf16.mxu0 0
      %7670 = vmatmul.mubr.bf16.gmra.mrb[0].mxu0 %v7470
      %v7671 = vpop.f32.mrb[0].mxu0
      %v7672 = vadd.f32 0.0, %v7671
      %v7673 = vpop.f32.mrb[0].mxu0
      %v7674 = vpop.f32.mrb[0].mxu0
      %v7675 = vadd.f32 0.0, %v7674
      %v7676 = vpop.f32.mrb[0].mxu0
      %7677 = vmatprep.mubr.bf16.mxu0 0
      %7678 = vmatmul.mubr.bf16.gmra.mrb[0].mxu0 %v7478
      %v7679 = vpop.f32.mrb[0].mxu0
      %v7680 = vadd.f32 0.0, %v7679
      %v7681 = vpop.f32.mrb[0].mxu0
      %v7682 = vpop.f32.mrb[0].mxu0
      %v7683 = vadd.f32 0.0, %v7682
      %v7684 = vpop.f32.mrb[0].mxu0
      %7685 = vmatprep.mubr.bf16.mxu0 0
      %7686 = vmatmul.mubr.bf16.gmra.mrb[0].mxu0 %v7486
      %v7687 = vpop.f32.mrb[0].mxu0
      %v7688 = vadd.f32 0.0, %v7687
      %v7689 = vpop.f32.mrb[0].mxu0
      %v7690 = vpop.f32.mrb[0].mxu0
      %v7691 = vadd.f32 0.0, %v7690
      %v7692 = vpop.f32.mrb[0].mxu0
      %7693 = vmatprep.mubr.bf16.mxu0 0
      %7694 = vmatmul.mubr.bf16.gmra.mrb[0].mxu0 %v7494
      %v7695 = vpop.f32.mrb[0].mxu0
      %v7696 = vadd.f32 0.0, %v7695
      %v7697 = vpop.f32.mrb[0].mxu0
      %v7698 = vpop.f32.mrb[0].mxu0
      %v7699 = vadd.f32 0.0, %v7698
      %v7700 = vpop.f32.mrb[0].mxu0
      %7701 = vmatprep.mubr.bf16.mxu0 0
      %7702 = vmatmul.mubr.bf16.gmra.mrb[0].mxu0 %v7502
      %v7703 = vpop.f32.mrb[0].mxu0
      %v7704 = vadd.f32 0.0, %v7703
      %v7705 = vpop.f32.mrb[0].mxu0
      %v7706 = vpop.f32.mrb[0].mxu0
      %v7707 = vadd.f32 0.0, %v7706
      %v7708 = vpop.f32.mrb[0].mxu0
      %7709 = vmatprep.mubr.bf16.mxu0 0
      %7710 = vmatmul.mubr.bf16.gmra.mrb[0].mxu0 %v7510
      %v7711 = vpop.f32.mrb[0].mxu0
      %v7712 = vadd.f32 0.0, %v7711
      %v7713 = vpop.f32.mrb[0].mxu0
      %v7714 = vpop.f32.mrb[0].mxu0
      %v7715 = vadd.f32 0.0, %v7714
      %v7716 = vpop.f32.mrb[0].mxu0
      %7717 = vmatprep.mubr.bf16.mxu0 0
      %7718 = vmatmul.mubr.bf16.gmra.mrb[0].mxu0 %v7518
      %v7719 = vpop.f32.mrb[0].mxu0
      %v7720 = vadd.f32 0.0, %v7719
      %v7721 = vpop.f32.mrb[0].mxu0
      %v7722 = vpop.f32.mrb[0].mxu0
      %v7723 = vadd.f32 0.0, %v7722
      %v7724 = vpop.f32.mrb[0].mxu0
      %7725 = vmatprep.mubr.bf16.mxu0 0
      %7726 = vmatmul.mubr.bf16.gmra.mrb[0].mxu0 %v7526
      %v7727 = vpop.f32.mrb[0].mxu0
      %v7728 = vadd.f32 0.0, %v7727
      %v7729 = vpop.f32.mrb[0].mxu0
      %v7730 = vpop.f32.mrb[0].mxu0
      %v7731 = vadd.f32 0.0, %v7730
      %v7732 = vpop.f32.mrb[0].mxu0
      %7733 = vmatprep.mubr.bf16.mxu0 0
      %7734 = vmatmul.mubr.bf16.gmra.mrb[0].mxu0 %v7534
      %v7735 = vpop.f32.mrb[0].mxu0
      %v7736 = vadd.f32 0.0, %v7735
      %v7737 = vpop.f32.mrb[0].mxu0
      %v7738 = vpop.f32.mrb[0].mxu0
      %v7739 = vadd.f32 0.0, %v7738
      %v7740 = vpop.f32.mrb[0].mxu0
      %7741 = vdwg.mxu0
      %v7742 = vadd.f32 %v7277, %v7632
      %v7743 = vadd.f32 %v7280, %v7635
      %v7744 = vadd.f32 %v7285, %v7640
      %v7745 = vadd.f32 %v7288, %v7643
      %v7746 = vadd.f32 %v7293, %v7648
      %v7747 = vadd.f32 %v7296, %v7651
      %v7748 = vadd.f32 %v7301, %v7656
      %v7749 = vadd.f32 %v7304, %v7659
      %v7750 = vadd.f32 %v7309, %v7664
      %v7751 = vadd.f32 %v7312, %v7667
      %v7752 = vadd.f32 %v7317, %v7672
      %v7753 = vadd.f32 %v7320, %v7675
      %v7754 = vadd.f32 %v7325, %v7680
      %v7755 = vadd.f32 %v7328, %v7683
      %v7756 = vadd.f32 %v7333, %v7688
      %v7757 = vadd.f32 %v7336, %v7691
      %v7758 = vadd.f32 %v7341, %v7696
      %v7759 = vadd.f32 %v7344, %v7699
      %v7760 = vadd.f32 %v7349, %v7704
      %v7761 = vadd.f32 %v7352, %v7707
      %v7762 = vadd.f32 %v7357, %v7712
      %v7763 = vadd.f32 %v7360, %v7715
      %v7764 = vadd.f32 %v7365, %v7720
      %v7765 = vadd.f32 %v7368, %v7723
      %v7766 = vadd.f32 %v7373, %v7728
      %v7767 = vadd.f32 %v7376, %v7731
      %v7768 = vadd.f32 %v7381, %v7736
      %v7769 = vadd.f32 %v7384, %v7739
      %v7770 = vld [vmem:[#allocation2 + $0x8] sm:$0x80]
      %v7771 = vld [vmem:[#allocation2 + $0x78] sm:$0xff]
      %s7772 = scalar_lea.vmem %s3, 768
      %v7773 = vld [vmem:[%s7772] sm:$0xf]
      %v7774 = vld [vmem:[%s7772 + $0x4] sm:$0xf]
      %v7775 = vld [vmem:[%s7772 + $0x8] sm:$0xf]
      %v7776 = vld [vmem:[%s7772 + $0xc] sm:$0xf]
      %v7777 = vld [vmem:[%s7772 + $0x10] sm:$0xf]
      %v7778 = vld [vmem:[%s7772 + $0x14] sm:$0xf]
      %v7779 = vld [vmem:[%s7772 + $0x18] sm:$0xf]
      %v7780 = vld [vmem:[%s7772 + $0x1c] sm:$0xf]
      %v7781 = vld [vmem:[%s7772 + $0x20] sm:$0xf]
      %v7782 = vld [vmem:[%s7772 + $0x24] sm:$0xf]
      %v7783 = vld [vmem:[%s7772 + $0x28] sm:$0xf]
      %v7784 = vld [vmem:[%s7772 + $0x2c] sm:$0xf]
      %v7785 = vld [vmem:[%s7772 + $0x30] sm:$0xf]
      %v7786 = vld [vmem:[%s7772 + $0x34] sm:$0xf]
      %v7787 = vld [vmem:[%s7772 + $0x38] sm:$0xf]
      %v7788 = vld [vmem:[%s7772 + $0x3c] sm:$0xf]
      %v7790 = vshrl.u32 %v7770, 16
      %v7792 = vrot.slane %v7790, 7
      %v7793 = vrot.slane %v7431, 7
      %v7794 = vor.u32 %v7793, %v7427
      %v7795 = vsel %vm4172, %v7792, %v7794
      %v7796 = vrot.slane %v7439, 7
      %v7797 = vor.u32 %v7796, %v7435
      %v7798 = vsel %vm4172, %v7793, %v7797
      %v7799 = vrot.slane %v7447, 7
      %v7800 = vor.u32 %v7799, %v7443
      %v7801 = vsel %vm4172, %v7796, %v7800
      %v7802 = vrot.slane %v7455, 7
      %v7803 = vor.u32 %v7802, %v7451
      %v7804 = vsel %vm4172, %v7799, %v7803
      %v7805 = vrot.slane %v7463, 7
      %v7806 = vor.u32 %v7805, %v7459
      %v7807 = vsel %vm4172, %v7802, %v7806
      %v7808 = vrot.slane %v7471, 7
      %v7809 = vor.u32 %v7808, %v7467
      %v7810 = vsel %vm4172, %v7805, %v7809
      %v7811 = vrot.slane %v7479, 7
      %v7812 = vor.u32 %v7811, %v7475
      %v7813 = vsel %vm4172, %v7808, %v7812
      %v7814 = vrot.slane %v7487, 7
      %v7815 = vor.u32 %v7814, %v7483
      %v7816 = vsel %vm4172, %v7811, %v7815
      %v7817 = vrot.slane %v7495, 7
      %v7818 = vor.u32 %v7817, %v7491
      %v7819 = vsel %vm4172, %v7814, %v7818
      %v7820 = vrot.slane %v7503, 7
      %v7821 = vor.u32 %v7820, %v7499
      %v7822 = vsel %vm4172, %v7817, %v7821
      %v7823 = vrot.slane %v7511, 7
      %v7824 = vor.u32 %v7823, %v7507
      %v7825 = vsel %vm4172, %v7820, %v7824
      %v7826 = vrot.slane %v7519, 7
      %v7827 = vor.u32 %v7826, %v7515
      %v7828 = vsel %vm4172, %v7823, %v7827
      %v7829 = vrot.slane %v7527, 7
      %v7830 = vor.u32 %v7829, %v7523
      %v7831 = vsel %vm4172, %v7826, %v7830
      %v7833 = vshrl.u32 %v7771, 16
      %v7835 = vrot.slane %v7833, 7
      %v7836 = vshll.u32 %v7771, 16
      %v7838 = vor.u32 %v7835, %v7836
      %v7839 = vsel %vm4172, %v7829, %v7838
      %v7870 = vunpack.c.l.b16 %v7773
      %v7871 = vunpack.c.l.b16 %v7774
      %v7872 = vunpack.c.l.b16 %v7775
      %v7873 = vunpack.c.l.b16 %v7776
      %v7874 = vunpack.c.l.b16 %v7777
      %v7875 = vunpack.c.l.b16 %v7778
      %v7876 = vunpack.c.l.b16 %v7779
      %v7877 = vunpack.c.l.b16 %v7780
      %v7878 = vunpack.c.l.b16 %v7781
      %v7879 = vunpack.c.l.b16 %v7782
      %v7880 = vunpack.c.l.b16 %v7783
      %v7881 = vunpack.c.l.b16 %v7784
      %v7882 = vunpack.c.l.b16 %v7785
      %v7883 = vunpack.c.l.b16 %v7786
      %v7884 = vunpack.c.l.b16 %v7787
      %v7885 = vunpack.c.l.b16 %v7788
      %v7886 = vpack.c.b16 %v7871, %v7870
      %v7887 = vpack.c.b16 %v7873, %v7872
      %v7888 = vpack.c.b16 %v7875, %v7874
      %v7889 = vpack.c.b16 %v7877, %v7876
      %v7890 = vpack.c.b16 %v7879, %v7878
      %v7891 = vpack.c.b16 %v7881, %v7880
      %v7892 = vpack.c.b16 %v7883, %v7882
      %v7893 = vpack.c.b16 %v7885, %v7884
      %7902 = vmatprep.subr.bf16.mxu0 0
      %7903 = vmatpush1.bf16.msra.mxu0 %v7886
      %7904 = vmatprep.subr.bf16.mxu0 0
      %7905 = vmatpush1.bf16.msra.mxu0 %v7887
      %7906 = vmatprep.subr.bf16.mxu0 0
      %7907 = vmatpush1.bf16.msra.mxu0 %v7888
      %7908 = vmatprep.subr.bf16.mxu0 0
      %7909 = vmatpush1.bf16.msra.mxu0 %v7889
      %7910 = vmatprep.subr.bf16.mxu0 0
      %7911 = vmatpush1.bf16.msra.mxu0 %v7890
      %7912 = vmatprep.subr.bf16.mxu0 0
      %7913 = vmatpush1.bf16.msra.mxu0 %v7891
      %7914 = vmatprep.subr.bf16.mxu0 0
      %7915 = vmatpush1.bf16.msra.mxu0 %v7892
      %7916 = vmatprep.subr.bf16.mxu0 0
      %7917 = vmatpush1.bf16.msra.mxu0 %v7893
      %7918 = vmatprep.subr.bf16.mxu0 0
      %7919 = vmatpush1.bf16.msra.mxu0 0
      %7920 = vmatprep.subr.bf16.mxu0 0
      %7921 = vmatpush1.bf16.msra.mxu0 0
      %7922 = vmatprep.subr.bf16.mxu0 0
      %7923 = vmatpush1.bf16.msra.mxu0 0
      %7924 = vmatprep.subr.bf16.mxu0 0
      %7925 = vmatpush1.bf16.msra.mxu0 0
      %7926 = vmatprep.subr.bf16.mxu0 0
      %7927 = vmatpush1.bf16.msra.mxu0 0
      %7928 = vmatprep.subr.bf16.mxu0 0
      %7929 = vmatpush1.bf16.msra.mxu0 0
      %7930 = vmatprep.subr.bf16.mxu0 0
      %7931 = vmatpush1.bf16.msra.mxu0 0
      %7932 = vmatprep.subr.bf16.mxu0 0
      %7933 = vmatpush1.bf16.msra.mxu0 0
      %7934 = vmatprep.mubr.bf16.mxu0 0
      %7935 = vmatmul.mubr.bf16.gmra.mrb[0].mxu0 %v7795
      %v7936 = vpop.f32.mrb[0].mxu0
      %v7937 = vadd.f32 0.0, %v7936
      %v7938 = vpop.f32.mrb[0].mxu0
      %v7939 = vpop.f32.mrb[0].mxu0
      %v7940 = vadd.f32 0.0, %v7939
      %v7941 = vpop.f32.mrb[0].mxu0
      %7942 = vmatprep.mubr.bf16.mxu0 0
      %7943 = vmatmul.mubr.bf16.gmra.mrb[0].mxu0 %v7798
      %v7944 = vpop.f32.mrb[0].mxu0
      %v7945 = vadd.f32 0.0, %v7944
      %v7946 = vpop.f32.mrb[0].mxu0
      %v7947 = vpop.f32.mrb[0].mxu0
      %v7948 = vadd.f32 0.0, %v7947
      %v7949 = vpop.f32.mrb[0].mxu0
      %7950 = vmatprep.mubr.bf16.mxu0 0
      %7951 = vmatmul.mubr.bf16.gmra.mrb[0].mxu0 %v7801
      %v7952 = vpop.f32.mrb[0].mxu0
      %v7953 = vadd.f32 0.0, %v7952
      %v7954 = vpop.f32.mrb[0].mxu0
      %v7955 = vpop.f32.mrb[0].mxu0
      %v7956 = vadd.f32 0.0, %v7955
      %v7957 = vpop.f32.mrb[0].mxu0
      %7958 = vmatprep.mubr.bf16.mxu0 0
      %7959 = vmatmul.mubr.bf16.gmra.mrb[0].mxu0 %v7804
      %v7960 = vpop.f32.mrb[0].mxu0
      %v7961 = vadd.f32 0.0, %v7960
      %v7962 = vpop.f32.mrb[0].mxu0
      %v7963 = vpop.f32.mrb[0].mxu0
      %v7964 = vadd.f32 0.0, %v7963
      %v7965 = vpop.f32.mrb[0].mxu0
      %7966 = vmatprep.mubr.bf16.mxu0 0
      %7967 = vmatmul.mubr.bf16.gmra.mrb[0].mxu0 %v7807
      %v7968 = vpop.f32.mrb[0].mxu0
      %v7969 = vadd.f32 0.0, %v7968
      %v7970 = vpop.f32.mrb[0].mxu0
      %v7971 = vpop.f32.mrb[0].mxu0
      %v7972 = vadd.f32 0.0, %v7971
      %v7973 = vpop.f32.mrb[0].mxu0
      %7974 = vmatprep.mubr.bf16.mxu0 0
      %7975 = vmatmul.mubr.bf16.gmra.mrb[0].mxu0 %v7810
      %v7976 = vpop.f32.mrb[0].mxu0
      %v7977 = vadd.f32 0.0, %v7976
      %v7978 = vpop.f32.mrb[0].mxu0
      %v7979 = vpop.f32.mrb[0].mxu0
      %v7980 = vadd.f32 0.0, %v7979
      %v7981 = vpop.f32.mrb[0].mxu0
      %7982 = vmatprep.mubr.bf16.mxu0 0
      %7983 = vmatmul.mubr.bf16.gmra.mrb[0].mxu0 %v7813
      %v7984 = vpop.f32.mrb[0].mxu0
      %v7985 = vadd.f32 0.0, %v7984
      %v7986 = vpop.f32.mrb[0].mxu0
      %v7987 = vpop.f32.mrb[0].mxu0
      %v7988 = vadd.f32 0.0, %v7987
      %v7989 = vpop.f32.mrb[0].mxu0
      %7990 = vmatprep.mubr.bf16.mxu0 0
      %7991 = vmatmul.mubr.bf16.gmra.mrb[0].mxu0 %v7816
      %v7992 = vpop.f32.mrb[0].mxu0
      %v7993 = vadd.f32 0.0, %v7992
      %v7994 = vpop.f32.mrb[0].mxu0
      %v7995 = vpop.f32.mrb[0].mxu0
      %v7996 = vadd.f32 0.0, %v7995
      %v7997 = vpop.f32.mrb[0].mxu0
      %7998 = vmatprep.mubr.bf16.mxu0 0
      %7999 = vmatmul.mubr.bf16.gmra.mrb[0].mxu0 %v7819
      %v8000 = vpop.f32.mrb[0].mxu0
      %v8001 = vadd.f32 0.0, %v8000
      %v8002 = vpop.f32.mrb[0].mxu0
      %v8003 = vpop.f32.mrb[0].mxu0
      %v8004 = vadd.f32 0.0, %v8003
      %v8005 = vpop.f32.mrb[0].mxu0
      %8006 = vmatprep.mubr.bf16.mxu0 0
      %8007 = vmatmul.mubr.bf16.gmra.mrb[0].mxu0 %v7822
      %v8008 = vpop.f32.mrb[0].mxu0
      %v8009 = vadd.f32 0.0, %v8008
      %v8010 = vpop.f32.mrb[0].mxu0
      %v8011 = vpop.f32.mrb[0].mxu0
      %v8012 = vadd.f32 0.0, %v8011
      %v8013 = vpop.f32.mrb[0].mxu0
      %8014 = vmatprep.mubr.bf16.mxu0 0
      %8015 = vmatmul.mubr.bf16.gmra.mrb[0].mxu0 %v7825
      %v8016 = vpop.f32.mrb[0].mxu0
      %v8017 = vadd.f32 0.0, %v8016
      %v8018 = vpop.f32.mrb[0].mxu0
      %v8019 = vpop.f32.mrb[0].mxu0
      %v8020 = vadd.f32 0.0, %v8019
      %v8021 = vpop.f32.mrb[0].mxu0
      %8022 = vmatprep.mubr.bf16.mxu0 0
      %8023 = vmatmul.mubr.bf16.gmra.mrb[0].mxu0 %v7828
      %v8024 = vpop.f32.mrb[0].mxu0
      %v8025 = vadd.f32 0.0, %v8024
      %v8026 = vpop.f32.mrb[0].mxu0
      %v8027 = vpop.f32.mrb[0].mxu0
      %v8028 = vadd.f32 0.0, %v8027
      %v8029 = vpop.f32.mrb[0].mxu0
      %8030 = vmatprep.mubr.bf16.mxu0 0
      %8031 = vmatmul.mubr.bf16.gmra.mrb[0].mxu0 %v7831
      %v8032 = vpop.f32.mrb[0].mxu0
      %v8033 = vadd.f32 0.0, %v8032
      %v8034 = vpop.f32.mrb[0].mxu0
      %v8035 = vpop.f32.mrb[0].mxu0
      %v8036 = vadd.f32 0.0, %v8035
      %v8037 = vpop.f32.mrb[0].mxu0
      %8038 = vmatprep.mubr.bf16.mxu0 0
      %8039 = vmatmul.mubr.bf16.gmra.mrb[0].mxu0 %v7839
      %v8040 = vpop.f32.mrb[0].mxu0
      %v8041 = vadd.f32 0.0, %v8040
      %v8042 = vpop.f32.mrb[0].mxu0
      %v8043 = vpop.f32.mrb[0].mxu0
      %v8044 = vadd.f32 0.0, %v8043
      %v8045 = vpop.f32.mrb[0].mxu0
      %8046 = vdwg.mxu0
      %v8047 = vadd.f32 %v7742, %v7937
      %v8048 = vadd.f32 %v7743, %v7940
      %v8049 = vadd.f32 %v7744, %v7945
      %v8050 = vadd.f32 %v7745, %v7948
      %v8051 = vadd.f32 %v7746, %v7953
      %v8052 = vadd.f32 %v7747, %v7956
      %v8053 = vadd.f32 %v7748, %v7961
      %v8054 = vadd.f32 %v7749, %v7964
      %v8055 = vadd.f32 %v7750, %v7969
      %v8056 = vadd.f32 %v7751, %v7972
      %v8057 = vadd.f32 %v7752, %v7977
      %v8058 = vadd.f32 %v7753, %v7980
      %v8059 = vadd.f32 %v7754, %v7985
      %v8060 = vadd.f32 %v7755, %v7988
      %v8061 = vadd.f32 %v7756, %v7993
      %v8062 = vadd.f32 %v7757, %v7996
      %v8063 = vadd.f32 %v7758, %v8001
      %v8064 = vadd.f32 %v7759, %v8004
      %v8065 = vadd.f32 %v7760, %v8009
      %v8066 = vadd.f32 %v7761, %v8012
      %v8067 = vadd.f32 %v7762, %v8017
      %v8068 = vadd.f32 %v7763, %v8020
      %v8069 = vadd.f32 %v7764, %v8025
      %v8070 = vadd.f32 %v7765, %v8028
      %v8071 = vadd.f32 %v7766, %v8033
      %v8072 = vadd.f32 %v7767, %v8036
      %v8073 = vadd.f32 %v7768, %v8041
      %v8074 = vadd.f32 %v7769, %v8044
      %s8075 = scalar_lea.vmem %s3, 832
      %v8076 = vld [vmem:[%s8075] sm:$0xf]
      %v8077 = vld [vmem:[%s8075 + $0x4] sm:$0xf]
      %v8078 = vld [vmem:[%s8075 + $0x8] sm:$0xf]
      %v8079 = vld [vmem:[%s8075 + $0xc] sm:$0xf]
      %v8080 = vld [vmem:[%s8075 + $0x10] sm:$0xf]
      %v8081 = vld [vmem:[%s8075 + $0x14] sm:$0xf]
      %v8082 = vld [vmem:[%s8075 + $0x18] sm:$0xf]
      %v8083 = vld [vmem:[%s8075 + $0x1c] sm:$0xf]
      %v8084 = vld [vmem:[%s8075 + $0x20] sm:$0xf]
      %v8085 = vld [vmem:[%s8075 + $0x24] sm:$0xf]
      %v8086 = vld [vmem:[%s8075 + $0x28] sm:$0xf]
      %v8087 = vld [vmem:[%s8075 + $0x2c] sm:$0xf]
      %v8088 = vld [vmem:[%s8075 + $0x30] sm:$0xf]
      %v8089 = vld [vmem:[%s8075 + $0x34] sm:$0xf]
      %v8090 = vld [vmem:[%s8075 + $0x38] sm:$0xf]
      %v8091 = vld [vmem:[%s8075 + $0x3c] sm:$0xf]
      %v8108 = vunpack.c.l.b16 %v8076
      %v8109 = vunpack.c.l.b16 %v8077
      %v8110 = vunpack.c.l.b16 %v8078
      %v8111 = vunpack.c.l.b16 %v8079
      %v8112 = vunpack.c.l.b16 %v8080
      %v8113 = vunpack.c.l.b16 %v8081
      %v8114 = vunpack.c.l.b16 %v8082
      %v8115 = vunpack.c.l.b16 %v8083
      %v8116 = vunpack.c.l.b16 %v8084
      %v8117 = vunpack.c.l.b16 %v8085
      %v8118 = vunpack.c.l.b16 %v8086
      %v8119 = vunpack.c.l.b16 %v8087
      %v8120 = vunpack.c.l.b16 %v8088
      %v8121 = vunpack.c.l.b16 %v8089
      %v8122 = vunpack.c.l.b16 %v8090
      %v8123 = vunpack.c.l.b16 %v8091
      %v8124 = vpack.c.b16 %v8109, %v8108
      %v8125 = vpack.c.b16 %v8111, %v8110
      %v8126 = vpack.c.b16 %v8113, %v8112
      %v8127 = vpack.c.b16 %v8115, %v8114
      %v8128 = vpack.c.b16 %v8117, %v8116
      %v8129 = vpack.c.b16 %v8119, %v8118
      %v8130 = vpack.c.b16 %v8121, %v8120
      %v8131 = vpack.c.b16 %v8123, %v8122
      %8140 = vmatprep.subr.bf16.mxu0 0
      %8141 = vmatpush1.bf16.msra.mxu0 %v8124
      %8142 = vmatprep.subr.bf16.mxu0 0
      %8143 = vmatpush1.bf16.msra.mxu0 %v8125
      %8144 = vmatprep.subr.bf16.mxu0 0
      %8145 = vmatpush1.bf16.msra.mxu0 %v8126
      %8146 = vmatprep.subr.bf16.mxu0 0
      %8147 = vmatpush1.bf16.msra.mxu0 %v8127
      %8148 = vmatprep.subr.bf16.mxu0 0
      %8149 = vmatpush1.bf16.msra.mxu0 %v8128
      %8150 = vmatprep.subr.bf16.mxu0 0
      %8151 = vmatpush1.bf16.msra.mxu0 %v8129
      %8152 = vmatprep.subr.bf16.mxu0 0
      %8153 = vmatpush1.bf16.msra.mxu0 %v8130
      %8154 = vmatprep.subr.bf16.mxu0 0
      %8155 = vmatpush1.bf16.msra.mxu0 %v8131
      %8156 = vmatprep.subr.bf16.mxu0 0
      %8157 = vmatpush1.bf16.msra.mxu0 0
      %8158 = vmatprep.subr.bf16.mxu0 0
      %8159 = vmatpush1.bf16.msra.mxu0 0
      %8160 = vmatprep.subr.bf16.mxu0 0
      %8161 = vmatpush1.bf16.msra.mxu0 0
      %8162 = vmatprep.subr.bf16.mxu0 0
      %8163 = vmatpush1.bf16.msra.mxu0 0
      %8164 = vmatprep.subr.bf16.mxu0 0
      %8165 = vmatpush1.bf16.msra.mxu0 0
      %8166 = vmatprep.subr.bf16.mxu0 0
      %8167 = vmatpush1.bf16.msra.mxu0 0
      %8168 = vmatprep.subr.bf16.mxu0 0
      %8169 = vmatpush1.bf16.msra.mxu0 0
      %8170 = vmatprep.subr.bf16.mxu0 0
      %8171 = vmatpush1.bf16.msra.mxu0 0
      %8172 = vmatprep.mubr.bf16.mxu0 0
      %8173 = vmatmul.mubr.bf16.gmra.mrb[0].mxu0 %v7388
      %v8174 = vpop.f32.mrb[0].mxu0
      %v8175 = vadd.f32 0.0, %v8174
      %v8176 = vpop.f32.mrb[0].mxu0
      %v8177 = vpop.f32.mrb[0].mxu0
      %v8178 = vadd.f32 0.0, %v8177
      %v8179 = vpop.f32.mrb[0].mxu0
      %8180 = vmatprep.mubr.bf16.mxu0 0
      %8181 = vmatmul.mubr.bf16.gmra.mrb[0].mxu0 %v7389
      %v8182 = vpop.f32.mrb[0].mxu0
      %v8183 = vadd.f32 0.0, %v8182
      %v8184 = vpop.f32.mrb[0].mxu0
      %v8185 = vpop.f32.mrb[0].mxu0
      %v8186 = vadd.f32 0.0, %v8185
      %v8187 = vpop.f32.mrb[0].mxu0
      %8188 = vmatprep.mubr.bf16.mxu0 0
      %8189 = vmatmul.mubr.bf16.gmra.mrb[0].mxu0 %v7390
      %v8190 = vpop.f32.mrb[0].mxu0
      %v8191 = vadd.f32 0.0, %v8190
      %v8192 = vpop.f32.mrb[0].mxu0
      %v8193 = vpop.f32.mrb[0].mxu0
      %v8194 = vadd.f32 0.0, %v8193
      %v8195 = vpop.f32.mrb[0].mxu0
      %8196 = vmatprep.mubr.bf16.mxu0 0
      %8197 = vmatmul.mubr.bf16.gmra.mrb[0].mxu0 %v7391
      %v8198 = vpop.f32.mrb[0].mxu0
      %v8199 = vadd.f32 0.0, %v8198
      %v8200 = vpop.f32.mrb[0].mxu0
      %v8201 = vpop.f32.mrb[0].mxu0
      %v8202 = vadd.f32 0.0, %v8201
      %v8203 = vpop.f32.mrb[0].mxu0
      %8204 = vmatprep.mubr.bf16.mxu0 0
      %8205 = vmatmul.mubr.bf16.gmra.mrb[0].mxu0 %v7392
      %v8206 = vpop.f32.mrb[0].mxu0
      %v8207 = vadd.f32 0.0, %v8206
      %v8208 = vpop.f32.mrb[0].mxu0
      %v8209 = vpop.f32.mrb[0].mxu0
      %v8210 = vadd.f32 0.0, %v8209
      %v8211 = vpop.f32.mrb[0].mxu0
      %8212 = vmatprep.mubr.bf16.mxu0 0
      %8213 = vmatmul.mubr.bf16.gmra.mrb[0].mxu0 %v7393
      %v8214 = vpop.f32.mrb[0].mxu0
      %v8215 = vadd.f32 0.0, %v8214
      %v8216 = vpop.f32.mrb[0].mxu0
      %v8217 = vpop.f32.mrb[0].mxu0
      %v8218 = vadd.f32 0.0, %v8217
      %v8219 = vpop.f32.mrb[0].mxu0
      %8220 = vmatprep.mubr.bf16.mxu0 0
      %8221 = vmatmul.mubr.bf16.gmra.mrb[0].mxu0 %v7394
      %v8222 = vpop.f32.mrb[0].mxu0
      %v8223 = vadd.f32 0.0, %v8222
      %v8224 = vpop.f32.mrb[0].mxu0
      %v8225 = vpop.f32.mrb[0].mxu0
      %v8226 = vadd.f32 0.0, %v8225
      %v8227 = vpop.f32.mrb[0].mxu0
      %8228 = vmatprep.mubr.bf16.mxu0 0
      %8229 = vmatmul.mubr.bf16.gmra.mrb[0].mxu0 %v7395
      %v8230 = vpop.f32.mrb[0].mxu0
      %v8231 = vadd.f32 0.0, %v8230
      %v8232 = vpop.f32.mrb[0].mxu0
      %v8233 = vpop.f32.mrb[0].mxu0
      %v8234 = vadd.f32 0.0, %v8233
      %v8235 = vpop.f32.mrb[0].mxu0
      %8236 = vmatprep.mubr.bf16.mxu0 0
      %8237 = vmatmul.mubr.bf16.gmra.mrb[0].mxu0 %v7396
      %v8238 = vpop.f32.mrb[0].mxu0
      %v8239 = vadd.f32 0.0, %v8238
      %v8240 = vpop.f32.mrb[0].mxu0
      %v8241 = vpop.f32.mrb[0].mxu0
      %v8242 = vadd.f32 0.0, %v8241
      %v8243 = vpop.f32.mrb[0].mxu0
      %8244 = vmatprep.mubr.bf16.mxu0 0
      %8245 = vmatmul.mubr.bf16.gmra.mrb[0].mxu0 %v7397
      %v8246 = vpop.f32.mrb[0].mxu0
      %v8247 = vadd.f32 0.0, %v8246
      %v8248 = vpop.f32.mrb[0].mxu0
      %v8249 = vpop.f32.mrb[0].mxu0
      %v8250 = vadd.f32 0.0, %v8249
      %v8251 = vpop.f32.mrb[0].mxu0
      %8252 = vmatprep.mubr.bf16.mxu0 0
      %8253 = vmatmul.mubr.bf16.gmra.mrb[0].mxu0 %v7398
      %v8254 = vpop.f32.mrb[0].mxu0
      %v8255 = vadd.f32 0.0, %v8254
      %v8256 = vpop.f32.mrb[0].mxu0
      %v8257 = vpop.f32.mrb[0].mxu0
      %v8258 = vadd.f32 0.0, %v8257
      %v8259 = vpop.f32.mrb[0].mxu0
      %8260 = vmatprep.mubr.bf16.mxu0 0
      %8261 = vmatmul.mubr.bf16.gmra.mrb[0].mxu0 %v7399
      %v8262 = vpop.f32.mrb[0].mxu0
      %v8263 = vadd.f32 0.0, %v8262
      %v8264 = vpop.f32.mrb[0].mxu0
      %v8265 = vpop.f32.mrb[0].mxu0
      %v8266 = vadd.f32 0.0, %v8265
      %v8267 = vpop.f32.mrb[0].mxu0
      %8268 = vmatprep.mubr.bf16.mxu0 0
      %8269 = vmatmul.mubr.bf16.gmra.mrb[0].mxu0 %v7400
      %v8270 = vpop.f32.mrb[0].mxu0
      %v8271 = vadd.f32 0.0, %v8270
      %v8272 = vpop.f32.mrb[0].mxu0
      %v8273 = vpop.f32.mrb[0].mxu0
      %v8274 = vadd.f32 0.0, %v8273
      %v8275 = vpop.f32.mrb[0].mxu0
      %8276 = vmatprep.mubr.bf16.mxu0 0
      %8277 = vmatmul.mubr.bf16.gmra.mrb[0].mxu0 %v7771
      %v8278 = vpop.f32.mrb[0].mxu0
      %v8279 = vadd.f32 0.0, %v8278
      %v8280 = vpop.f32.mrb[0].mxu0
      %v8281 = vpop.f32.mrb[0].mxu0
      %v8282 = vadd.f32 0.0, %v8281
      %v8283 = vpop.f32.mrb[0].mxu0
      %8284 = vdwg.mxu0
      %v8285 = vadd.f32 %v8047, %v8175
      %v8286 = vadd.f32 %v8048, %v8178
      %v8287 = vadd.f32 %v8049, %v8183
      %v8288 = vadd.f32 %v8050, %v8186
      %v8289 = vadd.f32 %v8051, %v8191
      %v8290 = vadd.f32 %v8052, %v8194
      %v8291 = vadd.f32 %v8053, %v8199
      %v8292 = vadd.f32 %v8054, %v8202
      %v8293 = vadd.f32 %v8055, %v8207
      %v8294 = vadd.f32 %v8056, %v8210
      %v8295 = vadd.f32 %v8057, %v8215
      %v8296 = vadd.f32 %v8058, %v8218
      %v8297 = vadd.f32 %v8059, %v8223
      %v8298 = vadd.f32 %v8060, %v8226
      %v8299 = vadd.f32 %v8061, %v8231
      %v8300 = vadd.f32 %v8062, %v8234
      %v8301 = vadd.f32 %v8063, %v8239
      %v8302 = vadd.f32 %v8064, %v8242
      %v8303 = vadd.f32 %v8065, %v8247
      %v8304 = vadd.f32 %v8066, %v8250
      %v8305 = vadd.f32 %v8067, %v8255
      %v8306 = vadd.f32 %v8068, %v8258
      %v8307 = vadd.f32 %v8069, %v8263
      %v8308 = vadd.f32 %v8070, %v8266
      %v8309 = vadd.f32 %v8071, %v8271
      %v8310 = vadd.f32 %v8072, %v8274
      %v8311 = vadd.f32 %v8073, %v8279
      %v8312 = vadd.f32 %v8074, %v8282
      %v8313 = vld [vmem:[#allocation2 + $0x10] sm:$0xff]
      %v8314 = vld [vmem:[#allocation2 + $0x18] sm:$0xff]
      %v8315 = vld [vmem:[#allocation2 + $0x20] sm:$0xff]
      %v8316 = vld [vmem:[#allocation2 + $0x28] sm:$0xff]
      %v8317 = vld [vmem:[#allocation2 + $0x30] sm:$0xff]
      %v8318 = vld [vmem:[#allocation2 + $0x38] sm:$0xff]
      %v8319 = vld [vmem:[#allocation2 + $0x40] sm:$0xff]
      %v8320 = vld [vmem:[#allocation2 + $0x48] sm:$0xff]
      %v8321 = vld [vmem:[#allocation2 + $0x50] sm:$0xff]
      %v8322 = vld [vmem:[#allocation2 + $0x58] sm:$0xff]
      %v8323 = vld [vmem:[#allocation2 + $0x60] sm:$0xff]
      %v8324 = vld [vmem:[#allocation2 + $0x68] sm:$0xff]
      %v8325 = vld [vmem:[#allocation2 + $0x70] sm:$0xff]
      %v8326 = vld [vmem:[#allocation2 + $0x78] sm:$0xff]
      %v8327 = vld [vmem:[#allocation2 + $0x80] sm:$0x1]
      %s8328 = scalar_lea.vmem %s3, 896
      %v8329 = vld [vmem:[%s8328] sm:$0xf]
      %v8330 = vld [vmem:[%s8328 + $0x4] sm:$0xf]
      %v8331 = vld [vmem:[%s8328 + $0x8] sm:$0xf]
      %v8332 = vld [vmem:[%s8328 + $0xc] sm:$0xf]
      %v8333 = vld [vmem:[%s8328 + $0x10] sm:$0xf]
      %v8334 = vld [vmem:[%s8328 + $0x14] sm:$0xf]
      %v8335 = vld [vmem:[%s8328 + $0x18] sm:$0xf]
      %v8336 = vld [vmem:[%s8328 + $0x1c] sm:$0xf]
      %v8337 = vld [vmem:[%s8328 + $0x20] sm:$0xf]
      %v8338 = vld [vmem:[%s8328 + $0x24] sm:$0xf]
      %v8339 = vld [vmem:[%s8328 + $0x28] sm:$0xf]
      %v8340 = vld [vmem:[%s8328 + $0x2c] sm:$0xf]
      %v8341 = vld [vmem:[%s8328 + $0x30] sm:$0xf]
      %v8342 = vld [vmem:[%s8328 + $0x34] sm:$0xf]
      %v8343 = vld [vmem:[%s8328 + $0x38] sm:$0xf]
      %v8344 = vld [vmem:[%s8328 + $0x3c] sm:$0xf]
      %v8346 = vshrl.u32 %v8313, 16
      %v8348 = vshll.u32 %v8313, 16
      %v8350 = vrot.slane %v8348, 1
      %v8351 = vor.u32 %v8346, %v8350
      %v8353 = vshll.u32 %v8314, 16
      %v8355 = vrot.slane %v8353, 1
      %v8356 = vsel %vm388, %v8351, %v8355
      %v8357 = vshrl.u32 %v8314, 16
      %v8359 = vor.u32 %v8357, %v8355
      %v8361 = vshll.u32 %v8315, 16
      %v8363 = vrot.slane %v8361, 1
      %v8364 = vsel %vm388, %v8359, %v8363
      %v8365 = vshrl.u32 %v8315, 16
      %v8367 = vor.u32 %v8365, %v8363
      %v8369 = vshll.u32 %v8316, 16
      %v8371 = vrot.slane %v8369, 1
      %v8372 = vsel %vm388, %v8367, %v8371
      %v8373 = vshrl.u32 %v8316, 16
      %v8375 = vor.u32 %v8373, %v8371
      %v8377 = vshll.u32 %v8317, 16
      %v8379 = vrot.slane %v8377, 1
      %v8380 = vsel %vm388, %v8375, %v8379
      %v8381 = vshrl.u32 %v8317, 16
      %v8383 = vor.u32 %v8381, %v8379
      %v8385 = vshll.u32 %v8318, 16
      %v8387 = vrot.slane %v8385, 1
      %v8388 = vsel %vm388, %v8383, %v8387
      %v8389 = vshrl.u32 %v8318, 16
      %v8391 = vor.u32 %v8389, %v8387
      %v8393 = vshll.u32 %v8319, 16
      %v8395 = vrot.slane %v8393, 1
      %v8396 = vsel %vm388, %v8391, %v8395
      %v8397 = vshrl.u32 %v8319, 16
      %v8399 = vor.u32 %v8397, %v8395
      %v8401 = vshll.u32 %v8320, 16
      %v8403 = vrot.slane %v8401, 1
      %v8404 = vsel %vm388, %v8399, %v8403
      %v8405 = vshrl.u32 %v8320, 16
      %v8407 = vor.u32 %v8405, %v8403
      %v8409 = vshll.u32 %v8321, 16
      %v8411 = vrot.slane %v8409, 1
      %v8412 = vsel %vm388, %v8407, %v8411
      %v8413 = vshrl.u32 %v8321, 16
      %v8415 = vor.u32 %v8413, %v8411
      %v8417 = vshll.u32 %v8322, 16
      %v8419 = vrot.slane %v8417, 1
      %v8420 = vsel %vm388, %v8415, %v8419
      %v8421 = vshrl.u32 %v8322, 16
      %v8423 = vor.u32 %v8421, %v8419
      %v8425 = vshll.u32 %v8323, 16
      %v8427 = vrot.slane %v8425, 1
      %v8428 = vsel %vm388, %v8423, %v8427
      %v8429 = vshrl.u32 %v8323, 16
      %v8431 = vor.u32 %v8429, %v8427
      %v8433 = vshll.u32 %v8324, 16
      %v8435 = vrot.slane %v8433, 1
      %v8436 = vsel %vm388, %v8431, %v8435
      %v8437 = vshrl.u32 %v8324, 16
      %v8439 = vor.u32 %v8437, %v8435
      %v8441 = vshll.u32 %v8325, 16
      %v8443 = vrot.slane %v8441, 1
      %v8444 = vsel %vm388, %v8439, %v8443
      %v8445 = vshrl.u32 %v8325, 16
      %v8447 = vor.u32 %v8445, %v8443
      %v8449 = vshll.u32 %v8326, 16
      %v8451 = vrot.slane %v8449, 1
      %v8452 = vsel %vm388, %v8447, %v8451
      %v8453 = vshrl.u32 %v8326, 16
      %v8455 = vor.u32 %v8453, %v8451
      %v8457 = vshll.u32 %v8327, 16
      %v8459 = vrot.slane %v8457, 1
      %v8460 = vsel %vm388, %v8455, %v8459
      %v8491 = vunpack.c.l.b16 %v8329
      %v8492 = vunpack.c.l.b16 %v8330
      %v8493 = vunpack.c.l.b16 %v8331
      %v8494 = vunpack.c.l.b16 %v8332
      %v8495 = vunpack.c.l.b16 %v8333
      %v8496 = vunpack.c.l.b16 %v8334
      %v8497 = vunpack.c.l.b16 %v8335
      %v8498 = vunpack.c.l.b16 %v8336
      %v8499 = vunpack.c.l.b16 %v8337
      %v8500 = vunpack.c.l.b16 %v8338
      %v8501 = vunpack.c.l.b16 %v8339
      %v8502 = vunpack.c.l.b16 %v8340
      %v8503 = vunpack.c.l.b16 %v8341
      %v8504 = vunpack.c.l.b16 %v8342
      %v8505 = vunpack.c.l.b16 %v8343
      %v8506 = vunpack.c.l.b16 %v8344
      %v8507 = vpack.c.b16 %v8492, %v8491
      %v8508 = vpack.c.b16 %v8494, %v8493
      %v8509 = vpack.c.b16 %v8496, %v8495
      %v8510 = vpack.c.b16 %v8498, %v8497
      %v8511 = vpack.c.b16 %v8500, %v8499
      %v8512 = vpack.c.b16 %v8502, %v8501
      %v8513 = vpack.c.b16 %v8504, %v8503
      %v8514 = vpack.c.b16 %v8506, %v8505
      %8523 = vmatprep.subr.bf16.mxu0 0
      %8524 = vmatpush1.bf16.msra.mxu0 %v8507
      %8525 = vmatprep.subr.bf16.mxu0 0
      %8526 = vmatpush1.bf16.msra.mxu0 %v8508
      %8527 = vmatprep.subr.bf16.mxu0 0
      %8528 = vmatpush1.bf16.msra.mxu0 %v8509
      %8529 = vmatprep.subr.bf16.mxu0 0
      %8530 = vmatpush1.bf16.msra.mxu0 %v8510
      %8531 = vmatprep.subr.bf16.mxu0 0
      %8532 = vmatpush1.bf16.msra.mxu0 %v8511
      %8533 = vmatprep.subr.bf16.mxu0 0
      %8534 = vmatpush1.bf16.msra.mxu0 %v8512
      %8535 = vmatprep.subr.bf16.mxu0 0
      %8536 = vmatpush1.bf16.msra.mxu0 %v8513
      %8537 = vmatprep.subr.bf16.mxu0 0
      %8538 = vmatpush1.bf16.msra.mxu0 %v8514
      %8539 = vmatprep.subr.bf16.mxu0 0
      %8540 = vmatpush1.bf16.msra.mxu0 0
      %8541 = vmatprep.subr.bf16.mxu0 0
      %8542 = vmatpush1.bf16.msra.mxu0 0
      %8543 = vmatprep.subr.bf16.mxu0 0
      %8544 = vmatpush1.bf16.msra.mxu0 0
      %8545 = vmatprep.subr.bf16.mxu0 0
      %8546 = vmatpush1.bf16.msra.mxu0 0
      %8547 = vmatprep.subr.bf16.mxu0 0
      %8548 = vmatpush1.bf16.msra.mxu0 0
      %8549 = vmatprep.subr.bf16.mxu0 0
      %8550 = vmatpush1.bf16.msra.mxu0 0
      %8551 = vmatprep.subr.bf16.mxu0 0
      %8552 = vmatpush1.bf16.msra.mxu0 0
      %8553 = vmatprep.subr.bf16.mxu0 0
      %8554 = vmatpush1.bf16.msra.mxu0 0
      %8555 = vmatprep.mubr.bf16.mxu0 0
      %8556 = vmatmul.mubr.bf16.gmra.mrb[0].mxu0 %v8356
      %v8557 = vpop.f32.mrb[0].mxu0
      %v8558 = vadd.f32 0.0, %v8557
      %v8559 = vpop.f32.mrb[0].mxu0
      %v8560 = vpop.f32.mrb[0].mxu0
      %v8561 = vadd.f32 0.0, %v8560
      %v8562 = vpop.f32.mrb[0].mxu0
      %8563 = vmatprep.mubr.bf16.mxu0 0
      %8564 = vmatmul.mubr.bf16.gmra.mrb[0].mxu0 %v8364
      %v8565 = vpop.f32.mrb[0].mxu0
      %v8566 = vadd.f32 0.0, %v8565
      %v8567 = vpop.f32.mrb[0].mxu0
      %v8568 = vpop.f32.mrb[0].mxu0
      %v8569 = vadd.f32 0.0, %v8568
      %v8570 = vpop.f32.mrb[0].mxu0
      %8571 = vmatprep.mubr.bf16.mxu0 0
      %8572 = vmatmul.mubr.bf16.gmra.mrb[0].mxu0 %v8372
      %v8573 = vpop.f32.mrb[0].mxu0
      %v8574 = vadd.f32 0.0, %v8573
      %v8575 = vpop.f32.mrb[0].mxu0
      %v8576 = vpop.f32.mrb[0].mxu0
      %v8577 = vadd.f32 0.0, %v8576
      %v8578 = vpop.f32.mrb[0].mxu0
      %8579 = vmatprep.mubr.bf16.mxu0 0
      %8580 = vmatmul.mubr.bf16.gmra.mrb[0].mxu0 %v8380
      %v8581 = vpop.f32.mrb[0].mxu0
      %v8582 = vadd.f32 0.0, %v8581
      %v8583 = vpop.f32.mrb[0].mxu0
      %v8584 = vpop.f32.mrb[0].mxu0
      %v8585 = vadd.f32 0.0, %v8584
      %v8586 = vpop.f32.mrb[0].mxu0
      %8587 = vmatprep.mubr.bf16.mxu0 0
      %8588 = vmatmul.mubr.bf16.gmra.mrb[0].mxu0 %v8388
      %v8589 = vpop.f32.mrb[0].mxu0
      %v8590 = vadd.f32 0.0, %v8589
      %v8591 = vpop.f32.mrb[0].mxu0
      %v8592 = vpop.f32.mrb[0].mxu0
      %v8593 = vadd.f32 0.0, %v8592
      %v8594 = vpop.f32.mrb[0].mxu0
      %8595 = vmatprep.mubr.bf16.mxu0 0
      %8596 = vmatmul.mubr.bf16.gmra.mrb[0].mxu0 %v8396
      %v8597 = vpop.f32.mrb[0].mxu0
      %v8598 = vadd.f32 0.0, %v8597
      %v8599 = vpop.f32.mrb[0].mxu0
      %v8600 = vpop.f32.mrb[0].mxu0
      %v8601 = vadd.f32 0.0, %v8600
      %v8602 = vpop.f32.mrb[0].mxu0
      %8603 = vmatprep.mubr.bf16.mxu0 0
      %8604 = vmatmul.mubr.bf16.gmra.mrb[0].mxu0 %v8404
      %v8605 = vpop.f32.mrb[0].mxu0
      %v8606 = vadd.f32 0.0, %v8605
      %v8607 = vpop.f32.mrb[0].mxu0
      %v8608 = vpop.f32.mrb[0].mxu0
      %v8609 = vadd.f32 0.0, %v8608
      %v8610 = vpop.f32.mrb[0].mxu0
      %8611 = vmatprep.mubr.bf16.mxu0 0
      %8612 = vmatmul.mubr.bf16.gmra.mrb[0].mxu0 %v8412
      %v8613 = vpop.f32.mrb[0].mxu0
      %v8614 = vadd.f32 0.0, %v8613
      %v8615 = vpop.f32.mrb[0].mxu0
      %v8616 = vpop.f32.mrb[0].mxu0
      %v8617 = vadd.f32 0.0, %v8616
      %v8618 = vpop.f32.mrb[0].mxu0
      %8619 = vmatprep.mubr.bf16.mxu0 0
      %8620 = vmatmul.mubr.bf16.gmra.mrb[0].mxu0 %v8420
      %v8621 = vpop.f32.mrb[0].mxu0
      %v8622 = vadd.f32 0.0, %v8621
      %v8623 = vpop.f32.mrb[0].mxu0
      %v8624 = vpop.f32.mrb[0].mxu0
      %v8625 = vadd.f32 0.0, %v8624
      %v8626 = vpop.f32.mrb[0].mxu0
      %8627 = vmatprep.mubr.bf16.mxu0 0
      %8628 = vmatmul.mubr.bf16.gmra.mrb[0].mxu0 %v8428
      %v8629 = vpop.f32.mrb[0].mxu0
      %v8630 = vadd.f32 0.0, %v8629
      %v8631 = vpop.f32.mrb[0].mxu0
      %v8632 = vpop.f32.mrb[0].mxu0
      %v8633 = vadd.f32 0.0, %v8632
      %v8634 = vpop.f32.mrb[0].mxu0
      %8635 = vmatprep.mubr.bf16.mxu0 0
      %8636 = vmatmul.mubr.bf16.gmra.mrb[0].mxu0 %v8436
      %v8637 = vpop.f32.mrb[0].mxu0
      %v8638 = vadd.f32 0.0, %v8637
      %v8639 = vpop.f32.mrb[0].mxu0
      %v8640 = vpop.f32.mrb[0].mxu0
      %v8641 = vadd.f32 0.0, %v8640
      %v8642 = vpop.f32.mrb[0].mxu0
      %8643 = vmatprep.mubr.bf16.mxu0 0
      %8644 = vmatmul.mubr.bf16.gmra.mrb[0].mxu0 %v8444
      %v8645 = vpop.f32.mrb[0].mxu0
      %v8646 = vadd.f32 0.0, %v8645
      %v8647 = vpop.f32.mrb[0].mxu0
      %v8648 = vpop.f32.mrb[0].mxu0
      %v8649 = vadd.f32 0.0, %v8648
      %v8650 = vpop.f32.mrb[0].mxu0
      %8651 = vmatprep.mubr.bf16.mxu0 0
      %8652 = vmatmul.mubr.bf16.gmra.mrb[0].mxu0 %v8452
      %v8653 = vpop.f32.mrb[0].mxu0
      %v8654 = vadd.f32 0.0, %v8653
      %v8655 = vpop.f32.mrb[0].mxu0
      %v8656 = vpop.f32.mrb[0].mxu0
      %v8657 = vadd.f32 0.0, %v8656
      %v8658 = vpop.f32.mrb[0].mxu0
      %8659 = vmatprep.mubr.bf16.mxu0 0
      %8660 = vmatmul.mubr.bf16.gmra.mrb[0].mxu0 %v8460
      %v8661 = vpop.f32.mrb[0].mxu0
      %v8662 = vadd.f32 0.0, %v8661
      %v8663 = vpop.f32.mrb[0].mxu0
      %v8664 = vpop.f32.mrb[0].mxu0
      %v8665 = vadd.f32 0.0, %v8664
      %v8666 = vpop.f32.mrb[0].mxu0
      %8667 = vdwg.mxu0
      %v8668 = vadd.f32 %v8285, %v8558
      %v8669 = vadd.f32 %v8286, %v8561
      %v8670 = vadd.f32 %v8287, %v8566
      %v8671 = vadd.f32 %v8288, %v8569
      %v8672 = vadd.f32 %v8289, %v8574
      %v8673 = vadd.f32 %v8290, %v8577
      %v8674 = vadd.f32 %v8291, %v8582
      %v8675 = vadd.f32 %v8292, %v8585
      %v8676 = vadd.f32 %v8293, %v8590
      %v8677 = vadd.f32 %v8294, %v8593
      %v8678 = vadd.f32 %v8295, %v8598
      %v8679 = vadd.f32 %v8296, %v8601
      %v8680 = vadd.f32 %v8297, %v8606
      %v8681 = vadd.f32 %v8298, %v8609
      %v8682 = vadd.f32 %v8299, %v8614
      %v8683 = vadd.f32 %v8300, %v8617
      %v8684 = vadd.f32 %v8301, %v8622
      %v8685 = vadd.f32 %v8302, %v8625
      %v8686 = vadd.f32 %v8303, %v8630
      %v8687 = vadd.f32 %v8304, %v8633
      %v8688 = vadd.f32 %v8305, %v8638
      %v8689 = vadd.f32 %v8306, %v8641
      %v8690 = vadd.f32 %v8307, %v8646
      %v8691 = vadd.f32 %v8308, %v8649
      %v8692 = vadd.f32 %v8309, %v8654
      %v8693 = vadd.f32 %v8310, %v8657
      %v8694 = vadd.f32 %v8311, %v8662
      %v8695 = vadd.f32 %v8312, %v8665
      %v8696 = vld [vmem:[#allocation2 + $0x10] sm:$0x80]
      %v8697 = vld [vmem:[#allocation2 + $0x80] sm:$0xff]
      %s8698 = scalar_lea.vmem %s3, 960
      %v8699 = vld [vmem:[%s8698] sm:$0xf]
      %v8700 = vld [vmem:[%s8698 + $0x4] sm:$0xf]
      %v8701 = vld [vmem:[%s8698 + $0x8] sm:$0xf]
      %v8702 = vld [vmem:[%s8698 + $0xc] sm:$0xf]
      %v8703 = vld [vmem:[%s8698 + $0x10] sm:$0xf]
      %v8704 = vld [vmem:[%s8698 + $0x14] sm:$0xf]
      %v8705 = vld [vmem:[%s8698 + $0x18] sm:$0xf]
      %v8706 = vld [vmem:[%s8698 + $0x1c] sm:$0xf]
      %v8707 = vld [vmem:[%s8698 + $0x20] sm:$0xf]
      %v8708 = vld [vmem:[%s8698 + $0x24] sm:$0xf]
      %v8709 = vld [vmem:[%s8698 + $0x28] sm:$0xf]
      %v8710 = vld [vmem:[%s8698 + $0x2c] sm:$0xf]
      %v8711 = vld [vmem:[%s8698 + $0x30] sm:$0xf]
      %v8712 = vld [vmem:[%s8698 + $0x34] sm:$0xf]
      %v8713 = vld [vmem:[%s8698 + $0x38] sm:$0xf]
      %v8714 = vld [vmem:[%s8698 + $0x3c] sm:$0xf]
      %v8716 = vshrl.u32 %v8696, 16
      %v8718 = vrot.slane %v8716, 7
      %v8719 = vrot.slane %v8357, 7
      %v8720 = vor.u32 %v8719, %v8353
      %v8721 = vsel %vm4172, %v8718, %v8720
      %v8722 = vrot.slane %v8365, 7
      %v8723 = vor.u32 %v8722, %v8361
      %v8724 = vsel %vm4172, %v8719, %v8723
      %v8725 = vrot.slane %v8373, 7
      %v8726 = vor.u32 %v8725, %v8369
      %v8727 = vsel %vm4172, %v8722, %v8726
      %v8728 = vrot.slane %v8381, 7
      %v8729 = vor.u32 %v8728, %v8377
      %v8730 = vsel %vm4172, %v8725, %v8729
      %v8731 = vrot.slane %v8389, 7
      %v8732 = vor.u32 %v8731, %v8385
      %v8733 = vsel %vm4172, %v8728, %v8732
      %v8734 = vrot.slane %v8397, 7
      %v8735 = vor.u32 %v8734, %v8393
      %v8736 = vsel %vm4172, %v8731, %v8735
      %v8737 = vrot.slane %v8405, 7
      %v8738 = vor.u32 %v8737, %v8401
      %v8739 = vsel %vm4172, %v8734, %v8738
      %v8740 = vrot.slane %v8413, 7
      %v8741 = vor.u32 %v8740, %v8409
      %v8742 = vsel %vm4172, %v8737, %v8741
      %v8743 = vrot.slane %v8421, 7
      %v8744 = vor.u32 %v8743, %v8417
      %v8745 = vsel %vm4172, %v8740, %v8744
      %v8746 = vrot.slane %v8429, 7
      %v8747 = vor.u32 %v8746, %v8425
      %v8748 = vsel %vm4172, %v8743, %v8747
      %v8749 = vrot.slane %v8437, 7
      %v8750 = vor.u32 %v8749, %v8433
      %v8751 = vsel %vm4172, %v8746, %v8750
      %v8752 = vrot.slane %v8445, 7
      %v8753 = vor.u32 %v8752, %v8441
      %v8754 = vsel %vm4172, %v8749, %v8753
      %v8755 = vrot.slane %v8453, 7
      %v8756 = vor.u32 %v8755, %v8449
      %v8757 = vsel %vm4172, %v8752, %v8756
      %v8759 = vshrl.u32 %v8697, 16
      %v8761 = vrot.slane %v8759, 7
      %v8762 = vshll.u32 %v8697, 16
      %v8764 = vor.u32 %v8761, %v8762
      %v8765 = vsel %vm4172, %v8755, %v8764
      %v8796 = vunpack.c.l.b16 %v8699
      %v8797 = vunpack.c.l.b16 %v8700
      %v8798 = vunpack.c.l.b16 %v8701
      %v8799 = vunpack.c.l.b16 %v8702
      %v8800 = vunpack.c.l.b16 %v8703
      %v8801 = vunpack.c.l.b16 %v8704
      %v8802 = vunpack.c.l.b16 %v8705
      %v8803 = vunpack.c.l.b16 %v8706
      %v8804 = vunpack.c.l.b16 %v8707
      %v8805 = vunpack.c.l.b16 %v8708
      %v8806 = vunpack.c.l.b16 %v8709
      %v8807 = vunpack.c.l.b16 %v8710
      %v8808 = vunpack.c.l.b16 %v8711
      %v8809 = vunpack.c.l.b16 %v8712
      %v8810 = vunpack.c.l.b16 %v8713
      %v8811 = vunpack.c.l.b16 %v8714
      %v8812 = vpack.c.b16 %v8797, %v8796
      %v8813 = vpack.c.b16 %v8799, %v8798
      %v8814 = vpack.c.b16 %v8801, %v8800
      %v8815 = vpack.c.b16 %v8803, %v8802
      %v8816 = vpack.c.b16 %v8805, %v8804
      %v8817 = vpack.c.b16 %v8807, %v8806
      %v8818 = vpack.c.b16 %v8809, %v8808
      %v8819 = vpack.c.b16 %v8811, %v8810
      %8828 = vmatprep.subr.bf16.mxu0 0
      %8829 = vmatpush1.bf16.msra.mxu0 %v8812
      %8830 = vmatprep.subr.bf16.mxu0 0
      %8831 = vmatpush1.bf16.msra.mxu0 %v8813
      %8832 = vmatprep.subr.bf16.mxu0 0
      %8833 = vmatpush1.bf16.msra.mxu0 %v8814
      %8834 = vmatprep.subr.bf16.mxu0 0
      %8835 = vmatpush1.bf16.msra.mxu0 %v8815
      %8836 = vmatprep.subr.bf16.mxu0 0
      %8837 = vmatpush1.bf16.msra.mxu0 %v8816
      %8838 = vmatprep.subr.bf16.mxu0 0
      %8839 = vmatpush1.bf16.msra.mxu0 %v8817
      %8840 = vmatprep.subr.bf16.mxu0 0
      %8841 = vmatpush1.bf16.msra.mxu0 %v8818
      %8842 = vmatprep.subr.bf16.mxu0 0
      %8843 = vmatpush1.bf16.msra.mxu0 %v8819
      %8844 = vmatprep.subr.bf16.mxu0 0
      %8845 = vmatpush1.bf16.msra.mxu0 0
      %8846 = vmatprep.subr.bf16.mxu0 0
      %8847 = vmatpush1.bf16.msra.mxu0 0
      %8848 = vmatprep.subr.bf16.mxu0 0
      %8849 = vmatpush1.bf16.msra.mxu0 0
      %8850 = vmatprep.subr.bf16.mxu0 0
      %8851 = vmatpush1.bf16.msra.mxu0 0
      %8852 = vmatprep.subr.bf16.mxu0 0
      %8853 = vmatpush1.bf16.msra.mxu0 0
      %8854 = vmatprep.subr.bf16.mxu0 0
      %8855 = vmatpush1.bf16.msra.mxu0 0
      %8856 = vmatprep.subr.bf16.mxu0 0
      %8857 = vmatpush1.bf16.msra.mxu0 0
      %8858 = vmatprep.subr.bf16.mxu0 0
      %8859 = vmatpush1.bf16.msra.mxu0 0
      %8860 = vmatprep.mubr.bf16.mxu0 0
      %8861 = vmatmul.mubr.bf16.gmra.mrb[0].mxu0 %v8721
      %v8862 = vpop.f32.mrb[0].mxu0
      %v8863 = vadd.f32 0.0, %v8862
      %v8864 = vpop.f32.mrb[0].mxu0
      %v8865 = vpop.f32.mrb[0].mxu0
      %v8866 = vadd.f32 0.0, %v8865
      %v8867 = vpop.f32.mrb[0].mxu0
      %8868 = vmatprep.mubr.bf16.mxu0 0
      %8869 = vmatmul.mubr.bf16.gmra.mrb[0].mxu0 %v8724
      %v8870 = vpop.f32.mrb[0].mxu0
      %v8871 = vadd.f32 0.0, %v8870
      %v8872 = vpop.f32.mrb[0].mxu0
      %v8873 = vpop.f32.mrb[0].mxu0
      %v8874 = vadd.f32 0.0, %v8873
      %v8875 = vpop.f32.mrb[0].mxu0
      %8876 = vmatprep.mubr.bf16.mxu0 0
      %8877 = vmatmul.mubr.bf16.gmra.mrb[0].mxu0 %v8727
      %v8878 = vpop.f32.mrb[0].mxu0
      %v8879 = vadd.f32 0.0, %v8878
      %v8880 = vpop.f32.mrb[0].mxu0
      %v8881 = vpop.f32.mrb[0].mxu0
      %v8882 = vadd.f32 0.0, %v8881
      %v8883 = vpop.f32.mrb[0].mxu0
      %8884 = vmatprep.mubr.bf16.mxu0 0
      %8885 = vmatmul.mubr.bf16.gmra.mrb[0].mxu0 %v8730
      %v8886 = vpop.f32.mrb[0].mxu0
      %v8887 = vadd.f32 0.0, %v8886
      %v8888 = vpop.f32.mrb[0].mxu0
      %v8889 = vpop.f32.mrb[0].mxu0
      %v8890 = vadd.f32 0.0, %v8889
      %v8891 = vpop.f32.mrb[0].mxu0
      %8892 = vmatprep.mubr.bf16.mxu0 0
      %8893 = vmatmul.mubr.bf16.gmra.mrb[0].mxu0 %v8733
      %v8894 = vpop.f32.mrb[0].mxu0
      %v8895 = vadd.f32 0.0, %v8894
      %v8896 = vpop.f32.mrb[0].mxu0
      %v8897 = vpop.f32.mrb[0].mxu0
      %v8898 = vadd.f32 0.0, %v8897
      %v8899 = vpop.f32.mrb[0].mxu0
      %8900 = vmatprep.mubr.bf16.mxu0 0
      %8901 = vmatmul.mubr.bf16.gmra.mrb[0].mxu0 %v8736
      %v8902 = vpop.f32.mrb[0].mxu0
      %v8903 = vadd.f32 0.0, %v8902
      %v8904 = vpop.f32.mrb[0].mxu0
      %v8905 = vpop.f32.mrb[0].mxu0
      %v8906 = vadd.f32 0.0, %v8905
      %v8907 = vpop.f32.mrb[0].mxu0
      %8908 = vmatprep.mubr.bf16.mxu0 0
      %8909 = vmatmul.mubr.bf16.gmra.mrb[0].mxu0 %v8739
      %v8910 = vpop.f32.mrb[0].mxu0
      %v8911 = vadd.f32 0.0, %v8910
      %v8912 = vpop.f32.mrb[0].mxu0
      %v8913 = vpop.f32.mrb[0].mxu0
      %v8914 = vadd.f32 0.0, %v8913
      %v8915 = vpop.f32.mrb[0].mxu0
      %8916 = vmatprep.mubr.bf16.mxu0 0
      %8917 = vmatmul.mubr.bf16.gmra.mrb[0].mxu0 %v8742
      %v8918 = vpop.f32.mrb[0].mxu0
      %v8919 = vadd.f32 0.0, %v8918
      %v8920 = vpop.f32.mrb[0].mxu0
      %v8921 = vpop.f32.mrb[0].mxu0
      %v8922 = vadd.f32 0.0, %v8921
      %v8923 = vpop.f32.mrb[0].mxu0
      %8924 = vmatprep.mubr.bf16.mxu0 0
      %8925 = vmatmul.mubr.bf16.gmra.mrb[0].mxu0 %v8745
      %v8926 = vpop.f32.mrb[0].mxu0
      %v8927 = vadd.f32 0.0, %v8926
      %v8928 = vpop.f32.mrb[0].mxu0
      %v8929 = vpop.f32.mrb[0].mxu0
      %v8930 = vadd.f32 0.0, %v8929
      %v8931 = vpop.f32.mrb[0].mxu0
      %8932 = vmatprep.mubr.bf16.mxu0 0
      %8933 = vmatmul.mubr.bf16.gmra.mrb[0].mxu0 %v8748
      %v8934 = vpop.f32.mrb[0].mxu0
      %v8935 = vadd.f32 0.0, %v8934
      %v8936 = vpop.f32.mrb[0].mxu0
      %v8937 = vpop.f32.mrb[0].mxu0
      %v8938 = vadd.f32 0.0, %v8937
      %v8939 = vpop.f32.mrb[0].mxu0
      %8940 = vmatprep.mubr.bf16.mxu0 0
      %8941 = vmatmul.mubr.bf16.gmra.mrb[0].mxu0 %v8751
      %v8942 = vpop.f32.mrb[0].mxu0
      %v8943 = vadd.f32 0.0, %v8942
      %v8944 = vpop.f32.mrb[0].mxu0
      %v8945 = vpop.f32.mrb[0].mxu0
      %v8946 = vadd.f32 0.0, %v8945
      %v8947 = vpop.f32.mrb[0].mxu0
      %8948 = vmatprep.mubr.bf16.mxu0 0
      %8949 = vmatmul.mubr.bf16.gmra.mrb[0].mxu0 %v8754
      %v8950 = vpop.f32.mrb[0].mxu0
      %v8951 = vadd.f32 0.0, %v8950
      %v8952 = vpop.f32.mrb[0].mxu0
      %v8953 = vpop.f32.mrb[0].mxu0
      %v8954 = vadd.f32 0.0, %v8953
      %v8955 = vpop.f32.mrb[0].mxu0
      %8956 = vmatprep.mubr.bf16.mxu0 0
      %8957 = vmatmul.mubr.bf16.gmra.mrb[0].mxu0 %v8757
      %v8958 = vpop.f32.mrb[0].mxu0
      %v8959 = vadd.f32 0.0, %v8958
      %v8960 = vpop.f32.mrb[0].mxu0
      %v8961 = vpop.f32.mrb[0].mxu0
      %v8962 = vadd.f32 0.0, %v8961
      %v8963 = vpop.f32.mrb[0].mxu0
      %8964 = vmatprep.mubr.bf16.mxu0 0
      %8965 = vmatmul.mubr.bf16.gmra.mrb[0].mxu0 %v8765
      %v8966 = vpop.f32.mrb[0].mxu0
      %v8967 = vadd.f32 0.0, %v8966
      %v8968 = vpop.f32.mrb[0].mxu0
      %v8969 = vpop.f32.mrb[0].mxu0
      %v8970 = vadd.f32 0.0, %v8969
      %v8971 = vpop.f32.mrb[0].mxu0
      %8972 = vdwg.mxu0
      %v8973 = vadd.f32 %v8668, %v8863
      %v8974 = vadd.f32 %v8669, %v8866
      %v8975 = vadd.f32 %v8670, %v8871
      %v8976 = vadd.f32 %v8671, %v8874
      %v8977 = vadd.f32 %v8672, %v8879
      %v8978 = vadd.f32 %v8673, %v8882
      %v8979 = vadd.f32 %v8674, %v8887
      %v8980 = vadd.f32 %v8675, %v8890
      %v8981 = vadd.f32 %v8676, %v8895
      %v8982 = vadd.f32 %v8677, %v8898
      %v8983 = vadd.f32 %v8678, %v8903
      %v8984 = vadd.f32 %v8679, %v8906
      %v8985 = vadd.f32 %v8680, %v8911
      %v8986 = vadd.f32 %v8681, %v8914
      %v8987 = vadd.f32 %v8682, %v8919
      %v8988 = vadd.f32 %v8683, %v8922
      %v8989 = vadd.f32 %v8684, %v8927
      %v8990 = vadd.f32 %v8685, %v8930
      %v8991 = vadd.f32 %v8686, %v8935
      %v8992 = vadd.f32 %v8687, %v8938
      %v8993 = vadd.f32 %v8688, %v8943
      %v8994 = vadd.f32 %v8689, %v8946
      %v8995 = vadd.f32 %v8690, %v8951
      %v8996 = vadd.f32 %v8691, %v8954
      %v8997 = vadd.f32 %v8692, %v8959
      %v8998 = vadd.f32 %v8693, %v8962
      %v8999 = vadd.f32 %v8694, %v8967
      %v9000 = vadd.f32 %v8695, %v8970
      %s9001 = scalar_lea.vmem %s3, 1024
      %v9002 = vld [vmem:[%s9001] sm:$0xf]
      %v9003 = vld [vmem:[%s9001 + $0x4] sm:$0xf]
      %v9004 = vld [vmem:[%s9001 + $0x8] sm:$0xf]
      %v9005 = vld [vmem:[%s9001 + $0xc] sm:$0xf]
      %v9006 = vld [vmem:[%s9001 + $0x10] sm:$0xf]
      %v9007 = vld [vmem:[%s9001 + $0x14] sm:$0xf]
      %v9008 = vld [vmem:[%s9001 + $0x18] sm:$0xf]
      %v9009 = vld [vmem:[%s9001 + $0x1c] sm:$0xf]
      %v9010 = vld [vmem:[%s9001 + $0x20] sm:$0xf]
      %v9011 = vld [vmem:[%s9001 + $0x24] sm:$0xf]
      %v9012 = vld [vmem:[%s9001 + $0x28] sm:$0xf]
      %v9013 = vld [vmem:[%s9001 + $0x2c] sm:$0xf]
      %v9014 = vld [vmem:[%s9001 + $0x30] sm:$0xf]
      %v9015 = vld [vmem:[%s9001 + $0x34] sm:$0xf]
      %v9016 = vld [vmem:[%s9001 + $0x38] sm:$0xf]
      %v9017 = vld [vmem:[%s9001 + $0x3c] sm:$0xf]
      %v9034 = vunpack.c.l.b16 %v9002
      %v9035 = vunpack.c.l.b16 %v9003
      %v9036 = vunpack.c.l.b16 %v9004
      %v9037 = vunpack.c.l.b16 %v9005
      %v9038 = vunpack.c.l.b16 %v9006
      %v9039 = vunpack.c.l.b16 %v9007
      %v9040 = vunpack.c.l.b16 %v9008
      %v9041 = vunpack.c.l.b16 %v9009
      %v9042 = vunpack.c.l.b16 %v9010
      %v9043 = vunpack.c.l.b16 %v9011
      %v9044 = vunpack.c.l.b16 %v9012
      %v9045 = vunpack.c.l.b16 %v9013
      %v9046 = vunpack.c.l.b16 %v9014
      %v9047 = vunpack.c.l.b16 %v9015
      %v9048 = vunpack.c.l.b16 %v9016
      %v9049 = vunpack.c.l.b16 %v9017
      %v9050 = vpack.c.b16 %v9035, %v9034
      %v9051 = vpack.c.b16 %v9037, %v9036
      %v9052 = vpack.c.b16 %v9039, %v9038
      %v9053 = vpack.c.b16 %v9041, %v9040
      %v9054 = vpack.c.b16 %v9043, %v9042
      %v9055 = vpack.c.b16 %v9045, %v9044
      %v9056 = vpack.c.b16 %v9047, %v9046
      %v9057 = vpack.c.b16 %v9049, %v9048
      %9066 = vmatprep.subr.bf16.mxu0 0
      %9067 = vmatpush1.bf16.msra.mxu0 %v9050
      %9068 = vmatprep.subr.bf16.mxu0 0
      %9069 = vmatpush1.bf16.msra.mxu0 %v9051
      %9070 = vmatprep.subr.bf16.mxu0 0
      %9071 = vmatpush1.bf16.msra.mxu0 %v9052
      %9072 = vmatprep.subr.bf16.mxu0 0
      %9073 = vmatpush1.bf16.msra.mxu0 %v9053
      %9074 = vmatprep.subr.bf16.mxu0 0
      %9075 = vmatpush1.bf16.msra.mxu0 %v9054
      %9076 = vmatprep.subr.bf16.mxu0 0
      %9077 = vmatpush1.bf16.msra.mxu0 %v9055
      %9078 = vmatprep.subr.bf16.mxu0 0
      %9079 = vmatpush1.bf16.msra.mxu0 %v9056
      %9080 = vmatprep.subr.bf16.mxu0 0
      %9081 = vmatpush1.bf16.msra.mxu0 %v9057
      %9082 = vmatprep.subr.bf16.mxu0 0
      %9083 = vmatpush1.bf16.msra.mxu0 0
      %9084 = vmatprep.subr.bf16.mxu0 0
      %9085 = vmatpush1.bf16.msra.mxu0 0
      %9086 = vmatprep.subr.bf16.mxu0 0
      %9087 = vmatpush1.bf16.msra.mxu0 0
      %9088 = vmatprep.subr.bf16.mxu0 0
      %9089 = vmatpush1.bf16.msra.mxu0 0
      %9090 = vmatprep.subr.bf16.mxu0 0
      %9091 = vmatpush1.bf16.msra.mxu0 0
      %9092 = vmatprep.subr.bf16.mxu0 0
      %9093 = vmatpush1.bf16.msra.mxu0 0
      %9094 = vmatprep.subr.bf16.mxu0 0
      %9095 = vmatpush1.bf16.msra.mxu0 0
      %9096 = vmatprep.subr.bf16.mxu0 0
      %9097 = vmatpush1.bf16.msra.mxu0 0
      %9098 = vmatprep.mubr.bf16.mxu0 0
      %9099 = vmatmul.mubr.bf16.gmra.mrb[0].mxu0 %v8314
      %v9100 = vpop.f32.mrb[0].mxu0
      %v9101 = vadd.f32 0.0, %v9100
      %v9102 = vpop.f32.mrb[0].mxu0
      %v9103 = vpop.f32.mrb[0].mxu0
      %v9104 = vadd.f32 0.0, %v9103
      %v9105 = vpop.f32.mrb[0].mxu0
      %9106 = vmatprep.mubr.bf16.mxu0 0
      %9107 = vmatmul.mubr.bf16.gmra.mrb[0].mxu0 %v8315
      %v9108 = vpop.f32.mrb[0].mxu0
      %v9109 = vadd.f32 0.0, %v9108
      %v9110 = vpop.f32.mrb[0].mxu0
      %v9111 = vpop.f32.mrb[0].mxu0
      %v9112 = vadd.f32 0.0, %v9111
      %v9113 = vpop.f32.mrb[0].mxu0
      %9114 = vmatprep.mubr.bf16.mxu0 0
      %9115 = vmatmul.mubr.bf16.gmra.mrb[0].mxu0 %v8316
      %v9116 = vpop.f32.mrb[0].mxu0
      %v9117 = vadd.f32 0.0, %v9116
      %v9118 = vpop.f32.mrb[0].mxu0
      %v9119 = vpop.f32.mrb[0].mxu0
      %v9120 = vadd.f32 0.0, %v9119
      %v9121 = vpop.f32.mrb[0].mxu0
      %9122 = vmatprep.mubr.bf16.mxu0 0
      %9123 = vmatmul.mubr.bf16.gmra.mrb[0].mxu0 %v8317
      %v9124 = vpop.f32.mrb[0].mxu0
      %v9125 = vadd.f32 0.0, %v9124
      %v9126 = vpop.f32.mrb[0].mxu0
      %v9127 = vpop.f32.mrb[0].mxu0
      %v9128 = vadd.f32 0.0, %v9127
      %v9129 = vpop.f32.mrb[0].mxu0
      %9130 = vmatprep.mubr.bf16.mxu0 0
      %9131 = vmatmul.mubr.bf16.gmra.mrb[0].mxu0 %v8318
      %v9132 = vpop.f32.mrb[0].mxu0
      %v9133 = vadd.f32 0.0, %v9132
      %v9134 = vpop.f32.mrb[0].mxu0
      %v9135 = vpop.f32.mrb[0].mxu0
      %v9136 = vadd.f32 0.0, %v9135
      %v9137 = vpop.f32.mrb[0].mxu0
      %9138 = vmatprep.mubr.bf16.mxu0 0
      %9139 = vmatmul.mubr.bf16.gmra.mrb[0].mxu0 %v8319
      %v9140 = vpop.f32.mrb[0].mxu0
      %v9141 = vadd.f32 0.0, %v9140
      %v9142 = vpop.f32.mrb[0].mxu0
      %v9143 = vpop.f32.mrb[0].mxu0
      %v9144 = vadd.f32 0.0, %v9143
      %v9145 = vpop.f32.mrb[0].mxu0
      %9146 = vmatprep.mubr.bf16.mxu0 0
      %9147 = vmatmul.mubr.bf16.gmra.mrb[0].mxu0 %v8320
      %v9148 = vpop.f32.mrb[0].mxu0
      %v9149 = vadd.f32 0.0, %v9148
      %v9150 = vpop.f32.mrb[0].mxu0
      %v9151 = vpop.f32.mrb[0].mxu0
      %v9152 = vadd.f32 0.0, %v9151
      %v9153 = vpop.f32.mrb[0].mxu0
      %9154 = vmatprep.mubr.bf16.mxu0 0
      %9155 = vmatmul.mubr.bf16.gmra.mrb[0].mxu0 %v8321
      %v9156 = vpop.f32.mrb[0].mxu0
      %v9157 = vadd.f32 0.0, %v9156
      %v9158 = vpop.f32.mrb[0].mxu0
      %v9159 = vpop.f32.mrb[0].mxu0
      %v9160 = vadd.f32 0.0, %v9159
      %v9161 = vpop.f32.mrb[0].mxu0
      %9162 = vmatprep.mubr.bf16.mxu0 0
      %9163 = vmatmul.mubr.bf16.gmra.mrb[0].mxu0 %v8322
      %v9164 = vpop.f32.mrb[0].mxu0
      %v9165 = vadd.f32 0.0, %v9164
      %v9166 = vpop.f32.mrb[0].mxu0
      %v9167 = vpop.f32.mrb[0].mxu0
      %v9168 = vadd.f32 0.0, %v9167
      %v9169 = vpop.f32.mrb[0].mxu0
      %9170 = vmatprep.mubr.bf16.mxu0 0
      %9171 = vmatmul.mubr.bf16.gmra.mrb[0].mxu0 %v8323
      %v9172 = vpop.f32.mrb[0].mxu0
      %v9173 = vadd.f32 0.0, %v9172
      %v9174 = vpop.f32.mrb[0].mxu0
      %v9175 = vpop.f32.mrb[0].mxu0
      %v9176 = vadd.f32 0.0, %v9175
      %v9177 = vpop.f32.mrb[0].mxu0
      %9178 = vmatprep.mubr.bf16.mxu0 0
      %9179 = vmatmul.mubr.bf16.gmra.mrb[0].mxu0 %v8324
      %v9180 = vpop.f32.mrb[0].mxu0
      %v9181 = vadd.f32 0.0, %v9180
      %v9182 = vpop.f32.mrb[0].mxu0
      %v9183 = vpop.f32.mrb[0].mxu0
      %v9184 = vadd.f32 0.0, %v9183
      %v9185 = vpop.f32.mrb[0].mxu0
      %9186 = vmatprep.mubr.bf16.mxu0 0
      %9187 = vmatmul.mubr.bf16.gmra.mrb[0].mxu0 %v8325
      %v9188 = vpop.f32.mrb[0].mxu0
      %v9189 = vadd.f32 0.0, %v9188
      %v9190 = vpop.f32.mrb[0].mxu0
      %v9191 = vpop.f32.mrb[0].mxu0
      %v9192 = vadd.f32 0.0, %v9191
      %v9193 = vpop.f32.mrb[0].mxu0
      %9194 = vmatprep.mubr.bf16.mxu0 0
      %9195 = vmatmul.mubr.bf16.gmra.mrb[0].mxu0 %v8326
      %v9196 = vpop.f32.mrb[0].mxu0
      %v9197 = vadd.f32 0.0, %v9196
      %v9198 = vpop.f32.mrb[0].mxu0
      %v9199 = vpop.f32.mrb[0].mxu0
      %v9200 = vadd.f32 0.0, %v9199
      %v9201 = vpop.f32.mrb[0].mxu0
      %9202 = vmatprep.mubr.bf16.mxu0 0
      %9203 = vmatmul.mubr.bf16.gmra.mrb[0].mxu0 %v8697
      %v9204 = vpop.f32.mrb[0].mxu0
      %v9205 = vadd.f32 0.0, %v9204
      %v9206 = vpop.f32.mrb[0].mxu0
      %v9207 = vpop.f32.mrb[0].mxu0
      %v9208 = vadd.f32 0.0, %v9207
      %v9209 = vpop.f32.mrb[0].mxu0
      %9210 = vdwg.mxu0
      %v9211 = vadd.f32 %v8973, %v9101
      %v9212 = vadd.f32 %v8974, %v9104
      %v9213 = vadd.f32 %v8975, %v9109
      %v9214 = vadd.f32 %v8976, %v9112
      %v9215 = vadd.f32 %v8977, %v9117
      %v9216 = vadd.f32 %v8978, %v9120
      %v9217 = vadd.f32 %v8979, %v9125
      %v9218 = vadd.f32 %v8980, %v9128
      %v9219 = vadd.f32 %v8981, %v9133
      %v9220 = vadd.f32 %v8982, %v9136
      %v9221 = vadd.f32 %v8983, %v9141
      %v9222 = vadd.f32 %v8984, %v9144
      %v9223 = vadd.f32 %v8985, %v9149
      %v9224 = vadd.f32 %v8986, %v9152
      %v9225 = vadd.f32 %v8987, %v9157
      %v9226 = vadd.f32 %v8988, %v9160
      %v9227 = vadd.f32 %v8989, %v9165
      %v9228 = vadd.f32 %v8990, %v9168
      %v9229 = vadd.f32 %v8991, %v9173
      %v9230 = vadd.f32 %v8992, %v9176
      %v9231 = vadd.f32 %v8993, %v9181
      %v9232 = vadd.f32 %v8994, %v9184
      %v9233 = vadd.f32 %v8995, %v9189
      %v9234 = vadd.f32 %v8996, %v9192
      %v9235 = vadd.f32 %v8997, %v9197
      %v9236 = vadd.f32 %v8998, %v9200
      %v9237 = vadd.f32 %v8999, %v9205
      %v9238 = vadd.f32 %v9000, %v9208
      %v9239 = vld [vmem:[#allocation2 + $0x18] sm:$0xff]
      %v9240 = vld [vmem:[#allocation2 + $0x20] sm:$0xff]
      %v9241 = vld [vmem:[#allocation2 + $0x28] sm:$0xff]
      %v9242 = vld [vmem:[#allocation2 + $0x30] sm:$0xff]
      %v9243 = vld [vmem:[#allocation2 + $0x38] sm:$0xff]
      %v9244 = vld [vmem:[#allocation2 + $0x40] sm:$0xff]
      %v9245 = vld [vmem:[#allocation2 + $0x48] sm:$0xff]
      %v9246 = vld [vmem:[#allocation2 + $0x50] sm:$0xff]
      %v9247 = vld [vmem:[#allocation2 + $0x58] sm:$0xff]
      %v9248 = vld [vmem:[#allocation2 + $0x60] sm:$0xff]
      %v9249 = vld [vmem:[#allocation2 + $0x68] sm:$0xff]
      %v9250 = vld [vmem:[#allocation2 + $0x70] sm:$0xff]
      %v9251 = vld [vmem:[#allocation2 + $0x78] sm:$0xff]
      %v9252 = vld [vmem:[#allocation2 + $0x80] sm:$0xff]
      %v9253 = vld [vmem:[#allocation2 + $0x88] sm:$0x1]
      %s9254 = scalar_lea.vmem %s3, 1088
      %v9255 = vld [vmem:[%s9254] sm:$0xf]
      %v9256 = vld [vmem:[%s9254 + $0x4] sm:$0xf]
      %v9257 = vld [vmem:[%s9254 + $0x8] sm:$0xf]
      %v9258 = vld [vmem:[%s9254 + $0xc] sm:$0xf]
      %v9259 = vld [vmem:[%s9254 + $0x10] sm:$0xf]
      %v9260 = vld [vmem:[%s9254 + $0x14] sm:$0xf]
      %v9261 = vld [vmem:[%s9254 + $0x18] sm:$0xf]
      %v9262 = vld [vmem:[%s9254 + $0x1c] sm:$0xf]
      %v9263 = vld [vmem:[%s9254 + $0x20] sm:$0xf]
      %v9264 = vld [vmem:[%s9254 + $0x24] sm:$0xf]
      %v9265 = vld [vmem:[%s9254 + $0x28] sm:$0xf]
      %v9266 = vld [vmem:[%s9254 + $0x2c] sm:$0xf]
      %v9267 = vld [vmem:[%s9254 + $0x30] sm:$0xf]
      %v9268 = vld [vmem:[%s9254 + $0x34] sm:$0xf]
      %v9269 = vld [vmem:[%s9254 + $0x38] sm:$0xf]
      %v9270 = vld [vmem:[%s9254 + $0x3c] sm:$0xf]
      %v9272 = vshrl.u32 %v9239, 16
      %v9274 = vshll.u32 %v9239, 16
      %v9276 = vrot.slane %v9274, 1
      %v9277 = vor.u32 %v9272, %v9276
      %v9279 = vshll.u32 %v9240, 16
      %v9281 = vrot.slane %v9279, 1
      %v9282 = vsel %vm388, %v9277, %v9281
      %v9283 = vshrl.u32 %v9240, 16
      %v9285 = vor.u32 %v9283, %v9281
      %v9287 = vshll.u32 %v9241, 16
      %v9289 = vrot.slane %v9287, 1
      %v9290 = vsel %vm388, %v9285, %v9289
      %v9291 = vshrl.u32 %v9241, 16
      %v9293 = vor.u32 %v9291, %v9289
      %v9295 = vshll.u32 %v9242, 16
      %v9297 = vrot.slane %v9295, 1
      %v9298 = vsel %vm388, %v9293, %v9297
      %v9299 = vshrl.u32 %v9242, 16
      %v9301 = vor.u32 %v9299, %v9297
      %v9303 = vshll.u32 %v9243, 16
      %v9305 = vrot.slane %v9303, 1
      %v9306 = vsel %vm388, %v9301, %v9305
      %v9307 = vshrl.u32 %v9243, 16
      %v9309 = vor.u32 %v9307, %v9305
      %v9311 = vshll.u32 %v9244, 16
      %v9313 = vrot.slane %v9311, 1
      %v9314 = vsel %vm388, %v9309, %v9313
      %v9315 = vshrl.u32 %v9244, 16
      %v9317 = vor.u32 %v9315, %v9313
      %v9319 = vshll.u32 %v9245, 16
      %v9321 = vrot.slane %v9319, 1
      %v9322 = vsel %vm388, %v9317, %v9321
      %v9323 = vshrl.u32 %v9245, 16
      %v9325 = vor.u32 %v9323, %v9321
      %v9327 = vshll.u32 %v9246, 16
      %v9329 = vrot.slane %v9327, 1
      %v9330 = vsel %vm388, %v9325, %v9329
      %v9331 = vshrl.u32 %v9246, 16
      %v9333 = vor.u32 %v9331, %v9329
      %v9335 = vshll.u32 %v9247, 16
      %v9337 = vrot.slane %v9335, 1
      %v9338 = vsel %vm388, %v9333, %v9337
      %v9339 = vshrl.u32 %v9247, 16
      %v9341 = vor.u32 %v9339, %v9337
      %v9343 = vshll.u32 %v9248, 16
      %v9345 = vrot.slane %v9343, 1
      %v9346 = vsel %vm388, %v9341, %v9345
      %v9347 = vshrl.u32 %v9248, 16
      %v9349 = vor.u32 %v9347, %v9345
      %v9351 = vshll.u32 %v9249, 16
      %v9353 = vrot.slane %v9351, 1
      %v9354 = vsel %vm388, %v9349, %v9353
      %v9355 = vshrl.u32 %v9249, 16
      %v9357 = vor.u32 %v9355, %v9353
      %v9359 = vshll.u32 %v9250, 16
      %v9361 = vrot.slane %v9359, 1
      %v9362 = vsel %vm388, %v9357, %v9361
      %v9363 = vshrl.u32 %v9250, 16
      %v9365 = vor.u32 %v9363, %v9361
      %v9367 = vshll.u32 %v9251, 16
      %v9369 = vrot.slane %v9367, 1
      %v9370 = vsel %vm388, %v9365, %v9369
      %v9371 = vshrl.u32 %v9251, 16
      %v9373 = vor.u32 %v9371, %v9369
      %v9375 = vshll.u32 %v9252, 16
      %v9377 = vrot.slane %v9375, 1
      %v9378 = vsel %vm388, %v9373, %v9377
      %v9379 = vshrl.u32 %v9252, 16
      %v9381 = vor.u32 %v9379, %v9377
      %v9383 = vshll.u32 %v9253, 16
      %v9385 = vrot.slane %v9383, 1
      %v9386 = vsel %vm388, %v9381, %v9385
      %v9417 = vunpack.c.l.b16 %v9255
      %v9418 = vunpack.c.l.b16 %v9256
      %v9419 = vunpack.c.l.b16 %v9257
      %v9420 = vunpack.c.l.b16 %v9258
      %v9421 = vunpack.c.l.b16 %v9259
      %v9422 = vunpack.c.l.b16 %v9260
      %v9423 = vunpack.c.l.b16 %v9261
      %v9424 = vunpack.c.l.b16 %v9262
      %v9425 = vunpack.c.l.b16 %v9263
      %v9426 = vunpack.c.l.b16 %v9264
      %v9427 = vunpack.c.l.b16 %v9265
      %v9428 = vunpack.c.l.b16 %v9266
      %v9429 = vunpack.c.l.b16 %v9267
      %v9430 = vunpack.c.l.b16 %v9268
      %v9431 = vunpack.c.l.b16 %v9269
      %v9432 = vunpack.c.l.b16 %v9270
      %v9433 = vpack.c.b16 %v9418, %v9417
      %v9434 = vpack.c.b16 %v9420, %v9419
      %v9435 = vpack.c.b16 %v9422, %v9421
      %v9436 = vpack.c.b16 %v9424, %v9423
      %v9437 = vpack.c.b16 %v9426, %v9425
      %v9438 = vpack.c.b16 %v9428, %v9427
      %v9439 = vpack.c.b16 %v9430, %v9429
      %v9440 = vpack.c.b16 %v9432, %v9431
      %9449 = vmatprep.subr.bf16.mxu0 0
      %9450 = vmatpush1.bf16.msra.mxu0 %v9433
      %9451 = vmatprep.subr.bf16.mxu0 0
      %9452 = vmatpush1.bf16.msra.mxu0 %v9434
      %9453 = vmatprep.subr.bf16.mxu0 0
      %9454 = vmatpush1.bf16.msra.mxu0 %v9435
      %9455 = vmatprep.subr.bf16.mxu0 0
      %9456 = vmatpush1.bf16.msra.mxu0 %v9436
      %9457 = vmatprep.subr.bf16.mxu0 0
      %9458 = vmatpush1.bf16.msra.mxu0 %v9437
      %9459 = vmatprep.subr.bf16.mxu0 0
      %9460 = vmatpush1.bf16.msra.mxu0 %v9438
      %9461 = vmatprep.subr.bf16.mxu0 0
      %9462 = vmatpush1.bf16.msra.mxu0 %v9439
      %9463 = vmatprep.subr.bf16.mxu0 0
      %9464 = vmatpush1.bf16.msra.mxu0 %v9440
      %9465 = vmatprep.subr.bf16.mxu0 0
      %9466 = vmatpush1.bf16.msra.mxu0 0
      %9467 = vmatprep.subr.bf16.mxu0 0
      %9468 = vmatpush1.bf16.msra.mxu0 0
      %9469 = vmatprep.subr.bf16.mxu0 0
      %9470 = vmatpush1.bf16.msra.mxu0 0
      %9471 = vmatprep.subr.bf16.mxu0 0
      %9472 = vmatpush1.bf16.msra.mxu0 0
      %9473 = vmatprep.subr.bf16.mxu0 0
      %9474 = vmatpush1.bf16.msra.mxu0 0
      %9475 = vmatprep.subr.bf16.mxu0 0
      %9476 = vmatpush1.bf16.msra.mxu0 0
      %9477 = vmatprep.subr.bf16.mxu0 0
      %9478 = vmatpush1.bf16.msra.mxu0 0
      %9479 = vmatprep.subr.bf16.mxu0 0
      %9480 = vmatpush1.bf16.msra.mxu0 0
      %9481 = vmatprep.mubr.bf16.mxu0 0
      %9482 = vmatmul.mubr.bf16.gmra.mrb[0].mxu0 %v9282
      %v9483 = vpop.f32.mrb[0].mxu0
      %v9484 = vadd.f32 0.0, %v9483
      %v9485 = vpop.f32.mrb[0].mxu0
      %v9486 = vpop.f32.mrb[0].mxu0
      %v9487 = vadd.f32 0.0, %v9486
      %v9488 = vpop.f32.mrb[0].mxu0
      %9489 = vmatprep.mubr.bf16.mxu0 0
      %9490 = vmatmul.mubr.bf16.gmra.mrb[0].mxu0 %v9290
      %v9491 = vpop.f32.mrb[0].mxu0
      %v9492 = vadd.f32 0.0, %v9491
      %v9493 = vpop.f32.mrb[0].mxu0
      %v9494 = vpop.f32.mrb[0].mxu0
      %v9495 = vadd.f32 0.0, %v9494
      %v9496 = vpop.f32.mrb[0].mxu0
      %9497 = vmatprep.mubr.bf16.mxu0 0
      %9498 = vmatmul.mubr.bf16.gmra.mrb[0].mxu0 %v9298
      %v9499 = vpop.f32.mrb[0].mxu0
      %v9500 = vadd.f32 0.0, %v9499
      %v9501 = vpop.f32.mrb[0].mxu0
      %v9502 = vpop.f32.mrb[0].mxu0
      %v9503 = vadd.f32 0.0, %v9502
      %v9504 = vpop.f32.mrb[0].mxu0
      %9505 = vmatprep.mubr.bf16.mxu0 0
      %9506 = vmatmul.mubr.bf16.gmra.mrb[0].mxu0 %v9306
      %v9507 = vpop.f32.mrb[0].mxu0
      %v9508 = vadd.f32 0.0, %v9507
      %v9509 = vpop.f32.mrb[0].mxu0
      %v9510 = vpop.f32.mrb[0].mxu0
      %v9511 = vadd.f32 0.0, %v9510
      %v9512 = vpop.f32.mrb[0].mxu0
      %9513 = vmatprep.mubr.bf16.mxu0 0
      %9514 = vmatmul.mubr.bf16.gmra.mrb[0].mxu0 %v9314
      %v9515 = vpop.f32.mrb[0].mxu0
      %v9516 = vadd.f32 0.0, %v9515
      %v9517 = vpop.f32.mrb[0].mxu0
      %v9518 = vpop.f32.mrb[0].mxu0
      %v9519 = vadd.f32 0.0, %v9518
      %v9520 = vpop.f32.mrb[0].mxu0
      %9521 = vmatprep.mubr.bf16.mxu0 0
      %9522 = vmatmul.mubr.bf16.gmra.mrb[0].mxu0 %v9322
      %v9523 = vpop.f32.mrb[0].mxu0
      %v9524 = vadd.f32 0.0, %v9523
      %v9525 = vpop.f32.mrb[0].mxu0
      %v9526 = vpop.f32.mrb[0].mxu0
      %v9527 = vadd.f32 0.0, %v9526
      %v9528 = vpop.f32.mrb[0].mxu0
      %9529 = vmatprep.mubr.bf16.mxu0 0
      %9530 = vmatmul.mubr.bf16.gmra.mrb[0].mxu0 %v9330
      %v9531 = vpop.f32.mrb[0].mxu0
      %v9532 = vadd.f32 0.0, %v9531
      %v9533 = vpop.f32.mrb[0].mxu0
      %v9534 = vpop.f32.mrb[0].mxu0
      %v9535 = vadd.f32 0.0, %v9534
      %v9536 = vpop.f32.mrb[0].mxu0
      %9537 = vmatprep.mubr.bf16.mxu0 0
      %9538 = vmatmul.mubr.bf16.gmra.mrb[0].mxu0 %v9338
      %v9539 = vpop.f32.mrb[0].mxu0
      %v9540 = vadd.f32 0.0, %v9539
      %v9541 = vpop.f32.mrb[0].mxu0
      %v9542 = vpop.f32.mrb[0].mxu0
      %v9543 = vadd.f32 0.0, %v9542
      %v9544 = vpop.f32.mrb[0].mxu0
      %9545 = vmatprep.mubr.bf16.mxu0 0
      %9546 = vmatmul.mubr.bf16.gmra.mrb[0].mxu0 %v9346
      %v9547 = vpop.f32.mrb[0].mxu0
      %v9548 = vadd.f32 0.0, %v9547
      %v9549 = vpop.f32.mrb[0].mxu0
      %v9550 = vpop.f32.mrb[0].mxu0
      %v9551 = vadd.f32 0.0, %v9550
      %v9552 = vpop.f32.mrb[0].mxu0
      %9553 = vmatprep.mubr.bf16.mxu0 0
      %9554 = vmatmul.mubr.bf16.gmra.mrb[0].mxu0 %v9354
      %v9555 = vpop.f32.mrb[0].mxu0
      %v9556 = vadd.f32 0.0, %v9555
      %v9557 = vpop.f32.mrb[0].mxu0
      %v9558 = vpop.f32.mrb[0].mxu0
      %v9559 = vadd.f32 0.0, %v9558
      %v9560 = vpop.f32.mrb[0].mxu0
      %9561 = vmatprep.mubr.bf16.mxu0 0
      %9562 = vmatmul.mubr.bf16.gmra.mrb[0].mxu0 %v9362
      %v9563 = vpop.f32.mrb[0].mxu0
      %v9564 = vadd.f32 0.0, %v9563
      %v9565 = vpop.f32.mrb[0].mxu0
      %v9566 = vpop.f32.mrb[0].mxu0
      %v9567 = vadd.f32 0.0, %v9566
      %v9568 = vpop.f32.mrb[0].mxu0
      %9569 = vmatprep.mubr.bf16.mxu0 0
      %9570 = vmatmul.mubr.bf16.gmra.mrb[0].mxu0 %v9370
      %v9571 = vpop.f32.mrb[0].mxu0
      %v9572 = vadd.f32 0.0, %v9571
      %v9573 = vpop.f32.mrb[0].mxu0
      %v9574 = vpop.f32.mrb[0].mxu0
      %v9575 = vadd.f32 0.0, %v9574
      %v9576 = vpop.f32.mrb[0].mxu0
      %9577 = vmatprep.mubr.bf16.mxu0 0
      %9578 = vmatmul.mubr.bf16.gmra.mrb[0].mxu0 %v9378
      %v9579 = vpop.f32.mrb[0].mxu0
      %v9580 = vadd.f32 0.0, %v9579
      %v9581 = vpop.f32.mrb[0].mxu0
      %v9582 = vpop.f32.mrb[0].mxu0
      %v9583 = vadd.f32 0.0, %v9582
      %v9584 = vpop.f32.mrb[0].mxu0
      %9585 = vmatprep.mubr.bf16.mxu0 0
      %9586 = vmatmul.mubr.bf16.gmra.mrb[0].mxu0 %v9386
      %v9587 = vpop.f32.mrb[0].mxu0
      %v9588 = vadd.f32 0.0, %v9587
      %v9589 = vpop.f32.mrb[0].mxu0
      %v9590 = vpop.f32.mrb[0].mxu0
      %v9591 = vadd.f32 0.0, %v9590
      %v9592 = vpop.f32.mrb[0].mxu0
      %9593 = vdwg.mxu0
      %v9594 = vadd.f32 %v9211, %v9484
      %v9595 = vadd.f32 %v9212, %v9487
      %v9596 = vadd.f32 %v9213, %v9492
      %v9597 = vadd.f32 %v9214, %v9495
      %v9598 = vadd.f32 %v9215, %v9500
      %v9599 = vadd.f32 %v9216, %v9503
      %v9600 = vadd.f32 %v9217, %v9508
      %v9601 = vadd.f32 %v9218, %v9511
      %v9602 = vadd.f32 %v9219, %v9516
      %v9603 = vadd.f32 %v9220, %v9519
      %v9604 = vadd.f32 %v9221, %v9524
      %v9605 = vadd.f32 %v9222, %v9527
      %v9606 = vadd.f32 %v9223, %v9532
      %v9607 = vadd.f32 %v9224, %v9535
      %v9608 = vadd.f32 %v9225, %v9540
      %v9609 = vadd.f32 %v9226, %v9543
      %v9610 = vadd.f32 %v9227, %v9548
      %v9611 = vadd.f32 %v9228, %v9551
      %v9612 = vadd.f32 %v9229, %v9556
      %v9613 = vadd.f32 %v9230, %v9559
      %v9614 = vadd.f32 %v9231, %v9564
      %v9615 = vadd.f32 %v9232, %v9567
      %v9616 = vadd.f32 %v9233, %v9572
      %v9617 = vadd.f32 %v9234, %v9575
      %v9618 = vadd.f32 %v9235, %v9580
      %v9619 = vadd.f32 %v9236, %v9583
      %v9620 = vadd.f32 %v9237, %v9588
      %v9621 = vadd.f32 %v9238, %v9591
      %s9622 = scalar_lea.vmem %s4, 1
      %v9623 = vld [vmem:[%s9622] sm:$0x1]
      %v9625 = vlaneseq
      %v9626 = vshrl.u32 %v9625, 7
      %v9627 = vsub.s32 0, %v9626
      %v9628 = vrot.slane %v9623, %v9627
      %v9630 = vadd.f32 %v9594, %v9628
      %v9631 = vadd.f32 %v9595, %v9628
      %v9632 = vadd.f32 %v9596, %v9628
      %v9633 = vadd.f32 %v9597, %v9628
      %v9634 = vadd.f32 %v9598, %v9628
      %v9635 = vadd.f32 %v9599, %v9628
      %v9636 = vadd.f32 %v9600, %v9628
      %v9637 = vadd.f32 %v9601, %v9628
      %v9638 = vadd.f32 %v9602, %v9628
      %v9639 = vadd.f32 %v9603, %v9628
      %v9640 = vadd.f32 %v9604, %v9628
      %v9641 = vadd.f32 %v9605, %v9628
      %v9642 = vadd.f32 %v9606, %v9628
      %v9643 = vadd.f32 %v9607, %v9628
      %v9644 = vadd.f32 %v9608, %v9628
      %v9645 = vadd.f32 %v9609, %v9628
      %v9646 = vadd.f32 %v9610, %v9628
      %v9647 = vadd.f32 %v9611, %v9628
      %v9648 = vadd.f32 %v9612, %v9628
      %v9649 = vadd.f32 %v9613, %v9628
      %v9650 = vadd.f32 %v9614, %v9628
      %v9651 = vadd.f32 %v9615, %v9628
      %v9652 = vadd.f32 %v9616, %v9628
      %v9653 = vadd.f32 %v9617, %v9628
      %v9654 = vadd.f32 %v9618, %v9628
      %v9655 = vadd.f32 %v9619, %v9628
      %v9656 = vadd.f32 %v9620, %v9628
      %v9657 = vadd.f32 %v9621, %v9628
      %v9658 = vmax.f32 %v9630, 0.0
      %v9659 = vmax.f32 %v9631, 0.0
      %v9660 = vmax.f32 %v9632, 0.0
      %v9661 = vmax.f32 %v9633, 0.0
      %v9662 = vmax.f32 %v9634, 0.0
      %v9663 = vmax.f32 %v9635, 0.0
      %v9664 = vmax.f32 %v9636, 0.0
      %v9665 = vmax.f32 %v9637, 0.0
      %v9666 = vmax.f32 %v9638, 0.0
      %v9667 = vmax.f32 %v9639, 0.0
      %v9668 = vmax.f32 %v9640, 0.0
      %v9669 = vmax.f32 %v9641, 0.0
      %v9670 = vmax.f32 %v9642, 0.0
      %v9671 = vmax.f32 %v9643, 0.0
      %v9672 = vmax.f32 %v9644, 0.0
      %v9673 = vmax.f32 %v9645, 0.0
      %v9674 = vmax.f32 %v9646, 0.0
      %v9675 = vmax.f32 %v9647, 0.0
      %v9676 = vmax.f32 %v9648, 0.0
      %v9677 = vmax.f32 %v9649, 0.0
      %v9678 = vmax.f32 %v9650, 0.0
      %v9679 = vmax.f32 %v9651, 0.0
      %v9680 = vmax.f32 %v9652, 0.0
      %v9681 = vmax.f32 %v9653, 0.0
      %v9682 = vmax.f32 %v9654, 0.0
      %v9683 = vmax.f32 %v9655, 0.0
      %v9684 = vmax.f32 %v9656, 0.0
      %v9685 = vmax.f32 %v9657, 0.0
      %9686 = vst [vmem:[#allocation3 + $0x8] sm:$0xff] %v9658
      %9687 = vst [vmem:[#allocation3 + $0x18] sm:$0xff] %v9659
      %9688 = vst [vmem:[#allocation3 + $0x28] sm:$0xff] %v9660
      %9689 = vst [vmem:[#allocation3 + $0x38] sm:$0xff] %v9661
      %9690 = vst [vmem:[#allocation3 + $0x48] sm:$0xff] %v9662
      %9691 = vst [vmem:[#allocation3 + $0x58] sm:$0xff] %v9663
      %9692 = vst [vmem:[#allocation3 + $0x68] sm:$0xff] %v9664
      %9693 = vst [vmem:[#allocation3 + $0x78] sm:$0xff] %v9665
      %9694 = vst [vmem:[#allocation3 + $0x88] sm:$0xff] %v9666
      %9695 = vst [vmem:[#allocation3 + $0x98] sm:$0xff] %v9667
      %9696 = vst [vmem:[#allocation3 + $0xa8] sm:$0xff] %v9668
      %9697 = vst [vmem:[#allocation3 + $0xb8] sm:$0xff] %v9669
      %9698 = vst [vmem:[#allocation3 + $0xc8] sm:$0xff] %v9670
      %9699 = vst [vmem:[#allocation3 + $0xd8] sm:$0xff] %v9671
      %9700 = vst [vmem:[#allocation3 + $0xe8] sm:$0xff] %v9672
      %9701 = vst [vmem:[#allocation3 + $0xf8] sm:$0xff] %v9673
      %9702 = vst [vmem:[#allocation3 + $0x108] sm:$0xff] %v9674
      %9703 = vst [vmem:[#allocation3 + $0x118] sm:$0xff] %v9675
      %9704 = vst [vmem:[#allocation3 + $0x128] sm:$0xff] %v9676
      %9705 = vst [vmem:[#allocation3 + $0x138] sm:$0xff] %v9677
      %9706 = vst [vmem:[#allocation3 + $0x148] sm:$0xff] %v9678
      %9707 = vst [vmem:[#allocation3 + $0x158] sm:$0xff] %v9679
      %9708 = vst [vmem:[#allocation3 + $0x168] sm:$0xff] %v9680
      %9709 = vst [vmem:[#allocation3 + $0x178] sm:$0xff] %v9681
      %9710 = vst [vmem:[#allocation3 + $0x188] sm:$0xff] %v9682
      %9711 = vst [vmem:[#allocation3 + $0x198] sm:$0xff] %v9683
      %9712 = vst [vmem:[#allocation3 + $0x1a8] sm:$0xff] %v9684
      %9713 = vst [vmem:[#allocation3 + $0x1b8] sm:$0xff] %v9685
      %v9714 = vld [vmem:[#allocation3] sm:$0xff]
      %v9715 = vld [vmem:[#allocation3 + $0x8] sm:$0xff]
      %v9716 = vld [vmem:[#allocation3 + $0x10] sm:$0xff]
      %v9717 = vld [vmem:[#allocation3 + $0x18] sm:$0xff]
      %v9718 = vld [vmem:[#allocation3 + $0x20] sm:$0xff]
      %v9719 = vld [vmem:[#allocation3 + $0x28] sm:$0xff]
      %v9720 = vld [vmem:[#allocation3 + $0x30] sm:$0xff]
      %v9721 = vld [vmem:[#allocation3 + $0x38] sm:$0xff]
      %v9722 = vld [vmem:[#allocation3 + $0x40] sm:$0xff]
      %v9723 = vld [vmem:[#allocation3 + $0x48] sm:$0xff]
      %v9724 = vld [vmem:[#allocation3 + $0x50] sm:$0xff]
      %v9725 = vld [vmem:[#allocation3 + $0x58] sm:$0xff]
      %v9726 = vld [vmem:[#allocation3 + $0x60] sm:$0xff]
      %v9727 = vld [vmem:[#allocation3 + $0x68] sm:$0xff]
      %v9728 = vld [vmem:[#allocation3 + $0x70] sm:$0xff]
      %v9729 = vld [vmem:[#allocation3 + $0x78] sm:$0xff]
      %v9730 = vld [vmem:[#allocation3 + $0x80] sm:$0xff]
      %v9731 = vld [vmem:[#allocation3 + $0x88] sm:$0xff]
      %v9732 = vld [vmem:[#allocation3 + $0x90] sm:$0xff]
      %v9733 = vld [vmem:[#allocation3 + $0x98] sm:$0xff]
      %v9734 = vld [vmem:[#allocation3 + $0xa0] sm:$0xff]
      %v9735 = vld [vmem:[#allocation3 + $0xa8] sm:$0xff]
      %v9736 = vld [vmem:[#allocation3 + $0xb0] sm:$0xff]
      %v9737 = vld [vmem:[#allocation3 + $0xb8] sm:$0xff]
      %v9738 = vld [vmem:[#allocation3 + $0xc0] sm:$0xff]
      %v9739 = vld [vmem:[#allocation3 + $0xc8] sm:$0xff]
      %v9740 = vld [vmem:[#allocation3 + $0xd0] sm:$0xff]
      %v9741 = vld [vmem:[#allocation3 + $0xd8] sm:$0xff]
      %v9742 = vld [vmem:[#allocation3 + $0xe0] sm:$0xff]
      %v9743 = vld [vmem:[#allocation3 + $0xe8] sm:$0xff]
      %v9744 = vld [vmem:[#allocation3 + $0xf0] sm:$0xff]
      %v9745 = vld [vmem:[#allocation3 + $0xf8] sm:$0xff]
      %v9746 = vld [vmem:[#allocation3 + $0x100] sm:$0xff]
      %v9747 = vld [vmem:[#allocation3 + $0x108] sm:$0xff]
      %v9748 = vld [vmem:[#allocation3 + $0x110] sm:$0xff]
      %v9749 = vld [vmem:[#allocation3 + $0x118] sm:$0xff]
      %v9750 = vld [vmem:[#allocation3 + $0x120] sm:$0xff]
      %v9751 = vld [vmem:[#allocation3 + $0x128] sm:$0xff]
      %v9752 = vld [vmem:[#allocation3 + $0x130] sm:$0xff]
      %v9753 = vld [vmem:[#allocation3 + $0x138] sm:$0xff]
      %v9754 = vld [vmem:[#allocation3 + $0x140] sm:$0xff]
      %v9755 = vld [vmem:[#allocation3 + $0x148] sm:$0xff]
      %v9756 = vld [vmem:[#allocation3 + $0x150] sm:$0xff]
      %v9757 = vld [vmem:[#allocation3 + $0x158] sm:$0xff]
      %v9758 = vld [vmem:[#allocation3 + $0x160] sm:$0xff]
      %v9759 = vld [vmem:[#allocation3 + $0x168] sm:$0xff]
      %v9760 = vld [vmem:[#allocation3 + $0x170] sm:$0xff]
      %v9761 = vld [vmem:[#allocation3 + $0x178] sm:$0xff]
      %v9762 = vld [vmem:[#allocation3 + $0x180] sm:$0xff]
      %v9763 = vld [vmem:[#allocation3 + $0x188] sm:$0xff]
      %v9764 = vld [vmem:[#allocation3 + $0x190] sm:$0x7f]
      %v9765 = vld [vmem:[#allocation3 + $0x198] sm:$0x7f]
      %v9766 = vld [vmem:[#allocation3] sm:$0xfe]
      %v9767 = vld [vmem:[#allocation3 + $0x8] sm:$0xfe]
      %v9768 = vld [vmem:[#allocation3 + $0x190] sm:$0xff]
      %v9769 = vld [vmem:[#allocation3 + $0x198] sm:$0xff]
      %vm9822 = vcmask 1046528
      %v9823 = vrot.slane %v9766, 1
      %v9824 = vrot.slane %v9716, 1
      %v9825 = vsel %vm9822, %v9823, %v9824
      %v9826 = vrot.slane %v9767, 1
      %v9827 = vrot.slane %v9717, 1
      %v9828 = vsel %vm9822, %v9826, %v9827
      %v9829 = vrot.slane %v9718, 1
      %v9830 = vsel %vm9822, %v9824, %v9829
      %v9831 = vrot.slane %v9719, 1
      %v9832 = vsel %vm9822, %v9827, %v9831
      %v9833 = vrot.slane %v9720, 1
      %v9834 = vsel %vm9822, %v9829, %v9833
      %v9835 = vrot.slane %v9721, 1
      %v9836 = vsel %vm9822, %v9831, %v9835
      %v9837 = vrot.slane %v9722, 1
      %v9838 = vsel %vm9822, %v9833, %v9837
      %v9839 = vrot.slane %v9723, 1
      %v9840 = vsel %vm9822, %v9835, %v9839
      %v9841 = vrot.slane %v9724, 1
      %v9842 = vsel %vm9822, %v9837, %v9841
      %v9843 = vrot.slane %v9725, 1
      %v9844 = vsel %vm9822, %v9839, %v9843
      %v9845 = vrot.slane %v9726, 1
      %v9846 = vsel %vm9822, %v9841, %v9845
      %v9847 = vrot.slane %v9727, 1
      %v9848 = vsel %vm9822, %v9843, %v9847
      %v9849 = vrot.slane %v9728, 1
      %v9850 = vsel %vm9822, %v9845, %v9849
      %v9851 = vrot.slane %v9729, 1
      %v9852 = vsel %vm9822, %v9847, %v9851
      %v9853 = vrot.slane %v9730, 1
      %v9854 = vsel %vm9822, %v9849, %v9853
      %v9855 = vrot.slane %v9731, 1
      %v9856 = vsel %vm9822, %v9851, %v9855
      %v9857 = vrot.slane %v9732, 1
      %v9858 = vsel %vm9822, %v9853, %v9857
      %v9859 = vrot.slane %v9733, 1
      %v9860 = vsel %vm9822, %v9855, %v9859
      %v9861 = vrot.slane %v9734, 1
      %v9862 = vsel %vm9822, %v9857, %v9861
      %v9863 = vrot.slane %v9735, 1
      %v9864 = vsel %vm9822, %v9859, %v9863
      %v9865 = vrot.slane %v9736, 1
      %v9866 = vsel %vm9822, %v9861, %v9865
      %v9867 = vrot.slane %v9737, 1
      %v9868 = vsel %vm9822, %v9863, %v9867
      %v9869 = vrot.slane %v9738, 1
      %v9870 = vsel %vm9822, %v9865, %v9869
      %v9871 = vrot.slane %v9739, 1
      %v9872 = vsel %vm9822, %v9867, %v9871
      %v9873 = vrot.slane %v9740, 1
      %v9874 = vsel %vm9822, %v9869, %v9873
      %v9875 = vrot.slane %v9741, 1
      %v9876 = vsel %vm9822, %v9871, %v9875
      %v9877 = vrot.slane %v9742, 1
      %v9878 = vsel %vm9822, %v9873, %v9877
      %v9879 = vrot.slane %v9743, 1
      %v9880 = vsel %vm9822, %v9875, %v9879
      %v9881 = vrot.slane %v9744, 1
      %v9882 = vsel %vm9822, %v9877, %v9881
      %v9883 = vrot.slane %v9745, 1
      %v9884 = vsel %vm9822, %v9879, %v9883
      %v9885 = vrot.slane %v9746, 1
      %v9886 = vsel %vm9822, %v9881, %v9885
      %v9887 = vrot.slane %v9747, 1
      %v9888 = vsel %vm9822, %v9883, %v9887
      %v9889 = vrot.slane %v9748, 1
      %v9890 = vsel %vm9822, %v9885, %v9889
      %v9891 = vrot.slane %v9749, 1
      %v9892 = vsel %vm9822, %v9887, %v9891
      %v9893 = vrot.slane %v9750, 1
      %v9894 = vsel %vm9822, %v9889, %v9893
      %v9895 = vrot.slane %v9751, 1
      %v9896 = vsel %vm9822, %v9891, %v9895
      %v9897 = vrot.slane %v9752, 1
      %v9898 = vsel %vm9822, %v9893, %v9897
      %v9899 = vrot.slane %v9753, 1
      %v9900 = vsel %vm9822, %v9895, %v9899
      %v9901 = vrot.slane %v9754, 1
      %v9902 = vsel %vm9822, %v9897, %v9901
      %v9903 = vrot.slane %v9755, 1
      %v9904 = vsel %vm9822, %v9899, %v9903
      %v9905 = vrot.slane %v9756, 1
      %v9906 = vsel %vm9822, %v9901, %v9905
      %v9907 = vrot.slane %v9757, 1
      %v9908 = vsel %vm9822, %v9903, %v9907
      %v9909 = vrot.slane %v9758, 1
      %v9910 = vsel %vm9822, %v9905, %v9909
      %v9911 = vrot.slane %v9759, 1
      %v9912 = vsel %vm9822, %v9907, %v9911
      %v9913 = vrot.slane %v9760, 1
      %v9914 = vsel %vm9822, %v9909, %v9913
      %v9915 = vrot.slane %v9761, 1
      %v9916 = vsel %vm9822, %v9911, %v9915
      %v9917 = vrot.slane %v9762, 1
      %v9918 = vsel %vm9822, %v9913, %v9917
      %v9919 = vrot.slane %v9763, 1
      %v9920 = vsel %vm9822, %v9915, %v9919
      %v9921 = vrot.slane %v9768, 1
      %v9922 = vsel %vm9822, %v9917, %v9921
      %v9923 = vrot.slane %v9769, 1
      %v9924 = vsel %vm9822, %v9919, %v9923
      %v9977 = vmax.f32 %v9714, %v9825
      %v9978 = vmax.f32 %v9715, %v9828
      %v9979 = vmax.f32 %v9716, %v9830
      %v9980 = vmax.f32 %v9717, %v9832
      %v9981 = vmax.f32 %v9718, %v9834
      %v9982 = vmax.f32 %v9719, %v9836
      %v9983 = vmax.f32 %v9720, %v9838
      %v9984 = vmax.f32 %v9721, %v9840
      %v9985 = vmax.f32 %v9722, %v9842
      %v9986 = vmax.f32 %v9723, %v9844
      %v9987 = vmax.f32 %v9724, %v9846
      %v9988 = vmax.f32 %v9725, %v9848
      %v9989 = vmax.f32 %v9726, %v9850
      %v9990 = vmax.f32 %v9727, %v9852
      %v9991 = vmax.f32 %v9728, %v9854
      %v9992 = vmax.f32 %v9729, %v9856
      %v9993 = vmax.f32 %v9730, %v9858
      %v9994 = vmax.f32 %v9731, %v9860
      %v9995 = vmax.f32 %v9732, %v9862
      %v9996 = vmax.f32 %v9733, %v9864
      %v9997 = vmax.f32 %v9734, %v9866
      %v9998 = vmax.f32 %v9735, %v9868
      %v9999 = vmax.f32 %v9736, %v9870
      %v10000 = vmax.f32 %v9737, %v9872
      %v10001 = vmax.f32 %v9738, %v9874
      %v10002 = vmax.f32 %v9739, %v9876
      %v10003 = vmax.f32 %v9740, %v9878
      %v10004 = vmax.f32 %v9741, %v9880
      %v10005 = vmax.f32 %v9742, %v9882
      %v10006 = vmax.f32 %v9743, %v9884
      %v10007 = vmax.f32 %v9744, %v9886
      %v10008 = vmax.f32 %v9745, %v9888
      %v10009 = vmax.f32 %v9746, %v9890
      %v10010 = vmax.f32 %v9747, %v9892
      %v10011 = vmax.f32 %v9748, %v9894
      %v10012 = vmax.f32 %v9749, %v9896
      %v10013 = vmax.f32 %v9750, %v9898
      %v10014 = vmax.f32 %v9751, %v9900
      %v10015 = vmax.f32 %v9752, %v9902
      %v10016 = vmax.f32 %v9753, %v9904
      %v10017 = vmax.f32 %v9754, %v9906
      %v10018 = vmax.f32 %v9755, %v9908
      %v10019 = vmax.f32 %v9756, %v9910
      %v10020 = vmax.f32 %v9757, %v9912
      %v10021 = vmax.f32 %v9758, %v9914
      %v10022 = vmax.f32 %v9759, %v9916
      %v10023 = vmax.f32 %v9760, %v9918
      %v10024 = vmax.f32 %v9761, %v9920
      %v10025 = vmax.f32 %v9762, %v9922
      %v10026 = vmax.f32 %v9763, %v9924
      %v10027 = vmax.f32 %v9764, %v9921
      %v10028 = vmax.f32 %v9765, %v9923
      %v10029 = vld [vmem:[#allocation3 + $0x20] sm:$0xff]
      %v10030 = vld [vmem:[#allocation3 + $0x28] sm:$0xff]
      %v10031 = vld [vmem:[#allocation3 + $0x30] sm:$0xff]
      %v10032 = vld [vmem:[#allocation3 + $0x38] sm:$0xff]
      %v10033 = vld [vmem:[#allocation3 + $0x40] sm:$0xff]
      %v10034 = vld [vmem:[#allocation3 + $0x48] sm:$0xff]
      %v10035 = vld [vmem:[#allocation3 + $0x50] sm:$0xff]
      %v10036 = vld [vmem:[#allocation3 + $0x58] sm:$0xff]
      %v10037 = vld [vmem:[#allocation3 + $0x60] sm:$0xff]
      %v10038 = vld [vmem:[#allocation3 + $0x68] sm:$0xff]
      %v10039 = vld [vmem:[#allocation3 + $0x70] sm:$0xff]
      %v10040 = vld [vmem:[#allocation3 + $0x78] sm:$0xff]
      %v10041 = vld [vmem:[#allocation3 + $0x80] sm:$0xff]
      %v10042 = vld [vmem:[#allocation3 + $0x88] sm:$0xff]
      %v10043 = vld [vmem:[#allocation3 + $0x90] sm:$0xff]
      %v10044 = vld [vmem:[#allocation3 + $0x98] sm:$0xff]
      %v10045 = vld [vmem:[#allocation3 + $0xa0] sm:$0xff]
      %v10046 = vld [vmem:[#allocation3 + $0xa8] sm:$0xff]
      %v10047 = vld [vmem:[#allocation3 + $0xb0] sm:$0xff]
      %v10048 = vld [vmem:[#allocation3 + $0xb8] sm:$0xff]
      %v10049 = vld [vmem:[#allocation3 + $0xc0] sm:$0xff]
      %v10050 = vld [vmem:[#allocation3 + $0xc8] sm:$0xff]
      %v10051 = vld [vmem:[#allocation3 + $0xd0] sm:$0xff]
      %v10052 = vld [vmem:[#allocation3 + $0xd8] sm:$0xff]
      %v10053 = vld [vmem:[#allocation3 + $0xe0] sm:$0xff]
      %v10054 = vld [vmem:[#allocation3 + $0xe8] sm:$0xff]
      %v10055 = vld [vmem:[#allocation3 + $0xf0] sm:$0xff]
      %v10056 = vld [vmem:[#allocation3 + $0xf8] sm:$0xff]
      %v10057 = vld [vmem:[#allocation3 + $0x100] sm:$0xff]
      %v10058 = vld [vmem:[#allocation3 + $0x108] sm:$0xff]
      %v10059 = vld [vmem:[#allocation3 + $0x110] sm:$0xff]
      %v10060 = vld [vmem:[#allocation3 + $0x118] sm:$0xff]
      %v10061 = vld [vmem:[#allocation3 + $0x120] sm:$0xff]
      %v10062 = vld [vmem:[#allocation3 + $0x128] sm:$0xff]
      %v10063 = vld [vmem:[#allocation3 + $0x130] sm:$0xff]
      %v10064 = vld [vmem:[#allocation3 + $0x138] sm:$0xff]
      %v10065 = vld [vmem:[#allocation3 + $0x140] sm:$0xff]
      %v10066 = vld [vmem:[#allocation3 + $0x148] sm:$0xff]
      %v10067 = vld [vmem:[#allocation3 + $0x150] sm:$0xff]
      %v10068 = vld [vmem:[#allocation3 + $0x158] sm:$0xff]
      %v10069 = vld [vmem:[#allocation3 + $0x160] sm:$0xff]
      %v10070 = vld [vmem:[#allocation3 + $0x168] sm:$0xff]
      %v10071 = vld [vmem:[#allocation3 + $0x170] sm:$0xff]
      %v10072 = vld [vmem:[#allocation3 + $0x178] sm:$0xff]
      %v10073 = vld [vmem:[#allocation3 + $0x180] sm:$0xff]
      %v10074 = vld [vmem:[#allocation3 + $0x188] sm:$0xff]
      %v10075 = vld [vmem:[#allocation3 + $0x190] sm:$0xff]
      %v10076 = vld [vmem:[#allocation3 + $0x198] sm:$0xff]
      %v10077 = vld [vmem:[#allocation3 + $0x1a0] sm:$0xff]
      %v10078 = vld [vmem:[#allocation3 + $0x1a8] sm:$0xff]
      %v10079 = vld [vmem:[#allocation3 + $0x1b0] sm:$0x7f]
      %v10080 = vld [vmem:[#allocation3 + $0x1b8] sm:$0x7f]
      %v10081 = vld [vmem:[#allocation3 + $0x20] sm:$0xfe]
      %v10082 = vld [vmem:[#allocation3 + $0x28] sm:$0xfe]
      %v10083 = vld [vmem:[#allocation3 + $0x1b0] sm:$0xff]
      %v10084 = vld [vmem:[#allocation3 + $0x1b8] sm:$0xff]
      %v10137 = vrot.slane %v10081, 1
      %v10138 = vrot.slane %v10031, 1
      %v10139 = vsel %vm9822, %v10137, %v10138
      %v10140 = vrot.slane %v10082, 1
      %v10141 = vrot.slane %v10032, 1
      %v10142 = vsel %vm9822, %v10140, %v10141
      %v10143 = vrot.slane %v10033, 1
      %v10144 = vsel %vm9822, %v10138, %v10143
      %v10145 = vrot.slane %v10034, 1
      %v10146 = vsel %vm9822, %v10141, %v10145
      %v10147 = vrot.slane %v10035, 1
      %v10148 = vsel %vm9822, %v10143, %v10147
      %v10149 = vrot.slane %v10036, 1
      %v10150 = vsel %vm9822, %v10145, %v10149
      %v10151 = vrot.slane %v10037, 1
      %v10152 = vsel %vm9822, %v10147, %v10151
      %v10153 = vrot.slane %v10038, 1
      %v10154 = vsel %vm9822, %v10149, %v10153
      %v10155 = vrot.slane %v10039, 1
      %v10156 = vsel %vm9822, %v10151, %v10155
      %v10157 = vrot.slane %v10040, 1
      %v10158 = vsel %vm9822, %v10153, %v10157
      %v10159 = vrot.slane %v10041, 1
      %v10160 = vsel %vm9822, %v10155, %v10159
      %v10161 = vrot.slane %v10042, 1
      %v10162 = vsel %vm9822, %v10157, %v10161
      %v10163 = vrot.slane %v10043, 1
      %v10164 = vsel %vm9822, %v10159, %v10163
      %v10165 = vrot.slane %v10044, 1
      %v10166 = vsel %vm9822, %v10161, %v10165
      %v10167 = vrot.slane %v10045, 1
      %v10168 = vsel %vm9822, %v10163, %v10167
      %v10169 = vrot.slane %v10046, 1
      %v10170 = vsel %vm9822, %v10165, %v10169
      %v10171 = vrot.slane %v10047, 1
      %v10172 = vsel %vm9822, %v10167, %v10171
      %v10173 = vrot.slane %v10048, 1
      %v10174 = vsel %vm9822, %v10169, %v10173
      %v10175 = vrot.slane %v10049, 1
      %v10176 = vsel %vm9822, %v10171, %v10175
      %v10177 = vrot.slane %v10050, 1
      %v10178 = vsel %vm9822, %v10173, %v10177
      %v10179 = vrot.slane %v10051, 1
      %v10180 = vsel %vm9822, %v10175, %v10179
      %v10181 = vrot.slane %v10052, 1
      %v10182 = vsel %vm9822, %v10177, %v10181
      %v10183 = vrot.slane %v10053, 1
      %v10184 = vsel %vm9822, %v10179, %v10183
      %v10185 = vrot.slane %v10054, 1
      %v10186 = vsel %vm9822, %v10181, %v10185
      %v10187 = vrot.slane %v10055, 1
      %v10188 = vsel %vm9822, %v10183, %v10187
      %v10189 = vrot.slane %v10056, 1
      %v10190 = vsel %vm9822, %v10185, %v10189
      %v10191 = vrot.slane %v10057, 1
      %v10192 = vsel %vm9822, %v10187, %v10191
      %v10193 = vrot.slane %v10058, 1
      %v10194 = vsel %vm9822, %v10189, %v10193
      %v10195 = vrot.slane %v10059, 1
      %v10196 = vsel %vm9822, %v10191, %v10195
      %v10197 = vrot.slane %v10060, 1
      %v10198 = vsel %vm9822, %v10193, %v10197
      %v10199 = vrot.slane %v10061, 1
      %v10200 = vsel %vm9822, %v10195, %v10199
      %v10201 = vrot.slane %v10062, 1
      %v10202 = vsel %vm9822, %v10197, %v10201
      %v10203 = vrot.slane %v10063, 1
      %v10204 = vsel %vm9822, %v10199, %v10203
      %v10205 = vrot.slane %v10064, 1
      %v10206 = vsel %vm9822, %v10201, %v10205
      %v10207 = vrot.slane %v10065, 1
      %v10208 = vsel %vm9822, %v10203, %v10207
      %v10209 = vrot.slane %v10066, 1
      %v10210 = vsel %vm9822, %v10205, %v10209
      %v10211 = vrot.slane %v10067, 1
      %v10212 = vsel %vm9822, %v10207, %v10211
      %v10213 = vrot.slane %v10068, 1
      %v10214 = vsel %vm9822, %v10209, %v10213
      %v10215 = vrot.slane %v10069, 1
      %v10216 = vsel %vm9822, %v10211, %v10215
      %v10217 = vrot.slane %v10070, 1
      %v10218 = vsel %vm9822, %v10213, %v10217
      %v10219 = vrot.slane %v10071, 1
      %v10220 = vsel %vm9822, %v10215, %v10219
      %v10221 = vrot.slane %v10072, 1
      %v10222 = vsel %vm9822, %v10217, %v10221
      %v10223 = vrot.slane %v10073, 1
      %v10224 = vsel %vm9822, %v10219, %v10223
      %v10225 = vrot.slane %v10074, 1
      %v10226 = vsel %vm9822, %v10221, %v10225
      %v10227 = vrot.slane %v10075, 1
      %v10228 = vsel %vm9822, %v10223, %v10227
      %v10229 = vrot.slane %v10076, 1
      %v10230 = vsel %vm9822, %v10225, %v10229
      %v10231 = vrot.slane %v10077, 1
      %v10232 = vsel %vm9822, %v10227, %v10231
      %v10233 = vrot.slane %v10078, 1
      %v10234 = vsel %vm9822, %v10229, %v10233
      %v10235 = vrot.slane %v10083, 1
      %v10236 = vsel %vm9822, %v10231, %v10235
      %v10237 = vrot.slane %v10084, 1
      %v10238 = vsel %vm9822, %v10233, %v10237
      %v10291 = vmax.f32 %v10029, %v10139
      %v10292 = vmax.f32 %v10030, %v10142
      %v10293 = vmax.f32 %v10031, %v10144
      %v10294 = vmax.f32 %v10032, %v10146
      %v10295 = vmax.f32 %v10033, %v10148
      %v10296 = vmax.f32 %v10034, %v10150
      %v10297 = vmax.f32 %v10035, %v10152
      %v10298 = vmax.f32 %v10036, %v10154
      %v10299 = vmax.f32 %v10037, %v10156
      %v10300 = vmax.f32 %v10038, %v10158
      %v10301 = vmax.f32 %v10039, %v10160
      %v10302 = vmax.f32 %v10040, %v10162
      %v10303 = vmax.f32 %v10041, %v10164
      %v10304 = vmax.f32 %v10042, %v10166
      %v10305 = vmax.f32 %v10043, %v10168
      %v10306 = vmax.f32 %v10044, %v10170
      %v10307 = vmax.f32 %v10045, %v10172
      %v10308 = vmax.f32 %v10046, %v10174
      %v10309 = vmax.f32 %v10047, %v10176
      %v10310 = vmax.f32 %v10048, %v10178
      %v10311 = vmax.f32 %v10049, %v10180
      %v10312 = vmax.f32 %v10050, %v10182
      %v10313 = vmax.f32 %v10051, %v10184
      %v10314 = vmax.f32 %v10052, %v10186
      %v10315 = vmax.f32 %v10053, %v10188
      %v10316 = vmax.f32 %v10054, %v10190
      %v10317 = vmax.f32 %v10055, %v10192
      %v10318 = vmax.f32 %v10056, %v10194
      %v10319 = vmax.f32 %v10057, %v10196
      %v10320 = vmax.f32 %v10058, %v10198
      %v10321 = vmax.f32 %v10059, %v10200
      %v10322 = vmax.f32 %v10060, %v10202
      %v10323 = vmax.f32 %v10061, %v10204
      %v10324 = vmax.f32 %v10062, %v10206
      %v10325 = vmax.f32 %v10063, %v10208
      %v10326 = vmax.f32 %v10064, %v10210
      %v10327 = vmax.f32 %v10065, %v10212
      %v10328 = vmax.f32 %v10066, %v10214
      %v10329 = vmax.f32 %v10067, %v10216
      %v10330 = vmax.f32 %v10068, %v10218
      %v10331 = vmax.f32 %v10069, %v10220
      %v10332 = vmax.f32 %v10070, %v10222
      %v10333 = vmax.f32 %v10071, %v10224
      %v10334 = vmax.f32 %v10072, %v10226
      %v10335 = vmax.f32 %v10073, %v10228
      %v10336 = vmax.f32 %v10074, %v10230
      %v10337 = vmax.f32 %v10075, %v10232
      %v10338 = vmax.f32 %v10076, %v10234
      %v10339 = vmax.f32 %v10077, %v10236
      %v10340 = vmax.f32 %v10078, %v10238
      %v10341 = vmax.f32 %v10079, %v10235
      %v10342 = vmax.f32 %v10080, %v10237
      %v10343 = vmax.f32 %v9977, %v10291
      %v10344 = vmax.f32 %v9978, %v10292
      %v10345 = vmax.f32 %v9979, %v10293
      %v10346 = vmax.f32 %v9980, %v10294
      %v10347 = vmax.f32 %v9981, %v10295
      %v10348 = vmax.f32 %v9982, %v10296
      %v10349 = vmax.f32 %v9983, %v10297
      %v10350 = vmax.f32 %v9984, %v10298
      %v10351 = vmax.f32 %v9985, %v10299
      %v10352 = vmax.f32 %v9986, %v10300
      %v10353 = vmax.f32 %v9987, %v10301
      %v10354 = vmax.f32 %v9988, %v10302
      %v10355 = vmax.f32 %v9989, %v10303
      %v10356 = vmax.f32 %v9990, %v10304
      %v10357 = vmax.f32 %v9991, %v10305
      %v10358 = vmax.f32 %v9992, %v10306
      %v10359 = vmax.f32 %v9993, %v10307
      %v10360 = vmax.f32 %v9994, %v10308
      %v10361 = vmax.f32 %v9995, %v10309
      %v10362 = vmax.f32 %v9996, %v10310
      %v10363 = vmax.f32 %v9997, %v10311
      %v10364 = vmax.f32 %v9998, %v10312
      %v10365 = vmax.f32 %v9999, %v10313
      %v10366 = vmax.f32 %v10000, %v10314
      %v10367 = vmax.f32 %v10001, %v10315
      %v10368 = vmax.f32 %v10002, %v10316
      %v10369 = vmax.f32 %v10003, %v10317
      %v10370 = vmax.f32 %v10004, %v10318
      %v10371 = vmax.f32 %v10005, %v10319
      %v10372 = vmax.f32 %v10006, %v10320
      %v10373 = vmax.f32 %v10007, %v10321
      %v10374 = vmax.f32 %v10008, %v10322
      %v10375 = vmax.f32 %v10009, %v10323
      %v10376 = vmax.f32 %v10010, %v10324
      %v10377 = vmax.f32 %v10011, %v10325
      %v10378 = vmax.f32 %v10012, %v10326
      %v10379 = vmax.f32 %v10013, %v10327
      %v10380 = vmax.f32 %v10014, %v10328
      %v10381 = vmax.f32 %v10015, %v10329
      %v10382 = vmax.f32 %v10016, %v10330
      %v10383 = vmax.f32 %v10017, %v10331
      %v10384 = vmax.f32 %v10018, %v10332
      %v10385 = vmax.f32 %v10019, %v10333
      %v10386 = vmax.f32 %v10020, %v10334
      %v10387 = vmax.f32 %v10021, %v10335
      %v10388 = vmax.f32 %v10022, %v10336
      %v10389 = vmax.f32 %v10023, %v10337
      %v10390 = vmax.f32 %v10024, %v10338
      %v10391 = vmax.f32 %v10025, %v10339
      %v10392 = vmax.f32 %v10026, %v10340
      %v10393 = vmax.f32 %v10027, %v10341
      %v10394 = vmax.f32 %v10028, %v10342
      %v10395 = vld [vmem:[%s5] sm:$0xff]
      %v10396 = vld [vmem:[%s5 + $0x8] sm:$0xff]
      %v10397 = vld [vmem:[%s5 + $0x10] sm:$0xff]
      %v10398 = vld [vmem:[%s5 + $0x18] sm:$0xff]
      %v10399 = vld [vmem:[%s5 + $0x20] sm:$0xff]
      %v10400 = vld [vmem:[%s5 + $0x28] sm:$0xff]
      %v10401 = vld [vmem:[%s5 + $0x30] sm:$0xff]
      %v10402 = vld [vmem:[%s5 + $0x38] sm:$0xff]
      %v10403 = vld [vmem:[%s5 + $0x40] sm:$0xff]
      %v10404 = vld [vmem:[%s5 + $0x48] sm:$0xff]
      %v10405 = vld [vmem:[%s5 + $0x50] sm:$0xff]
      %v10406 = vld [vmem:[%s5 + $0x58] sm:$0xff]
      %v10407 = vld [vmem:[%s5 + $0x60] sm:$0x1]
      %v10408 = vld [vmem:[%s5 + $0x68] sm:$0x1]
      %vm10409 = vcmask 646144
      %v10411 = vsel %vm10409, %v10396, 0
      %v10414 = vsel %vm10409, %v10398, 0
      %v10417 = vsel %vm10409, %v10400, 0
      %v10420 = vsel %vm10409, %v10402, 0
      %v10423 = vsel %vm10409, %v10404, 0
      %v10426 = vsel %vm10409, %v10406, 0
      %v10429 = vsel %vm10409, %v10408, 0
      %v10432 = vsel %vm9822, %v10393, 0
      %v10435 = vsel %vm9822, %v10394, 0
      %10437 = vmatprep.subr.mxu0 %v10344
      %10438 = vmatpush1.msra.mxu0 %v10343
      %10439 = vmatprep.subr.mxu0 %v10346
      %10440 = vmatpush1.msra.mxu0 %v10345
      %10441 = vmatprep.subr.mxu0 %v10348
      %10442 = vmatpush1.msra.mxu0 %v10347
      %10443 = vmatprep.subr.mxu0 %v10350
      %10444 = vmatpush1.msra.mxu0 %v10349
      %10445 = vmatprep.subr.mxu0 %v10352
      %10446 = vmatpush1.msra.mxu0 %v10351
      %10447 = vmatprep.subr.mxu0 %v10354
      %10448 = vmatpush1.msra.mxu0 %v10353
      %10449 = vmatprep.subr.mxu0 %v10356
      %10450 = vmatpush1.msra.mxu0 %v10355
      %10451 = vmatprep.subr.mxu0 %v10358
      %10452 = vmatpush1.msra.mxu0 %v10357
      %10453 = vmatprep.subr.mxu0 %v10360
      %10454 = vmatpush1.msra.mxu0 %v10359
      %10455 = vmatprep.subr.mxu0 %v10362
      %10456 = vmatpush1.msra.mxu0 %v10361
      %10457 = vmatprep.subr.mxu0 %v10364
      %10458 = vmatpush1.msra.mxu0 %v10363
      %10459 = vmatprep.subr.mxu0 %v10366
      %10460 = vmatpush1.msra.mxu0 %v10365
      %10461 = vmatprep.subr.mxu0 %v10368
      %10462 = vmatpush1.msra.mxu0 %v10367
      %10463 = vmatprep.subr.mxu0 %v10370
      %10464 = vmatpush1.msra.mxu0 %v10369
      %10465 = vmatprep.subr.mxu0 %v10372
      %10466 = vmatpush1.msra.mxu0 %v10371
      %10467 = vmatprep.subr.mxu0 %v10374
      %10468 = vmatpush1.msra.mxu0 %v10373
      %10469 = vmatprep.subr.mxu0 %v10376
      %10470 = vmatpush1.msra.mxu0 %v10375
      %10471 = vmatprep.subr.mxu0 %v10378
      %10472 = vmatpush1.msra.mxu0 %v10377
      %10473 = vmatprep.subr.mxu0 %v10380
      %10474 = vmatpush1.msra.mxu0 %v10379
      %10475 = vmatprep.subr.mxu0 %v10382
      %10476 = vmatpush1.msra.mxu0 %v10381
      %10477 = vmatprep.subr.mxu0 %v10384
      %10478 = vmatpush1.msra.mxu0 %v10383
      %10479 = vmatprep.subr.mxu0 %v10386
      %10480 = vmatpush1.msra.mxu0 %v10385
      %10481 = vmatprep.subr.mxu0 %v10388
      %10482 = vmatpush1.msra.mxu0 %v10387
      %10483 = vmatprep.subr.mxu0 %v10390
      %10484 = vmatpush1.msra.mxu0 %v10389
      %10485 = vmatprep.subr.mxu0 %v10392
      %10486 = vmatpush1.msra.mxu0 %v10391
      %10487 = vmatprep.subr.mxu0 %v10435
      %10488 = vmatpush1.msra.mxu0 %v10432
      %10489 = vmatprep.subr.mxu0 0.0
      %10490 = vmatpush1.msra.mxu0 0.0
      %10491 = vmatprep.subr.mxu0 0.0
      %10492 = vmatpush1.msra.mxu0 0.0
      %10493 = vmatprep.subr.mxu0 0.0
      %10494 = vmatpush1.msra.mxu0 0.0
      %10495 = vmatprep.subr.mxu0 0.0
      %10496 = vmatpush1.msra.mxu0 0.0
      %10497 = vmatprep.subr.mxu0 0.0
      %10498 = vmatpush1.msra.mxu0 0.0
      %10499 = vmatprep.subr.mxu0 0.0
      %10500 = vmatpush1.msra.mxu0 0.0
      %10501 = vmatprep.mubr.f32.mxu0 %v10411
      %10502 = vmatmul.mubr.f32.gmra.mrb[0].mxu0 %v10395
      %v10503 = vpop.f32.mrb[0].mxu0
      %v10504 = vadd.f32 0.0, %v10503
      %v10505 = vpop.f32.mrb[0].mxu0
      %v10506 = vadd.f32 0.0, %v10505
      %10507 = vmatprep.mubr.f32.mxu0 %v10414
      %10508 = vmatmul.mubr.f32.gmra.mrb[0].mxu0 %v10397
      %v10509 = vpop.f32.mrb[0].mxu0
      %v10510 = vadd.f32 0.0, %v10509
      %v10511 = vpop.f32.mrb[0].mxu0
      %v10512 = vadd.f32 0.0, %v10511
      %10513 = vmatprep.mubr.f32.mxu0 %v10417
      %10514 = vmatmul.mubr.f32.gmra.mrb[0].mxu0 %v10399
      %v10515 = vpop.f32.mrb[0].mxu0
      %v10516 = vadd.f32 0.0, %v10515
      %v10517 = vpop.f32.mrb[0].mxu0
      %v10518 = vadd.f32 0.0, %v10517
      %10519 = vmatprep.mubr.f32.mxu0 %v10420
      %10520 = vmatmul.mubr.f32.gmra.mrb[0].mxu0 %v10401
      %v10521 = vpop.f32.mrb[0].mxu0
      %v10522 = vadd.f32 0.0, %v10521
      %v10523 = vpop.f32.mrb[0].mxu0
      %v10524 = vadd.f32 0.0, %v10523
      %10525 = vmatprep.mubr.f32.mxu0 %v10423
      %10526 = vmatmul.mubr.f32.gmra.mrb[0].mxu0 %v10403
      %v10527 = vpop.f32.mrb[0].mxu0
      %v10528 = vadd.f32 0.0, %v10527
      %v10529 = vpop.f32.mrb[0].mxu0
      %v10530 = vadd.f32 0.0, %v10529
      %10531 = vmatprep.mubr.f32.mxu0 %v10426
      %10532 = vmatmul.mubr.f32.gmra.mrb[0].mxu0 %v10405
      %v10533 = vpop.f32.mrb[0].mxu0
      %v10534 = vadd.f32 0.0, %v10533
      %v10535 = vpop.f32.mrb[0].mxu0
      %v10536 = vadd.f32 0.0, %v10535
      %10537 = vmatprep.mubr.f32.mxu0 %v10429
      %10538 = vmatmul.mubr.f32.gmra.mrb[0].mxu0 %v10407
      %v10539 = vpop.f32.mrb[0].mxu0
      %v10540 = vadd.f32 0.0, %v10539
      %v10541 = vpop.f32.mrb[0].mxu0
      %v10542 = vadd.f32 0.0, %v10541
      %10543 = vdwg.mxu0
      %10544 = vst [vmem:[%s251] sm:$0xff] %v10504
      %10545 = vst [vmem:[%s251 + $0x8] sm:$0xff] %v10506
      %10546 = vst [vmem:[%s251 + $0x10] sm:$0xff] %v10510
      %10547 = vst [vmem:[%s251 + $0x18] sm:$0xff] %v10512
      %10548 = vst [vmem:[%s251 + $0x20] sm:$0xff] %v10516
      %10549 = vst [vmem:[%s251 + $0x28] sm:$0xff] %v10518
      %10550 = vst [vmem:[%s251 + $0x30] sm:$0xff] %v10522
      %10551 = vst [vmem:[%s251 + $0x38] sm:$0xff] %v10524
      %10552 = vst [vmem:[%s251 + $0x40] sm:$0xff] %v10528
      %10553 = vst [vmem:[%s251 + $0x48] sm:$0xff] %v10530
      %10554 = vst [vmem:[%s251 + $0x50] sm:$0xff] %v10534
      %10555 = vst [vmem:[%s251 + $0x58] sm:$0xff] %v10536
      %10556 = vst [vmem:[%s251 + $0x60] sm:$0x1] %v10540
      %10557 = vst [vmem:[%s251 + $0x68] sm:$0x1] %v10542
      %p10558 = scmp.lt.s32.totalorder %s17, 1
      %s10559 = scalar_select %p10558, %s17, 1
      %s10560 = smul.addr %s10559, 14
      %s10561 = smul.addr %s10560, 8
      %s10562 = scalar_lea.vmem %s6, %s10561
      // Predicated region
      $region45: #{mod_four_forward.1} parent=43 // pred_check
        %p10563 = pneg %p166
      $region46: #{mod_four_forward.1} parent=43 // pred_check_branch
        %10565 = sbr.rel (%p10563) target = $region48
      $region47: #{mod_four_forward.1} parent=43 // pred_region
        _
      $region48: #{mod_four_forward.1} parent=43 // pred_fallthru
        _
    $region44: #{mod_four_forward.1} parent=5 // pred_fallthru
      _
    %p10566 = scmp.le.s32.totalorder 2, %s12
    // Predicated region
    $region49: #{mod_four_forward.1} parent=5 // pred_check
      %p10567 = pneg %p10566
    $region50: #{mod_four_forward.1} parent=5 // pred_check_branch
      %10569 = sbr.rel (%p10567) target = $region52
    $region51: #{mod_four_forward.1} parent=5 // pred_region
      %s10570 = ssub.s32 %s12, 2
      // Predicated region
      $region53: #{mod_four_forward.1} parent=51 // pred_check
        %p10571 = pneg %p172
      $region54: #{mod_four_forward.1} parent=51 // pred_check_branch
        %10573 = sbr.rel (%p10571) target = $region56
      $region55: #{mod_four_forward.1} parent=51 // pred_region
        %p10574 = scmp.lt.s32.totalorder %s18, 1
        %s10575 = scalar_select %p10574, %s18, 1
        %s10576 = smul.addr %s10575, 14
        %s10577 = smul.addr %s10576, 8
        %s10578 = scalar_lea.vmem %s6, %s10577
      $region56: #{mod_four_forward.1} parent=51 // pred_fallthru
        _
    $region52: #{mod_four_forward.1} parent=5 // pred_fallthru
      _
  $region6: #{mod_four_forward.1} parent=0 // loop_footer
    %s16 = sadd.s32 1, %s12
  $region7: #{mod_four_forward.1} parent=0 // loop_footer_branch
    %11 = sbr.rel target = $region3
  $region8: #{mod_four_forward.1} parent=0 // loop_exit
    _

</llo_original>
